<compile_context>
chip_gen: v6e
topology: v6e:2x2x1
jax: 0.10.0
libtpu: 0.0.40
codegen_flags: <defaults>
</compile_context>

<pallas_src>
import math
import functools

import jax
import jax.numpy as jnp
from jax import lax
from jax.experimental import pallas as pl
from jax.experimental.pallas import tpu as pltpu

INPUT_SIZE = 512
HIDDEN = 64
NUM_LAYERS = 2
FC1_DIM = 32
NUM_CLASSES = 14

_VMEM_SPEC = pl.BlockSpec(memory_space=pltpu.MemorySpace.VMEM)


# ----------------------------------------------------------------------------
# Fused Pallas kernel: 2-layer bidirectional LSTM + head
# ----------------------------------------------------------------------------
def _fused_kernel(x_ref,        # (T*Bp, 512)   time-major, flattened (t*Bp + b)
                  wih0_ref,     # (512, 512)    layer0 input->gates, fused dirs
                  whh0_ref,     # (128, 512)    layer0 hidden->gates, block-diag
                  b0_ref,       # (1, 512)
                  wih1f_ref,    # (64, 512)     layer1 rows for fwd l0-features
                  wih1b_ref,    # (64, 512)     layer1 rows for bwd l0-features
                  whh1_ref,     # (128, 512)
                  b1_ref,       # (1, 512)
                  fc1w_ref,     # (64, 32)
                  fc1b_ref,     # (1, 32)
                  fc2w_ref,     # (32, 14)
                  fc2b_ref,     # (1, 14)
                  out_ref,      # (Bp, 14)
                  g_scr,        # (T*Bp, 512)   gate pre-activations (input proj)
                  yf_scr,       # (T*Bp, 64)    layer0 fwd outputs, time-aligned
                  yb_scr,       # (T*Bp, 64)    layer0 bwd outputs, time-aligned
                  h_scr,        # (Bp, 128)     [h_fwd | h_bwd]
                  c_scr,        # (Bp, 128)     [c_fwd | c_bwd]
                  *, T, Bp):
    H = HIDDEN
    H2 = 2 * H          # 128 : fused fwd/bwd feature width
    G4 = 4 * H2         # 512 : fused gate width

    # Column-select mask, hoisted out of the loops: in each 128-lane gate
    # block, lanes [0,64) belong to the forward direction.
    lane = lax.broadcasted_iota(jnp.int32, (Bp, G4), 1)
    fwd_cols = (lane % H2) < H
    unroll = True if T <= 16 else 4

    def run_layer(whh_ref, store_outputs):
        h_scr[...] = jnp.zeros(h_scr.shape, h_scr.dtype)
        c_scr[...] = jnp.zeros(c_scr.shape, c_scr.dtype)

        def step(s, carry):
            # forward direction consumes time s, backward consumes time T-1-s
            row_f = pl.multiple_of(s * Bp, Bp)
            row_b = pl.multiple_of((T - 1 - s) * Bp, Bp)
            g_f = g_scr[pl.ds(row_f, Bp), :]           # (Bp, 512)
            g_b = g_scr[pl.ds(row_b, Bp), :]           # (Bp, 512)
            gates = jnp.where(fwd_cols, g_f, g_b) + jnp.dot(
                h_scr[...], whh_ref[...], preferred_element_type=jnp.float32)
            # gate layout: [i_f|i_b | f_f|f_b | g_f|g_b | o_f|o_b]
            i = jax.nn.sigmoid(gates[:, 0 * H2:1 * H2])
            f = jax.nn.sigmoid(gates[:, 1 * H2:2 * H2])
            g = jnp.tanh(gates[:, 2 * H2:3 * H2])
            o = jax.nn.sigmoid(gates[:, 3 * H2:4 * H2])
            c_new = f * c_scr[...] + i * g
            h_new = o * jnp.tanh(c_new)
            c_scr[...] = c_new
            h_scr[...] = h_new
            if store_outputs:
                # time-align the per-step outputs (bwd output belongs to T-1-s)
                yf_scr[pl.ds(row_f, Bp), :] = h_new[:, :H]
                yb_scr[pl.ds(row_b, Bp), :] = h_new[:, H:]
            return carry

        lax.fori_loop(0, T, step, 0, unroll=unroll)

    # ---- layer 0: hoisted input projection over all T*Bp rows (K=512) ----
    g_scr[...] = jnp.dot(x_ref[...], wih0_ref[...],
                         preferred_element_type=jnp.float32) + b0_ref[...]
    run_layer(whh0_ref, store_outputs=True)
    h_final_l0 = h_scr[...]                            # (Bp, 128) final fwd/bwd

    # ---- layer 1: hoisted input projection from layer-0 outputs ----
    g_scr[...] = (jnp.dot(yf_scr[...], wih1f_ref[...],
                          preferred_element_type=jnp.float32)
                  + jnp.dot(yb_scr[...], wih1b_ref[...],
                            preferred_element_type=jnp.float32)
                  + b1_ref[...])
    run_layer(whh1_ref, store_outputs=False)           # per-step output unused

    # ---- head: mean of the 4 final hidden states -> fc1 -> fc2 -> softmax --
    hsum = h_final_l0 + h_scr[...]                     # (Bp, 128)
    h_mean = (hsum[:, :H] + hsum[:, H:]) * 0.25        # (Bp, 64)
    z = jnp.dot(h_mean, fc1w_ref[...],
                preferred_element_type=jnp.float32) + fc1b_ref[...]
    z = jnp.dot(z, fc2w_ref[...],
                preferred_element_type=jnp.float32) + fc2b_ref[...]
    z = z - jnp.max(z, axis=1, keepdims=True)
    e = jnp.exp(z)
    out_ref[...] = (e / jnp.sum(e, axis=1, keepdims=True)).astype(out_ref.dtype)


def _fused_forward_call(x_flat, wih0, whh0, b0, wih1f, wih1b, whh1, b1,
                        fc1w, fc1b, fc2w, fc2b, *, T, Bp):
    H = HIDDEN
    G4 = 8 * H

    inputs = (x_flat, wih0, whh0, b0, wih1f, wih1b, whh1, b1,
              fc1w, fc1b, fc2w, fc2b)
    scratch_bytes = 4 * (T * Bp * G4 + 2 * T * Bp * H + 2 * Bp * 2 * H)
    need = (sum(a.size * a.dtype.itemsize for a in inputs)
            + scratch_bytes + Bp * NUM_CLASSES * 4)
    vmem_limit = int(min(max(32 << 20, 2 * need), 64 << 20))

    return pl.pallas_call(
        functools.partial(_fused_kernel, T=T, Bp=Bp),
        out_shape=jax.ShapeDtypeStruct((Bp, NUM_CLASSES), jnp.float32),
        in_specs=[_VMEM_SPEC] * len(inputs),
        out_specs=_VMEM_SPEC,
        scratch_shapes=[
            pltpu.VMEM((T * Bp, G4), jnp.float32),   # gate pre-activations
            pltpu.VMEM((T * Bp, H), jnp.float32),    # layer-0 fwd outputs
            pltpu.VMEM((T * Bp, H), jnp.float32),    # layer-0 bwd outputs
            pltpu.VMEM((Bp, 2 * H), jnp.float32),    # h state [fwd|bwd]
            pltpu.VMEM((Bp, 2 * H), jnp.float32),    # c state [fwd|bwd]
        ],
        compiler_params=pltpu.CompilerParams(vmem_limit_bytes=vmem_limit),
    )(*inputs)


# ----------------------------------------------------------------------------
# Weight fusion: PyTorch per-direction layout -> fused lane-interleaved layout
# ----------------------------------------------------------------------------
def _fuse_direction_weights(p_f, p_b):
    """Return (wih, whh, b) with gate/direction-interleaved columns.

    Column layout (width 8H=512): [i_f|i_b|f_f|f_b|g_f|g_b|o_f|o_b], 64 each.
    whh is block-diagonal over directions: rows 0:64 = h_fwd, rows 64:128 = h_bwd.
    """
    H = HIDDEN

    def interleave(mf, mb):          # (rows, 4H) x 2 -> (rows, 8H)
        blocks = []
        for k in range(4):
            blocks.append(mf[:, k * H:(k + 1) * H])
            blocks.append(mb[:, k * H:(k + 1) * H])
        return jnp.concatenate(blocks, axis=1)

    wih = interleave(p_f["wih"].T, p_b["wih"].T)                 # (d_in, 512)
    zH = jnp.zeros((H, 4 * H), jnp.float32)
    whh = jnp.concatenate([interleave(p_f["whh"].T, zH),
                           interleave(zH, p_b["whh"].T)], axis=0)  # (128, 512)
    b = interleave((p_f["bih"] + p_f["bhh"])[None, :],
                   (p_b["bih"] + p_b["bhh"])[None, :])             # (1, 512)
    return wih, whh, b


# ----------------------------------------------------------------------------
# Full forward (mirrors INIT_CLIP_LSTM.forward, eval mode)
# ----------------------------------------------------------------------------
@jax.jit
def init_clip_lstm_pallas(feat, params):
    B, T, D = feat.shape
    Bp = max(8, ((B + 7) // 8) * 8)            # pad batch to full sublanes
    x = jnp.transpose(feat, (1, 0, 2))         # (T, B, 512) time-major
    if Bp != B:
        x = jnp.pad(x, ((0, 0), (0, Bp - B), (0, 0)))
    x_flat = x.reshape(T * Bp, D)

    l0, l1 = params["lstm"]
    wih0, whh0, b0 = _fuse_direction_weights(l0[0], l0[1])
    wih1, whh1, b1 = _fuse_direction_weights(l1[0], l1[1])
    wih1f, wih1b = wih1[:HIDDEN], wih1[HIDDEN:]
    fc1w, fc1b = params["fc1_w"].T, params["fc1_b"][None, :]
    fc2w, fc2b = params["fc2_w"].T, params["fc2_b"][None, :]

    out = _fused_forward_call(x_flat, wih0, whh0, b0, wih1f, wih1b, whh1, b1,
                              fc1w, fc1b, fc2w, fc2b, T=T, Bp=Bp)
    return out[:B]


# ----------------------------------------------------------------------------
# Pure-JAX reference (PyTorch semantics, f32)
# ----------------------------------------------------------------------------
def _lstm_dir_ref(x_tm, wih_t, whh_t, bias):
    H = HIDDEN
    B = x_tm.shape[1]

    def step(carry, x_t):
        h, c = carry
        gates = x_t @ wih_t + h @ whh_t + bias
        i = jax.nn.sigmoid(gates[:, 0 * H:1 * H])
        f = jax.nn.sigmoid(gates[:, 1 * H:2 * H])
        g = jnp.tanh(gates[:, 2 * H:3 * H])
        o = jax.nn.sigmoid(gates[:, 3 * H:4 * H])
        c = f * c + i * g
        h = o * jnp.tanh(c)
        return (h, c), h

    init = (jnp.zeros((B, H), jnp.float32), jnp.zeros((B, H), jnp.float32))
    (h, c), outs = lax.scan(step, init, x_tm)
    return outs, h, c


def init_clip_lstm_ref(feat, params):
    x = jnp.transpose(feat, (1, 0, 2))  # (T, B, 512)
    h_finals = []
    layer_in = x
    for layer in range(NUM_LAYERS):
        dir_outs = []
        for d in range(2):
            p = params["lstm"][layer][d]
            xin = layer_in[::-1] if d == 1 else layer_in
            out, h_f, _ = _lstm_dir_ref(xin, p["wih"].T, p["whh"].T,
                                        (p["bih"] + p["bhh"])[None, :])
            if d == 1:
                out = out[::-1]
            dir_outs.append(out)
            h_finals.append(h_f)
        layer_in = jnp.concatenate(dir_outs, axis=-1)
    h_mean = jnp.stack(h_finals, axis=0).mean(axis=0)
    z = (h_mean @ params["fc1_w"].T + params["fc1_b"]) @ params["fc2_w"].T \
        + params["fc2_b"]
    return jax.nn.softmax(z, axis=1)


# ----------------------------------------------------------------------------
# Deterministic parameter init (same shapes / layout as the PyTorch module)
# ----------------------------------------------------------------------------
def init_params(key):
    stdv = 1.0 / math.sqrt(HIDDEN)

    def uni(k, shape, bound):
        return jax.random.uniform(k, shape, jnp.float32, -bound, bound)

    keys = jax.random.split(key, NUM_LAYERS * 2 * 4 + 4)
    ki = 0
    lstm = []
    for layer in range(NUM_LAYERS):
        d_in = INPUT_SIZE if layer == 0 else 2 * HIDDEN
        dirs = []
        for _d in range(2):
            dirs.append({
                "wih": uni(keys[ki + 0], (4 * HIDDEN, d_in), stdv),
                "whh": uni(keys[ki + 1], (4 * HIDDEN, HIDDEN), stdv),
                "bih": uni(keys[ki + 2], (4 * HIDDEN,), stdv),
                "bhh": uni(keys[ki + 3], (4 * HIDDEN,), stdv),
            })
            ki += 4
        lstm.append(dirs)
    b1 = 1.0 / math.sqrt(HIDDEN)
    b2 = 1.0 / math.sqrt(FC1_DIM)
    return {
        "lstm": lstm,
        "fc1_w": uni(keys[ki + 0], (FC1_DIM, HIDDEN), b1),
        "fc1_b": uni(keys[ki + 1], (FC1_DIM,), b1),
        "fc2_w": uni(keys[ki + 2], (NUM_CLASSES, FC1_DIM), b2),
        "fc2_b": uni(keys[ki + 3], (NUM_CLASSES,), b2),
    }


if __name__ == "__main__":
    B, T = 2, 8
    key = jax.random.PRNGKey(0)
    k_feat, k_param = jax.random.split(key)
    feat = jax.random.normal(k_feat, (B, T, INPUT_SIZE), jnp.float32)
    params = init_params(k_param)

    out = init_clip_lstm_pallas(feat, params)
    out = jax.block_until_ready(out)

    ref = init_clip_lstm_ref(feat, params)
    assert out.shape == (B, NUM_CLASSES)
    assert jnp.allclose(out, ref, rtol=1e-4, atol=1e-5), "mismatch vs reference"
    assert jnp.allclose(jnp.sum(out, axis=1), 1.0, atol=1e-5)

    print("KERNEL_OK")
</pallas_src>

<mosaic_0001>
module attributes {stable_mosaic.version = 11 : i64} {
  func.func @_fused_kernel(%arg0: memref<64x512xf32, #tpu.memory_space<vmem>>, %arg1: memref<512x512xf32, #tpu.memory_space<vmem>>, %arg2: memref<128x512xf32, #tpu.memory_space<vmem>>, %arg3: memref<1x512xf32, #tpu.memory_space<vmem>>, %arg4: memref<64x512xf32, #tpu.memory_space<vmem>>, %arg5: memref<64x512xf32, #tpu.memory_space<vmem>>, %arg6: memref<128x512xf32, #tpu.memory_space<vmem>>, %arg7: memref<1x512xf32, #tpu.memory_space<vmem>>, %arg8: memref<64x32xf32, #tpu.memory_space<vmem>>, %arg9: memref<1x32xf32, #tpu.memory_space<vmem>>, %arg10: memref<32x14xf32, #tpu.memory_space<vmem>>, %arg11: memref<1x14xf32, #tpu.memory_space<vmem>>, %arg12: memref<8x14xf32, #tpu.memory_space<vmem>>, %arg13: memref<64x512xf32, #tpu.memory_space<vmem>>, %arg14: memref<64x64xf32, #tpu.memory_space<vmem>>, %arg15: memref<64x64xf32, #tpu.memory_space<vmem>>, %arg16: memref<8x128xf32, #tpu.memory_space<vmem>>, %arg17: memref<8x128xf32, #tpu.memory_space<vmem>>) attributes {dimension_semantics = [], scalar_prefetch = 0 : i64, scratch_operands = 5 : i64, tpu.core_type = #tpu.core_type<tc>} {
    %0 = tpu.iota {dimensions = array<i32: 1>} : vector<8x512xi32>
    %c128_i32 = arith.constant 128 : i32
    %c0_i32 = arith.constant 0 : i32
    %1 = arith.cmpi eq, %c128_i32, %c0_i32 : i32
    %c1_i32 = arith.constant 1 : i32
    %2 = arith.select %1, %c1_i32, %c128_i32 : i32
    %3 = vector.broadcast %2 : i32 to vector<8x512xi32>
    %4 = arith.remsi %0, %3 : vector<8x512xi32>
    %c0_i32_0 = arith.constant 0 : i32
    %5 = vector.broadcast %c0_i32_0 : i32 to vector<8x512xi32>
    %6 = arith.cmpi ne, %4, %5 : vector<8x512xi32>
    %c0_i32_1 = arith.constant 0 : i32
    %7 = vector.broadcast %c0_i32_1 : i32 to vector<8x512xi32>
    %8 = arith.cmpi slt, %4, %7 : vector<8x512xi32>
    %c0_i32_2 = arith.constant 0 : i32
    %9 = arith.cmpi slt, %2, %c0_i32_2 : i32
    %10 = vector.broadcast %9 : i1 to vector<8x512xi1>
    %11 = vector.broadcast %10 : vector<8x512xi1> to vector<8x512xi1>
    %12 = arith.xori %8, %11 : vector<8x512xi1>
    %13 = arith.andi %12, %6 : vector<8x512xi1>
    %14 = vector.broadcast %2 : i32 to vector<8x512xi32>
    %15 = arith.addi %4, %14 : vector<8x512xi32>
    %16 = arith.select %13, %15, %4 : vector<8x512xi1>, vector<8x512xi32>
    %c64_i32 = arith.constant 64 : i32
    %17 = vector.broadcast %c64_i32 : i32 to vector<8x512xi32>
    %18 = arith.cmpi slt, %16, %17 : vector<8x512xi32>
    %c0 = arith.constant 0 : index
    %c0_3 = arith.constant 0 : index
    %19 = vector.load %arg0[%c0, %c0_3] : memref<64x512xf32, #tpu.memory_space<vmem>>, vector<64x512xf32>
    %c0_4 = arith.constant 0 : index
    %c0_5 = arith.constant 0 : index
    %20 = vector.load %arg1[%c0_4, %c0_5] : memref<512x512xf32, #tpu.memory_space<vmem>>, vector<512x512xf32>
    %cst = arith.constant dense<0.000000e+00> : vector<64x512xf32>
    %21 = tpu.matmul %19, %20, %cst {dimension_numbers = #tpu.dot_dimension_numbers<[1], [0], [0], [1], [0, 0, 1, 1], [], []>} : vector<64x512xf32>, vector<512x512xf32>, vector<64x512xf32> -> vector<64x512xf32>
    %c0_6 = arith.constant 0 : index
    %c0_7 = arith.constant 0 : index
    %22 = vector.load %arg3[%c0_6, %c0_7] : memref<1x512xf32, #tpu.memory_space<vmem>>, vector<1x512xf32>
    %23 = vector.broadcast %22 : vector<1x512xf32> to vector<64x512xf32>
    %24 = arith.addf %21, %23 : vector<64x512xf32>
    %c0_8 = arith.constant 0 : index
    %c0_9 = arith.constant 0 : index
    %25 = vector.load %arg13[%c0_8, %c0_9] : memref<64x512xf32, #tpu.memory_space<vmem>>, vector<64x512xf32>
    tpu.vector_store %arg13[%c0_8, %c0_9], %24 {strides = array<i32>} : memref<64x512xf32, #tpu.memory_space<vmem>>, vector<64x512xf32>,
    %cst_10 = arith.constant 0.000000e+00 : f32
    %26 = vector.broadcast %cst_10 : f32 to vector<8x128xf32>
    %c0_11 = arith.constant 0 : index
    %c0_12 = arith.constant 0 : index
    %27 = vector.load %arg16[%c0_11, %c0_12] : memref<8x128xf32, #tpu.memory_space<vmem>>, vector<8x128xf32>
    tpu.vector_store %arg16[%c0_11, %c0_12], %26 {strides = array<i32>} : memref<8x128xf32, #tpu.memory_space<vmem>>, vector<8x128xf32>,
    %cst_13 = arith.constant 0.000000e+00 : f32
    %28 = vector.broadcast %cst_13 : f32 to vector<8x128xf32>
    %c0_14 = arith.constant 0 : index
    %c0_15 = arith.constant 0 : index
    %29 = vector.load %arg17[%c0_14, %c0_15] : memref<8x128xf32, #tpu.memory_space<vmem>>, vector<8x128xf32>
    tpu.vector_store %arg17[%c0_14, %c0_15], %28 {strides = array<i32>} : memref<8x128xf32, #tpu.memory_space<vmem>>, vector<8x128xf32>,
    %c0_i32_16 = arith.constant 0 : i32
    %c8_i32 = arith.constant 8 : i32
    %30 = arith.muli %c0_i32_16, %c8_i32 : i32
    %31 = tpu.assume_multiple %30, 8 : i32
    %c7_i32 = arith.constant 7 : i32
    %32 = arith.subi %c7_i32, %c0_i32_16 : i32
    %c8_i32_17 = arith.constant 8 : i32
    %33 = arith.muli %32, %c8_i32_17 : i32
    %34 = tpu.assume_multiple %33, 8 : i32
    %35 = arith.index_cast %31 : i32 to index
    %c0_18 = arith.constant 0 : index
    %36 = vector.load %arg13[%35, %c0_18] : memref<64x512xf32, #tpu.memory_space<vmem>>, vector<8x512xf32>
    %37 = arith.index_cast %34 : i32 to index
    %c0_19 = arith.constant 0 : index
    %38 = vector.load %arg13[%37, %c0_19] : memref<64x512xf32, #tpu.memory_space<vmem>>, vector<8x512xf32>
    %39 = arith.select %18, %36, %38 : vector<8x512xi1>, vector<8x512xf32>
    %c0_20 = arith.constant 0 : index
    %c0_21 = arith.constant 0 : index
    %40 = vector.load %arg16[%c0_20, %c0_21] : memref<8x128xf32, #tpu.memory_space<vmem>>, vector<8x128xf32>
    %c0_22 = arith.constant 0 : index
    %c0_23 = arith.constant 0 : index
    %41 = vector.load %arg2[%c0_22, %c0_23] : memref<128x512xf32, #tpu.memory_space<vmem>>, vector<128x512xf32>
    %cst_24 = arith.constant dense<0.000000e+00> : vector<8x512xf32>
    %42 = tpu.matmul %40, %41, %cst_24 {dimension_numbers = #tpu.dot_dimension_numbers<[1], [0], [0], [1], [0, 0, 1, 1], [], []>} : vector<8x128xf32>, vector<128x512xf32>, vector<8x512xf32> -> vector<8x512xf32>
    %43 = arith.addf %39, %42 : vector<8x512xf32>
    %44 = vector.extract_strided_slice %43 {offsets = [0, 0], sizes = [8, 128], strides = [1, 1]} : vector<8x512xf32> to vector<8x128xf32>
    %45 = arith.negf %44 : vector<8x128xf32>
    %46 = math.exp %45 : vector<8x128xf32>
    %cst_25 = arith.constant 1.000000e+00 : f32
    %47 = vector.broadcast %cst_25 : f32 to vector<8x128xf32>
    %48 = arith.addf %47, %46 : vector<8x128xf32>
    %49 = arith.divf %47, %48 : vector<8x128xf32>
    %50 = vector.extract_strided_slice %43 {offsets = [0, 128], sizes = [8, 128], strides = [1, 1]} : vector<8x512xf32> to vector<8x128xf32>
    %51 = arith.negf %50 : vector<8x128xf32>
    %52 = math.exp %51 : vector<8x128xf32>
    %cst_26 = arith.constant 1.000000e+00 : f32
    %53 = vector.broadcast %cst_26 : f32 to vector<8x128xf32>
    %54 = arith.addf %53, %52 : vector<8x128xf32>
    %55 = arith.divf %53, %54 : vector<8x128xf32>
    %56 = vector.extract_strided_slice %43 {offsets = [0, 256], sizes = [8, 128], strides = [1, 1]} : vector<8x512xf32> to vector<8x128xf32>
    %57 = math.tanh %56 : vector<8x128xf32>
    %58 = vector.extract_strided_slice %43 {offsets = [0, 384], sizes = [8, 128], strides = [1, 1]} : vector<8x512xf32> to vector<8x128xf32>
    %59 = arith.negf %58 : vector<8x128xf32>
    %60 = math.exp %59 : vector<8x128xf32>
    %cst_27 = arith.constant 1.000000e+00 : f32
    %61 = vector.broadcast %cst_27 : f32 to vector<8x128xf32>
    %62 = arith.addf %61, %60 : vector<8x128xf32>
    %63 = arith.divf %61, %62 : vector<8x128xf32>
    %c0_28 = arith.constant 0 : index
    %c0_29 = arith.constant 0 : index
    %64 = vector.load %arg17[%c0_28, %c0_29] : memref<8x128xf32, #tpu.memory_space<vmem>>, vector<8x128xf32>
    %65 = arith.mulf %55, %64 : vector<8x128xf32>
    %66 = arith.mulf %49, %57 : vector<8x128xf32>
    %67 = arith.addf %65, %66 : vector<8x128xf32>
    %68 = math.tanh %67 : vector<8x128xf32>
    %69 = arith.mulf %63, %68 : vector<8x128xf32>
    %c0_30 = arith.constant 0 : index
    %c0_31 = arith.constant 0 : index
    %70 = vector.load %arg17[%c0_30, %c0_31] : memref<8x128xf32, #tpu.memory_space<vmem>>, vector<8x128xf32>
    tpu.vector_store %arg17[%c0_30, %c0_31], %67 {strides = array<i32>} : memref<8x128xf32, #tpu.memory_space<vmem>>, vector<8x128xf32>,
    %c0_32 = arith.constant 0 : index
    %c0_33 = arith.constant 0 : index
    %71 = vector.load %arg16[%c0_32, %c0_33] : memref<8x128xf32, #tpu.memory_space<vmem>>, vector<8x128xf32>
    tpu.vector_store %arg16[%c0_32, %c0_33], %69 {strides = array<i32>} : memref<8x128xf32, #tpu.memory_space<vmem>>, vector<8x128xf32>,
    %72 = vector.extract_strided_slice %69 {offsets = [0, 0], sizes = [8, 64], strides = [1, 1]} : vector<8x128xf32> to vector<8x64xf32>
    %73 = arith.index_cast %31 : i32 to index
    %c0_34 = arith.constant 0 : index
    %74 = vector.load %arg14[%73, %c0_34] : memref<64x64xf32, #tpu.memory_space<vmem>>, vector<8x64xf32>
    tpu.vector_store %arg14[%73, %c0_34], %72 {strides = array<i32>} : memref<64x64xf32, #tpu.memory_space<vmem>>, vector<8x64xf32>,
    %75 = vector.extract_strided_slice %69 {offsets = [0, 64], sizes = [8, 64], strides = [1, 1]} : vector<8x128xf32> to vector<8x64xf32>
    %76 = arith.index_cast %34 : i32 to index
    %c0_35 = arith.constant 0 : index
    %77 = vector.load %arg15[%76, %c0_35] : memref<64x64xf32, #tpu.memory_space<vmem>>, vector<8x64xf32>
    tpu.vector_store %arg15[%76, %c0_35], %75 {strides = array<i32>} : memref<64x64xf32, #tpu.memory_space<vmem>>, vector<8x64xf32>,
    %c1_i32_36 = arith.constant 1 : i32
    %c8_i32_37 = arith.constant 8 : i32
    %78 = arith.muli %c1_i32_36, %c8_i32_37 : i32
    %79 = tpu.assume_multiple %78, 8 : i32
    %c7_i32_38 = arith.constant 7 : i32
    %80 = arith.subi %c7_i32_38, %c1_i32_36 : i32
    %c8_i32_39 = arith.constant 8 : i32
    %81 = arith.muli %80, %c8_i32_39 : i32
    %82 = tpu.assume_multiple %81, 8 : i32
    %83 = arith.index_cast %79 : i32 to index
    %c0_40 = arith.constant 0 : index
    %84 = vector.load %arg13[%83, %c0_40] : memref<64x512xf32, #tpu.memory_space<vmem>>, vector<8x512xf32>
    %85 = arith.index_cast %82 : i32 to index
    %c0_41 = arith.constant 0 : index
    %86 = vector.load %arg13[%85, %c0_41] : memref<64x512xf32, #tpu.memory_space<vmem>>, vector<8x512xf32>
    %87 = arith.select %18, %84, %86 : vector<8x512xi1>, vector<8x512xf32>
    %c0_42 = arith.constant 0 : index
    %c0_43 = arith.constant 0 : index
    %88 = vector.load %arg16[%c0_42, %c0_43] : memref<8x128xf32, #tpu.memory_space<vmem>>, vector<8x128xf32>
    %c0_44 = arith.constant 0 : index
    %c0_45 = arith.constant 0 : index
    %89 = vector.load %arg2[%c0_44, %c0_45] : memref<128x512xf32, #tpu.memory_space<vmem>>, vector<128x512xf32>
    %cst_46 = arith.constant dense<0.000000e+00> : vector<8x512xf32>
    %90 = tpu.matmul %88, %89, %cst_46 {dimension_numbers = #tpu.dot_dimension_numbers<[1], [0], [0], [1], [0, 0, 1, 1], [], []>} : vector<8x128xf32>, vector<128x512xf32>, vector<8x512xf32> -> vector<8x512xf32>
    %91 = arith.addf %87, %90 : vector<8x512xf32>
    %92 = vector.extract_strided_slice %91 {offsets = [0, 0], sizes = [8, 128], strides = [1, 1]} : vector<8x512xf32> to vector<8x128xf32>
    %93 = arith.negf %92 : vector<8x128xf32>
    %94 = math.exp %93 : vector<8x128xf32>
    %cst_47 = arith.constant 1.000000e+00 : f32
    %95 = vector.broadcast %cst_47 : f32 to vector<8x128xf32>
    %96 = arith.addf %95, %94 : vector<8x128xf32>
    %97 = arith.divf %95, %96 : vector<8x128xf32>
    %98 = vector.extract_strided_slice %91 {offsets = [0, 128], sizes = [8, 128], strides = [1, 1]} : vector<8x512xf32> to vector<8x128xf32>
    %99 = arith.negf %98 : vector<8x128xf32>
    %100 = math.exp %99 : vector<8x128xf32>
    %cst_48 = arith.constant 1.000000e+00 : f32
    %101 = vector.broadcast %cst_48 : f32 to vector<8x128xf32>
    %102 = arith.addf %101, %100 : vector<8x128xf32>
    %103 = arith.divf %101, %102 : vector<8x128xf32>
    %104 = vector.extract_strided_slice %91 {offsets = [0, 256], sizes = [8, 128], strides = [1, 1]} : vector<8x512xf32> to vector<8x128xf32>
    %105 = math.tanh %104 : vector<8x128xf32>
    %106 = vector.extract_strided_slice %91 {offsets = [0, 384], sizes = [8, 128], strides = [1, 1]} : vector<8x512xf32> to vector<8x128xf32>
    %107 = arith.negf %106 : vector<8x128xf32>
    %108 = math.exp %107 : vector<8x128xf32>
    %cst_49 = arith.constant 1.000000e+00 : f32
    %109 = vector.broadcast %cst_49 : f32 to vector<8x128xf32>
    %110 = arith.addf %109, %108 : vector<8x128xf32>
    %111 = arith.divf %109, %110 : vector<8x128xf32>
    %c0_50 = arith.constant 0 : index
    %c0_51 = arith.constant 0 : index
    %112 = vector.load %arg17[%c0_50, %c0_51] : memref<8x128xf32, #tpu.memory_space<vmem>>, vector<8x128xf32>
    %113 = arith.mulf %103, %112 : vector<8x128xf32>
    %114 = arith.mulf %97, %105 : vector<8x128xf32>
    %115 = arith.addf %113, %114 : vector<8x128xf32>
    %116 = math.tanh %115 : vector<8x128xf32>
    %117 = arith.mulf %111, %116 : vector<8x128xf32>
    %c0_52 = arith.constant 0 : index
    %c0_53 = arith.constant 0 : index
    %118 = vector.load %arg17[%c0_52, %c0_53] : memref<8x128xf32, #tpu.memory_space<vmem>>, vector<8x128xf32>
    tpu.vector_store %arg17[%c0_52, %c0_53], %115 {strides = array<i32>} : memref<8x128xf32, #tpu.memory_space<vmem>>, vector<8x128xf32>,
    %c0_54 = arith.constant 0 : index
    %c0_55 = arith.constant 0 : index
    %119 = vector.load %arg16[%c0_54, %c0_55] : memref<8x128xf32, #tpu.memory_space<vmem>>, vector<8x128xf32>
    tpu.vector_store %arg16[%c0_54, %c0_55], %117 {strides = array<i32>} : memref<8x128xf32, #tpu.memory_space<vmem>>, vector<8x128xf32>,
    %120 = vector.extract_strided_slice %117 {offsets = [0, 0], sizes = [8, 64], strides = [1, 1]} : vector<8x128xf32> to vector<8x64xf32>
    %121 = arith.index_cast %79 : i32 to index
    %c0_56 = arith.constant 0 : index
    %122 = vector.load %arg14[%121, %c0_56] : memref<64x64xf32, #tpu.memory_space<vmem>>, vector<8x64xf32>
    tpu.vector_store %arg14[%121, %c0_56], %120 {strides = array<i32>} : memref<64x64xf32, #tpu.memory_space<vmem>>, vector<8x64xf32>,
    %123 = vector.extract_strided_slice %117 {offsets = [0, 64], sizes = [8, 64], strides = [1, 1]} : vector<8x128xf32> to vector<8x64xf32>
    %124 = arith.index_cast %82 : i32 to index
    %c0_57 = arith.constant 0 : index
    %125 = vector.load %arg15[%124, %c0_57] : memref<64x64xf32, #tpu.memory_space<vmem>>, vector<8x64xf32>
    tpu.vector_store %arg15[%124, %c0_57], %123 {strides = array<i32>} : memref<64x64xf32, #tpu.memory_space<vmem>>, vector<8x64xf32>,
    %c2_i32 = arith.constant 2 : i32
    %c8_i32_58 = arith.constant 8 : i32
    %126 = arith.muli %c2_i32, %c8_i32_58 : i32
    %127 = tpu.assume_multiple %126, 8 : i32
    %c7_i32_59 = arith.constant 7 : i32
    %128 = arith.subi %c7_i32_59, %c2_i32 : i32
    %c8_i32_60 = arith.constant 8 : i32
    %129 = arith.muli %128, %c8_i32_60 : i32
    %130 = tpu.assume_multiple %129, 8 : i32
    %131 = arith.index_cast %127 : i32 to index
    %c0_61 = arith.constant 0 : index
    %132 = vector.load %arg13[%131, %c0_61] : memref<64x512xf32, #tpu.memory_space<vmem>>, vector<8x512xf32>
    %133 = arith.index_cast %130 : i32 to index
    %c0_62 = arith.constant 0 : index
    %134 = vector.load %arg13[%133, %c0_62] : memref<64x512xf32, #tpu.memory_space<vmem>>, vector<8x512xf32>
    %135 = arith.select %18, %132, %134 : vector<8x512xi1>, vector<8x512xf32>
    %c0_63 = arith.constant 0 : index
    %c0_64 = arith.constant 0 : index
    %136 = vector.load %arg16[%c0_63, %c0_64] : memref<8x128xf32, #tpu.memory_space<vmem>>, vector<8x128xf32>
    %c0_65 = arith.constant 0 : index
    %c0_66 = arith.constant 0 : index
    %137 = vector.load %arg2[%c0_65, %c0_66] : memref<128x512xf32, #tpu.memory_space<vmem>>, vector<128x512xf32>
    %cst_67 = arith.constant dense<0.000000e+00> : vector<8x512xf32>
    %138 = tpu.matmul %136, %137, %cst_67 {dimension_numbers = #tpu.dot_dimension_numbers<[1], [0], [0], [1], [0, 0, 1, 1], [], []>} : vector<8x128xf32>, vector<128x512xf32>, vector<8x512xf32> -> vector<8x512xf32>
    %139 = arith.addf %135, %138 : vector<8x512xf32>
    %140 = vector.extract_strided_slice %139 {offsets = [0, 0], sizes = [8, 128], strides = [1, 1]} : vector<8x512xf32> to vector<8x128xf32>
    %141 = arith.negf %140 : vector<8x128xf32>
    %142 = math.exp %141 : vector<8x128xf32>
    %cst_68 = arith.constant 1.000000e+00 : f32
    %143 = vector.broadcast %cst_68 : f32 to vector<8x128xf32>
    %144 = arith.addf %143, %142 : vector<8x128xf32>
    %145 = arith.divf %143, %144 : vector<8x128xf32>
    %146 = vector.extract_strided_slice %139 {offsets = [0, 128], sizes = [8, 128], strides = [1, 1]} : vector<8x512xf32> to vector<8x128xf32>
    %147 = arith.negf %146 : vector<8x128xf32>
    %148 = math.exp %147 : vector<8x128xf32>
    %cst_69 = arith.constant 1.000000e+00 : f32
    %149 = vector.broadcast %cst_69 : f32 to vector<8x128xf32>
    %150 = arith.addf %149, %148 : vector<8x128xf32>
    %151 = arith.divf %149, %150 : vector<8x128xf32>
    %152 = vector.extract_strided_slice %139 {offsets = [0, 256], sizes = [8, 128], strides = [1, 1]} : vector<8x512xf32> to vector<8x128xf32>
    %153 = math.tanh %152 : vector<8x128xf32>
    %154 = vector.extract_strided_slice %139 {offsets = [0, 384], sizes = [8, 128], strides = [1, 1]} : vector<8x512xf32> to vector<8x128xf32>
    %155 = arith.negf %154 : vector<8x128xf32>
    %156 = math.exp %155 : vector<8x128xf32>
    %cst_70 = arith.constant 1.000000e+00 : f32
    %157 = vector.broadcast %cst_70 : f32 to vector<8x128xf32>
    %158 = arith.addf %157, %156 : vector<8x128xf32>
    %159 = arith.divf %157, %158 : vector<8x128xf32>
    %c0_71 = arith.constant 0 : index
    %c0_72 = arith.constant 0 : index
    %160 = vector.load %arg17[%c0_71, %c0_72] : memref<8x128xf32, #tpu.memory_space<vmem>>, vector<8x128xf32>
    %161 = arith.mulf %151, %160 : vector<8x128xf32>
    %162 = arith.mulf %145, %153 : vector<8x128xf32>
    %163 = arith.addf %161, %162 : vector<8x128xf32>
    %164 = math.tanh %163 : vector<8x128xf32>
    %165 = arith.mulf %159, %164 : vector<8x128xf32>
    %c0_73 = arith.constant 0 : index
    %c0_74 = arith.constant 0 : index
    %166 = vector.load %arg17[%c0_73, %c0_74] : memref<8x128xf32, #tpu.memory_space<vmem>>, vector<8x128xf32>
    tpu.vector_store %arg17[%c0_73, %c0_74], %163 {strides = array<i32>} : memref<8x128xf32, #tpu.memory_space<vmem>>, vector<8x128xf32>,
    %c0_75 = arith.constant 0 : index
    %c0_76 = arith.constant 0 : index
    %167 = vector.load %arg16[%c0_75, %c0_76] : memref<8x128xf32, #tpu.memory_space<vmem>>, vector<8x128xf32>
    tpu.vector_store %arg16[%c0_75, %c0_76], %165 {strides = array<i32>} : memref<8x128xf32, #tpu.memory_space<vmem>>, vector<8x128xf32>,
    %168 = vector.extract_strided_slice %165 {offsets = [0, 0], sizes = [8, 64], strides = [1, 1]} : vector<8x128xf32> to vector<8x64xf32>
    %169 = arith.index_cast %127 : i32 to index
    %c0_77 = arith.constant 0 : index
    %170 = vector.load %arg14[%169, %c0_77] : memref<64x64xf32, #tpu.memory_space<vmem>>, vector<8x64xf32>
    tpu.vector_store %arg14[%169, %c0_77], %168 {strides = array<i32>} : memref<64x64xf32, #tpu.memory_space<vmem>>, vector<8x64xf32>,
    %171 = vector.extract_strided_slice %165 {offsets = [0, 64], sizes = [8, 64], strides = [1, 1]} : vector<8x128xf32> to vector<8x64xf32>
    %172 = arith.index_cast %130 : i32 to index
    %c0_78 = arith.constant 0 : index
    %173 = vector.load %arg15[%172, %c0_78] : memref<64x64xf32, #tpu.memory_space<vmem>>, vector<8x64xf32>
    tpu.vector_store %arg15[%172, %c0_78], %171 {strides = array<i32>} : memref<64x64xf32, #tpu.memory_space<vmem>>, vector<8x64xf32>,
    %c3_i32 = arith.constant 3 : i32
    %c8_i32_79 = arith.constant 8 : i32
    %174 = arith.muli %c3_i32, %c8_i32_79 : i32
    %175 = tpu.assume_multiple %174, 8 : i32
    %c7_i32_80 = arith.constant 7 : i32
    %176 = arith.subi %c7_i32_80, %c3_i32 : i32
    %c8_i32_81 = arith.constant 8 : i32
    %177 = arith.muli %176, %c8_i32_81 : i32
    %178 = tpu.assume_multiple %177, 8 : i32
    %179 = arith.index_cast %175 : i32 to index
    %c0_82 = arith.constant 0 : index
    %180 = vector.load %arg13[%179, %c0_82] : memref<64x512xf32, #tpu.memory_space<vmem>>, vector<8x512xf32>
    %181 = arith.index_cast %178 : i32 to index
    %c0_83 = arith.constant 0 : index
    %182 = vector.load %arg13[%181, %c0_83] : memref<64x512xf32, #tpu.memory_space<vmem>>, vector<8x512xf32>
    %183 = arith.select %18, %180, %182 : vector<8x512xi1>, vector<8x512xf32>
    %c0_84 = arith.constant 0 : index
    %c0_85 = arith.constant 0 : index
    %184 = vector.load %arg16[%c0_84, %c0_85] : memref<8x128xf32, #tpu.memory_space<vmem>>, vector<8x128xf32>
    %c0_86 = arith.constant 0 : index
    %c0_87 = arith.constant 0 : index
    %185 = vector.load %arg2[%c0_86, %c0_87] : memref<128x512xf32, #tpu.memory_space<vmem>>, vector<128x512xf32>
    %cst_88 = arith.constant dense<0.000000e+00> : vector<8x512xf32>
    %186 = tpu.matmul %184, %185, %cst_88 {dimension_numbers = #tpu.dot_dimension_numbers<[1], [0], [0], [1], [0, 0, 1, 1], [], []>} : vector<8x128xf32>, vector<128x512xf32>, vector<8x512xf32> -> vector<8x512xf32>
    %187 = arith.addf %183, %186 : vector<8x512xf32>
    %188 = vector.extract_strided_slice %187 {offsets = [0, 0], sizes = [8, 128], strides = [1, 1]} : vector<8x512xf32> to vector<8x128xf32>
    %189 = arith.negf %188 : vector<8x128xf32>
    %190 = math.exp %189 : vector<8x128xf32>
    %cst_89 = arith.constant 1.000000e+00 : f32
    %191 = vector.broadcast %cst_89 : f32 to vector<8x128xf32>
    %192 = arith.addf %191, %190 : vector<8x128xf32>
    %193 = arith.divf %191, %192 : vector<8x128xf32>
    %194 = vector.extract_strided_slice %187 {offsets = [0, 128], sizes = [8, 128], strides = [1, 1]} : vector<8x512xf32> to vector<8x128xf32>
    %195 = arith.negf %194 : vector<8x128xf32>
    %196 = math.exp %195 : vector<8x128xf32>
    %cst_90 = arith.constant 1.000000e+00 : f32
    %197 = vector.broadcast %cst_90 : f32 to vector<8x128xf32>
    %198 = arith.addf %197, %196 : vector<8x128xf32>
    %199 = arith.divf %197, %198 : vector<8x128xf32>
    %200 = vector.extract_strided_slice %187 {offsets = [0, 256], sizes = [8, 128], strides = [1, 1]} : vector<8x512xf32> to vector<8x128xf32>
    %201 = math.tanh %200 : vector<8x128xf32>
    %202 = vector.extract_strided_slice %187 {offsets = [0, 384], sizes = [8, 128], strides = [1, 1]} : vector<8x512xf32> to vector<8x128xf32>
    %203 = arith.negf %202 : vector<8x128xf32>
    %204 = math.exp %203 : vector<8x128xf32>
    %cst_91 = arith.constant 1.000000e+00 : f32
    %205 = vector.broadcast %cst_91 : f32 to vector<8x128xf32>
    %206 = arith.addf %205, %204 : vector<8x128xf32>
    %207 = arith.divf %205, %206 : vector<8x128xf32>
    %c0_92 = arith.constant 0 : index
    %c0_93 = arith.constant 0 : index
    %208 = vector.load %arg17[%c0_92, %c0_93] : memref<8x128xf32, #tpu.memory_space<vmem>>, vector<8x128xf32>
    %209 = arith.mulf %199, %208 : vector<8x128xf32>
    %210 = arith.mulf %193, %201 : vector<8x128xf32>
    %211 = arith.addf %209, %210 : vector<8x128xf32>
    %212 = math.tanh %211 : vector<8x128xf32>
    %213 = arith.mulf %207, %212 : vector<8x128xf32>
    %c0_94 = arith.constant 0 : index
    %c0_95 = arith.constant 0 : index
    %214 = vector.load %arg17[%c0_94, %c0_95] : memref<8x128xf32, #tpu.memory_space<vmem>>, vector<8x128xf32>
    tpu.vector_store %arg17[%c0_94, %c0_95], %211 {strides = array<i32>} : memref<8x128xf32, #tpu.memory_space<vmem>>, vector<8x128xf32>,
    %c0_96 = arith.constant 0 : index
    %c0_97 = arith.constant 0 : index
    %215 = vector.load %arg16[%c0_96, %c0_97] : memref<8x128xf32, #tpu.memory_space<vmem>>, vector<8x128xf32>
    tpu.vector_store %arg16[%c0_96, %c0_97], %213 {strides = array<i32>} : memref<8x128xf32, #tpu.memory_space<vmem>>, vector<8x128xf32>,
    %216 = vector.extract_strided_slice %213 {offsets = [0, 0], sizes = [8, 64], strides = [1, 1]} : vector<8x128xf32> to vector<8x64xf32>
    %217 = arith.index_cast %175 : i32 to index
    %c0_98 = arith.constant 0 : index
    %218 = vector.load %arg14[%217, %c0_98] : memref<64x64xf32, #tpu.memory_space<vmem>>, vector<8x64xf32>
    tpu.vector_store %arg14[%217, %c0_98], %216 {strides = array<i32>} : memref<64x64xf32, #tpu.memory_space<vmem>>, vector<8x64xf32>,
    %219 = vector.extract_strided_slice %213 {offsets = [0, 64], sizes = [8, 64], strides = [1, 1]} : vector<8x128xf32> to vector<8x64xf32>
    %220 = arith.index_cast %178 : i32 to index
    %c0_99 = arith.constant 0 : index
    %221 = vector.load %arg15[%220, %c0_99] : memref<64x64xf32, #tpu.memory_space<vmem>>, vector<8x64xf32>
    tpu.vector_store %arg15[%220, %c0_99], %219 {strides = array<i32>} : memref<64x64xf32, #tpu.memory_space<vmem>>, vector<8x64xf32>,
    %c4_i32 = arith.constant 4 : i32
    %c8_i32_100 = arith.constant 8 : i32
    %222 = arith.muli %c4_i32, %c8_i32_100 : i32
    %223 = tpu.assume_multiple %222, 8 : i32
    %c7_i32_101 = arith.constant 7 : i32
    %224 = arith.subi %c7_i32_101, %c4_i32 : i32
    %c8_i32_102 = arith.constant 8 : i32
    %225 = arith.muli %224, %c8_i32_102 : i32
    %226 = tpu.assume_multiple %225, 8 : i32
    %227 = arith.index_cast %223 : i32 to index
    %c0_103 = arith.constant 0 : index
    %228 = vector.load %arg13[%227, %c0_103] : memref<64x512xf32, #tpu.memory_space<vmem>>, vector<8x512xf32>
    %229 = arith.index_cast %226 : i32 to index
    %c0_104 = arith.constant 0 : index
    %230 = vector.load %arg13[%229, %c0_104] : memref<64x512xf32, #tpu.memory_space<vmem>>, vector<8x512xf32>
    %231 = arith.select %18, %228, %230 : vector<8x512xi1>, vector<8x512xf32>
    %c0_105 = arith.constant 0 : index
    %c0_106 = arith.constant 0 : index
    %232 = vector.load %arg16[%c0_105, %c0_106] : memref<8x128xf32, #tpu.memory_space<vmem>>, vector<8x128xf32>
    %c0_107 = arith.constant 0 : index
    %c0_108 = arith.constant 0 : index
    %233 = vector.load %arg2[%c0_107, %c0_108] : memref<128x512xf32, #tpu.memory_space<vmem>>, vector<128x512xf32>
    %cst_109 = arith.constant dense<0.000000e+00> : vector<8x512xf32>
    %234 = tpu.matmul %232, %233, %cst_109 {dimension_numbers = #tpu.dot_dimension_numbers<[1], [0], [0], [1], [0, 0, 1, 1], [], []>} : vector<8x128xf32>, vector<128x512xf32>, vector<8x512xf32> -> vector<8x512xf32>
    %235 = arith.addf %231, %234 : vector<8x512xf32>
    %236 = vector.extract_strided_slice %235 {offsets = [0, 0], sizes = [8, 128], strides = [1, 1]} : vector<8x512xf32> to vector<8x128xf32>
    %237 = arith.negf %236 : vector<8x128xf32>
    %238 = math.exp %237 : vector<8x128xf32>
    %cst_110 = arith.constant 1.000000e+00 : f32
    %239 = vector.broadcast %cst_110 : f32 to vector<8x128xf32>
    %240 = arith.addf %239, %238 : vector<8x128xf32>
    %241 = arith.divf %239, %240 : vector<8x128xf32>
    %242 = vector.extract_strided_slice %235 {offsets = [0, 128], sizes = [8, 128], strides = [1, 1]} : vector<8x512xf32> to vector<8x128xf32>
    %243 = arith.negf %242 : vector<8x128xf32>
    %244 = math.exp %243 : vector<8x128xf32>
    %cst_111 = arith.constant 1.000000e+00 : f32
    %245 = vector.broadcast %cst_111 : f32 to vector<8x128xf32>
    %246 = arith.addf %245, %244 : vector<8x128xf32>
    %247 = arith.divf %245, %246 : vector<8x128xf32>
    %248 = vector.extract_strided_slice %235 {offsets = [0, 256], sizes = [8, 128], strides = [1, 1]} : vector<8x512xf32> to vector<8x128xf32>
    %249 = math.tanh %248 : vector<8x128xf32>
    %250 = vector.extract_strided_slice %235 {offsets = [0, 384], sizes = [8, 128], strides = [1, 1]} : vector<8x512xf32> to vector<8x128xf32>
    %251 = arith.negf %250 : vector<8x128xf32>
    %252 = math.exp %251 : vector<8x128xf32>
    %cst_112 = arith.constant 1.000000e+00 : f32
    %253 = vector.broadcast %cst_112 : f32 to vector<8x128xf32>
    %254 = arith.addf %253, %252 : vector<8x128xf32>
    %255 = arith.divf %253, %254 : vector<8x128xf32>
    %c0_113 = arith.constant 0 : index
    %c0_114 = arith.constant 0 : index
    %256 = vector.load %arg17[%c0_113, %c0_114] : memref<8x128xf32, #tpu.memory_space<vmem>>, vector<8x128xf32>
    %257 = arith.mulf %247, %256 : vector<8x128xf32>
    %258 = arith.mulf %241, %249 : vector<8x128xf32>
    %259 = arith.addf %257, %258 : vector<8x128xf32>
    %260 = math.tanh %259 : vector<8x128xf32>
    %261 = arith.mulf %255, %260 : vector<8x128xf32>
    %c0_115 = arith.constant 0 : index
    %c0_116 = arith.constant 0 : index
    %262 = vector.load %arg17[%c0_115, %c0_116] : memref<8x128xf32, #tpu.memory_space<vmem>>, vector<8x128xf32>
    tpu.vector_store %arg17[%c0_115, %c0_116], %259 {strides = array<i32>} : memref<8x128xf32, #tpu.memory_space<vmem>>, vector<8x128xf32>,
    %c0_117 = arith.constant 0 : index
    %c0_118 = arith.constant 0 : index
    %263 = vector.load %arg16[%c0_117, %c0_118] : memref<8x128xf32, #tpu.memory_space<vmem>>, vector<8x128xf32>
    tpu.vector_store %arg16[%c0_117, %c0_118], %261 {strides = array<i32>} : memref<8x128xf32, #tpu.memory_space<vmem>>, vector<8x128xf32>,
    %264 = vector.extract_strided_slice %261 {offsets = [0, 0], sizes = [8, 64], strides = [1, 1]} : vector<8x128xf32> to vector<8x64xf32>
    %265 = arith.index_cast %223 : i32 to index
    %c0_119 = arith.constant 0 : index
    %266 = vector.load %arg14[%265, %c0_119] : memref<64x64xf32, #tpu.memory_space<vmem>>, vector<8x64xf32>
    tpu.vector_store %arg14[%265, %c0_119], %264 {strides = array<i32>} : memref<64x64xf32, #tpu.memory_space<vmem>>, vector<8x64xf32>,
    %267 = vector.extract_strided_slice %261 {offsets = [0, 64], sizes = [8, 64], strides = [1, 1]} : vector<8x128xf32> to vector<8x64xf32>
    %268 = arith.index_cast %226 : i32 to index
    %c0_120 = arith.constant 0 : index
    %269 = vector.load %arg15[%268, %c0_120] : memref<64x64xf32, #tpu.memory_space<vmem>>, vector<8x64xf32>
    tpu.vector_store %arg15[%268, %c0_120], %267 {strides = array<i32>} : memref<64x64xf32, #tpu.memory_space<vmem>>, vector<8x64xf32>,
    %c5_i32 = arith.constant 5 : i32
    %c8_i32_121 = arith.constant 8 : i32
    %270 = arith.muli %c5_i32, %c8_i32_121 : i32
    %271 = tpu.assume_multiple %270, 8 : i32
    %c7_i32_122 = arith.constant 7 : i32
    %272 = arith.subi %c7_i32_122, %c5_i32 : i32
    %c8_i32_123 = arith.constant 8 : i32
    %273 = arith.muli %272, %c8_i32_123 : i32
    %274 = tpu.assume_multiple %273, 8 : i32
    %275 = arith.index_cast %271 : i32 to index
    %c0_124 = arith.constant 0 : index
    %276 = vector.load %arg13[%275, %c0_124] : memref<64x512xf32, #tpu.memory_space<vmem>>, vector<8x512xf32>
    %277 = arith.index_cast %274 : i32 to index
    %c0_125 = arith.constant 0 : index
    %278 = vector.load %arg13[%277, %c0_125] : memref<64x512xf32, #tpu.memory_space<vmem>>, vector<8x512xf32>
    %279 = arith.select %18, %276, %278 : vector<8x512xi1>, vector<8x512xf32>
    %c0_126 = arith.constant 0 : index
    %c0_127 = arith.constant 0 : index
    %280 = vector.load %arg16[%c0_126, %c0_127] : memref<8x128xf32, #tpu.memory_space<vmem>>, vector<8x128xf32>
    %c0_128 = arith.constant 0 : index
    %c0_129 = arith.constant 0 : index
    %281 = vector.load %arg2[%c0_128, %c0_129] : memref<128x512xf32, #tpu.memory_space<vmem>>, vector<128x512xf32>
    %cst_130 = arith.constant dense<0.000000e+00> : vector<8x512xf32>
    %282 = tpu.matmul %280, %281, %cst_130 {dimension_numbers = #tpu.dot_dimension_numbers<[1], [0], [0], [1], [0, 0, 1, 1], [], []>} : vector<8x128xf32>, vector<128x512xf32>, vector<8x512xf32> -> vector<8x512xf32>
    %283 = arith.addf %279, %282 : vector<8x512xf32>
    %284 = vector.extract_strided_slice %283 {offsets = [0, 0], sizes = [8, 128], strides = [1, 1]} : vector<8x512xf32> to vector<8x128xf32>
    %285 = arith.negf %284 : vector<8x128xf32>
    %286 = math.exp %285 : vector<8x128xf32>
    %cst_131 = arith.constant 1.000000e+00 : f32
    %287 = vector.broadcast %cst_131 : f32 to vector<8x128xf32>
    %288 = arith.addf %287, %286 : vector<8x128xf32>
    %289 = arith.divf %287, %288 : vector<8x128xf32>
    %290 = vector.extract_strided_slice %283 {offsets = [0, 128], sizes = [8, 128], strides = [1, 1]} : vector<8x512xf32> to vector<8x128xf32>
    %291 = arith.negf %290 : vector<8x128xf32>
    %292 = math.exp %291 : vector<8x128xf32>
    %cst_132 = arith.constant 1.000000e+00 : f32
    %293 = vector.broadcast %cst_132 : f32 to vector<8x128xf32>
    %294 = arith.addf %293, %292 : vector<8x128xf32>
    %295 = arith.divf %293, %294 : vector<8x128xf32>
    %296 = vector.extract_strided_slice %283 {offsets = [0, 256], sizes = [8, 128], strides = [1, 1]} : vector<8x512xf32> to vector<8x128xf32>
    %297 = math.tanh %296 : vector<8x128xf32>
    %298 = vector.extract_strided_slice %283 {offsets = [0, 384], sizes = [8, 128], strides = [1, 1]} : vector<8x512xf32> to vector<8x128xf32>
    %299 = arith.negf %298 : vector<8x128xf32>
    %300 = math.exp %299 : vector<8x128xf32>
    %cst_133 = arith.constant 1.000000e+00 : f32
    %301 = vector.broadcast %cst_133 : f32 to vector<8x128xf32>
    %302 = arith.addf %301, %300 : vector<8x128xf32>
    %303 = arith.divf %301, %302 : vector<8x128xf32>
    %c0_134 = arith.constant 0 : index
    %c0_135 = arith.constant 0 : index
    %304 = vector.load %arg17[%c0_134, %c0_135] : memref<8x128xf32, #tpu.memory_space<vmem>>, vector<8x128xf32>
    %305 = arith.mulf %295, %304 : vector<8x128xf32>
    %306 = arith.mulf %289, %297 : vector<8x128xf32>
    %307 = arith.addf %305, %306 : vector<8x128xf32>
    %308 = math.tanh %307 : vector<8x128xf32>
    %309 = arith.mulf %303, %308 : vector<8x128xf32>
    %c0_136 = arith.constant 0 : index
    %c0_137 = arith.constant 0 : index
    %310 = vector.load %arg17[%c0_136, %c0_137] : memref<8x128xf32, #tpu.memory_space<vmem>>, vector<8x128xf32>
    tpu.vector_store %arg17[%c0_136, %c0_137], %307 {strides = array<i32>} : memref<8x128xf32, #tpu.memory_space<vmem>>, vector<8x128xf32>,
    %c0_138 = arith.constant 0 : index
    %c0_139 = arith.constant 0 : index
    %311 = vector.load %arg16[%c0_138, %c0_139] : memref<8x128xf32, #tpu.memory_space<vmem>>, vector<8x128xf32>
    tpu.vector_store %arg16[%c0_138, %c0_139], %309 {strides = array<i32>} : memref<8x128xf32, #tpu.memory_space<vmem>>, vector<8x128xf32>,
    %312 = vector.extract_strided_slice %309 {offsets = [0, 0], sizes = [8, 64], strides = [1, 1]} : vector<8x128xf32> to vector<8x64xf32>
    %313 = arith.index_cast %271 : i32 to index
    %c0_140 = arith.constant 0 : index
    %314 = vector.load %arg14[%313, %c0_140] : memref<64x64xf32, #tpu.memory_space<vmem>>, vector<8x64xf32>
    tpu.vector_store %arg14[%313, %c0_140], %312 {strides = array<i32>} : memref<64x64xf32, #tpu.memory_space<vmem>>, vector<8x64xf32>,
    %315 = vector.extract_strided_slice %309 {offsets = [0, 64], sizes = [8, 64], strides = [1, 1]} : vector<8x128xf32> to vector<8x64xf32>
    %316 = arith.index_cast %274 : i32 to index
    %c0_141 = arith.constant 0 : index
    %317 = vector.load %arg15[%316, %c0_141] : memref<64x64xf32, #tpu.memory_space<vmem>>, vector<8x64xf32>
    tpu.vector_store %arg15[%316, %c0_141], %315 {strides = array<i32>} : memref<64x64xf32, #tpu.memory_space<vmem>>, vector<8x64xf32>,
    %c6_i32 = arith.constant 6 : i32
    %c8_i32_142 = arith.constant 8 : i32
    %318 = arith.muli %c6_i32, %c8_i32_142 : i32
    %319 = tpu.assume_multiple %318, 8 : i32
    %c7_i32_143 = arith.constant 7 : i32
    %320 = arith.subi %c7_i32_143, %c6_i32 : i32
    %c8_i32_144 = arith.constant 8 : i32
    %321 = arith.muli %320, %c8_i32_144 : i32
    %322 = tpu.assume_multiple %321, 8 : i32
    %323 = arith.index_cast %319 : i32 to index
    %c0_145 = arith.constant 0 : index
    %324 = vector.load %arg13[%323, %c0_145] : memref<64x512xf32, #tpu.memory_space<vmem>>, vector<8x512xf32>
    %325 = arith.index_cast %322 : i32 to index
    %c0_146 = arith.constant 0 : index
    %326 = vector.load %arg13[%325, %c0_146] : memref<64x512xf32, #tpu.memory_space<vmem>>, vector<8x512xf32>
    %327 = arith.select %18, %324, %326 : vector<8x512xi1>, vector<8x512xf32>
    %c0_147 = arith.constant 0 : index
    %c0_148 = arith.constant 0 : index
    %328 = vector.load %arg16[%c0_147, %c0_148] : memref<8x128xf32, #tpu.memory_space<vmem>>, vector<8x128xf32>
    %c0_149 = arith.constant 0 : index
    %c0_150 = arith.constant 0 : index
    %329 = vector.load %arg2[%c0_149, %c0_150] : memref<128x512xf32, #tpu.memory_space<vmem>>, vector<128x512xf32>
    %cst_151 = arith.constant dense<0.000000e+00> : vector<8x512xf32>
    %330 = tpu.matmul %328, %329, %cst_151 {dimension_numbers = #tpu.dot_dimension_numbers<[1], [0], [0], [1], [0, 0, 1, 1], [], []>} : vector<8x128xf32>, vector<128x512xf32>, vector<8x512xf32> -> vector<8x512xf32>
    %331 = arith.addf %327, %330 : vector<8x512xf32>
    %332 = vector.extract_strided_slice %331 {offsets = [0, 0], sizes = [8, 128], strides = [1, 1]} : vector<8x512xf32> to vector<8x128xf32>
    %333 = arith.negf %332 : vector<8x128xf32>
    %334 = math.exp %333 : vector<8x128xf32>
    %cst_152 = arith.constant 1.000000e+00 : f32
    %335 = vector.broadcast %cst_152 : f32 to vector<8x128xf32>
    %336 = arith.addf %335, %334 : vector<8x128xf32>
    %337 = arith.divf %335, %336 : vector<8x128xf32>
    %338 = vector.extract_strided_slice %331 {offsets = [0, 128], sizes = [8, 128], strides = [1, 1]} : vector<8x512xf32> to vector<8x128xf32>
    %339 = arith.negf %338 : vector<8x128xf32>
    %340 = math.exp %339 : vector<8x128xf32>
    %cst_153 = arith.constant 1.000000e+00 : f32
    %341 = vector.broadcast %cst_153 : f32 to vector<8x128xf32>
    %342 = arith.addf %341, %340 : vector<8x128xf32>
    %343 = arith.divf %341, %342 : vector<8x128xf32>
    %344 = vector.extract_strided_slice %331 {offsets = [0, 256], sizes = [8, 128], strides = [1, 1]} : vector<8x512xf32> to vector<8x128xf32>
    %345 = math.tanh %344 : vector<8x128xf32>
    %346 = vector.extract_strided_slice %331 {offsets = [0, 384], sizes = [8, 128], strides = [1, 1]} : vector<8x512xf32> to vector<8x128xf32>
    %347 = arith.negf %346 : vector<8x128xf32>
    %348 = math.exp %347 : vector<8x128xf32>
    %cst_154 = arith.constant 1.000000e+00 : f32
    %349 = vector.broadcast %cst_154 : f32 to vector<8x128xf32>
    %350 = arith.addf %349, %348 : vector<8x128xf32>
    %351 = arith.divf %349, %350 : vector<8x128xf32>
    %c0_155 = arith.constant 0 : index
    %c0_156 = arith.constant 0 : index
    %352 = vector.load %arg17[%c0_155, %c0_156] : memref<8x128xf32, #tpu.memory_space<vmem>>, vector<8x128xf32>
    %353 = arith.mulf %343, %352 : vector<8x128xf32>
    %354 = arith.mulf %337, %345 : vector<8x128xf32>
    %355 = arith.addf %353, %354 : vector<8x128xf32>
    %356 = math.tanh %355 : vector<8x128xf32>
    %357 = arith.mulf %351, %356 : vector<8x128xf32>
    %c0_157 = arith.constant 0 : index
    %c0_158 = arith.constant 0 : index
    %358 = vector.load %arg17[%c0_157, %c0_158] : memref<8x128xf32, #tpu.memory_space<vmem>>, vector<8x128xf32>
    tpu.vector_store %arg17[%c0_157, %c0_158], %355 {strides = array<i32>} : memref<8x128xf32, #tpu.memory_space<vmem>>, vector<8x128xf32>,
    %c0_159 = arith.constant 0 : index
    %c0_160 = arith.constant 0 : index
    %359 = vector.load %arg16[%c0_159, %c0_160] : memref<8x128xf32, #tpu.memory_space<vmem>>, vector<8x128xf32>
    tpu.vector_store %arg16[%c0_159, %c0_160], %357 {strides = array<i32>} : memref<8x128xf32, #tpu.memory_space<vmem>>, vector<8x128xf32>,
    %360 = vector.extract_strided_slice %357 {offsets = [0, 0], sizes = [8, 64], strides = [1, 1]} : vector<8x128xf32> to vector<8x64xf32>
    %361 = arith.index_cast %319 : i32 to index
    %c0_161 = arith.constant 0 : index
    %362 = vector.load %arg14[%361, %c0_161] : memref<64x64xf32, #tpu.memory_space<vmem>>, vector<8x64xf32>
    tpu.vector_store %arg14[%361, %c0_161], %360 {strides = array<i32>} : memref<64x64xf32, #tpu.memory_space<vmem>>, vector<8x64xf32>,
    %363 = vector.extract_strided_slice %357 {offsets = [0, 64], sizes = [8, 64], strides = [1, 1]} : vector<8x128xf32> to vector<8x64xf32>
    %364 = arith.index_cast %322 : i32 to index
    %c0_162 = arith.constant 0 : index
    %365 = vector.load %arg15[%364, %c0_162] : memref<64x64xf32, #tpu.memory_space<vmem>>, vector<8x64xf32>
    tpu.vector_store %arg15[%364, %c0_162], %363 {strides = array<i32>} : memref<64x64xf32, #tpu.memory_space<vmem>>, vector<8x64xf32>,
    %c7_i32_163 = arith.constant 7 : i32
    %c8_i32_164 = arith.constant 8 : i32
    %366 = arith.muli %c7_i32_163, %c8_i32_164 : i32
    %367 = tpu.assume_multiple %366, 8 : i32
    %c7_i32_165 = arith.constant 7 : i32
    %368 = arith.subi %c7_i32_165, %c7_i32_163 : i32
    %c8_i32_166 = arith.constant 8 : i32
    %369 = arith.muli %368, %c8_i32_166 : i32
    %370 = tpu.assume_multiple %369, 8 : i32
    %371 = arith.index_cast %367 : i32 to index
    %c0_167 = arith.constant 0 : index
    %372 = vector.load %arg13[%371, %c0_167] : memref<64x512xf32, #tpu.memory_space<vmem>>, vector<8x512xf32>
    %373 = arith.index_cast %370 : i32 to index
    %c0_168 = arith.constant 0 : index
    %374 = vector.load %arg13[%373, %c0_168] : memref<64x512xf32, #tpu.memory_space<vmem>>, vector<8x512xf32>
    %375 = arith.select %18, %372, %374 : vector<8x512xi1>, vector<8x512xf32>
    %c0_169 = arith.constant 0 : index
    %c0_170 = arith.constant 0 : index
    %376 = vector.load %arg16[%c0_169, %c0_170] : memref<8x128xf32, #tpu.memory_space<vmem>>, vector<8x128xf32>
    %c0_171 = arith.constant 0 : index
    %c0_172 = arith.constant 0 : index
    %377 = vector.load %arg2[%c0_171, %c0_172] : memref<128x512xf32, #tpu.memory_space<vmem>>, vector<128x512xf32>
    %cst_173 = arith.constant dense<0.000000e+00> : vector<8x512xf32>
    %378 = tpu.matmul %376, %377, %cst_173 {dimension_numbers = #tpu.dot_dimension_numbers<[1], [0], [0], [1], [0, 0, 1, 1], [], []>} : vector<8x128xf32>, vector<128x512xf32>, vector<8x512xf32> -> vector<8x512xf32>
    %379 = arith.addf %375, %378 : vector<8x512xf32>
    %380 = vector.extract_strided_slice %379 {offsets = [0, 0], sizes = [8, 128], strides = [1, 1]} : vector<8x512xf32> to vector<8x128xf32>
    %381 = arith.negf %380 : vector<8x128xf32>
    %382 = math.exp %381 : vector<8x128xf32>
    %cst_174 = arith.constant 1.000000e+00 : f32
    %383 = vector.broadcast %cst_174 : f32 to vector<8x128xf32>
    %384 = arith.addf %383, %382 : vector<8x128xf32>
    %385 = arith.divf %383, %384 : vector<8x128xf32>
    %386 = vector.extract_strided_slice %379 {offsets = [0, 128], sizes = [8, 128], strides = [1, 1]} : vector<8x512xf32> to vector<8x128xf32>
    %387 = arith.negf %386 : vector<8x128xf32>
    %388 = math.exp %387 : vector<8x128xf32>
    %cst_175 = arith.constant 1.000000e+00 : f32
    %389 = vector.broadcast %cst_175 : f32 to vector<8x128xf32>
    %390 = arith.addf %389, %388 : vector<8x128xf32>
    %391 = arith.divf %389, %390 : vector<8x128xf32>
    %392 = vector.extract_strided_slice %379 {offsets = [0, 256], sizes = [8, 128], strides = [1, 1]} : vector<8x512xf32> to vector<8x128xf32>
    %393 = math.tanh %392 : vector<8x128xf32>
    %394 = vector.extract_strided_slice %379 {offsets = [0, 384], sizes = [8, 128], strides = [1, 1]} : vector<8x512xf32> to vector<8x128xf32>
    %395 = arith.negf %394 : vector<8x128xf32>
    %396 = math.exp %395 : vector<8x128xf32>
    %cst_176 = arith.constant 1.000000e+00 : f32
    %397 = vector.broadcast %cst_176 : f32 to vector<8x128xf32>
    %398 = arith.addf %397, %396 : vector<8x128xf32>
    %399 = arith.divf %397, %398 : vector<8x128xf32>
    %c0_177 = arith.constant 0 : index
    %c0_178 = arith.constant 0 : index
    %400 = vector.load %arg17[%c0_177, %c0_178] : memref<8x128xf32, #tpu.memory_space<vmem>>, vector<8x128xf32>
    %401 = arith.mulf %391, %400 : vector<8x128xf32>
    %402 = arith.mulf %385, %393 : vector<8x128xf32>
    %403 = arith.addf %401, %402 : vector<8x128xf32>
    %404 = math.tanh %403 : vector<8x128xf32>
    %405 = arith.mulf %399, %404 : vector<8x128xf32>
    %c0_179 = arith.constant 0 : index
    %c0_180 = arith.constant 0 : index
    %406 = vector.load %arg17[%c0_179, %c0_180] : memref<8x128xf32, #tpu.memory_space<vmem>>, vector<8x128xf32>
    tpu.vector_store %arg17[%c0_179, %c0_180], %403 {strides = array<i32>} : memref<8x128xf32, #tpu.memory_space<vmem>>, vector<8x128xf32>,
    %c0_181 = arith.constant 0 : index
    %c0_182 = arith.constant 0 : index
    %407 = vector.load %arg16[%c0_181, %c0_182] : memref<8x128xf32, #tpu.memory_space<vmem>>, vector<8x128xf32>
    tpu.vector_store %arg16[%c0_181, %c0_182], %405 {strides = array<i32>} : memref<8x128xf32, #tpu.memory_space<vmem>>, vector<8x128xf32>,
    %408 = vector.extract_strided_slice %405 {offsets = [0, 0], sizes = [8, 64], strides = [1, 1]} : vector<8x128xf32> to vector<8x64xf32>
    %409 = arith.index_cast %367 : i32 to index
    %c0_183 = arith.constant 0 : index
    %410 = vector.load %arg14[%409, %c0_183] : memref<64x64xf32, #tpu.memory_space<vmem>>, vector<8x64xf32>
    tpu.vector_store %arg14[%409, %c0_183], %408 {strides = array<i32>} : memref<64x64xf32, #tpu.memory_space<vmem>>, vector<8x64xf32>,
    %411 = vector.extract_strided_slice %405 {offsets = [0, 64], sizes = [8, 64], strides = [1, 1]} : vector<8x128xf32> to vector<8x64xf32>
    %412 = arith.index_cast %370 : i32 to index
    %c0_184 = arith.constant 0 : index
    %413 = vector.load %arg15[%412, %c0_184] : memref<64x64xf32, #tpu.memory_space<vmem>>, vector<8x64xf32>
    tpu.vector_store %arg15[%412, %c0_184], %411 {strides = array<i32>} : memref<64x64xf32, #tpu.memory_space<vmem>>, vector<8x64xf32>,
    %c8_i32_185 = arith.constant 8 : i32
    %c0_186 = arith.constant 0 : index
    %c0_187 = arith.constant 0 : index
    %414 = vector.load %arg16[%c0_186, %c0_187] : memref<8x128xf32, #tpu.memory_space<vmem>>, vector<8x128xf32>
    %c0_188 = arith.constant 0 : index
    %c0_189 = arith.constant 0 : index
    %415 = vector.load %arg14[%c0_188, %c0_189] : memref<64x64xf32, #tpu.memory_space<vmem>>, vector<64x64xf32>
    %c0_190 = arith.constant 0 : index
    %c0_191 = arith.constant 0 : index
    %416 = vector.load %arg4[%c0_190, %c0_191] : memref<64x512xf32, #tpu.memory_space<vmem>>, vector<64x512xf32>
    %cst_192 = arith.constant dense<0.000000e+00> : vector<64x512xf32>
    %417 = tpu.matmul %415, %416, %cst_192 {dimension_numbers = #tpu.dot_dimension_numbers<[1], [0], [0], [1], [0, 0, 1, 1], [], []>} : vector<64x64xf32>, vector<64x512xf32>, vector<64x512xf32> -> vector<64x512xf32>
    %c0_193 = arith.constant 0 : index
    %c0_194 = arith.constant 0 : index
    %418 = vector.load %arg15[%c0_193, %c0_194] : memref<64x64xf32, #tpu.memory_space<vmem>>, vector<64x64xf32>
    %c0_195 = arith.constant 0 : index
    %c0_196 = arith.constant 0 : index
    %419 = vector.load %arg5[%c0_195, %c0_196] : memref<64x512xf32, #tpu.memory_space<vmem>>, vector<64x512xf32>
    %cst_197 = arith.constant dense<0.000000e+00> : vector<64x512xf32>
    %420 = tpu.matmul %418, %419, %cst_197 {dimension_numbers = #tpu.dot_dimension_numbers<[1], [0], [0], [1], [0, 0, 1, 1], [], []>} : vector<64x64xf32>, vector<64x512xf32>, vector<64x512xf32> -> vector<64x512xf32>
    %421 = arith.addf %417, %420 : vector<64x512xf32>
    %c0_198 = arith.constant 0 : index
    %c0_199 = arith.constant 0 : index
    %422 = vector.load %arg7[%c0_198, %c0_199] : memref<1x512xf32, #tpu.memory_space<vmem>>, vector<1x512xf32>
    %423 = vector.broadcast %422 : vector<1x512xf32> to vector<64x512xf32>
    %424 = arith.addf %421, %423 : vector<64x512xf32>
    %c0_200 = arith.constant 0 : index
    %c0_201 = arith.constant 0 : index
    %425 = vector.load %arg13[%c0_200, %c0_201] : memref<64x512xf32, #tpu.memory_space<vmem>>, vector<64x512xf32>
    tpu.vector_store %arg13[%c0_200, %c0_201], %424 {strides = array<i32>} : memref<64x512xf32, #tpu.memory_space<vmem>>, vector<64x512xf32>,
    %cst_202 = arith.constant 0.000000e+00 : f32
    %426 = vector.broadcast %cst_202 : f32 to vector<8x128xf32>
    %c0_203 = arith.constant 0 : index
    %c0_204 = arith.constant 0 : index
    %427 = vector.load %arg16[%c0_203, %c0_204] : memref<8x128xf32, #tpu.memory_space<vmem>>, vector<8x128xf32>
    tpu.vector_store %arg16[%c0_203, %c0_204], %426 {strides = array<i32>} : memref<8x128xf32, #tpu.memory_space<vmem>>, vector<8x128xf32>,
    %cst_205 = arith.constant 0.000000e+00 : f32
    %428 = vector.broadcast %cst_205 : f32 to vector<8x128xf32>
    %c0_206 = arith.constant 0 : index
    %c0_207 = arith.constant 0 : index
    %429 = vector.load %arg17[%c0_206, %c0_207] : memref<8x128xf32, #tpu.memory_space<vmem>>, vector<8x128xf32>
    tpu.vector_store %arg17[%c0_206, %c0_207], %428 {strides = array<i32>} : memref<8x128xf32, #tpu.memory_space<vmem>>, vector<8x128xf32>,
    %c0_i32_208 = arith.constant 0 : i32
    %c8_i32_209 = arith.constant 8 : i32
    %430 = arith.muli %c0_i32_208, %c8_i32_209 : i32
    %431 = tpu.assume_multiple %430, 8 : i32
    %c7_i32_210 = arith.constant 7 : i32
    %432 = arith.subi %c7_i32_210, %c0_i32_208 : i32
    %c8_i32_211 = arith.constant 8 : i32
    %433 = arith.muli %432, %c8_i32_211 : i32
    %434 = tpu.assume_multiple %433, 8 : i32
    %435 = arith.index_cast %431 : i32 to index
    %c0_212 = arith.constant 0 : index
    %436 = vector.load %arg13[%435, %c0_212] : memref<64x512xf32, #tpu.memory_space<vmem>>, vector<8x512xf32>
    %437 = arith.index_cast %434 : i32 to index
    %c0_213 = arith.constant 0 : index
    %438 = vector.load %arg13[%437, %c0_213] : memref<64x512xf32, #tpu.memory_space<vmem>>, vector<8x512xf32>
    %439 = arith.select %18, %436, %438 : vector<8x512xi1>, vector<8x512xf32>
    %c0_214 = arith.constant 0 : index
    %c0_215 = arith.constant 0 : index
    %440 = vector.load %arg16[%c0_214, %c0_215] : memref<8x128xf32, #tpu.memory_space<vmem>>, vector<8x128xf32>
    %c0_216 = arith.constant 0 : index
    %c0_217 = arith.constant 0 : index
    %441 = vector.load %arg6[%c0_216, %c0_217] : memref<128x512xf32, #tpu.memory_space<vmem>>, vector<128x512xf32>
    %cst_218 = arith.constant dense<0.000000e+00> : vector<8x512xf32>
    %442 = tpu.matmul %440, %441, %cst_218 {dimension_numbers = #tpu.dot_dimension_numbers<[1], [0], [0], [1], [0, 0, 1, 1], [], []>} : vector<8x128xf32>, vector<128x512xf32>, vector<8x512xf32> -> vector<8x512xf32>
    %443 = arith.addf %439, %442 : vector<8x512xf32>
    %444 = vector.extract_strided_slice %443 {offsets = [0, 0], sizes = [8, 128], strides = [1, 1]} : vector<8x512xf32> to vector<8x128xf32>
    %445 = arith.negf %444 : vector<8x128xf32>
    %446 = math.exp %445 : vector<8x128xf32>
    %cst_219 = arith.constant 1.000000e+00 : f32
    %447 = vector.broadcast %cst_219 : f32 to vector<8x128xf32>
    %448 = arith.addf %447, %446 : vector<8x128xf32>
    %449 = arith.divf %447, %448 : vector<8x128xf32>
    %450 = vector.extract_strided_slice %443 {offsets = [0, 128], sizes = [8, 128], strides = [1, 1]} : vector<8x512xf32> to vector<8x128xf32>
    %451 = arith.negf %450 : vector<8x128xf32>
    %452 = math.exp %451 : vector<8x128xf32>
    %cst_220 = arith.constant 1.000000e+00 : f32
    %453 = vector.broadcast %cst_220 : f32 to vector<8x128xf32>
    %454 = arith.addf %453, %452 : vector<8x128xf32>
    %455 = arith.divf %453, %454 : vector<8x128xf32>
    %456 = vector.extract_strided_slice %443 {offsets = [0, 256], sizes = [8, 128], strides = [1, 1]} : vector<8x512xf32> to vector<8x128xf32>
    %457 = math.tanh %456 : vector<8x128xf32>
    %458 = vector.extract_strided_slice %443 {offsets = [0, 384], sizes = [8, 128], strides = [1, 1]} : vector<8x512xf32> to vector<8x128xf32>
    %459 = arith.negf %458 : vector<8x128xf32>
    %460 = math.exp %459 : vector<8x128xf32>
    %cst_221 = arith.constant 1.000000e+00 : f32
    %461 = vector.broadcast %cst_221 : f32 to vector<8x128xf32>
    %462 = arith.addf %461, %460 : vector<8x128xf32>
    %463 = arith.divf %461, %462 : vector<8x128xf32>
    %c0_222 = arith.constant 0 : index
    %c0_223 = arith.constant 0 : index
    %464 = vector.load %arg17[%c0_222, %c0_223] : memref<8x128xf32, #tpu.memory_space<vmem>>, vector<8x128xf32>
    %465 = arith.mulf %455, %464 : vector<8x128xf32>
    %466 = arith.mulf %449, %457 : vector<8x128xf32>
    %467 = arith.addf %465, %466 : vector<8x128xf32>
    %468 = math.tanh %467 : vector<8x128xf32>
    %469 = arith.mulf %463, %468 : vector<8x128xf32>
    %c0_224 = arith.constant 0 : index
    %c0_225 = arith.constant 0 : index
    %470 = vector.load %arg17[%c0_224, %c0_225] : memref<8x128xf32, #tpu.memory_space<vmem>>, vector<8x128xf32>
    tpu.vector_store %arg17[%c0_224, %c0_225], %467 {strides = array<i32>} : memref<8x128xf32, #tpu.memory_space<vmem>>, vector<8x128xf32>,
    %c0_226 = arith.constant 0 : index
    %c0_227 = arith.constant 0 : index
    %471 = vector.load %arg16[%c0_226, %c0_227] : memref<8x128xf32, #tpu.memory_space<vmem>>, vector<8x128xf32>
    tpu.vector_store %arg16[%c0_226, %c0_227], %469 {strides = array<i32>} : memref<8x128xf32, #tpu.memory_space<vmem>>, vector<8x128xf32>,
    %c1_i32_228 = arith.constant 1 : i32
    %c8_i32_229 = arith.constant 8 : i32
    %472 = arith.muli %c1_i32_228, %c8_i32_229 : i32
    %473 = tpu.assume_multiple %472, 8 : i32
    %c7_i32_230 = arith.constant 7 : i32
    %474 = arith.subi %c7_i32_230, %c1_i32_228 : i32
    %c8_i32_231 = arith.constant 8 : i32
    %475 = arith.muli %474, %c8_i32_231 : i32
    %476 = tpu.assume_multiple %475, 8 : i32
    %477 = arith.index_cast %473 : i32 to index
    %c0_232 = arith.constant 0 : index
    %478 = vector.load %arg13[%477, %c0_232] : memref<64x512xf32, #tpu.memory_space<vmem>>, vector<8x512xf32>
    %479 = arith.index_cast %476 : i32 to index
    %c0_233 = arith.constant 0 : index
    %480 = vector.load %arg13[%479, %c0_233] : memref<64x512xf32, #tpu.memory_space<vmem>>, vector<8x512xf32>
    %481 = arith.select %18, %478, %480 : vector<8x512xi1>, vector<8x512xf32>
    %c0_234 = arith.constant 0 : index
    %c0_235 = arith.constant 0 : index
    %482 = vector.load %arg16[%c0_234, %c0_235] : memref<8x128xf32, #tpu.memory_space<vmem>>, vector<8x128xf32>
    %c0_236 = arith.constant 0 : index
    %c0_237 = arith.constant 0 : index
    %483 = vector.load %arg6[%c0_236, %c0_237] : memref<128x512xf32, #tpu.memory_space<vmem>>, vector<128x512xf32>
    %cst_238 = arith.constant dense<0.000000e+00> : vector<8x512xf32>
    %484 = tpu.matmul %482, %483, %cst_238 {dimension_numbers = #tpu.dot_dimension_numbers<[1], [0], [0], [1], [0, 0, 1, 1], [], []>} : vector<8x128xf32>, vector<128x512xf32>, vector<8x512xf32> -> vector<8x512xf32>
    %485 = arith.addf %481, %484 : vector<8x512xf32>
    %486 = vector.extract_strided_slice %485 {offsets = [0, 0], sizes = [8, 128], strides = [1, 1]} : vector<8x512xf32> to vector<8x128xf32>
    %487 = arith.negf %486 : vector<8x128xf32>
    %488 = math.exp %487 : vector<8x128xf32>
    %cst_239 = arith.constant 1.000000e+00 : f32
    %489 = vector.broadcast %cst_239 : f32 to vector<8x128xf32>
    %490 = arith.addf %489, %488 : vector<8x128xf32>
    %491 = arith.divf %489, %490 : vector<8x128xf32>
    %492 = vector.extract_strided_slice %485 {offsets = [0, 128], sizes = [8, 128], strides = [1, 1]} : vector<8x512xf32> to vector<8x128xf32>
    %493 = arith.negf %492 : vector<8x128xf32>
    %494 = math.exp %493 : vector<8x128xf32>
    %cst_240 = arith.constant 1.000000e+00 : f32
    %495 = vector.broadcast %cst_240 : f32 to vector<8x128xf32>
    %496 = arith.addf %495, %494 : vector<8x128xf32>
    %497 = arith.divf %495, %496 : vector<8x128xf32>
    %498 = vector.extract_strided_slice %485 {offsets = [0, 256], sizes = [8, 128], strides = [1, 1]} : vector<8x512xf32> to vector<8x128xf32>
    %499 = math.tanh %498 : vector<8x128xf32>
    %500 = vector.extract_strided_slice %485 {offsets = [0, 384], sizes = [8, 128], strides = [1, 1]} : vector<8x512xf32> to vector<8x128xf32>
    %501 = arith.negf %500 : vector<8x128xf32>
    %502 = math.exp %501 : vector<8x128xf32>
    %cst_241 = arith.constant 1.000000e+00 : f32
    %503 = vector.broadcast %cst_241 : f32 to vector<8x128xf32>
    %504 = arith.addf %503, %502 : vector<8x128xf32>
    %505 = arith.divf %503, %504 : vector<8x128xf32>
    %c0_242 = arith.constant 0 : index
    %c0_243 = arith.constant 0 : index
    %506 = vector.load %arg17[%c0_242, %c0_243] : memref<8x128xf32, #tpu.memory_space<vmem>>, vector<8x128xf32>
    %507 = arith.mulf %497, %506 : vector<8x128xf32>
    %508 = arith.mulf %491, %499 : vector<8x128xf32>
    %509 = arith.addf %507, %508 : vector<8x128xf32>
    %510 = math.tanh %509 : vector<8x128xf32>
    %511 = arith.mulf %505, %510 : vector<8x128xf32>
    %c0_244 = arith.constant 0 : index
    %c0_245 = arith.constant 0 : index
    %512 = vector.load %arg17[%c0_244, %c0_245] : memref<8x128xf32, #tpu.memory_space<vmem>>, vector<8x128xf32>
    tpu.vector_store %arg17[%c0_244, %c0_245], %509 {strides = array<i32>} : memref<8x128xf32, #tpu.memory_space<vmem>>, vector<8x128xf32>,
    %c0_246 = arith.constant 0 : index
    %c0_247 = arith.constant 0 : index
    %513 = vector.load %arg16[%c0_246, %c0_247] : memref<8x128xf32, #tpu.memory_space<vmem>>, vector<8x128xf32>
    tpu.vector_store %arg16[%c0_246, %c0_247], %511 {strides = array<i32>} : memref<8x128xf32, #tpu.memory_space<vmem>>, vector<8x128xf32>,
    %c2_i32_248 = arith.constant 2 : i32
    %c8_i32_249 = arith.constant 8 : i32
    %514 = arith.muli %c2_i32_248, %c8_i32_249 : i32
    %515 = tpu.assume_multiple %514, 8 : i32
    %c7_i32_250 = arith.constant 7 : i32
    %516 = arith.subi %c7_i32_250, %c2_i32_248 : i32
    %c8_i32_251 = arith.constant 8 : i32
    %517 = arith.muli %516, %c8_i32_251 : i32
    %518 = tpu.assume_multiple %517, 8 : i32
    %519 = arith.index_cast %515 : i32 to index
    %c0_252 = arith.constant 0 : index
    %520 = vector.load %arg13[%519, %c0_252] : memref<64x512xf32, #tpu.memory_space<vmem>>, vector<8x512xf32>
    %521 = arith.index_cast %518 : i32 to index
    %c0_253 = arith.constant 0 : index
    %522 = vector.load %arg13[%521, %c0_253] : memref<64x512xf32, #tpu.memory_space<vmem>>, vector<8x512xf32>
    %523 = arith.select %18, %520, %522 : vector<8x512xi1>, vector<8x512xf32>
    %c0_254 = arith.constant 0 : index
    %c0_255 = arith.constant 0 : index
    %524 = vector.load %arg16[%c0_254, %c0_255] : memref<8x128xf32, #tpu.memory_space<vmem>>, vector<8x128xf32>
    %c0_256 = arith.constant 0 : index
    %c0_257 = arith.constant 0 : index
    %525 = vector.load %arg6[%c0_256, %c0_257] : memref<128x512xf32, #tpu.memory_space<vmem>>, vector<128x512xf32>
    %cst_258 = arith.constant dense<0.000000e+00> : vector<8x512xf32>
    %526 = tpu.matmul %524, %525, %cst_258 {dimension_numbers = #tpu.dot_dimension_numbers<[1], [0], [0], [1], [0, 0, 1, 1], [], []>} : vector<8x128xf32>, vector<128x512xf32>, vector<8x512xf32> -> vector<8x512xf32>
    %527 = arith.addf %523, %526 : vector<8x512xf32>
    %528 = vector.extract_strided_slice %527 {offsets = [0, 0], sizes = [8, 128], strides = [1, 1]} : vector<8x512xf32> to vector<8x128xf32>
    %529 = arith.negf %528 : vector<8x128xf32>
    %530 = math.exp %529 : vector<8x128xf32>
    %cst_259 = arith.constant 1.000000e+00 : f32
    %531 = vector.broadcast %cst_259 : f32 to vector<8x128xf32>
    %532 = arith.addf %531, %530 : vector<8x128xf32>
    %533 = arith.divf %531, %532 : vector<8x128xf32>
    %534 = vector.extract_strided_slice %527 {offsets = [0, 128], sizes = [8, 128], strides = [1, 1]} : vector<8x512xf32> to vector<8x128xf32>
    %535 = arith.negf %534 : vector<8x128xf32>
    %536 = math.exp %535 : vector<8x128xf32>
    %cst_260 = arith.constant 1.000000e+00 : f32
    %537 = vector.broadcast %cst_260 : f32 to vector<8x128xf32>
    %538 = arith.addf %537, %536 : vector<8x128xf32>
    %539 = arith.divf %537, %538 : vector<8x128xf32>
    %540 = vector.extract_strided_slice %527 {offsets = [0, 256], sizes = [8, 128], strides = [1, 1]} : vector<8x512xf32> to vector<8x128xf32>
    %541 = math.tanh %540 : vector<8x128xf32>
    %542 = vector.extract_strided_slice %527 {offsets = [0, 384], sizes = [8, 128], strides = [1, 1]} : vector<8x512xf32> to vector<8x128xf32>
    %543 = arith.negf %542 : vector<8x128xf32>
    %544 = math.exp %543 : vector<8x128xf32>
    %cst_261 = arith.constant 1.000000e+00 : f32
    %545 = vector.broadcast %cst_261 : f32 to vector<8x128xf32>
    %546 = arith.addf %545, %544 : vector<8x128xf32>
    %547 = arith.divf %545, %546 : vector<8x128xf32>
    %c0_262 = arith.constant 0 : index
    %c0_263 = arith.constant 0 : index
    %548 = vector.load %arg17[%c0_262, %c0_263] : memref<8x128xf32, #tpu.memory_space<vmem>>, vector<8x128xf32>
    %549 = arith.mulf %539, %548 : vector<8x128xf32>
    %550 = arith.mulf %533, %541 : vector<8x128xf32>
    %551 = arith.addf %549, %550 : vector<8x128xf32>
    %552 = math.tanh %551 : vector<8x128xf32>
    %553 = arith.mulf %547, %552 : vector<8x128xf32>
    %c0_264 = arith.constant 0 : index
    %c0_265 = arith.constant 0 : index
    %554 = vector.load %arg17[%c0_264, %c0_265] : memref<8x128xf32, #tpu.memory_space<vmem>>, vector<8x128xf32>
    tpu.vector_store %arg17[%c0_264, %c0_265], %551 {strides = array<i32>} : memref<8x128xf32, #tpu.memory_space<vmem>>, vector<8x128xf32>,
    %c0_266 = arith.constant 0 : index
    %c0_267 = arith.constant 0 : index
    %555 = vector.load %arg16[%c0_266, %c0_267] : memref<8x128xf32, #tpu.memory_space<vmem>>, vector<8x128xf32>
    tpu.vector_store %arg16[%c0_266, %c0_267], %553 {strides = array<i32>} : memref<8x128xf32, #tpu.memory_space<vmem>>, vector<8x128xf32>,
    %c3_i32_268 = arith.constant 3 : i32
    %c8_i32_269 = arith.constant 8 : i32
    %556 = arith.muli %c3_i32_268, %c8_i32_269 : i32
    %557 = tpu.assume_multiple %556, 8 : i32
    %c7_i32_270 = arith.constant 7 : i32
    %558 = arith.subi %c7_i32_270, %c3_i32_268 : i32
    %c8_i32_271 = arith.constant 8 : i32
    %559 = arith.muli %558, %c8_i32_271 : i32
    %560 = tpu.assume_multiple %559, 8 : i32
    %561 = arith.index_cast %557 : i32 to index
    %c0_272 = arith.constant 0 : index
    %562 = vector.load %arg13[%561, %c0_272] : memref<64x512xf32, #tpu.memory_space<vmem>>, vector<8x512xf32>
    %563 = arith.index_cast %560 : i32 to index
    %c0_273 = arith.constant 0 : index
    %564 = vector.load %arg13[%563, %c0_273] : memref<64x512xf32, #tpu.memory_space<vmem>>, vector<8x512xf32>
    %565 = arith.select %18, %562, %564 : vector<8x512xi1>, vector<8x512xf32>
    %c0_274 = arith.constant 0 : index
    %c0_275 = arith.constant 0 : index
    %566 = vector.load %arg16[%c0_274, %c0_275] : memref<8x128xf32, #tpu.memory_space<vmem>>, vector<8x128xf32>
    %c0_276 = arith.constant 0 : index
    %c0_277 = arith.constant 0 : index
    %567 = vector.load %arg6[%c0_276, %c0_277] : memref<128x512xf32, #tpu.memory_space<vmem>>, vector<128x512xf32>
    %cst_278 = arith.constant dense<0.000000e+00> : vector<8x512xf32>
    %568 = tpu.matmul %566, %567, %cst_278 {dimension_numbers = #tpu.dot_dimension_numbers<[1], [0], [0], [1], [0, 0, 1, 1], [], []>} : vector<8x128xf32>, vector<128x512xf32>, vector<8x512xf32> -> vector<8x512xf32>
    %569 = arith.addf %565, %568 : vector<8x512xf32>
    %570 = vector.extract_strided_slice %569 {offsets = [0, 0], sizes = [8, 128], strides = [1, 1]} : vector<8x512xf32> to vector<8x128xf32>
    %571 = arith.negf %570 : vector<8x128xf32>
    %572 = math.exp %571 : vector<8x128xf32>
    %cst_279 = arith.constant 1.000000e+00 : f32
    %573 = vector.broadcast %cst_279 : f32 to vector<8x128xf32>
    %574 = arith.addf %573, %572 : vector<8x128xf32>
    %575 = arith.divf %573, %574 : vector<8x128xf32>
    %576 = vector.extract_strided_slice %569 {offsets = [0, 128], sizes = [8, 128], strides = [1, 1]} : vector<8x512xf32> to vector<8x128xf32>
    %577 = arith.negf %576 : vector<8x128xf32>
    %578 = math.exp %577 : vector<8x128xf32>
    %cst_280 = arith.constant 1.000000e+00 : f32
    %579 = vector.broadcast %cst_280 : f32 to vector<8x128xf32>
    %580 = arith.addf %579, %578 : vector<8x128xf32>
    %581 = arith.divf %579, %580 : vector<8x128xf32>
    %582 = vector.extract_strided_slice %569 {offsets = [0, 256], sizes = [8, 128], strides = [1, 1]} : vector<8x512xf32> to vector<8x128xf32>
    %583 = math.tanh %582 : vector<8x128xf32>
    %584 = vector.extract_strided_slice %569 {offsets = [0, 384], sizes = [8, 128], strides = [1, 1]} : vector<8x512xf32> to vector<8x128xf32>
    %585 = arith.negf %584 : vector<8x128xf32>
    %586 = math.exp %585 : vector<8x128xf32>
    %cst_281 = arith.constant 1.000000e+00 : f32
    %587 = vector.broadcast %cst_281 : f32 to vector<8x128xf32>
    %588 = arith.addf %587, %586 : vector<8x128xf32>
    %589 = arith.divf %587, %588 : vector<8x128xf32>
    %c0_282 = arith.constant 0 : index
    %c0_283 = arith.constant 0 : index
    %590 = vector.load %arg17[%c0_282, %c0_283] : memref<8x128xf32, #tpu.memory_space<vmem>>, vector<8x128xf32>
    %591 = arith.mulf %581, %590 : vector<8x128xf32>
    %592 = arith.mulf %575, %583 : vector<8x128xf32>
    %593 = arith.addf %591, %592 : vector<8x128xf32>
    %594 = math.tanh %593 : vector<8x128xf32>
    %595 = arith.mulf %589, %594 : vector<8x128xf32>
    %c0_284 = arith.constant 0 : index
    %c0_285 = arith.constant 0 : index
    %596 = vector.load %arg17[%c0_284, %c0_285] : memref<8x128xf32, #tpu.memory_space<vmem>>, vector<8x128xf32>
    tpu.vector_store %arg17[%c0_284, %c0_285], %593 {strides = array<i32>} : memref<8x128xf32, #tpu.memory_space<vmem>>, vector<8x128xf32>,
    %c0_286 = arith.constant 0 : index
    %c0_287 = arith.constant 0 : index
    %597 = vector.load %arg16[%c0_286, %c0_287] : memref<8x128xf32, #tpu.memory_space<vmem>>, vector<8x128xf32>
    tpu.vector_store %arg16[%c0_286, %c0_287], %595 {strides = array<i32>} : memref<8x128xf32, #tpu.memory_space<vmem>>, vector<8x128xf32>,
    %c4_i32_288 = arith.constant 4 : i32
    %c8_i32_289 = arith.constant 8 : i32
    %598 = arith.muli %c4_i32_288, %c8_i32_289 : i32
    %599 = tpu.assume_multiple %598, 8 : i32
    %c7_i32_290 = arith.constant 7 : i32
    %600 = arith.subi %c7_i32_290, %c4_i32_288 : i32
    %c8_i32_291 = arith.constant 8 : i32
    %601 = arith.muli %600, %c8_i32_291 : i32
    %602 = tpu.assume_multiple %601, 8 : i32
    %603 = arith.index_cast %599 : i32 to index
    %c0_292 = arith.constant 0 : index
    %604 = vector.load %arg13[%603, %c0_292] : memref<64x512xf32, #tpu.memory_space<vmem>>, vector<8x512xf32>
    %605 = arith.index_cast %602 : i32 to index
    %c0_293 = arith.constant 0 : index
    %606 = vector.load %arg13[%605, %c0_293] : memref<64x512xf32, #tpu.memory_space<vmem>>, vector<8x512xf32>
    %607 = arith.select %18, %604, %606 : vector<8x512xi1>, vector<8x512xf32>
    %c0_294 = arith.constant 0 : index
    %c0_295 = arith.constant 0 : index
    %608 = vector.load %arg16[%c0_294, %c0_295] : memref<8x128xf32, #tpu.memory_space<vmem>>, vector<8x128xf32>
    %c0_296 = arith.constant 0 : index
    %c0_297 = arith.constant 0 : index
    %609 = vector.load %arg6[%c0_296, %c0_297] : memref<128x512xf32, #tpu.memory_space<vmem>>, vector<128x512xf32>
    %cst_298 = arith.constant dense<0.000000e+00> : vector<8x512xf32>
    %610 = tpu.matmul %608, %609, %cst_298 {dimension_numbers = #tpu.dot_dimension_numbers<[1], [0], [0], [1], [0, 0, 1, 1], [], []>} : vector<8x128xf32>, vector<128x512xf32>, vector<8x512xf32> -> vector<8x512xf32>
    %611 = arith.addf %607, %610 : vector<8x512xf32>
    %612 = vector.extract_strided_slice %611 {offsets = [0, 0], sizes = [8, 128], strides = [1, 1]} : vector<8x512xf32> to vector<8x128xf32>
    %613 = arith.negf %612 : vector<8x128xf32>
    %614 = math.exp %613 : vector<8x128xf32>
    %cst_299 = arith.constant 1.000000e+00 : f32
    %615 = vector.broadcast %cst_299 : f32 to vector<8x128xf32>
    %616 = arith.addf %615, %614 : vector<8x128xf32>
    %617 = arith.divf %615, %616 : vector<8x128xf32>
    %618 = vector.extract_strided_slice %611 {offsets = [0, 128], sizes = [8, 128], strides = [1, 1]} : vector<8x512xf32> to vector<8x128xf32>
    %619 = arith.negf %618 : vector<8x128xf32>
    %620 = math.exp %619 : vector<8x128xf32>
    %cst_300 = arith.constant 1.000000e+00 : f32
    %621 = vector.broadcast %cst_300 : f32 to vector<8x128xf32>
    %622 = arith.addf %621, %620 : vector<8x128xf32>
    %623 = arith.divf %621, %622 : vector<8x128xf32>
    %624 = vector.extract_strided_slice %611 {offsets = [0, 256], sizes = [8, 128], strides = [1, 1]} : vector<8x512xf32> to vector<8x128xf32>
    %625 = math.tanh %624 : vector<8x128xf32>
    %626 = vector.extract_strided_slice %611 {offsets = [0, 384], sizes = [8, 128], strides = [1, 1]} : vector<8x512xf32> to vector<8x128xf32>
    %627 = arith.negf %626 : vector<8x128xf32>
    %628 = math.exp %627 : vector<8x128xf32>
    %cst_301 = arith.constant 1.000000e+00 : f32
    %629 = vector.broadcast %cst_301 : f32 to vector<8x128xf32>
    %630 = arith.addf %629, %628 : vector<8x128xf32>
    %631 = arith.divf %629, %630 : vector<8x128xf32>
    %c0_302 = arith.constant 0 : index
    %c0_303 = arith.constant 0 : index
    %632 = vector.load %arg17[%c0_302, %c0_303] : memref<8x128xf32, #tpu.memory_space<vmem>>, vector<8x128xf32>
    %633 = arith.mulf %623, %632 : vector<8x128xf32>
    %634 = arith.mulf %617, %625 : vector<8x128xf32>
    %635 = arith.addf %633, %634 : vector<8x128xf32>
    %636 = math.tanh %635 : vector<8x128xf32>
    %637 = arith.mulf %631, %636 : vector<8x128xf32>
    %c0_304 = arith.constant 0 : index
    %c0_305 = arith.constant 0 : index
    %638 = vector.load %arg17[%c0_304, %c0_305] : memref<8x128xf32, #tpu.memory_space<vmem>>, vector<8x128xf32>
    tpu.vector_store %arg17[%c0_304, %c0_305], %635 {strides = array<i32>} : memref<8x128xf32, #tpu.memory_space<vmem>>, vector<8x128xf32>,
    %c0_306 = arith.constant 0 : index
    %c0_307 = arith.constant 0 : index
    %639 = vector.load %arg16[%c0_306, %c0_307] : memref<8x128xf32, #tpu.memory_space<vmem>>, vector<8x128xf32>
    tpu.vector_store %arg16[%c0_306, %c0_307], %637 {strides = array<i32>} : memref<8x128xf32, #tpu.memory_space<vmem>>, vector<8x128xf32>,
    %c5_i32_308 = arith.constant 5 : i32
    %c8_i32_309 = arith.constant 8 : i32
    %640 = arith.muli %c5_i32_308, %c8_i32_309 : i32
    %641 = tpu.assume_multiple %640, 8 : i32
    %c7_i32_310 = arith.constant 7 : i32
    %642 = arith.subi %c7_i32_310, %c5_i32_308 : i32
    %c8_i32_311 = arith.constant 8 : i32
    %643 = arith.muli %642, %c8_i32_311 : i32
    %644 = tpu.assume_multiple %643, 8 : i32
    %645 = arith.index_cast %641 : i32 to index
    %c0_312 = arith.constant 0 : index
    %646 = vector.load %arg13[%645, %c0_312] : memref<64x512xf32, #tpu.memory_space<vmem>>, vector<8x512xf32>
    %647 = arith.index_cast %644 : i32 to index
    %c0_313 = arith.constant 0 : index
    %648 = vector.load %arg13[%647, %c0_313] : memref<64x512xf32, #tpu.memory_space<vmem>>, vector<8x512xf32>
    %649 = arith.select %18, %646, %648 : vector<8x512xi1>, vector<8x512xf32>
    %c0_314 = arith.constant 0 : index
    %c0_315 = arith.constant 0 : index
    %650 = vector.load %arg16[%c0_314, %c0_315] : memref<8x128xf32, #tpu.memory_space<vmem>>, vector<8x128xf32>
    %c0_316 = arith.constant 0 : index
    %c0_317 = arith.constant 0 : index
    %651 = vector.load %arg6[%c0_316, %c0_317] : memref<128x512xf32, #tpu.memory_space<vmem>>, vector<128x512xf32>
    %cst_318 = arith.constant dense<0.000000e+00> : vector<8x512xf32>
    %652 = tpu.matmul %650, %651, %cst_318 {dimension_numbers = #tpu.dot_dimension_numbers<[1], [0], [0], [1], [0, 0, 1, 1], [], []>} : vector<8x128xf32>, vector<128x512xf32>, vector<8x512xf32> -> vector<8x512xf32>
    %653 = arith.addf %649, %652 : vector<8x512xf32>
    %654 = vector.extract_strided_slice %653 {offsets = [0, 0], sizes = [8, 128], strides = [1, 1]} : vector<8x512xf32> to vector<8x128xf32>
    %655 = arith.negf %654 : vector<8x128xf32>
    %656 = math.exp %655 : vector<8x128xf32>
    %cst_319 = arith.constant 1.000000e+00 : f32
    %657 = vector.broadcast %cst_319 : f32 to vector<8x128xf32>
    %658 = arith.addf %657, %656 : vector<8x128xf32>
    %659 = arith.divf %657, %658 : vector<8x128xf32>
    %660 = vector.extract_strided_slice %653 {offsets = [0, 128], sizes = [8, 128], strides = [1, 1]} : vector<8x512xf32> to vector<8x128xf32>
    %661 = arith.negf %660 : vector<8x128xf32>
    %662 = math.exp %661 : vector<8x128xf32>
    %cst_320 = arith.constant 1.000000e+00 : f32
    %663 = vector.broadcast %cst_320 : f32 to vector<8x128xf32>
    %664 = arith.addf %663, %662 : vector<8x128xf32>
    %665 = arith.divf %663, %664 : vector<8x128xf32>
    %666 = vector.extract_strided_slice %653 {offsets = [0, 256], sizes = [8, 128], strides = [1, 1]} : vector<8x512xf32> to vector<8x128xf32>
    %667 = math.tanh %666 : vector<8x128xf32>
    %668 = vector.extract_strided_slice %653 {offsets = [0, 384], sizes = [8, 128], strides = [1, 1]} : vector<8x512xf32> to vector<8x128xf32>
    %669 = arith.negf %668 : vector<8x128xf32>
    %670 = math.exp %669 : vector<8x128xf32>
    %cst_321 = arith.constant 1.000000e+00 : f32
    %671 = vector.broadcast %cst_321 : f32 to vector<8x128xf32>
    %672 = arith.addf %671, %670 : vector<8x128xf32>
    %673 = arith.divf %671, %672 : vector<8x128xf32>
    %c0_322 = arith.constant 0 : index
    %c0_323 = arith.constant 0 : index
    %674 = vector.load %arg17[%c0_322, %c0_323] : memref<8x128xf32, #tpu.memory_space<vmem>>, vector<8x128xf32>
    %675 = arith.mulf %665, %674 : vector<8x128xf32>
    %676 = arith.mulf %659, %667 : vector<8x128xf32>
    %677 = arith.addf %675, %676 : vector<8x128xf32>
    %678 = math.tanh %677 : vector<8x128xf32>
    %679 = arith.mulf %673, %678 : vector<8x128xf32>
    %c0_324 = arith.constant 0 : index
    %c0_325 = arith.constant 0 : index
    %680 = vector.load %arg17[%c0_324, %c0_325] : memref<8x128xf32, #tpu.memory_space<vmem>>, vector<8x128xf32>
    tpu.vector_store %arg17[%c0_324, %c0_325], %677 {strides = array<i32>} : memref<8x128xf32, #tpu.memory_space<vmem>>, vector<8x128xf32>,
    %c0_326 = arith.constant 0 : index
    %c0_327 = arith.constant 0 : index
    %681 = vector.load %arg16[%c0_326, %c0_327] : memref<8x128xf32, #tpu.memory_space<vmem>>, vector<8x128xf32>
    tpu.vector_store %arg16[%c0_326, %c0_327], %679 {strides = array<i32>} : memref<8x128xf32, #tpu.memory_space<vmem>>, vector<8x128xf32>,
    %c6_i32_328 = arith.constant 6 : i32
    %c8_i32_329 = arith.constant 8 : i32
    %682 = arith.muli %c6_i32_328, %c8_i32_329 : i32
    %683 = tpu.assume_multiple %682, 8 : i32
    %c7_i32_330 = arith.constant 7 : i32
    %684 = arith.subi %c7_i32_330, %c6_i32_328 : i32
    %c8_i32_331 = arith.constant 8 : i32
    %685 = arith.muli %684, %c8_i32_331 : i32
    %686 = tpu.assume_multiple %685, 8 : i32
    %687 = arith.index_cast %683 : i32 to index
    %c0_332 = arith.constant 0 : index
    %688 = vector.load %arg13[%687, %c0_332] : memref<64x512xf32, #tpu.memory_space<vmem>>, vector<8x512xf32>
    %689 = arith.index_cast %686 : i32 to index
    %c0_333 = arith.constant 0 : index
    %690 = vector.load %arg13[%689, %c0_333] : memref<64x512xf32, #tpu.memory_space<vmem>>, vector<8x512xf32>
    %691 = arith.select %18, %688, %690 : vector<8x512xi1>, vector<8x512xf32>
    %c0_334 = arith.constant 0 : index
    %c0_335 = arith.constant 0 : index
    %692 = vector.load %arg16[%c0_334, %c0_335] : memref<8x128xf32, #tpu.memory_space<vmem>>, vector<8x128xf32>
    %c0_336 = arith.constant 0 : index
    %c0_337 = arith.constant 0 : index
    %693 = vector.load %arg6[%c0_336, %c0_337] : memref<128x512xf32, #tpu.memory_space<vmem>>, vector<128x512xf32>
    %cst_338 = arith.constant dense<0.000000e+00> : vector<8x512xf32>
    %694 = tpu.matmul %692, %693, %cst_338 {dimension_numbers = #tpu.dot_dimension_numbers<[1], [0], [0], [1], [0, 0, 1, 1], [], []>} : vector<8x128xf32>, vector<128x512xf32>, vector<8x512xf32> -> vector<8x512xf32>
    %695 = arith.addf %691, %694 : vector<8x512xf32>
    %696 = vector.extract_strided_slice %695 {offsets = [0, 0], sizes = [8, 128], strides = [1, 1]} : vector<8x512xf32> to vector<8x128xf32>
    %697 = arith.negf %696 : vector<8x128xf32>
    %698 = math.exp %697 : vector<8x128xf32>
    %cst_339 = arith.constant 1.000000e+00 : f32
    %699 = vector.broadcast %cst_339 : f32 to vector<8x128xf32>
    %700 = arith.addf %699, %698 : vector<8x128xf32>
    %701 = arith.divf %699, %700 : vector<8x128xf32>
    %702 = vector.extract_strided_slice %695 {offsets = [0, 128], sizes = [8, 128], strides = [1, 1]} : vector<8x512xf32> to vector<8x128xf32>
    %703 = arith.negf %702 : vector<8x128xf32>
    %704 = math.exp %703 : vector<8x128xf32>
    %cst_340 = arith.constant 1.000000e+00 : f32
    %705 = vector.broadcast %cst_340 : f32 to vector<8x128xf32>
    %706 = arith.addf %705, %704 : vector<8x128xf32>
    %707 = arith.divf %705, %706 : vector<8x128xf32>
    %708 = vector.extract_strided_slice %695 {offsets = [0, 256], sizes = [8, 128], strides = [1, 1]} : vector<8x512xf32> to vector<8x128xf32>
    %709 = math.tanh %708 : vector<8x128xf32>
    %710 = vector.extract_strided_slice %695 {offsets = [0, 384], sizes = [8, 128], strides = [1, 1]} : vector<8x512xf32> to vector<8x128xf32>
    %711 = arith.negf %710 : vector<8x128xf32>
    %712 = math.exp %711 : vector<8x128xf32>
    %cst_341 = arith.constant 1.000000e+00 : f32
    %713 = vector.broadcast %cst_341 : f32 to vector<8x128xf32>
    %714 = arith.addf %713, %712 : vector<8x128xf32>
    %715 = arith.divf %713, %714 : vector<8x128xf32>
    %c0_342 = arith.constant 0 : index
    %c0_343 = arith.constant 0 : index
    %716 = vector.load %arg17[%c0_342, %c0_343] : memref<8x128xf32, #tpu.memory_space<vmem>>, vector<8x128xf32>
    %717 = arith.mulf %707, %716 : vector<8x128xf32>
    %718 = arith.mulf %701, %709 : vector<8x128xf32>
    %719 = arith.addf %717, %718 : vector<8x128xf32>
    %720 = math.tanh %719 : vector<8x128xf32>
    %721 = arith.mulf %715, %720 : vector<8x128xf32>
    %c0_344 = arith.constant 0 : index
    %c0_345 = arith.constant 0 : index
    %722 = vector.load %arg17[%c0_344, %c0_345] : memref<8x128xf32, #tpu.memory_space<vmem>>, vector<8x128xf32>
    tpu.vector_store %arg17[%c0_344, %c0_345], %719 {strides = array<i32>} : memref<8x128xf32, #tpu.memory_space<vmem>>, vector<8x128xf32>,
    %c0_346 = arith.constant 0 : index
    %c0_347 = arith.constant 0 : index
    %723 = vector.load %arg16[%c0_346, %c0_347] : memref<8x128xf32, #tpu.memory_space<vmem>>, vector<8x128xf32>
    tpu.vector_store %arg16[%c0_346, %c0_347], %721 {strides = array<i32>} : memref<8x128xf32, #tpu.memory_space<vmem>>, vector<8x128xf32>,
    %c7_i32_348 = arith.constant 7 : i32
    %c8_i32_349 = arith.constant 8 : i32
    %724 = arith.muli %c7_i32_348, %c8_i32_349 : i32
    %725 = tpu.assume_multiple %724, 8 : i32
    %c7_i32_350 = arith.constant 7 : i32
    %726 = arith.subi %c7_i32_350, %c7_i32_348 : i32
    %c8_i32_351 = arith.constant 8 : i32
    %727 = arith.muli %726, %c8_i32_351 : i32
    %728 = tpu.assume_multiple %727, 8 : i32
    %729 = arith.index_cast %725 : i32 to index
    %c0_352 = arith.constant 0 : index
    %730 = vector.load %arg13[%729, %c0_352] : memref<64x512xf32, #tpu.memory_space<vmem>>, vector<8x512xf32>
    %731 = arith.index_cast %728 : i32 to index
    %c0_353 = arith.constant 0 : index
    %732 = vector.load %arg13[%731, %c0_353] : memref<64x512xf32, #tpu.memory_space<vmem>>, vector<8x512xf32>
    %733 = arith.select %18, %730, %732 : vector<8x512xi1>, vector<8x512xf32>
    %c0_354 = arith.constant 0 : index
    %c0_355 = arith.constant 0 : index
    %734 = vector.load %arg16[%c0_354, %c0_355] : memref<8x128xf32, #tpu.memory_space<vmem>>, vector<8x128xf32>
    %c0_356 = arith.constant 0 : index
    %c0_357 = arith.constant 0 : index
    %735 = vector.load %arg6[%c0_356, %c0_357] : memref<128x512xf32, #tpu.memory_space<vmem>>, vector<128x512xf32>
    %cst_358 = arith.constant dense<0.000000e+00> : vector<8x512xf32>
    %736 = tpu.matmul %734, %735, %cst_358 {dimension_numbers = #tpu.dot_dimension_numbers<[1], [0], [0], [1], [0, 0, 1, 1], [], []>} : vector<8x128xf32>, vector<128x512xf32>, vector<8x512xf32> -> vector<8x512xf32>
    %737 = arith.addf %733, %736 : vector<8x512xf32>
    %738 = vector.extract_strided_slice %737 {offsets = [0, 0], sizes = [8, 128], strides = [1, 1]} : vector<8x512xf32> to vector<8x128xf32>
    %739 = arith.negf %738 : vector<8x128xf32>
    %740 = math.exp %739 : vector<8x128xf32>
    %cst_359 = arith.constant 1.000000e+00 : f32
    %741 = vector.broadcast %cst_359 : f32 to vector<8x128xf32>
    %742 = arith.addf %741, %740 : vector<8x128xf32>
    %743 = arith.divf %741, %742 : vector<8x128xf32>
    %744 = vector.extract_strided_slice %737 {offsets = [0, 128], sizes = [8, 128], strides = [1, 1]} : vector<8x512xf32> to vector<8x128xf32>
    %745 = arith.negf %744 : vector<8x128xf32>
    %746 = math.exp %745 : vector<8x128xf32>
    %cst_360 = arith.constant 1.000000e+00 : f32
    %747 = vector.broadcast %cst_360 : f32 to vector<8x128xf32>
    %748 = arith.addf %747, %746 : vector<8x128xf32>
    %749 = arith.divf %747, %748 : vector<8x128xf32>
    %750 = vector.extract_strided_slice %737 {offsets = [0, 256], sizes = [8, 128], strides = [1, 1]} : vector<8x512xf32> to vector<8x128xf32>
    %751 = math.tanh %750 : vector<8x128xf32>
    %752 = vector.extract_strided_slice %737 {offsets = [0, 384], sizes = [8, 128], strides = [1, 1]} : vector<8x512xf32> to vector<8x128xf32>
    %753 = arith.negf %752 : vector<8x128xf32>
    %754 = math.exp %753 : vector<8x128xf32>
    %cst_361 = arith.constant 1.000000e+00 : f32
    %755 = vector.broadcast %cst_361 : f32 to vector<8x128xf32>
    %756 = arith.addf %755, %754 : vector<8x128xf32>
    %757 = arith.divf %755, %756 : vector<8x128xf32>
    %c0_362 = arith.constant 0 : index
    %c0_363 = arith.constant 0 : index
    %758 = vector.load %arg17[%c0_362, %c0_363] : memref<8x128xf32, #tpu.memory_space<vmem>>, vector<8x128xf32>
    %759 = arith.mulf %749, %758 : vector<8x128xf32>
    %760 = arith.mulf %743, %751 : vector<8x128xf32>
    %761 = arith.addf %759, %760 : vector<8x128xf32>
    %762 = math.tanh %761 : vector<8x128xf32>
    %763 = arith.mulf %757, %762 : vector<8x128xf32>
    %c0_364 = arith.constant 0 : index
    %c0_365 = arith.constant 0 : index
    %764 = vector.load %arg17[%c0_364, %c0_365] : memref<8x128xf32, #tpu.memory_space<vmem>>, vector<8x128xf32>
    tpu.vector_store %arg17[%c0_364, %c0_365], %761 {strides = array<i32>} : memref<8x128xf32, #tpu.memory_space<vmem>>, vector<8x128xf32>,
    %c0_366 = arith.constant 0 : index
    %c0_367 = arith.constant 0 : index
    %765 = vector.load %arg16[%c0_366, %c0_367] : memref<8x128xf32, #tpu.memory_space<vmem>>, vector<8x128xf32>
    tpu.vector_store %arg16[%c0_366, %c0_367], %763 {strides = array<i32>} : memref<8x128xf32, #tpu.memory_space<vmem>>, vector<8x128xf32>,
    %c8_i32_368 = arith.constant 8 : i32
    %c0_369 = arith.constant 0 : index
    %c0_370 = arith.constant 0 : index
    %766 = vector.load %arg16[%c0_369, %c0_370] : memref<8x128xf32, #tpu.memory_space<vmem>>, vector<8x128xf32>
    %767 = arith.addf %414, %766 : vector<8x128xf32>
    %768 = vector.extract_strided_slice %767 {offsets = [0, 0], sizes = [8, 64], strides = [1, 1]} : vector<8x128xf32> to vector<8x64xf32>
    %769 = vector.extract_strided_slice %767 {offsets = [0, 64], sizes = [8, 64], strides = [1, 1]} : vector<8x128xf32> to vector<8x64xf32>
    %770 = arith.addf %768, %769 : vector<8x64xf32>
    %cst_371 = arith.constant 2.500000e-01 : f32
    %771 = vector.broadcast %cst_371 : f32 to vector<8x64xf32>
    %772 = arith.mulf %770, %771 : vector<8x64xf32>
    %c0_372 = arith.constant 0 : index
    %c0_373 = arith.constant 0 : index
    %773 = vector.load %arg8[%c0_372, %c0_373] : memref<64x32xf32, #tpu.memory_space<vmem>>, vector<64x32xf32>
    %cst_374 = arith.constant dense<0.000000e+00> : vector<8x32xf32>
    %774 = tpu.matmul %772, %773, %cst_374 {dimension_numbers = #tpu.dot_dimension_numbers<[1], [0], [0], [1], [0, 0, 1, 1], [], []>} : vector<8x64xf32>, vector<64x32xf32>, vector<8x32xf32> -> vector<8x32xf32>
    %c0_375 = arith.constant 0 : index
    %c0_376 = arith.constant 0 : index
    %775 = vector.load %arg9[%c0_375, %c0_376] : memref<1x32xf32, #tpu.memory_space<vmem>>, vector<1x32xf32>
    %776 = vector.broadcast %775 : vector<1x32xf32> to vector<8x32xf32>
    %777 = arith.addf %774, %776 : vector<8x32xf32>
    %c0_377 = arith.constant 0 : index
    %c0_378 = arith.constant 0 : index
    %778 = vector.load %arg10[%c0_377, %c0_378] : memref<32x14xf32, #tpu.memory_space<vmem>>, vector<32x14xf32>
    %cst_379 = arith.constant dense<0.000000e+00> : vector<8x14xf32>
    %779 = tpu.matmul %777, %778, %cst_379 {dimension_numbers = #tpu.dot_dimension_numbers<[1], [0], [0], [1], [0, 0, 1, 1], [], []>} : vector<8x32xf32>, vector<32x14xf32>, vector<8x14xf32> -> vector<8x14xf32>
    %c0_380 = arith.constant 0 : index
    %c0_381 = arith.constant 0 : index
    %780 = vector.load %arg11[%c0_380, %c0_381] : memref<1x14xf32, #tpu.memory_space<vmem>>, vector<1x14xf32>
    %781 = vector.broadcast %780 : vector<1x14xf32> to vector<8x14xf32>
    %782 = arith.addf %779, %781 : vector<8x14xf32>
    %cst_382 = arith.constant dense<0xFF800000> : vector<8xf32>
    %783 = vector.multi_reduction <maximumf>, %782, %cst_382 [1] : vector<8x14xf32> to vector<8xf32>
    %784 = vector.shape_cast %783 : vector<8xf32> to vector<8x1xf32>
    %785 = vector.broadcast %784 : vector<8x1xf32> to vector<8x14xf32>
    %786 = arith.subf %782, %785 : vector<8x14xf32>
    %787 = math.exp %786 : vector<8x14xf32>
    %cst_383 = arith.constant dense<0.000000e+00> : vector<8xf32>
    %788 = vector.multi_reduction <add>, %787, %cst_383 [1] : vector<8x14xf32> to vector<8xf32>
    %789 = vector.shape_cast %788 : vector<8xf32> to vector<8x1xf32>
    %790 = vector.broadcast %789 : vector<8x1xf32> to vector<8x14xf32>
    %791 = arith.divf %787, %790 : vector<8x14xf32>
    %c0_384 = arith.constant 0 : index
    %c0_385 = arith.constant 0 : index
    %792 = vector.load %arg12[%c0_384, %c0_385] : memref<8x14xf32, #tpu.memory_space<vmem>>, vector<8x14xf32>
    tpu.vector_store %arg12[%c0_384, %c0_385], %791 {strides = array<i32>} : memref<8x14xf32, #tpu.memory_space<vmem>>, vector<8x14xf32>,
    return
  }
}

</mosaic_0001>

<llo_original>
// kernel: init_clip_lstm_pallas.1
$region0: #{init_clip_lstm_pallas.1}
  #allocation0 [shape = 'u32[]', space=smem, size = 0x4, offset = 0x4, fixed_abs, tag = 'smem constant byte address 0x4 - core index']
  #allocation1 [shape = 'u32[144,128]{1,0:T(1,128)}', space=vmem, size = 0x12000, scoped, tag = 'internal scratch']
  #allocation2 [shape = 'f32[64,512]{1,0:T(8,128)}', space=vmem, size = 0x20000, scoped, tag = 'scratch operand']
  #allocation3 [shape = 'f32[64,64]{1,0:T(8,128)}', space=vmem, size = 0x8000, scoped, tag = 'scratch operand']
  #allocation4 [shape = 'f32[64,64]{1,0:T(8,128)}', space=vmem, size = 0x8000, scoped, tag = 'scratch operand']
  #allocation5 [shape = 'f32[8,128]{1,0:T(8,128)}', space=vmem, size = 0x1000, scoped, tag = 'scratch operand']
  #allocation6 [shape = 'f32[8,128]{1,0:T(8,128)}', space=vmem, size = 0x1000, scoped, tag = 'scratch operand']
  %s0 = inlined_call_operand.vmem [shape: f32[64,512], index: 0, kind: input, shape index: {}]
  %s1 = inlined_call_operand.vmem [shape: f32[512,512], index: 1, kind: input, shape index: {}]
  %s2 = inlined_call_operand.vmem [shape: f32[128,512], index: 2, kind: input, shape index: {}]
  %s3 = inlined_call_operand.vmem [shape: f32[1,512], index: 3, kind: input, shape index: {}]
  %s4 = inlined_call_operand.vmem [shape: f32[64,512], index: 4, kind: input, shape index: {}]
  %s5 = inlined_call_operand.vmem [shape: f32[64,512], index: 5, kind: input, shape index: {}]
  %s6 = inlined_call_operand.vmem [shape: f32[128,512], index: 6, kind: input, shape index: {}]
  %s7 = inlined_call_operand.vmem [shape: f32[1,512], index: 7, kind: input, shape index: {}]
  %s8 = inlined_call_operand.vmem [shape: f32[64,32], index: 8, kind: input, shape index: {}]
  %s9 = inlined_call_operand.vmem [shape: f32[1,32], index: 9, kind: input, shape index: {}]
  %s10 = inlined_call_operand.vmem [shape: f32[32,14], index: 10, kind: input, shape index: {}]
  %s11 = inlined_call_operand.vmem [shape: f32[1,14], index: 11, kind: input, shape index: {}]
  %s12 = inlined_call_operand.vmem [shape: f32[8,14], index: 12, kind: output, shape index: {}]
  %s13 = sld [smem:[#allocation0]]
  $region58: #{init_clip_lstm_pallas.1} parent=0
    _
  %s15 = ssub.s32 1, %s13
  %s16 = scalar_select 0, %s15, %s13
  // Predicated region
  $region2: #{init_clip_lstm_pallas.1} parent=0 // pred_check
    _
  $region3: #{init_clip_lstm_pallas.1} parent=0 // pred_check_branch
    %18 = sbr.rel (0) target = $region5
  $region4: #{init_clip_lstm_pallas.1} parent=0 // pred_region
    _
  $region5: #{init_clip_lstm_pallas.1} parent=0 // pred_fallthru
    _
  // Predicated region
  $region6: #{init_clip_lstm_pallas.1} parent=0 // pred_check
    _
  $region7: #{init_clip_lstm_pallas.1} parent=0 // pred_check_branch
    %20 = sbr.rel (0) target = $region9
  $region8: #{init_clip_lstm_pallas.1} parent=0 // pred_region
    _
  $region9: #{init_clip_lstm_pallas.1} parent=0 // pred_fallthru
    _
  // Predicated region
  $region10: #{init_clip_lstm_pallas.1} parent=0 // pred_check
    _
  $region11: #{init_clip_lstm_pallas.1} parent=0 // pred_check_branch
    %22 = sbr.rel (0) target = $region13
  $region12: #{init_clip_lstm_pallas.1} parent=0 // pred_region
    _
  $region13: #{init_clip_lstm_pallas.1} parent=0 // pred_fallthru
    _
  // Predicated region
  $region14: #{init_clip_lstm_pallas.1} parent=0 // pred_check
    _
  $region15: #{init_clip_lstm_pallas.1} parent=0 // pred_check_branch
    %24 = sbr.rel (0) target = $region17
  $region16: #{init_clip_lstm_pallas.1} parent=0 // pred_region
    _
  $region17: #{init_clip_lstm_pallas.1} parent=0 // pred_fallthru
    _
  // Predicated region
  $region18: #{init_clip_lstm_pallas.1} parent=0 // pred_check
    _
  $region19: #{init_clip_lstm_pallas.1} parent=0 // pred_check_branch
    %26 = sbr.rel (0) target = $region21
  $region20: #{init_clip_lstm_pallas.1} parent=0 // pred_region
    _
  $region21: #{init_clip_lstm_pallas.1} parent=0 // pred_fallthru
    _
  // Predicated region
  $region22: #{init_clip_lstm_pallas.1} parent=0 // pred_check
    _
  $region23: #{init_clip_lstm_pallas.1} parent=0 // pred_check_branch
    %28 = sbr.rel (0) target = $region25
  $region24: #{init_clip_lstm_pallas.1} parent=0 // pred_region
    _
  $region25: #{init_clip_lstm_pallas.1} parent=0 // pred_fallthru
    _
  // Predicated region
  $region26: #{init_clip_lstm_pallas.1} parent=0 // pred_check
    _
  $region27: #{init_clip_lstm_pallas.1} parent=0 // pred_check_branch
    %30 = sbr.rel (0) target = $region29
  $region28: #{init_clip_lstm_pallas.1} parent=0 // pred_region
    _
  $region29: #{init_clip_lstm_pallas.1} parent=0 // pred_fallthru
    _
  // Predicated region
  $region30: #{init_clip_lstm_pallas.1} parent=0 // pred_check
    _
  $region31: #{init_clip_lstm_pallas.1} parent=0 // pred_check_branch
    %32 = sbr.rel (0) target = $region33
  $region32: #{init_clip_lstm_pallas.1} parent=0 // pred_region
    _
  $region33: #{init_clip_lstm_pallas.1} parent=0 // pred_fallthru
    _
  // Predicated region
  $region34: #{init_clip_lstm_pallas.1} parent=0 // pred_check
    _
  $region35: #{init_clip_lstm_pallas.1} parent=0 // pred_check_branch
    %34 = sbr.rel (0) target = $region37
  $region36: #{init_clip_lstm_pallas.1} parent=0 // pred_region
    _
  $region37: #{init_clip_lstm_pallas.1} parent=0 // pred_fallthru
    _
  // Predicated region
  $region38: #{init_clip_lstm_pallas.1} parent=0 // pred_check
    _
  $region39: #{init_clip_lstm_pallas.1} parent=0 // pred_check_branch
    %36 = sbr.rel (0) target = $region41
  $region40: #{init_clip_lstm_pallas.1} parent=0 // pred_region
    _
  $region41: #{init_clip_lstm_pallas.1} parent=0 // pred_fallthru
    _
  // Predicated region
  $region42: #{init_clip_lstm_pallas.1} parent=0 // pred_check
    _
  $region43: #{init_clip_lstm_pallas.1} parent=0 // pred_check_branch
    %38 = sbr.rel (0) target = $region45
  $region44: #{init_clip_lstm_pallas.1} parent=0 // pred_region
    _
  $region45: #{init_clip_lstm_pallas.1} parent=0 // pred_fallthru
    _
  // Predicated region
  $region46: #{init_clip_lstm_pallas.1} parent=0 // pred_check
    _
  $region47: #{init_clip_lstm_pallas.1} parent=0 // pred_check_branch
    %40 = sbr.rel (0) target = $region49
  $region48: #{init_clip_lstm_pallas.1} parent=0 // pred_region
    _
  $region49: #{init_clip_lstm_pallas.1} parent=0 // pred_fallthru
    _
  %v41 = vlaneseq
  %v42 = vand.u32 %v41, 127
  %v43 = vadd.s32 %v42, 128
  %v44 = vadd.s32 %v42, 256
  %v45 = vadd.s32 %v42, 384
  %vm46 = vcmp.lt.s32.totalorder %v42, 0
  %v47 = vsub.s32 0, %v42
  %v48 = vsel %vm46, %v47, %v42
  %v49 = vshrl.u32 %v48, 7
  %v50 = vand.u32 %v48, 127
  %v51 = vsub.s32 0, %v50
  %v52 = vsel %vm46, %v51, %v50
  %vm53 = vcmp.lt.s32.totalorder %v43, 0
  %v54 = vsub.s32 0, %v43
  %v55 = vsel %vm53, %v54, %v43
  %v56 = vshrl.u32 %v55, 7
  %v57 = vand.u32 %v55, 127
  %v58 = vsub.s32 0, %v57
  %v59 = vsel %vm53, %v58, %v57
  %vm60 = vcmp.lt.s32.totalorder %v44, 0
  %v61 = vsub.s32 0, %v44
  %v62 = vsel %vm60, %v61, %v44
  %v63 = vshrl.u32 %v62, 7
  %v64 = vand.u32 %v62, 127
  %v65 = vsub.s32 0, %v64
  %v66 = vsel %vm60, %v65, %v64
  %vm67 = vcmp.lt.s32.totalorder %v45, 0
  %v68 = vsub.s32 0, %v45
  %v69 = vsel %vm67, %v68, %v45
  %v70 = vshrl.u32 %v69, 7
  %v71 = vand.u32 %v69, 127
  %v72 = vsub.s32 0, %v71
  %v73 = vsel %vm67, %v72, %v71
  %vm74 = vcmp.ne.s32.totalorder %v52, 0
  %vm75 = vcmp.ne.s32.totalorder %v59, 0
  %vm76 = vcmp.ne.s32.totalorder %v66, 0
  %vm77 = vcmp.ne.s32.totalorder %v73, 0
  %vm78 = vcmp.lt.s32.totalorder %v52, 0
  %vm79 = vcmp.lt.s32.totalorder %v59, 0
  %vm80 = vcmp.lt.s32.totalorder %v66, 0
  %vm81 = vcmp.lt.s32.totalorder %v73, 0
  %vm82 = vmand %vm78, %vm74
  %vm83 = vmand %vm79, %vm75
  %vm84 = vmand %vm80, %vm76
  %vm85 = vmand %vm81, %vm77
  %v86 = vadd.s32 %v52, 128
  %v87 = vadd.s32 %v59, 128
  %v88 = vadd.s32 %v66, 128
  %v89 = vadd.s32 %v73, 128
  %v90 = vsel %vm82, %v86, %v52
  %v91 = vsel %vm83, %v87, %v59
  %v92 = vsel %vm84, %v88, %v66
  %v93 = vsel %vm85, %v89, %v73
  %vm94 = vcmp.lt.s32.totalorder %v90, 64
  %vm95 = vcmp.lt.s32.totalorder %v91, 64
  %vm96 = vcmp.lt.s32.totalorder %v92, 64
  %vm97 = vcmp.lt.s32.totalorder %v93, 64
  %v98 = vld [vmem:[%s0] sm:$0xff]
  %v99 = vld [vmem:[%s0 + $0x8] sm:$0xff]
  %v100 = vld [vmem:[%s0 + $0x10] sm:$0xff]
  %v101 = vld [vmem:[%s0 + $0x18] sm:$0xff]
  %v102 = vld [vmem:[%s0 + $0x20] sm:$0xff]
  %v103 = vld [vmem:[%s0 + $0x28] sm:$0xff]
  %v104 = vld [vmem:[%s0 + $0x30] sm:$0xff]
  %v105 = vld [vmem:[%s0 + $0x38] sm:$0xff]
  %v106 = vld [vmem:[%s0 + $0x40] sm:$0xff]
  %v107 = vld [vmem:[%s0 + $0x48] sm:$0xff]
  %v108 = vld [vmem:[%s0 + $0x50] sm:$0xff]
  %v109 = vld [vmem:[%s0 + $0x58] sm:$0xff]
  %v110 = vld [vmem:[%s0 + $0x60] sm:$0xff]
  %v111 = vld [vmem:[%s0 + $0x68] sm:$0xff]
  %v112 = vld [vmem:[%s0 + $0x70] sm:$0xff]
  %v113 = vld [vmem:[%s0 + $0x78] sm:$0xff]
  %v114 = vld [vmem:[%s0 + $0x80] sm:$0xff]
  %v115 = vld [vmem:[%s0 + $0x88] sm:$0xff]
  %v116 = vld [vmem:[%s0 + $0x90] sm:$0xff]
  %v117 = vld [vmem:[%s0 + $0x98] sm:$0xff]
  %v118 = vld [vmem:[%s0 + $0xa0] sm:$0xff]
  %v119 = vld [vmem:[%s0 + $0xa8] sm:$0xff]
  %v120 = vld [vmem:[%s0 + $0xb0] sm:$0xff]
  %v121 = vld [vmem:[%s0 + $0xb8] sm:$0xff]
  %v122 = vld [vmem:[%s0 + $0xc0] sm:$0xff]
  %v123 = vld [vmem:[%s0 + $0xc8] sm:$0xff]
  %v124 = vld [vmem:[%s0 + $0xd0] sm:$0xff]
  %v125 = vld [vmem:[%s0 + $0xd8] sm:$0xff]
  %v126 = vld [vmem:[%s0 + $0xe0] sm:$0xff]
  %v127 = vld [vmem:[%s0 + $0xe8] sm:$0xff]
  %v128 = vld [vmem:[%s0 + $0xf0] sm:$0xff]
  %v129 = vld [vmem:[%s0 + $0xf8] sm:$0xff]
  %v130 = vld [vmem:[%s1] sm:$0xff]
  %v131 = vld [vmem:[%s1 + $0x8] sm:$0xff]
  %v132 = vld [vmem:[%s1 + $0x10] sm:$0xff]
  %v133 = vld [vmem:[%s1 + $0x18] sm:$0xff]
  %v134 = vld [vmem:[%s1 + $0x20] sm:$0xff]
  %v135 = vld [vmem:[%s1 + $0x28] sm:$0xff]
  %v136 = vld [vmem:[%s1 + $0x30] sm:$0xff]
  %v137 = vld [vmem:[%s1 + $0x38] sm:$0xff]
  %v138 = vld [vmem:[%s1 + $0x40] sm:$0xff]
  %v139 = vld [vmem:[%s1 + $0x48] sm:$0xff]
  %v140 = vld [vmem:[%s1 + $0x50] sm:$0xff]
  %v141 = vld [vmem:[%s1 + $0x58] sm:$0xff]
  %v142 = vld [vmem:[%s1 + $0x60] sm:$0xff]
  %v143 = vld [vmem:[%s1 + $0x68] sm:$0xff]
  %v144 = vld [vmem:[%s1 + $0x70] sm:$0xff]
  %v145 = vld [vmem:[%s1 + $0x78] sm:$0xff]
  %v146 = vld [vmem:[%s1 + $0x80] sm:$0xff]
  %v147 = vld [vmem:[%s1 + $0x88] sm:$0xff]
  %v148 = vld [vmem:[%s1 + $0x90] sm:$0xff]
  %v149 = vld [vmem:[%s1 + $0x98] sm:$0xff]
  %v150 = vld [vmem:[%s1 + $0xa0] sm:$0xff]
  %v151 = vld [vmem:[%s1 + $0xa8] sm:$0xff]
  %v152 = vld [vmem:[%s1 + $0xb0] sm:$0xff]
  %v153 = vld [vmem:[%s1 + $0xb8] sm:$0xff]
  %v154 = vld [vmem:[%s1 + $0xc0] sm:$0xff]
  %v155 = vld [vmem:[%s1 + $0xc8] sm:$0xff]
  %v156 = vld [vmem:[%s1 + $0xd0] sm:$0xff]
  %v157 = vld [vmem:[%s1 + $0xd8] sm:$0xff]
  %v158 = vld [vmem:[%s1 + $0xe0] sm:$0xff]
  %v159 = vld [vmem:[%s1 + $0xe8] sm:$0xff]
  %v160 = vld [vmem:[%s1 + $0xf0] sm:$0xff]
  %v161 = vld [vmem:[%s1 + $0xf8] sm:$0xff]
  %v162 = vld [vmem:[%s1 + $0x100] sm:$0xff]
  %v163 = vld [vmem:[%s1 + $0x108] sm:$0xff]
  %v164 = vld [vmem:[%s1 + $0x110] sm:$0xff]
  %v165 = vld [vmem:[%s1 + $0x118] sm:$0xff]
  %v166 = vld [vmem:[%s1 + $0x120] sm:$0xff]
  %v167 = vld [vmem:[%s1 + $0x128] sm:$0xff]
  %v168 = vld [vmem:[%s1 + $0x130] sm:$0xff]
  %v169 = vld [vmem:[%s1 + $0x138] sm:$0xff]
  %v170 = vld [vmem:[%s1 + $0x140] sm:$0xff]
  %v171 = vld [vmem:[%s1 + $0x148] sm:$0xff]
  %v172 = vld [vmem:[%s1 + $0x150] sm:$0xff]
  %v173 = vld [vmem:[%s1 + $0x158] sm:$0xff]
  %v174 = vld [vmem:[%s1 + $0x160] sm:$0xff]
  %v175 = vld [vmem:[%s1 + $0x168] sm:$0xff]
  %v176 = vld [vmem:[%s1 + $0x170] sm:$0xff]
  %v177 = vld [vmem:[%s1 + $0x178] sm:$0xff]
  %v178 = vld [vmem:[%s1 + $0x180] sm:$0xff]
  %v179 = vld [vmem:[%s1 + $0x188] sm:$0xff]
  %v180 = vld [vmem:[%s1 + $0x190] sm:$0xff]
  %v181 = vld [vmem:[%s1 + $0x198] sm:$0xff]
  %v182 = vld [vmem:[%s1 + $0x1a0] sm:$0xff]
  %v183 = vld [vmem:[%s1 + $0x1a8] sm:$0xff]
  %v184 = vld [vmem:[%s1 + $0x1b0] sm:$0xff]
  %v185 = vld [vmem:[%s1 + $0x1b8] sm:$0xff]
  %v186 = vld [vmem:[%s1 + $0x1c0] sm:$0xff]
  %v187 = vld [vmem:[%s1 + $0x1c8] sm:$0xff]
  %v188 = vld [vmem:[%s1 + $0x1d0] sm:$0xff]
  %v189 = vld [vmem:[%s1 + $0x1d8] sm:$0xff]
  %v190 = vld [vmem:[%s1 + $0x1e0] sm:$0xff]
  %v191 = vld [vmem:[%s1 + $0x1e8] sm:$0xff]
  %v192 = vld [vmem:[%s1 + $0x1f0] sm:$0xff]
  %v193 = vld [vmem:[%s1 + $0x1f8] sm:$0xff]
  %v194 = vld [vmem:[%s1 + $0x200] sm:$0xff]
  %v195 = vld [vmem:[%s1 + $0x208] sm:$0xff]
  %v196 = vld [vmem:[%s1 + $0x210] sm:$0xff]
  %v197 = vld [vmem:[%s1 + $0x218] sm:$0xff]
  %v198 = vld [vmem:[%s1 + $0x220] sm:$0xff]
  %v199 = vld [vmem:[%s1 + $0x228] sm:$0xff]
  %v200 = vld [vmem:[%s1 + $0x230] sm:$0xff]
  %v201 = vld [vmem:[%s1 + $0x238] sm:$0xff]
  %v202 = vld [vmem:[%s1 + $0x240] sm:$0xff]
  %v203 = vld [vmem:[%s1 + $0x248] sm:$0xff]
  %v204 = vld [vmem:[%s1 + $0x250] sm:$0xff]
  %v205 = vld [vmem:[%s1 + $0x258] sm:$0xff]
  %v206 = vld [vmem:[%s1 + $0x260] sm:$0xff]
  %v207 = vld [vmem:[%s1 + $0x268] sm:$0xff]
  %v208 = vld [vmem:[%s1 + $0x270] sm:$0xff]
  %v209 = vld [vmem:[%s1 + $0x278] sm:$0xff]
  %v210 = vld [vmem:[%s1 + $0x280] sm:$0xff]
  %v211 = vld [vmem:[%s1 + $0x288] sm:$0xff]
  %v212 = vld [vmem:[%s1 + $0x290] sm:$0xff]
  %v213 = vld [vmem:[%s1 + $0x298] sm:$0xff]
  %v214 = vld [vmem:[%s1 + $0x2a0] sm:$0xff]
  %v215 = vld [vmem:[%s1 + $0x2a8] sm:$0xff]
  %v216 = vld [vmem:[%s1 + $0x2b0] sm:$0xff]
  %v217 = vld [vmem:[%s1 + $0x2b8] sm:$0xff]
  %v218 = vld [vmem:[%s1 + $0x2c0] sm:$0xff]
  %v219 = vld [vmem:[%s1 + $0x2c8] sm:$0xff]
  %v220 = vld [vmem:[%s1 + $0x2d0] sm:$0xff]
  %v221 = vld [vmem:[%s1 + $0x2d8] sm:$0xff]
  %v222 = vld [vmem:[%s1 + $0x2e0] sm:$0xff]
  %v223 = vld [vmem:[%s1 + $0x2e8] sm:$0xff]
  %v224 = vld [vmem:[%s1 + $0x2f0] sm:$0xff]
  %v225 = vld [vmem:[%s1 + $0x2f8] sm:$0xff]
  %v226 = vld [vmem:[%s1 + $0x300] sm:$0xff]
  %v227 = vld [vmem:[%s1 + $0x308] sm:$0xff]
  %v228 = vld [vmem:[%s1 + $0x310] sm:$0xff]
  %v229 = vld [vmem:[%s1 + $0x318] sm:$0xff]
  %v230 = vld [vmem:[%s1 + $0x320] sm:$0xff]
  %v231 = vld [vmem:[%s1 + $0x328] sm:$0xff]
  %v232 = vld [vmem:[%s1 + $0x330] sm:$0xff]
  %v233 = vld [vmem:[%s1 + $0x338] sm:$0xff]
  %v234 = vld [vmem:[%s1 + $0x340] sm:$0xff]
  %v235 = vld [vmem:[%s1 + $0x348] sm:$0xff]
  %v236 = vld [vmem:[%s1 + $0x350] sm:$0xff]
  %v237 = vld [vmem:[%s1 + $0x358] sm:$0xff]
  %v238 = vld [vmem:[%s1 + $0x360] sm:$0xff]
  %v239 = vld [vmem:[%s1 + $0x368] sm:$0xff]
  %v240 = vld [vmem:[%s1 + $0x370] sm:$0xff]
  %v241 = vld [vmem:[%s1 + $0x378] sm:$0xff]
  %v242 = vld [vmem:[%s1 + $0x380] sm:$0xff]
  %v243 = vld [vmem:[%s1 + $0x388] sm:$0xff]
  %v244 = vld [vmem:[%s1 + $0x390] sm:$0xff]
  %v245 = vld [vmem:[%s1 + $0x398] sm:$0xff]
  %v246 = vld [vmem:[%s1 + $0x3a0] sm:$0xff]
  %v247 = vld [vmem:[%s1 + $0x3a8] sm:$0xff]
  %v248 = vld [vmem:[%s1 + $0x3b0] sm:$0xff]
  %v249 = vld [vmem:[%s1 + $0x3b8] sm:$0xff]
  %v250 = vld [vmem:[%s1 + $0x3c0] sm:$0xff]
  %v251 = vld [vmem:[%s1 + $0x3c8] sm:$0xff]
  %v252 = vld [vmem:[%s1 + $0x3d0] sm:$0xff]
  %v253 = vld [vmem:[%s1 + $0x3d8] sm:$0xff]
  %v254 = vld [vmem:[%s1 + $0x3e0] sm:$0xff]
  %v255 = vld [vmem:[%s1 + $0x3e8] sm:$0xff]
  %v256 = vld [vmem:[%s1 + $0x3f0] sm:$0xff]
  %v257 = vld [vmem:[%s1 + $0x3f8] sm:$0xff]
  %v258 = vld [vmem:[%s1 + $0x400] sm:$0xff]
  %v259 = vld [vmem:[%s1 + $0x408] sm:$0xff]
  %v260 = vld [vmem:[%s1 + $0x410] sm:$0xff]
  %v261 = vld [vmem:[%s1 + $0x418] sm:$0xff]
  %v262 = vld [vmem:[%s1 + $0x420] sm:$0xff]
  %v263 = vld [vmem:[%s1 + $0x428] sm:$0xff]
  %v264 = vld [vmem:[%s1 + $0x430] sm:$0xff]
  %v265 = vld [vmem:[%s1 + $0x438] sm:$0xff]
  %v266 = vld [vmem:[%s1 + $0x440] sm:$0xff]
  %v267 = vld [vmem:[%s1 + $0x448] sm:$0xff]
  %v268 = vld [vmem:[%s1 + $0x450] sm:$0xff]
  %v269 = vld [vmem:[%s1 + $0x458] sm:$0xff]
  %v270 = vld [vmem:[%s1 + $0x460] sm:$0xff]
  %v271 = vld [vmem:[%s1 + $0x468] sm:$0xff]
  %v272 = vld [vmem:[%s1 + $0x470] sm:$0xff]
  %v273 = vld [vmem:[%s1 + $0x478] sm:$0xff]
  %v274 = vld [vmem:[%s1 + $0x480] sm:$0xff]
  %v275 = vld [vmem:[%s1 + $0x488] sm:$0xff]
  %v276 = vld [vmem:[%s1 + $0x490] sm:$0xff]
  %v277 = vld [vmem:[%s1 + $0x498] sm:$0xff]
  %v278 = vld [vmem:[%s1 + $0x4a0] sm:$0xff]
  %v279 = vld [vmem:[%s1 + $0x4a8] sm:$0xff]
  %v280 = vld [vmem:[%s1 + $0x4b0] sm:$0xff]
  %v281 = vld [vmem:[%s1 + $0x4b8] sm:$0xff]
  %v282 = vld [vmem:[%s1 + $0x4c0] sm:$0xff]
  %v283 = vld [vmem:[%s1 + $0x4c8] sm:$0xff]
  %v284 = vld [vmem:[%s1 + $0x4d0] sm:$0xff]
  %v285 = vld [vmem:[%s1 + $0x4d8] sm:$0xff]
  %v286 = vld [vmem:[%s1 + $0x4e0] sm:$0xff]
  %v287 = vld [vmem:[%s1 + $0x4e8] sm:$0xff]
  %v288 = vld [vmem:[%s1 + $0x4f0] sm:$0xff]
  %v289 = vld [vmem:[%s1 + $0x4f8] sm:$0xff]
  %v290 = vld [vmem:[%s1 + $0x500] sm:$0xff]
  %v291 = vld [vmem:[%s1 + $0x508] sm:$0xff]
  %v292 = vld [vmem:[%s1 + $0x510] sm:$0xff]
  %v293 = vld [vmem:[%s1 + $0x518] sm:$0xff]
  %v294 = vld [vmem:[%s1 + $0x520] sm:$0xff]
  %v295 = vld [vmem:[%s1 + $0x528] sm:$0xff]
  %v296 = vld [vmem:[%s1 + $0x530] sm:$0xff]
  %v297 = vld [vmem:[%s1 + $0x538] sm:$0xff]
  %v298 = vld [vmem:[%s1 + $0x540] sm:$0xff]
  %v299 = vld [vmem:[%s1 + $0x548] sm:$0xff]
  %v300 = vld [vmem:[%s1 + $0x550] sm:$0xff]
  %v301 = vld [vmem:[%s1 + $0x558] sm:$0xff]
  %v302 = vld [vmem:[%s1 + $0x560] sm:$0xff]
  %v303 = vld [vmem:[%s1 + $0x568] sm:$0xff]
  %v304 = vld [vmem:[%s1 + $0x570] sm:$0xff]
  %v305 = vld [vmem:[%s1 + $0x578] sm:$0xff]
  %v306 = vld [vmem:[%s1 + $0x580] sm:$0xff]
  %v307 = vld [vmem:[%s1 + $0x588] sm:$0xff]
  %v308 = vld [vmem:[%s1 + $0x590] sm:$0xff]
  %v309 = vld [vmem:[%s1 + $0x598] sm:$0xff]
  %v310 = vld [vmem:[%s1 + $0x5a0] sm:$0xff]
  %v311 = vld [vmem:[%s1 + $0x5a8] sm:$0xff]
  %v312 = vld [vmem:[%s1 + $0x5b0] sm:$0xff]
  %v313 = vld [vmem:[%s1 + $0x5b8] sm:$0xff]
  %v314 = vld [vmem:[%s1 + $0x5c0] sm:$0xff]
  %v315 = vld [vmem:[%s1 + $0x5c8] sm:$0xff]
  %v316 = vld [vmem:[%s1 + $0x5d0] sm:$0xff]
  %v317 = vld [vmem:[%s1 + $0x5d8] sm:$0xff]
  %v318 = vld [vmem:[%s1 + $0x5e0] sm:$0xff]
  %v319 = vld [vmem:[%s1 + $0x5e8] sm:$0xff]
  %v320 = vld [vmem:[%s1 + $0x5f0] sm:$0xff]
  %v321 = vld [vmem:[%s1 + $0x5f8] sm:$0xff]
  %v322 = vld [vmem:[%s1 + $0x600] sm:$0xff]
  %v323 = vld [vmem:[%s1 + $0x608] sm:$0xff]
  %v324 = vld [vmem:[%s1 + $0x610] sm:$0xff]
  %v325 = vld [vmem:[%s1 + $0x618] sm:$0xff]
  %v326 = vld [vmem:[%s1 + $0x620] sm:$0xff]
  %v327 = vld [vmem:[%s1 + $0x628] sm:$0xff]
  %v328 = vld [vmem:[%s1 + $0x630] sm:$0xff]
  %v329 = vld [vmem:[%s1 + $0x638] sm:$0xff]
  %v330 = vld [vmem:[%s1 + $0x640] sm:$0xff]
  %v331 = vld [vmem:[%s1 + $0x648] sm:$0xff]
  %v332 = vld [vmem:[%s1 + $0x650] sm:$0xff]
  %v333 = vld [vmem:[%s1 + $0x658] sm:$0xff]
  %v334 = vld [vmem:[%s1 + $0x660] sm:$0xff]
  %v335 = vld [vmem:[%s1 + $0x668] sm:$0xff]
  %v336 = vld [vmem:[%s1 + $0x670] sm:$0xff]
  %v337 = vld [vmem:[%s1 + $0x678] sm:$0xff]
  %v338 = vld [vmem:[%s1 + $0x680] sm:$0xff]
  %v339 = vld [vmem:[%s1 + $0x688] sm:$0xff]
  %v340 = vld [vmem:[%s1 + $0x690] sm:$0xff]
  %v341 = vld [vmem:[%s1 + $0x698] sm:$0xff]
  %v342 = vld [vmem:[%s1 + $0x6a0] sm:$0xff]
  %v343 = vld [vmem:[%s1 + $0x6a8] sm:$0xff]
  %v344 = vld [vmem:[%s1 + $0x6b0] sm:$0xff]
  %v345 = vld [vmem:[%s1 + $0x6b8] sm:$0xff]
  %v346 = vld [vmem:[%s1 + $0x6c0] sm:$0xff]
  %v347 = vld [vmem:[%s1 + $0x6c8] sm:$0xff]
  %v348 = vld [vmem:[%s1 + $0x6d0] sm:$0xff]
  %v349 = vld [vmem:[%s1 + $0x6d8] sm:$0xff]
  %v350 = vld [vmem:[%s1 + $0x6e0] sm:$0xff]
  %v351 = vld [vmem:[%s1 + $0x6e8] sm:$0xff]
  %v352 = vld [vmem:[%s1 + $0x6f0] sm:$0xff]
  %v353 = vld [vmem:[%s1 + $0x6f8] sm:$0xff]
  %v354 = vld [vmem:[%s1 + $0x700] sm:$0xff]
  %v355 = vld [vmem:[%s1 + $0x708] sm:$0xff]
  %v356 = vld [vmem:[%s1 + $0x710] sm:$0xff]
  %v357 = vld [vmem:[%s1 + $0x718] sm:$0xff]
  %v358 = vld [vmem:[%s1 + $0x720] sm:$0xff]
  %v359 = vld [vmem:[%s1 + $0x728] sm:$0xff]
  %v360 = vld [vmem:[%s1 + $0x730] sm:$0xff]
  %v361 = vld [vmem:[%s1 + $0x738] sm:$0xff]
  %v362 = vld [vmem:[%s1 + $0x740] sm:$0xff]
  %v363 = vld [vmem:[%s1 + $0x748] sm:$0xff]
  %v364 = vld [vmem:[%s1 + $0x750] sm:$0xff]
  %v365 = vld [vmem:[%s1 + $0x758] sm:$0xff]
  %v366 = vld [vmem:[%s1 + $0x760] sm:$0xff]
  %v367 = vld [vmem:[%s1 + $0x768] sm:$0xff]
  %v368 = vld [vmem:[%s1 + $0x770] sm:$0xff]
  %v369 = vld [vmem:[%s1 + $0x778] sm:$0xff]
  %v370 = vld [vmem:[%s1 + $0x780] sm:$0xff]
  %v371 = vld [vmem:[%s1 + $0x788] sm:$0xff]
  %v372 = vld [vmem:[%s1 + $0x790] sm:$0xff]
  %v373 = vld [vmem:[%s1 + $0x798] sm:$0xff]
  %v374 = vld [vmem:[%s1 + $0x7a0] sm:$0xff]
  %v375 = vld [vmem:[%s1 + $0x7a8] sm:$0xff]
  %v376 = vld [vmem:[%s1 + $0x7b0] sm:$0xff]
  %v377 = vld [vmem:[%s1 + $0x7b8] sm:$0xff]
  %v378 = vld [vmem:[%s1 + $0x7c0] sm:$0xff]
  %v379 = vld [vmem:[%s1 + $0x7c8] sm:$0xff]
  %v380 = vld [vmem:[%s1 + $0x7d0] sm:$0xff]
  %v381 = vld [vmem:[%s1 + $0x7d8] sm:$0xff]
  %v382 = vld [vmem:[%s1 + $0x7e0] sm:$0xff]
  %v383 = vld [vmem:[%s1 + $0x7e8] sm:$0xff]
  %v384 = vld [vmem:[%s1 + $0x7f0] sm:$0xff]
  %v385 = vld [vmem:[%s1 + $0x7f8] sm:$0xff]
  %v386 = vld [vmem:[%s3] sm:$0xf]
  %v388 = vlaneseq
  %v389 = vshrl.u32 %v388, 7
  %v390 = vsub.s32 0, %v389
  %v391 = vrot.slane %v386, %v390
  %v392 = vlaneseq
  %v393 = vshrl.u32 %v392, 7
  %v394 = vsub.s32 1, %v393
  %v395 = vrot.slane %v386, %v394
  %v396 = vlaneseq
  %v397 = vshrl.u32 %v396, 7
  %v398 = vsub.s32 2, %v397
  %v399 = vrot.slane %v386, %v398
  %v400 = vlaneseq
  %v401 = vshrl.u32 %v400, 7
  %v402 = vsub.s32 3, %v401
  %v403 = vrot.slane %v386, %v402
  %408 = vmatprep.subr.mxu0 %v191
  %409 = vmatpush1.msra.mxu0 %v190
  %410 = vmatprep.subr.mxu0 %v187
  %411 = vmatpush1.msra.mxu0 %v186
  %412 = vmatprep.subr.mxu0 %v183
  %413 = vmatpush1.msra.mxu0 %v182
  %414 = vmatprep.subr.mxu0 %v179
  %415 = vmatpush1.msra.mxu0 %v178
  %416 = vmatprep.subr.mxu0 %v175
  %417 = vmatpush1.msra.mxu0 %v174
  %418 = vmatprep.subr.mxu0 %v171
  %419 = vmatpush1.msra.mxu0 %v170
  %420 = vmatprep.subr.mxu0 %v167
  %421 = vmatpush1.msra.mxu0 %v166
  %422 = vmatprep.subr.mxu0 %v163
  %423 = vmatpush1.msra.mxu0 %v162
  %424 = vmatprep.subr.mxu0 %v159
  %425 = vmatpush1.msra.mxu0 %v158
  %426 = vmatprep.subr.mxu0 %v155
  %427 = vmatpush1.msra.mxu0 %v154
  %428 = vmatprep.subr.mxu0 %v151
  %429 = vmatpush1.msra.mxu0 %v150
  %430 = vmatprep.subr.mxu0 %v147
  %431 = vmatpush1.msra.mxu0 %v146
  %432 = vmatprep.subr.mxu0 %v143
  %433 = vmatpush1.msra.mxu0 %v142
  %434 = vmatprep.subr.mxu0 %v139
  %435 = vmatpush1.msra.mxu0 %v138
  %436 = vmatprep.subr.mxu0 %v135
  %437 = vmatpush1.msra.mxu0 %v134
  %438 = vmatprep.subr.mxu0 %v131
  %439 = vmatpush1.msra.mxu0 %v130
  %440 = vmatprep.subr.mxu0 %v255
  %441 = vmatpush2.msra.mxu0 %v254
  %442 = vmatprep.subr.mxu0 %v251
  %443 = vmatpush2.msra.mxu0 %v250
  %444 = vmatprep.subr.mxu0 %v247
  %445 = vmatpush2.msra.mxu0 %v246
  %446 = vmatprep.subr.mxu0 %v243
  %447 = vmatpush2.msra.mxu0 %v242
  %448 = vmatprep.subr.mxu0 %v239
  %449 = vmatpush2.msra.mxu0 %v238
  %450 = vmatprep.subr.mxu0 %v235
  %451 = vmatpush2.msra.mxu0 %v234
  %452 = vmatprep.subr.mxu0 %v231
  %453 = vmatpush2.msra.mxu0 %v230
  %454 = vmatprep.subr.mxu0 %v227
  %455 = vmatpush2.msra.mxu0 %v226
  %456 = vmatprep.subr.mxu0 %v223
  %457 = vmatpush2.msra.mxu0 %v222
  %458 = vmatprep.subr.mxu0 %v219
  %459 = vmatpush2.msra.mxu0 %v218
  %460 = vmatprep.subr.mxu0 %v215
  %461 = vmatpush2.msra.mxu0 %v214
  %462 = vmatprep.subr.mxu0 %v211
  %463 = vmatpush2.msra.mxu0 %v210
  %464 = vmatprep.subr.mxu0 %v207
  %465 = vmatpush2.msra.mxu0 %v206
  %466 = vmatprep.subr.mxu0 %v203
  %467 = vmatpush2.msra.mxu0 %v202
  %468 = vmatprep.subr.mxu0 %v199
  %469 = vmatpush2.msra.mxu0 %v198
  %470 = vmatprep.subr.mxu0 %v195
  %471 = vmatpush2.msra.mxu0 %v194
  %472 = vmatprep.mubr.f32.mxu0 %v99
  %473 = vmatmul.mubr.f32.gmra.mxu0 %v98
  %v474 = vpop.f32.mrf.mxu0
  %v475 = vadd.f32 %v391, %v474
  %v476 = vpop.f32.mrf.mxu0
  %v477 = vadd.f32 %v395, %v476
  %478 = vmatprep.mubr.f32.mxu0 %v103
  %479 = vmatmul.mubr.f32.gmra.mxu0 %v102
  %v480 = vpop.f32.mrf.mxu0
  %v481 = vadd.f32 %v391, %v480
  %v482 = vpop.f32.mrf.mxu0
  %v483 = vadd.f32 %v395, %v482
  %484 = vmatprep.mubr.f32.mxu0 %v107
  %485 = vmatmul.mubr.f32.gmra.mxu0 %v106
  %v486 = vpop.f32.mrf.mxu0
  %v487 = vadd.f32 %v391, %v486
  %v488 = vpop.f32.mrf.mxu0
  %v489 = vadd.f32 %v395, %v488
  %490 = vmatprep.mubr.f32.mxu0 %v111
  %491 = vmatmul.mubr.f32.gmra.mxu0 %v110
  %v492 = vpop.f32.mrf.mxu0
  %v493 = vadd.f32 %v391, %v492
  %v494 = vpop.f32.mrf.mxu0
  %v495 = vadd.f32 %v395, %v494
  %496 = vmatprep.mubr.f32.mxu0 %v115
  %497 = vmatmul.mubr.f32.gmra.mxu0 %v114
  %v498 = vpop.f32.mrf.mxu0
  %v499 = vadd.f32 %v391, %v498
  %v500 = vpop.f32.mrf.mxu0
  %v501 = vadd.f32 %v395, %v500
  %502 = vmatprep.mubr.f32.mxu0 %v119
  %503 = vmatmul.mubr.f32.gmra.mxu0 %v118
  %v504 = vpop.f32.mrf.mxu0
  %v505 = vadd.f32 %v391, %v504
  %v506 = vpop.f32.mrf.mxu0
  %v507 = vadd.f32 %v395, %v506
  %508 = vmatprep.mubr.f32.mxu0 %v123
  %509 = vmatmul.mubr.f32.gmra.mxu0 %v122
  %v510 = vpop.f32.mrf.mxu0
  %v511 = vadd.f32 %v391, %v510
  %v512 = vpop.f32.mrf.mxu0
  %v513 = vadd.f32 %v395, %v512
  %514 = vmatprep.mubr.f32.mxu0 %v127
  %515 = vmatmul.mubr.f32.gmra.mxu0 %v126
  %v516 = vpop.f32.mrf.mxu0
  %v517 = vadd.f32 %v391, %v516
  %v518 = vpop.f32.mrf.mxu0
  %v519 = vadd.f32 %v395, %v518
  %520 = vdwg.mxu0
  %521 = vmatprep.subr.mxu0 %v319
  %522 = vmatpush1.msra.mxu0 %v318
  %523 = vmatprep.subr.mxu0 %v315
  %524 = vmatpush1.msra.mxu0 %v314
  %525 = vmatprep.subr.mxu0 %v311
  %526 = vmatpush1.msra.mxu0 %v310
  %527 = vmatprep.subr.mxu0 %v307
  %528 = vmatpush1.msra.mxu0 %v306
  %529 = vmatprep.subr.mxu0 %v303
  %530 = vmatpush1.msra.mxu0 %v302
  %531 = vmatprep.subr.mxu0 %v299
  %532 = vmatpush1.msra.mxu0 %v298
  %533 = vmatprep.subr.mxu0 %v295
  %534 = vmatpush1.msra.mxu0 %v294
  %535 = vmatprep.subr.mxu0 %v291
  %536 = vmatpush1.msra.mxu0 %v290
  %537 = vmatprep.subr.mxu0 %v287
  %538 = vmatpush1.msra.mxu0 %v286
  %539 = vmatprep.subr.mxu0 %v283
  %540 = vmatpush1.msra.mxu0 %v282
  %541 = vmatprep.subr.mxu0 %v279
  %542 = vmatpush1.msra.mxu0 %v278
  %543 = vmatprep.subr.mxu0 %v275
  %544 = vmatpush1.msra.mxu0 %v274
  %545 = vmatprep.subr.mxu0 %v271
  %546 = vmatpush1.msra.mxu0 %v270
  %547 = vmatprep.subr.mxu0 %v267
  %548 = vmatpush1.msra.mxu0 %v266
  %549 = vmatprep.subr.mxu0 %v263
  %550 = vmatpush1.msra.mxu0 %v262
  %551 = vmatprep.subr.mxu0 %v259
  %552 = vmatpush1.msra.mxu0 %v258
  %553 = vmatprep.subr.mxu0 %v383
  %554 = vmatpush2.msra.mxu0 %v382
  %555 = vmatprep.subr.mxu0 %v379
  %556 = vmatpush2.msra.mxu0 %v378
  %557 = vmatprep.subr.mxu0 %v375
  %558 = vmatpush2.msra.mxu0 %v374
  %559 = vmatprep.subr.mxu0 %v371
  %560 = vmatpush2.msra.mxu0 %v370
  %561 = vmatprep.subr.mxu0 %v367
  %562 = vmatpush2.msra.mxu0 %v366
  %563 = vmatprep.subr.mxu0 %v363
  %564 = vmatpush2.msra.mxu0 %v362
  %565 = vmatprep.subr.mxu0 %v359
  %566 = vmatpush2.msra.mxu0 %v358
  %567 = vmatprep.subr.mxu0 %v355
  %568 = vmatpush2.msra.mxu0 %v354
  %569 = vmatprep.subr.mxu0 %v351
  %570 = vmatpush2.msra.mxu0 %v350
  %571 = vmatprep.subr.mxu0 %v347
  %572 = vmatpush2.msra.mxu0 %v346
  %573 = vmatprep.subr.mxu0 %v343
  %574 = vmatpush2.msra.mxu0 %v342
  %575 = vmatprep.subr.mxu0 %v339
  %576 = vmatpush2.msra.mxu0 %v338
  %577 = vmatprep.subr.mxu0 %v335
  %578 = vmatpush2.msra.mxu0 %v334
  %579 = vmatprep.subr.mxu0 %v331
  %580 = vmatpush2.msra.mxu0 %v330
  %581 = vmatprep.subr.mxu0 %v327
  %582 = vmatpush2.msra.mxu0 %v326
  %583 = vmatprep.subr.mxu0 %v323
  %584 = vmatpush2.msra.mxu0 %v322
  %585 = vmatprep.mubr.f32.mxu0 %v101
  %586 = vmatmul.mubr.f32.gmra.mxu0 %v100
  %v587 = vpop.f32.mrf.mxu0
  %v588 = vadd.f32 %v475, %v587
  %v589 = vpop.f32.mrf.mxu0
  %v590 = vadd.f32 %v477, %v589
  %591 = vmatprep.mubr.f32.mxu0 %v105
  %592 = vmatmul.mubr.f32.gmra.mxu0 %v104
  %v593 = vpop.f32.mrf.mxu0
  %v594 = vadd.f32 %v481, %v593
  %v595 = vpop.f32.mrf.mxu0
  %v596 = vadd.f32 %v483, %v595
  %597 = vmatprep.mubr.f32.mxu0 %v109
  %598 = vmatmul.mubr.f32.gmra.mxu0 %v108
  %v599 = vpop.f32.mrf.mxu0
  %v600 = vadd.f32 %v487, %v599
  %v601 = vpop.f32.mrf.mxu0
  %v602 = vadd.f32 %v489, %v601
  %603 = vmatprep.mubr.f32.mxu0 %v113
  %604 = vmatmul.mubr.f32.gmra.mxu0 %v112
  %v605 = vpop.f32.mrf.mxu0
  %v606 = vadd.f32 %v493, %v605
  %v607 = vpop.f32.mrf.mxu0
  %v608 = vadd.f32 %v495, %v607
  %609 = vmatprep.mubr.f32.mxu0 %v117
  %610 = vmatmul.mubr.f32.gmra.mxu0 %v116
  %v611 = vpop.f32.mrf.mxu0
  %v612 = vadd.f32 %v499, %v611
  %v613 = vpop.f32.mrf.mxu0
  %v614 = vadd.f32 %v501, %v613
  %615 = vmatprep.mubr.f32.mxu0 %v121
  %616 = vmatmul.mubr.f32.gmra.mxu0 %v120
  %v617 = vpop.f32.mrf.mxu0
  %v618 = vadd.f32 %v505, %v617
  %v619 = vpop.f32.mrf.mxu0
  %v620 = vadd.f32 %v507, %v619
  %621 = vmatprep.mubr.f32.mxu0 %v125
  %622 = vmatmul.mubr.f32.gmra.mxu0 %v124
  %v623 = vpop.f32.mrf.mxu0
  %v624 = vadd.f32 %v511, %v623
  %v625 = vpop.f32.mrf.mxu0
  %v626 = vadd.f32 %v513, %v625
  %627 = vmatprep.mubr.f32.mxu0 %v129
  %628 = vmatmul.mubr.f32.gmra.mxu0 %v128
  %v629 = vpop.f32.mrf.mxu0
  %v630 = vadd.f32 %v517, %v629
  %v631 = vpop.f32.mrf.mxu0
  %v632 = vadd.f32 %v519, %v631
  %633 = vdwg.mxu0
  %634 = vmatprep.subr.mxu0 %v193
  %635 = vmatpush1.msra.mxu0 %v192
  %636 = vmatprep.subr.mxu0 %v189
  %637 = vmatpush1.msra.mxu0 %v188
  %638 = vmatprep.subr.mxu0 %v185
  %639 = vmatpush1.msra.mxu0 %v184
  %640 = vmatprep.subr.mxu0 %v181
  %641 = vmatpush1.msra.mxu0 %v180
  %642 = vmatprep.subr.mxu0 %v177
  %643 = vmatpush1.msra.mxu0 %v176
  %644 = vmatprep.subr.mxu0 %v173
  %645 = vmatpush1.msra.mxu0 %v172
  %646 = vmatprep.subr.mxu0 %v169
  %647 = vmatpush1.msra.mxu0 %v168
  %648 = vmatprep.subr.mxu0 %v165
  %649 = vmatpush1.msra.mxu0 %v164
  %650 = vmatprep.subr.mxu0 %v161
  %651 = vmatpush1.msra.mxu0 %v160
  %652 = vmatprep.subr.mxu0 %v157
  %653 = vmatpush1.msra.mxu0 %v156
  %654 = vmatprep.subr.mxu0 %v153
  %655 = vmatpush1.msra.mxu0 %v152
  %656 = vmatprep.subr.mxu0 %v149
  %657 = vmatpush1.msra.mxu0 %v148
  %658 = vmatprep.subr.mxu0 %v145
  %659 = vmatpush1.msra.mxu0 %v144
  %660 = vmatprep.subr.mxu0 %v141
  %661 = vmatpush1.msra.mxu0 %v140
  %662 = vmatprep.subr.mxu0 %v137
  %663 = vmatpush1.msra.mxu0 %v136
  %664 = vmatprep.subr.mxu0 %v133
  %665 = vmatpush1.msra.mxu0 %v132
  %666 = vmatprep.subr.mxu0 %v257
  %667 = vmatpush2.msra.mxu0 %v256
  %668 = vmatprep.subr.mxu0 %v253
  %669 = vmatpush2.msra.mxu0 %v252
  %670 = vmatprep.subr.mxu0 %v249
  %671 = vmatpush2.msra.mxu0 %v248
  %672 = vmatprep.subr.mxu0 %v245
  %673 = vmatpush2.msra.mxu0 %v244
  %674 = vmatprep.subr.mxu0 %v241
  %675 = vmatpush2.msra.mxu0 %v240
  %676 = vmatprep.subr.mxu0 %v237
  %677 = vmatpush2.msra.mxu0 %v236
  %678 = vmatprep.subr.mxu0 %v233
  %679 = vmatpush2.msra.mxu0 %v232
  %680 = vmatprep.subr.mxu0 %v229
  %681 = vmatpush2.msra.mxu0 %v228
  %682 = vmatprep.subr.mxu0 %v225
  %683 = vmatpush2.msra.mxu0 %v224
  %684 = vmatprep.subr.mxu0 %v221
  %685 = vmatpush2.msra.mxu0 %v220
  %686 = vmatprep.subr.mxu0 %v217
  %687 = vmatpush2.msra.mxu0 %v216
  %688 = vmatprep.subr.mxu0 %v213
  %689 = vmatpush2.msra.mxu0 %v212
  %690 = vmatprep.subr.mxu0 %v209
  %691 = vmatpush2.msra.mxu0 %v208
  %692 = vmatprep.subr.mxu0 %v205
  %693 = vmatpush2.msra.mxu0 %v204
  %694 = vmatprep.subr.mxu0 %v201
  %695 = vmatpush2.msra.mxu0 %v200
  %696 = vmatprep.subr.mxu0 %v197
  %697 = vmatpush2.msra.mxu0 %v196
  %698 = vmatprep.mubr.f32.mxu0 %v99
  %699 = vmatmul.mubr.f32.gmra.mxu0 %v98
  %v700 = vpop.f32.mrf.mxu0
  %v701 = vadd.f32 %v399, %v700
  %v702 = vpop.f32.mrf.mxu0
  %v703 = vadd.f32 %v403, %v702
  %704 = vmatprep.mubr.f32.mxu0 %v103
  %705 = vmatmul.mubr.f32.gmra.mxu0 %v102
  %v706 = vpop.f32.mrf.mxu0
  %v707 = vadd.f32 %v399, %v706
  %v708 = vpop.f32.mrf.mxu0
  %v709 = vadd.f32 %v403, %v708
  %710 = vmatprep.mubr.f32.mxu0 %v107
  %711 = vmatmul.mubr.f32.gmra.mxu0 %v106
  %v712 = vpop.f32.mrf.mxu0
  %v713 = vadd.f32 %v399, %v712
  %v714 = vpop.f32.mrf.mxu0
  %v715 = vadd.f32 %v403, %v714
  %716 = vmatprep.mubr.f32.mxu0 %v111
  %717 = vmatmul.mubr.f32.gmra.mxu0 %v110
  %v718 = vpop.f32.mrf.mxu0
  %v719 = vadd.f32 %v399, %v718
  %v720 = vpop.f32.mrf.mxu0
  %v721 = vadd.f32 %v403, %v720
  %722 = vmatprep.mubr.f32.mxu0 %v115
  %723 = vmatmul.mubr.f32.gmra.mxu0 %v114
  %v724 = vpop.f32.mrf.mxu0
  %v725 = vadd.f32 %v399, %v724
  %v726 = vpop.f32.mrf.mxu0
  %v727 = vadd.f32 %v403, %v726
  %728 = vmatprep.mubr.f32.mxu0 %v119
  %729 = vmatmul.mubr.f32.gmra.mxu0 %v118
  %v730 = vpop.f32.mrf.mxu0
  %v731 = vadd.f32 %v399, %v730
  %v732 = vpop.f32.mrf.mxu0
  %v733 = vadd.f32 %v403, %v732
  %734 = vmatprep.mubr.f32.mxu0 %v123
  %735 = vmatmul.mubr.f32.gmra.mxu0 %v122
  %v736 = vpop.f32.mrf.mxu0
  %v737 = vadd.f32 %v399, %v736
  %v738 = vpop.f32.mrf.mxu0
  %v739 = vadd.f32 %v403, %v738
  %740 = vmatprep.mubr.f32.mxu0 %v127
  %741 = vmatmul.mubr.f32.gmra.mxu0 %v126
  %v742 = vpop.f32.mrf.mxu0
  %v743 = vadd.f32 %v399, %v742
  %v744 = vpop.f32.mrf.mxu0
  %v745 = vadd.f32 %v403, %v744
  %746 = vdwg.mxu0
  %747 = vmatprep.subr.mxu0 %v321
  %748 = vmatpush1.msra.mxu0 %v320
  %749 = vmatprep.subr.mxu0 %v317
  %750 = vmatpush1.msra.mxu0 %v316
  %751 = vmatprep.subr.mxu0 %v313
  %752 = vmatpush1.msra.mxu0 %v312
  %753 = vmatprep.subr.mxu0 %v309
  %754 = vmatpush1.msra.mxu0 %v308
  %755 = vmatprep.subr.mxu0 %v305
  %756 = vmatpush1.msra.mxu0 %v304
  %757 = vmatprep.subr.mxu0 %v301
  %758 = vmatpush1.msra.mxu0 %v300
  %759 = vmatprep.subr.mxu0 %v297
  %760 = vmatpush1.msra.mxu0 %v296
  %761 = vmatprep.subr.mxu0 %v293
  %762 = vmatpush1.msra.mxu0 %v292
  %763 = vmatprep.subr.mxu0 %v289
  %764 = vmatpush1.msra.mxu0 %v288
  %765 = vmatprep.subr.mxu0 %v285
  %766 = vmatpush1.msra.mxu0 %v284
  %767 = vmatprep.subr.mxu0 %v281
  %768 = vmatpush1.msra.mxu0 %v280
  %769 = vmatprep.subr.mxu0 %v277
  %770 = vmatpush1.msra.mxu0 %v276
  %771 = vmatprep.subr.mxu0 %v273
  %772 = vmatpush1.msra.mxu0 %v272
  %773 = vmatprep.subr.mxu0 %v269
  %774 = vmatpush1.msra.mxu0 %v268
  %775 = vmatprep.subr.mxu0 %v265
  %776 = vmatpush1.msra.mxu0 %v264
  %777 = vmatprep.subr.mxu0 %v261
  %778 = vmatpush1.msra.mxu0 %v260
  %779 = vmatprep.subr.mxu0 %v385
  %780 = vmatpush2.msra.mxu0 %v384
  %781 = vmatprep.subr.mxu0 %v381
  %782 = vmatpush2.msra.mxu0 %v380
  %783 = vmatprep.subr.mxu0 %v377
  %784 = vmatpush2.msra.mxu0 %v376
  %785 = vmatprep.subr.mxu0 %v373
  %786 = vmatpush2.msra.mxu0 %v372
  %787 = vmatprep.subr.mxu0 %v369
  %788 = vmatpush2.msra.mxu0 %v368
  %789 = vmatprep.subr.mxu0 %v365
  %790 = vmatpush2.msra.mxu0 %v364
  %791 = vmatprep.subr.mxu0 %v361
  %792 = vmatpush2.msra.mxu0 %v360
  %793 = vmatprep.subr.mxu0 %v357
  %794 = vmatpush2.msra.mxu0 %v356
  %795 = vmatprep.subr.mxu0 %v353
  %796 = vmatpush2.msra.mxu0 %v352
  %797 = vmatprep.subr.mxu0 %v349
  %798 = vmatpush2.msra.mxu0 %v348
  %799 = vmatprep.subr.mxu0 %v345
  %800 = vmatpush2.msra.mxu0 %v344
  %801 = vmatprep.subr.mxu0 %v341
  %802 = vmatpush2.msra.mxu0 %v340
  %803 = vmatprep.subr.mxu0 %v337
  %804 = vmatpush2.msra.mxu0 %v336
  %805 = vmatprep.subr.mxu0 %v333
  %806 = vmatpush2.msra.mxu0 %v332
  %807 = vmatprep.subr.mxu0 %v329
  %808 = vmatpush2.msra.mxu0 %v328
  %809 = vmatprep.subr.mxu0 %v325
  %810 = vmatpush2.msra.mxu0 %v324
  %811 = vmatprep.mubr.f32.mxu0 %v101
  %812 = vmatmul.mubr.f32.gmra.mxu0 %v100
  %v813 = vpop.f32.mrf.mxu0
  %v814 = vadd.f32 %v701, %v813
  %v815 = vpop.f32.mrf.mxu0
  %v816 = vadd.f32 %v703, %v815
  %817 = vmatprep.mubr.f32.mxu0 %v105
  %818 = vmatmul.mubr.f32.gmra.mxu0 %v104
  %v819 = vpop.f32.mrf.mxu0
  %v820 = vadd.f32 %v707, %v819
  %v821 = vpop.f32.mrf.mxu0
  %v822 = vadd.f32 %v709, %v821
  %823 = vmatprep.mubr.f32.mxu0 %v109
  %824 = vmatmul.mubr.f32.gmra.mxu0 %v108
  %v825 = vpop.f32.mrf.mxu0
  %v826 = vadd.f32 %v713, %v825
  %v827 = vpop.f32.mrf.mxu0
  %v828 = vadd.f32 %v715, %v827
  %829 = vmatprep.mubr.f32.mxu0 %v113
  %830 = vmatmul.mubr.f32.gmra.mxu0 %v112
  %v831 = vpop.f32.mrf.mxu0
  %v832 = vadd.f32 %v719, %v831
  %v833 = vpop.f32.mrf.mxu0
  %v834 = vadd.f32 %v721, %v833
  %835 = vmatprep.mubr.f32.mxu0 %v117
  %836 = vmatmul.mubr.f32.gmra.mxu0 %v116
  %v837 = vpop.f32.mrf.mxu0
  %v838 = vadd.f32 %v725, %v837
  %v839 = vpop.f32.mrf.mxu0
  %v840 = vadd.f32 %v727, %v839
  %841 = vmatprep.mubr.f32.mxu0 %v121
  %842 = vmatmul.mubr.f32.gmra.mxu0 %v120
  %v843 = vpop.f32.mrf.mxu0
  %v844 = vadd.f32 %v731, %v843
  %v845 = vpop.f32.mrf.mxu0
  %v846 = vadd.f32 %v733, %v845
  %847 = vmatprep.mubr.f32.mxu0 %v125
  %848 = vmatmul.mubr.f32.gmra.mxu0 %v124
  %v849 = vpop.f32.mrf.mxu0
  %v850 = vadd.f32 %v737, %v849
  %v851 = vpop.f32.mrf.mxu0
  %v852 = vadd.f32 %v739, %v851
  %853 = vmatprep.mubr.f32.mxu0 %v129
  %854 = vmatmul.mubr.f32.gmra.mxu0 %v128
  %v855 = vpop.f32.mrf.mxu0
  %v856 = vadd.f32 %v743, %v855
  %v857 = vpop.f32.mrf.mxu0
  %v858 = vadd.f32 %v745, %v857
  %859 = vdwg.mxu0
  %860 = vst [vmem:[#allocation2] sm:$0xff] %v588
  %861 = vst [vmem:[#allocation2 + $0x8] sm:$0xff] %v590
  %862 = vst [vmem:[#allocation2 + $0x10] sm:$0xff] %v814
  %863 = vst [vmem:[#allocation2 + $0x18] sm:$0xff] %v816
  %864 = vst [vmem:[#allocation2 + $0x20] sm:$0xff] %v594
  %865 = vst [vmem:[#allocation2 + $0x28] sm:$0xff] %v596
  %866 = vst [vmem:[#allocation2 + $0x30] sm:$0xff] %v820
  %867 = vst [vmem:[#allocation2 + $0x38] sm:$0xff] %v822
  %868 = vst [vmem:[#allocation2 + $0x40] sm:$0xff] %v600
  %869 = vst [vmem:[#allocation2 + $0x48] sm:$0xff] %v602
  %870 = vst [vmem:[#allocation2 + $0x50] sm:$0xff] %v826
  %871 = vst [vmem:[#allocation2 + $0x58] sm:$0xff] %v828
  %872 = vst [vmem:[#allocation2 + $0x60] sm:$0xff] %v606
  %873 = vst [vmem:[#allocation2 + $0x68] sm:$0xff] %v608
  %874 = vst [vmem:[#allocation2 + $0x70] sm:$0xff] %v832
  %875 = vst [vmem:[#allocation2 + $0x78] sm:$0xff] %v834
  %876 = vst [vmem:[#allocation2 + $0x80] sm:$0xff] %v612
  %877 = vst [vmem:[#allocation2 + $0x88] sm:$0xff] %v614
  %878 = vst [vmem:[#allocation2 + $0x90] sm:$0xff] %v838
  %879 = vst [vmem:[#allocation2 + $0x98] sm:$0xff] %v840
  %880 = vst [vmem:[#allocation2 + $0xa0] sm:$0xff] %v618
  %881 = vst [vmem:[#allocation2 + $0xa8] sm:$0xff] %v620
  %882 = vst [vmem:[#allocation2 + $0xb0] sm:$0xff] %v844
  %883 = vst [vmem:[#allocation2 + $0xb8] sm:$0xff] %v846
  %884 = vst [vmem:[#allocation2 + $0xc0] sm:$0xff] %v624
  %885 = vst [vmem:[#allocation2 + $0xc8] sm:$0xff] %v626
  %886 = vst [vmem:[#allocation2 + $0xd0] sm:$0xff] %v850
  %887 = vst [vmem:[#allocation2 + $0xd8] sm:$0xff] %v852
  %888 = vst [vmem:[#allocation2 + $0xe0] sm:$0xff] %v630
  %889 = vst [vmem:[#allocation2 + $0xe8] sm:$0xff] %v632
  %890 = vst [vmem:[#allocation2 + $0xf0] sm:$0xff] %v856
  %891 = vst [vmem:[#allocation2 + $0xf8] sm:$0xff] %v858
  %892 = vst [vmem:[#allocation5] sm:$0xff] 0.0
  %893 = vst [vmem:[#allocation6] sm:$0xff] 0.0
  %s894 = smul.u32 0, 4
  %s895 = smul.addr %s894, 8
  %s896 = scalar_lea.vmem [#allocation2], %s895
  %v897 = vld [vmem:[%s896] sm:$0xff]
  %v898 = vld [vmem:[%s896 + $0x8] sm:$0xff]
  %v899 = vld [vmem:[%s896 + $0x10] sm:$0xff]
  %v900 = vld [vmem:[%s896 + $0x18] sm:$0xff]
  %s901 = smul.u32 7, 4
  %s902 = smul.addr %s901, 8
  %s903 = scalar_lea.vmem [#allocation2], %s902
  %v904 = vld [vmem:[%s903] sm:$0xff]
  %v905 = vld [vmem:[%s903 + $0x8] sm:$0xff]
  %v906 = vld [vmem:[%s903 + $0x10] sm:$0xff]
  %v907 = vld [vmem:[%s903 + $0x18] sm:$0xff]
  %v908 = vsel %vm94, %v897, %v904
  %v909 = vsel %vm95, %v898, %v905
  %v910 = vsel %vm96, %v899, %v906
  %v911 = vsel %vm97, %v900, %v907
  %v912 = vld [vmem:[#allocation5] sm:$0xff]
  %v913 = vld [vmem:[%s2] sm:$0xff]
  %v914 = vld [vmem:[%s2 + $0x8] sm:$0xff]
  %v915 = vld [vmem:[%s2 + $0x10] sm:$0xff]
  %v916 = vld [vmem:[%s2 + $0x18] sm:$0xff]
  %v917 = vld [vmem:[%s2 + $0x20] sm:$0xff]
  %v918 = vld [vmem:[%s2 + $0x28] sm:$0xff]
  %v919 = vld [vmem:[%s2 + $0x30] sm:$0xff]
  %v920 = vld [vmem:[%s2 + $0x38] sm:$0xff]
  %v921 = vld [vmem:[%s2 + $0x40] sm:$0xff]
  %v922 = vld [vmem:[%s2 + $0x48] sm:$0xff]
  %v923 = vld [vmem:[%s2 + $0x50] sm:$0xff]
  %v924 = vld [vmem:[%s2 + $0x58] sm:$0xff]
  %v925 = vld [vmem:[%s2 + $0x60] sm:$0xff]
  %v926 = vld [vmem:[%s2 + $0x68] sm:$0xff]
  %v927 = vld [vmem:[%s2 + $0x70] sm:$0xff]
  %v928 = vld [vmem:[%s2 + $0x78] sm:$0xff]
  %v929 = vld [vmem:[%s2 + $0x80] sm:$0xff]
  %v930 = vld [vmem:[%s2 + $0x88] sm:$0xff]
  %v931 = vld [vmem:[%s2 + $0x90] sm:$0xff]
  %v932 = vld [vmem:[%s2 + $0x98] sm:$0xff]
  %v933 = vld [vmem:[%s2 + $0xa0] sm:$0xff]
  %v934 = vld [vmem:[%s2 + $0xa8] sm:$0xff]
  %v935 = vld [vmem:[%s2 + $0xb0] sm:$0xff]
  %v936 = vld [vmem:[%s2 + $0xb8] sm:$0xff]
  %v937 = vld [vmem:[%s2 + $0xc0] sm:$0xff]
  %v938 = vld [vmem:[%s2 + $0xc8] sm:$0xff]
  %v939 = vld [vmem:[%s2 + $0xd0] sm:$0xff]
  %v940 = vld [vmem:[%s2 + $0xd8] sm:$0xff]
  %v941 = vld [vmem:[%s2 + $0xe0] sm:$0xff]
  %v942 = vld [vmem:[%s2 + $0xe8] sm:$0xff]
  %v943 = vld [vmem:[%s2 + $0xf0] sm:$0xff]
  %v944 = vld [vmem:[%s2 + $0xf8] sm:$0xff]
  %v945 = vld [vmem:[%s2 + $0x100] sm:$0xff]
  %v946 = vld [vmem:[%s2 + $0x108] sm:$0xff]
  %v947 = vld [vmem:[%s2 + $0x110] sm:$0xff]
  %v948 = vld [vmem:[%s2 + $0x118] sm:$0xff]
  %v949 = vld [vmem:[%s2 + $0x120] sm:$0xff]
  %v950 = vld [vmem:[%s2 + $0x128] sm:$0xff]
  %v951 = vld [vmem:[%s2 + $0x130] sm:$0xff]
  %v952 = vld [vmem:[%s2 + $0x138] sm:$0xff]
  %v953 = vld [vmem:[%s2 + $0x140] sm:$0xff]
  %v954 = vld [vmem:[%s2 + $0x148] sm:$0xff]
  %v955 = vld [vmem:[%s2 + $0x150] sm:$0xff]
  %v956 = vld [vmem:[%s2 + $0x158] sm:$0xff]
  %v957 = vld [vmem:[%s2 + $0x160] sm:$0xff]
  %v958 = vld [vmem:[%s2 + $0x168] sm:$0xff]
  %v959 = vld [vmem:[%s2 + $0x170] sm:$0xff]
  %v960 = vld [vmem:[%s2 + $0x178] sm:$0xff]
  %v961 = vld [vmem:[%s2 + $0x180] sm:$0xff]
  %v962 = vld [vmem:[%s2 + $0x188] sm:$0xff]
  %v963 = vld [vmem:[%s2 + $0x190] sm:$0xff]
  %v964 = vld [vmem:[%s2 + $0x198] sm:$0xff]
  %v965 = vld [vmem:[%s2 + $0x1a0] sm:$0xff]
  %v966 = vld [vmem:[%s2 + $0x1a8] sm:$0xff]
  %v967 = vld [vmem:[%s2 + $0x1b0] sm:$0xff]
  %v968 = vld [vmem:[%s2 + $0x1b8] sm:$0xff]
  %v969 = vld [vmem:[%s2 + $0x1c0] sm:$0xff]
  %v970 = vld [vmem:[%s2 + $0x1c8] sm:$0xff]
  %v971 = vld [vmem:[%s2 + $0x1d0] sm:$0xff]
  %v972 = vld [vmem:[%s2 + $0x1d8] sm:$0xff]
  %v973 = vld [vmem:[%s2 + $0x1e0] sm:$0xff]
  %v974 = vld [vmem:[%s2 + $0x1e8] sm:$0xff]
  %v975 = vld [vmem:[%s2 + $0x1f0] sm:$0xff]
  %v976 = vld [vmem:[%s2 + $0x1f8] sm:$0xff]
  %977 = vmatprep.subr.mxu0 %v974
  %978 = vmatpush1.msra.mxu0 %v973
  %979 = vmatprep.subr.mxu0 %v970
  %980 = vmatpush1.msra.mxu0 %v969
  %981 = vmatprep.subr.mxu0 %v966
  %982 = vmatpush1.msra.mxu0 %v965
  %983 = vmatprep.subr.mxu0 %v962
  %984 = vmatpush1.msra.mxu0 %v961
  %985 = vmatprep.subr.mxu0 %v958
  %986 = vmatpush1.msra.mxu0 %v957
  %987 = vmatprep.subr.mxu0 %v954
  %988 = vmatpush1.msra.mxu0 %v953
  %989 = vmatprep.subr.mxu0 %v950
  %990 = vmatpush1.msra.mxu0 %v949
  %991 = vmatprep.subr.mxu0 %v946
  %992 = vmatpush1.msra.mxu0 %v945
  %993 = vmatprep.subr.mxu0 %v942
  %994 = vmatpush1.msra.mxu0 %v941
  %995 = vmatprep.subr.mxu0 %v938
  %996 = vmatpush1.msra.mxu0 %v937
  %997 = vmatprep.subr.mxu0 %v934
  %998 = vmatpush1.msra.mxu0 %v933
  %999 = vmatprep.subr.mxu0 %v930
  %1000 = vmatpush1.msra.mxu0 %v929
  %1001 = vmatprep.subr.mxu0 %v926
  %1002 = vmatpush1.msra.mxu0 %v925
  %1003 = vmatprep.subr.mxu0 %v922
  %1004 = vmatpush1.msra.mxu0 %v921
  %1005 = vmatprep.subr.mxu0 %v918
  %1006 = vmatpush1.msra.mxu0 %v917
  %1007 = vmatprep.subr.mxu0 %v914
  %1008 = vmatpush1.msra.mxu0 %v913
  %1009 = vmatprep.subr.mxu0 0.0
  %1010 = vmatpush2.msra.mxu0 0.0
  %1011 = vmatprep.subr.mxu0 0.0
  %1012 = vmatpush2.msra.mxu0 0.0
  %1013 = vmatprep.subr.mxu0 0.0
  %1014 = vmatpush2.msra.mxu0 0.0
  %1015 = vmatprep.subr.mxu0 0.0
  %1016 = vmatpush2.msra.mxu0 0.0
  %1017 = vmatprep.subr.mxu0 0.0
  %1018 = vmatpush2.msra.mxu0 0.0
  %1019 = vmatprep.subr.mxu0 0.0
  %1020 = vmatpush2.msra.mxu0 0.0
  %1021 = vmatprep.subr.mxu0 0.0
  %1022 = vmatpush2.msra.mxu0 0.0
  %1023 = vmatprep.subr.mxu0 0.0
  %1024 = vmatpush2.msra.mxu0 0.0
  %1025 = vmatprep.subr.mxu0 0.0
  %1026 = vmatpush2.msra.mxu0 0.0
  %1027 = vmatprep.subr.mxu0 0.0
  %1028 = vmatpush2.msra.mxu0 0.0
  %1029 = vmatprep.subr.mxu0 0.0
  %1030 = vmatpush2.msra.mxu0 0.0
  %1031 = vmatprep.subr.mxu0 0.0
  %1032 = vmatpush2.msra.mxu0 0.0
  %1033 = vmatprep.subr.mxu0 0.0
  %1034 = vmatpush2.msra.mxu0 0.0
  %1035 = vmatprep.subr.mxu0 0.0
  %1036 = vmatpush2.msra.mxu0 0.0
  %1037 = vmatprep.subr.mxu0 0.0
  %1038 = vmatpush2.msra.mxu0 0.0
  %1039 = vmatprep.subr.mxu0 0.0
  %1040 = vmatpush2.msra.mxu0 0.0
  %1041 = vmatprep.mubr.f32.mxu0 0.0
  %1042 = vmatmul.mubr.f32.gmra.mxu0 %v912
  %v1043 = vpop.f32.mrf.mxu0
  %v1044 = vadd.f32 0.0, %v1043
  %v1045 = vpop.f32.mrf.mxu0
  %v1046 = vadd.f32 0.0, %v1045
  %1047 = vdwg.mxu0
  %1048 = vmatprep.subr.mxu0 %v976
  %1049 = vmatpush1.msra.mxu0 %v975
  %1050 = vmatprep.subr.mxu0 %v972
  %1051 = vmatpush1.msra.mxu0 %v971
  %1052 = vmatprep.subr.mxu0 %v968
  %1053 = vmatpush1.msra.mxu0 %v967
  %1054 = vmatprep.subr.mxu0 %v964
  %1055 = vmatpush1.msra.mxu0 %v963
  %1056 = vmatprep.subr.mxu0 %v960
  %1057 = vmatpush1.msra.mxu0 %v959
  %1058 = vmatprep.subr.mxu0 %v956
  %1059 = vmatpush1.msra.mxu0 %v955
  %1060 = vmatprep.subr.mxu0 %v952
  %1061 = vmatpush1.msra.mxu0 %v951
  %1062 = vmatprep.subr.mxu0 %v948
  %1063 = vmatpush1.msra.mxu0 %v947
  %1064 = vmatprep.subr.mxu0 %v944
  %1065 = vmatpush1.msra.mxu0 %v943
  %1066 = vmatprep.subr.mxu0 %v940
  %1067 = vmatpush1.msra.mxu0 %v939
  %1068 = vmatprep.subr.mxu0 %v936
  %1069 = vmatpush1.msra.mxu0 %v935
  %1070 = vmatprep.subr.mxu0 %v932
  %1071 = vmatpush1.msra.mxu0 %v931
  %1072 = vmatprep.subr.mxu0 %v928
  %1073 = vmatpush1.msra.mxu0 %v927
  %1074 = vmatprep.subr.mxu0 %v924
  %1075 = vmatpush1.msra.mxu0 %v923
  %1076 = vmatprep.subr.mxu0 %v920
  %1077 = vmatpush1.msra.mxu0 %v919
  %1078 = vmatprep.subr.mxu0 %v916
  %1079 = vmatpush1.msra.mxu0 %v915
  %1080 = vmatprep.subr.mxu0 0.0
  %1081 = vmatpush2.msra.mxu0 0.0
  %1082 = vmatprep.subr.mxu0 0.0
  %1083 = vmatpush2.msra.mxu0 0.0
  %1084 = vmatprep.subr.mxu0 0.0
  %1085 = vmatpush2.msra.mxu0 0.0
  %1086 = vmatprep.subr.mxu0 0.0
  %1087 = vmatpush2.msra.mxu0 0.0
  %1088 = vmatprep.subr.mxu0 0.0
  %1089 = vmatpush2.msra.mxu0 0.0
  %1090 = vmatprep.subr.mxu0 0.0
  %1091 = vmatpush2.msra.mxu0 0.0
  %1092 = vmatprep.subr.mxu0 0.0
  %1093 = vmatpush2.msra.mxu0 0.0
  %1094 = vmatprep.subr.mxu0 0.0
  %1095 = vmatpush2.msra.mxu0 0.0
  %1096 = vmatprep.subr.mxu0 0.0
  %1097 = vmatpush2.msra.mxu0 0.0
  %1098 = vmatprep.subr.mxu0 0.0
  %1099 = vmatpush2.msra.mxu0 0.0
  %1100 = vmatprep.subr.mxu0 0.0
  %1101 = vmatpush2.msra.mxu0 0.0
  %1102 = vmatprep.subr.mxu0 0.0
  %1103 = vmatpush2.msra.mxu0 0.0
  %1104 = vmatprep.subr.mxu0 0.0
  %1105 = vmatpush2.msra.mxu0 0.0
  %1106 = vmatprep.subr.mxu0 0.0
  %1107 = vmatpush2.msra.mxu0 0.0
  %1108 = vmatprep.subr.mxu0 0.0
  %1109 = vmatpush2.msra.mxu0 0.0
  %1110 = vmatprep.subr.mxu0 0.0
  %1111 = vmatpush2.msra.mxu0 0.0
  %1112 = vmatprep.mubr.f32.mxu0 0.0
  %1113 = vmatmul.mubr.f32.gmra.mxu0 %v912
  %v1114 = vpop.f32.mrf.mxu0
  %v1115 = vadd.f32 0.0, %v1114
  %v1116 = vpop.f32.mrf.mxu0
  %v1117 = vadd.f32 0.0, %v1116
  %1118 = vdwg.mxu0
  %v1119 = vadd.f32 %v908, %v1044
  %v1120 = vadd.f32 %v909, %v1046
  %v1121 = vadd.f32 %v910, %v1115
  %v1122 = vadd.f32 %v911, %v1117
  %v1123 = vxor.u32 %v1119, 2147483648
  %v1124 = vmul.f32 %v1123, 1.442695
  %v1125 = vpow.pop %v1124
  %v1126 = vadd.f32 %v1125, 1.0
  %v1127 = vrcp.pop %v1126
  %v1128 = vmul.f32 1.0, %v1127
  %v1129 = vxor.u32 %v1120, 2147483648
  %v1130 = vmul.f32 %v1129, 1.442695
  %v1131 = vpow.pop %v1130
  %v1132 = vadd.f32 %v1131, 1.0
  %v1133 = vrcp.pop %v1132
  %v1134 = vmul.f32 1.0, %v1133
  %v1135 = vtanh.pop %v1121
  %v1136 = vxor.u32 %v1122, 2147483648
  %v1137 = vmul.f32 %v1136, 1.442695
  %v1138 = vpow.pop %v1137
  %v1139 = vadd.f32 %v1138, 1.0
  %v1140 = vrcp.pop %v1139
  %v1141 = vmul.f32 1.0, %v1140
  %v1142 = vld [vmem:[#allocation6] sm:$0xff]
  %v1143 = vmul.f32 %v1134, %v1142
  %v1144 = vmul.f32 %v1128, %v1135
  %v1145 = vadd.f32 %v1143, %v1144
  %v1146 = vtanh.pop %v1145
  %v1147 = vmul.f32 %v1141, %v1146
  %1148 = vst [vmem:[#allocation6] sm:$0xff] %v1145
  %1149 = vst [vmem:[#allocation5] sm:$0xff] %v1147
  %vm1150 = vcmask 523264
  %1151 = vst.msk [vmem:[#allocation3] sm:$0xff] %vm1150, %v1147
  %1153 = vrot.lane.b32.xlu0 %v1147, 64
  %v1154 = vpop.permute.xlu0 %1153
  %s1156 = scalar_lea.vmem [#allocation4], 56
  %1157 = vst.msk [vmem:[%s1156] sm:$0xff] %vm1150, %v1154
  %s1158 = smul.u32 1, 4
  %s1159 = smul.addr %s1158, 8
  %s1160 = scalar_lea.vmem [#allocation2], %s1159
  %v1161 = vld [vmem:[%s1160] sm:$0xff]
  %v1162 = vld [vmem:[%s1160 + $0x8] sm:$0xff]
  %v1163 = vld [vmem:[%s1160 + $0x10] sm:$0xff]
  %v1164 = vld [vmem:[%s1160 + $0x18] sm:$0xff]
  %s1165 = smul.u32 6, 4
  %s1166 = smul.addr %s1165, 8
  %s1167 = scalar_lea.vmem [#allocation2], %s1166
  %v1168 = vld [vmem:[%s1167] sm:$0xff]
  %v1169 = vld [vmem:[%s1167 + $0x8] sm:$0xff]
  %v1170 = vld [vmem:[%s1167 + $0x10] sm:$0xff]
  %v1171 = vld [vmem:[%s1167 + $0x18] sm:$0xff]
  %v1172 = vsel %vm94, %v1161, %v1168
  %v1173 = vsel %vm95, %v1162, %v1169
  %v1174 = vsel %vm96, %v1163, %v1170
  %v1175 = vsel %vm97, %v1164, %v1171
  %v1176 = vld [vmem:[#allocation5] sm:$0xff]
  %v1177 = vld [vmem:[%s2] sm:$0xff]
  %v1178 = vld [vmem:[%s2 + $0x8] sm:$0xff]
  %v1179 = vld [vmem:[%s2 + $0x10] sm:$0xff]
  %v1180 = vld [vmem:[%s2 + $0x18] sm:$0xff]
  %v1181 = vld [vmem:[%s2 + $0x20] sm:$0xff]
  %v1182 = vld [vmem:[%s2 + $0x28] sm:$0xff]
  %v1183 = vld [vmem:[%s2 + $0x30] sm:$0xff]
  %v1184 = vld [vmem:[%s2 + $0x38] sm:$0xff]
  %v1185 = vld [vmem:[%s2 + $0x40] sm:$0xff]
  %v1186 = vld [vmem:[%s2 + $0x48] sm:$0xff]
  %v1187 = vld [vmem:[%s2 + $0x50] sm:$0xff]
  %v1188 = vld [vmem:[%s2 + $0x58] sm:$0xff]
  %v1189 = vld [vmem:[%s2 + $0x60] sm:$0xff]
  %v1190 = vld [vmem:[%s2 + $0x68] sm:$0xff]
  %v1191 = vld [vmem:[%s2 + $0x70] sm:$0xff]
  %v1192 = vld [vmem:[%s2 + $0x78] sm:$0xff]
  %v1193 = vld [vmem:[%s2 + $0x80] sm:$0xff]
  %v1194 = vld [vmem:[%s2 + $0x88] sm:$0xff]
  %v1195 = vld [vmem:[%s2 + $0x90] sm:$0xff]
  %v1196 = vld [vmem:[%s2 + $0x98] sm:$0xff]
  %v1197 = vld [vmem:[%s2 + $0xa0] sm:$0xff]
  %v1198 = vld [vmem:[%s2 + $0xa8] sm:$0xff]
  %v1199 = vld [vmem:[%s2 + $0xb0] sm:$0xff]
  %v1200 = vld [vmem:[%s2 + $0xb8] sm:$0xff]
  %v1201 = vld [vmem:[%s2 + $0xc0] sm:$0xff]
  %v1202 = vld [vmem:[%s2 + $0xc8] sm:$0xff]
  %v1203 = vld [vmem:[%s2 + $0xd0] sm:$0xff]
  %v1204 = vld [vmem:[%s2 + $0xd8] sm:$0xff]
  %v1205 = vld [vmem:[%s2 + $0xe0] sm:$0xff]
  %v1206 = vld [vmem:[%s2 + $0xe8] sm:$0xff]
  %v1207 = vld [vmem:[%s2 + $0xf0] sm:$0xff]
  %v1208 = vld [vmem:[%s2 + $0xf8] sm:$0xff]
  %v1209 = vld [vmem:[%s2 + $0x100] sm:$0xff]
  %v1210 = vld [vmem:[%s2 + $0x108] sm:$0xff]
  %v1211 = vld [vmem:[%s2 + $0x110] sm:$0xff]
  %v1212 = vld [vmem:[%s2 + $0x118] sm:$0xff]
  %v1213 = vld [vmem:[%s2 + $0x120] sm:$0xff]
  %v1214 = vld [vmem:[%s2 + $0x128] sm:$0xff]
  %v1215 = vld [vmem:[%s2 + $0x130] sm:$0xff]
  %v1216 = vld [vmem:[%s2 + $0x138] sm:$0xff]
  %v1217 = vld [vmem:[%s2 + $0x140] sm:$0xff]
  %v1218 = vld [vmem:[%s2 + $0x148] sm:$0xff]
  %v1219 = vld [vmem:[%s2 + $0x150] sm:$0xff]
  %v1220 = vld [vmem:[%s2 + $0x158] sm:$0xff]
  %v1221 = vld [vmem:[%s2 + $0x160] sm:$0xff]
  %v1222 = vld [vmem:[%s2 + $0x168] sm:$0xff]
  %v1223 = vld [vmem:[%s2 + $0x170] sm:$0xff]
  %v1224 = vld [vmem:[%s2 + $0x178] sm:$0xff]
  %v1225 = vld [vmem:[%s2 + $0x180] sm:$0xff]
  %v1226 = vld [vmem:[%s2 + $0x188] sm:$0xff]
  %v1227 = vld [vmem:[%s2 + $0x190] sm:$0xff]
  %v1228 = vld [vmem:[%s2 + $0x198] sm:$0xff]
  %v1229 = vld [vmem:[%s2 + $0x1a0] sm:$0xff]
  %v1230 = vld [vmem:[%s2 + $0x1a8] sm:$0xff]
  %v1231 = vld [vmem:[%s2 + $0x1b0] sm:$0xff]
  %v1232 = vld [vmem:[%s2 + $0x1b8] sm:$0xff]
  %v1233 = vld [vmem:[%s2 + $0x1c0] sm:$0xff]
  %v1234 = vld [vmem:[%s2 + $0x1c8] sm:$0xff]
  %v1235 = vld [vmem:[%s2 + $0x1d0] sm:$0xff]
  %v1236 = vld [vmem:[%s2 + $0x1d8] sm:$0xff]
  %v1237 = vld [vmem:[%s2 + $0x1e0] sm:$0xff]
  %v1238 = vld [vmem:[%s2 + $0x1e8] sm:$0xff]
  %v1239 = vld [vmem:[%s2 + $0x1f0] sm:$0xff]
  %v1240 = vld [vmem:[%s2 + $0x1f8] sm:$0xff]
  %1241 = vmatprep.subr.mxu0 %v1238
  %1242 = vmatpush1.msra.mxu0 %v1237
  %1243 = vmatprep.subr.mxu0 %v1234
  %1244 = vmatpush1.msra.mxu0 %v1233
  %1245 = vmatprep.subr.mxu0 %v1230
  %1246 = vmatpush1.msra.mxu0 %v1229
  %1247 = vmatprep.subr.mxu0 %v1226
  %1248 = vmatpush1.msra.mxu0 %v1225
  %1249 = vmatprep.subr.mxu0 %v1222
  %1250 = vmatpush1.msra.mxu0 %v1221
  %1251 = vmatprep.subr.mxu0 %v1218
  %1252 = vmatpush1.msra.mxu0 %v1217
  %1253 = vmatprep.subr.mxu0 %v1214
  %1254 = vmatpush1.msra.mxu0 %v1213
  %1255 = vmatprep.subr.mxu0 %v1210
  %1256 = vmatpush1.msra.mxu0 %v1209
  %1257 = vmatprep.subr.mxu0 %v1206
  %1258 = vmatpush1.msra.mxu0 %v1205
  %1259 = vmatprep.subr.mxu0 %v1202
  %1260 = vmatpush1.msra.mxu0 %v1201
  %1261 = vmatprep.subr.mxu0 %v1198
  %1262 = vmatpush1.msra.mxu0 %v1197
  %1263 = vmatprep.subr.mxu0 %v1194
  %1264 = vmatpush1.msra.mxu0 %v1193
  %1265 = vmatprep.subr.mxu0 %v1190
  %1266 = vmatpush1.msra.mxu0 %v1189
  %1267 = vmatprep.subr.mxu0 %v1186
  %1268 = vmatpush1.msra.mxu0 %v1185
  %1269 = vmatprep.subr.mxu0 %v1182
  %1270 = vmatpush1.msra.mxu0 %v1181
  %1271 = vmatprep.subr.mxu0 %v1178
  %1272 = vmatpush1.msra.mxu0 %v1177
  %1273 = vmatprep.subr.mxu0 0.0
  %1274 = vmatpush2.msra.mxu0 0.0
  %1275 = vmatprep.subr.mxu0 0.0
  %1276 = vmatpush2.msra.mxu0 0.0
  %1277 = vmatprep.subr.mxu0 0.0
  %1278 = vmatpush2.msra.mxu0 0.0
  %1279 = vmatprep.subr.mxu0 0.0
  %1280 = vmatpush2.msra.mxu0 0.0
  %1281 = vmatprep.subr.mxu0 0.0
  %1282 = vmatpush2.msra.mxu0 0.0
  %1283 = vmatprep.subr.mxu0 0.0
  %1284 = vmatpush2.msra.mxu0 0.0
  %1285 = vmatprep.subr.mxu0 0.0
  %1286 = vmatpush2.msra.mxu0 0.0
  %1287 = vmatprep.subr.mxu0 0.0
  %1288 = vmatpush2.msra.mxu0 0.0
  %1289 = vmatprep.subr.mxu0 0.0
  %1290 = vmatpush2.msra.mxu0 0.0
  %1291 = vmatprep.subr.mxu0 0.0
  %1292 = vmatpush2.msra.mxu0 0.0
  %1293 = vmatprep.subr.mxu0 0.0
  %1294 = vmatpush2.msra.mxu0 0.0
  %1295 = vmatprep.subr.mxu0 0.0
  %1296 = vmatpush2.msra.mxu0 0.0
  %1297 = vmatprep.subr.mxu0 0.0
  %1298 = vmatpush2.msra.mxu0 0.0
  %1299 = vmatprep.subr.mxu0 0.0
  %1300 = vmatpush2.msra.mxu0 0.0
  %1301 = vmatprep.subr.mxu0 0.0
  %1302 = vmatpush2.msra.mxu0 0.0
  %1303 = vmatprep.subr.mxu0 0.0
  %1304 = vmatpush2.msra.mxu0 0.0
  %1305 = vmatprep.mubr.f32.mxu0 0.0
  %1306 = vmatmul.mubr.f32.gmra.mxu0 %v1176
  %v1307 = vpop.f32.mrf.mxu0
  %v1308 = vadd.f32 0.0, %v1307
  %v1309 = vpop.f32.mrf.mxu0
  %v1310 = vadd.f32 0.0, %v1309
  %1311 = vdwg.mxu0
  %1312 = vmatprep.subr.mxu0 %v1240
  %1313 = vmatpush1.msra.mxu0 %v1239
  %1314 = vmatprep.subr.mxu0 %v1236
  %1315 = vmatpush1.msra.mxu0 %v1235
  %1316 = vmatprep.subr.mxu0 %v1232
  %1317 = vmatpush1.msra.mxu0 %v1231
  %1318 = vmatprep.subr.mxu0 %v1228
  %1319 = vmatpush1.msra.mxu0 %v1227
  %1320 = vmatprep.subr.mxu0 %v1224
  %1321 = vmatpush1.msra.mxu0 %v1223
  %1322 = vmatprep.subr.mxu0 %v1220
  %1323 = vmatpush1.msra.mxu0 %v1219
  %1324 = vmatprep.subr.mxu0 %v1216
  %1325 = vmatpush1.msra.mxu0 %v1215
  %1326 = vmatprep.subr.mxu0 %v1212
  %1327 = vmatpush1.msra.mxu0 %v1211
  %1328 = vmatprep.subr.mxu0 %v1208
  %1329 = vmatpush1.msra.mxu0 %v1207
  %1330 = vmatprep.subr.mxu0 %v1204
  %1331 = vmatpush1.msra.mxu0 %v1203
  %1332 = vmatprep.subr.mxu0 %v1200
  %1333 = vmatpush1.msra.mxu0 %v1199
  %1334 = vmatprep.subr.mxu0 %v1196
  %1335 = vmatpush1.msra.mxu0 %v1195
  %1336 = vmatprep.subr.mxu0 %v1192
  %1337 = vmatpush1.msra.mxu0 %v1191
  %1338 = vmatprep.subr.mxu0 %v1188
  %1339 = vmatpush1.msra.mxu0 %v1187
  %1340 = vmatprep.subr.mxu0 %v1184
  %1341 = vmatpush1.msra.mxu0 %v1183
  %1342 = vmatprep.subr.mxu0 %v1180
  %1343 = vmatpush1.msra.mxu0 %v1179
  %1344 = vmatprep.subr.mxu0 0.0
  %1345 = vmatpush2.msra.mxu0 0.0
  %1346 = vmatprep.subr.mxu0 0.0
  %1347 = vmatpush2.msra.mxu0 0.0
  %1348 = vmatprep.subr.mxu0 0.0
  %1349 = vmatpush2.msra.mxu0 0.0
  %1350 = vmatprep.subr.mxu0 0.0
  %1351 = vmatpush2.msra.mxu0 0.0
  %1352 = vmatprep.subr.mxu0 0.0
  %1353 = vmatpush2.msra.mxu0 0.0
  %1354 = vmatprep.subr.mxu0 0.0
  %1355 = vmatpush2.msra.mxu0 0.0
  %1356 = vmatprep.subr.mxu0 0.0
  %1357 = vmatpush2.msra.mxu0 0.0
  %1358 = vmatprep.subr.mxu0 0.0
  %1359 = vmatpush2.msra.mxu0 0.0
  %1360 = vmatprep.subr.mxu0 0.0
  %1361 = vmatpush2.msra.mxu0 0.0
  %1362 = vmatprep.subr.mxu0 0.0
  %1363 = vmatpush2.msra.mxu0 0.0
  %1364 = vmatprep.subr.mxu0 0.0
  %1365 = vmatpush2.msra.mxu0 0.0
  %1366 = vmatprep.subr.mxu0 0.0
  %1367 = vmatpush2.msra.mxu0 0.0
  %1368 = vmatprep.subr.mxu0 0.0
  %1369 = vmatpush2.msra.mxu0 0.0
  %1370 = vmatprep.subr.mxu0 0.0
  %1371 = vmatpush2.msra.mxu0 0.0
  %1372 = vmatprep.subr.mxu0 0.0
  %1373 = vmatpush2.msra.mxu0 0.0
  %1374 = vmatprep.subr.mxu0 0.0
  %1375 = vmatpush2.msra.mxu0 0.0
  %1376 = vmatprep.mubr.f32.mxu0 0.0
  %1377 = vmatmul.mubr.f32.gmra.mxu0 %v1176
  %v1378 = vpop.f32.mrf.mxu0
  %v1379 = vadd.f32 0.0, %v1378
  %v1380 = vpop.f32.mrf.mxu0
  %v1381 = vadd.f32 0.0, %v1380
  %1382 = vdwg.mxu0
  %v1383 = vadd.f32 %v1172, %v1308
  %v1384 = vadd.f32 %v1173, %v1310
  %v1385 = vadd.f32 %v1174, %v1379
  %v1386 = vadd.f32 %v1175, %v1381
  %v1387 = vxor.u32 %v1383, 2147483648
  %v1388 = vmul.f32 %v1387, 1.442695
  %v1389 = vpow.pop %v1388
  %v1390 = vadd.f32 %v1389, 1.0
  %v1391 = vrcp.pop %v1390
  %v1392 = vmul.f32 1.0, %v1391
  %v1393 = vxor.u32 %v1384, 2147483648
  %v1394 = vmul.f32 %v1393, 1.442695
  %v1395 = vpow.pop %v1394
  %v1396 = vadd.f32 %v1395, 1.0
  %v1397 = vrcp.pop %v1396
  %v1398 = vmul.f32 1.0, %v1397
  %v1399 = vtanh.pop %v1385
  %v1400 = vxor.u32 %v1386, 2147483648
  %v1401 = vmul.f32 %v1400, 1.442695
  %v1402 = vpow.pop %v1401
  %v1403 = vadd.f32 %v1402, 1.0
  %v1404 = vrcp.pop %v1403
  %v1405 = vmul.f32 1.0, %v1404
  %v1406 = vld [vmem:[#allocation6] sm:$0xff]
  %v1407 = vmul.f32 %v1398, %v1406
  %v1408 = vmul.f32 %v1392, %v1399
  %v1409 = vadd.f32 %v1407, %v1408
  %v1410 = vtanh.pop %v1409
  %v1411 = vmul.f32 %v1405, %v1410
  %1412 = vst [vmem:[#allocation6] sm:$0xff] %v1409
  %1413 = vst [vmem:[#allocation5] sm:$0xff] %v1411
  %s1414 = scalar_lea.vmem [#allocation3], 8
  %1415 = vst.msk [vmem:[%s1414] sm:$0xff] %vm1150, %v1411
  %1417 = vrot.lane.b32.xlu0 %v1411, 64
  %v1418 = vpop.permute.xlu0 %1417
  %s1420 = scalar_lea.vmem [#allocation4], 48
  %1421 = vst.msk [vmem:[%s1420] sm:$0xff] %vm1150, %v1418
  %s1422 = smul.u32 2, 4
  %s1423 = smul.addr %s1422, 8
  %s1424 = scalar_lea.vmem [#allocation2], %s1423
  %v1425 = vld [vmem:[%s1424] sm:$0xff]
  %v1426 = vld [vmem:[%s1424 + $0x8] sm:$0xff]
  %v1427 = vld [vmem:[%s1424 + $0x10] sm:$0xff]
  %v1428 = vld [vmem:[%s1424 + $0x18] sm:$0xff]
  %s1429 = smul.u32 5, 4
  %s1430 = smul.addr %s1429, 8
  %s1431 = scalar_lea.vmem [#allocation2], %s1430
  %v1432 = vld [vmem:[%s1431] sm:$0xff]
  %v1433 = vld [vmem:[%s1431 + $0x8] sm:$0xff]
  %v1434 = vld [vmem:[%s1431 + $0x10] sm:$0xff]
  %v1435 = vld [vmem:[%s1431 + $0x18] sm:$0xff]
  %v1436 = vsel %vm94, %v1425, %v1432
  %v1437 = vsel %vm95, %v1426, %v1433
  %v1438 = vsel %vm96, %v1427, %v1434
  %v1439 = vsel %vm97, %v1428, %v1435
  %v1440 = vld [vmem:[#allocation5] sm:$0xff]
  %v1441 = vld [vmem:[%s2] sm:$0xff]
  %v1442 = vld [vmem:[%s2 + $0x8] sm:$0xff]
  %v1443 = vld [vmem:[%s2 + $0x10] sm:$0xff]
  %v1444 = vld [vmem:[%s2 + $0x18] sm:$0xff]
  %v1445 = vld [vmem:[%s2 + $0x20] sm:$0xff]
  %v1446 = vld [vmem:[%s2 + $0x28] sm:$0xff]
  %v1447 = vld [vmem:[%s2 + $0x30] sm:$0xff]
  %v1448 = vld [vmem:[%s2 + $0x38] sm:$0xff]
  %v1449 = vld [vmem:[%s2 + $0x40] sm:$0xff]
  %v1450 = vld [vmem:[%s2 + $0x48] sm:$0xff]
  %v1451 = vld [vmem:[%s2 + $0x50] sm:$0xff]
  %v1452 = vld [vmem:[%s2 + $0x58] sm:$0xff]
  %v1453 = vld [vmem:[%s2 + $0x60] sm:$0xff]
  %v1454 = vld [vmem:[%s2 + $0x68] sm:$0xff]
  %v1455 = vld [vmem:[%s2 + $0x70] sm:$0xff]
  %v1456 = vld [vmem:[%s2 + $0x78] sm:$0xff]
  %v1457 = vld [vmem:[%s2 + $0x80] sm:$0xff]
  %v1458 = vld [vmem:[%s2 + $0x88] sm:$0xff]
  %v1459 = vld [vmem:[%s2 + $0x90] sm:$0xff]
  %v1460 = vld [vmem:[%s2 + $0x98] sm:$0xff]
  %v1461 = vld [vmem:[%s2 + $0xa0] sm:$0xff]
  %v1462 = vld [vmem:[%s2 + $0xa8] sm:$0xff]
  %v1463 = vld [vmem:[%s2 + $0xb0] sm:$0xff]
  %v1464 = vld [vmem:[%s2 + $0xb8] sm:$0xff]
  %v1465 = vld [vmem:[%s2 + $0xc0] sm:$0xff]
  %v1466 = vld [vmem:[%s2 + $0xc8] sm:$0xff]
  %v1467 = vld [vmem:[%s2 + $0xd0] sm:$0xff]
  %v1468 = vld [vmem:[%s2 + $0xd8] sm:$0xff]
  %v1469 = vld [vmem:[%s2 + $0xe0] sm:$0xff]
  %v1470 = vld [vmem:[%s2 + $0xe8] sm:$0xff]
  %v1471 = vld [vmem:[%s2 + $0xf0] sm:$0xff]
  %v1472 = vld [vmem:[%s2 + $0xf8] sm:$0xff]
  %v1473 = vld [vmem:[%s2 + $0x100] sm:$0xff]
  %v1474 = vld [vmem:[%s2 + $0x108] sm:$0xff]
  %v1475 = vld [vmem:[%s2 + $0x110] sm:$0xff]
  %v1476 = vld [vmem:[%s2 + $0x118] sm:$0xff]
  %v1477 = vld [vmem:[%s2 + $0x120] sm:$0xff]
  %v1478 = vld [vmem:[%s2 + $0x128] sm:$0xff]
  %v1479 = vld [vmem:[%s2 + $0x130] sm:$0xff]
  %v1480 = vld [vmem:[%s2 + $0x138] sm:$0xff]
  %v1481 = vld [vmem:[%s2 + $0x140] sm:$0xff]
  %v1482 = vld [vmem:[%s2 + $0x148] sm:$0xff]
  %v1483 = vld [vmem:[%s2 + $0x150] sm:$0xff]
  %v1484 = vld [vmem:[%s2 + $0x158] sm:$0xff]
  %v1485 = vld [vmem:[%s2 + $0x160] sm:$0xff]
  %v1486 = vld [vmem:[%s2 + $0x168] sm:$0xff]
  %v1487 = vld [vmem:[%s2 + $0x170] sm:$0xff]
  %v1488 = vld [vmem:[%s2 + $0x178] sm:$0xff]
  %v1489 = vld [vmem:[%s2 + $0x180] sm:$0xff]
  %v1490 = vld [vmem:[%s2 + $0x188] sm:$0xff]
  %v1491 = vld [vmem:[%s2 + $0x190] sm:$0xff]
  %v1492 = vld [vmem:[%s2 + $0x198] sm:$0xff]
  %v1493 = vld [vmem:[%s2 + $0x1a0] sm:$0xff]
  %v1494 = vld [vmem:[%s2 + $0x1a8] sm:$0xff]
  %v1495 = vld [vmem:[%s2 + $0x1b0] sm:$0xff]
  %v1496 = vld [vmem:[%s2 + $0x1b8] sm:$0xff]
  %v1497 = vld [vmem:[%s2 + $0x1c0] sm:$0xff]
  %v1498 = vld [vmem:[%s2 + $0x1c8] sm:$0xff]
  %v1499 = vld [vmem:[%s2 + $0x1d0] sm:$0xff]
  %v1500 = vld [vmem:[%s2 + $0x1d8] sm:$0xff]
  %v1501 = vld [vmem:[%s2 + $0x1e0] sm:$0xff]
  %v1502 = vld [vmem:[%s2 + $0x1e8] sm:$0xff]
  %v1503 = vld [vmem:[%s2 + $0x1f0] sm:$0xff]
  %v1504 = vld [vmem:[%s2 + $0x1f8] sm:$0xff]
  %1505 = vmatprep.subr.mxu0 %v1502
  %1506 = vmatpush1.msra.mxu0 %v1501
  %1507 = vmatprep.subr.mxu0 %v1498
  %1508 = vmatpush1.msra.mxu0 %v1497
  %1509 = vmatprep.subr.mxu0 %v1494
  %1510 = vmatpush1.msra.mxu0 %v1493
  %1511 = vmatprep.subr.mxu0 %v1490
  %1512 = vmatpush1.msra.mxu0 %v1489
  %1513 = vmatprep.subr.mxu0 %v1486
  %1514 = vmatpush1.msra.mxu0 %v1485
  %1515 = vmatprep.subr.mxu0 %v1482
  %1516 = vmatpush1.msra.mxu0 %v1481
  %1517 = vmatprep.subr.mxu0 %v1478
  %1518 = vmatpush1.msra.mxu0 %v1477
  %1519 = vmatprep.subr.mxu0 %v1474
  %1520 = vmatpush1.msra.mxu0 %v1473
  %1521 = vmatprep.subr.mxu0 %v1470
  %1522 = vmatpush1.msra.mxu0 %v1469
  %1523 = vmatprep.subr.mxu0 %v1466
  %1524 = vmatpush1.msra.mxu0 %v1465
  %1525 = vmatprep.subr.mxu0 %v1462
  %1526 = vmatpush1.msra.mxu0 %v1461
  %1527 = vmatprep.subr.mxu0 %v1458
  %1528 = vmatpush1.msra.mxu0 %v1457
  %1529 = vmatprep.subr.mxu0 %v1454
  %1530 = vmatpush1.msra.mxu0 %v1453
  %1531 = vmatprep.subr.mxu0 %v1450
  %1532 = vmatpush1.msra.mxu0 %v1449
  %1533 = vmatprep.subr.mxu0 %v1446
  %1534 = vmatpush1.msra.mxu0 %v1445
  %1535 = vmatprep.subr.mxu0 %v1442
  %1536 = vmatpush1.msra.mxu0 %v1441
  %1537 = vmatprep.subr.mxu0 0.0
  %1538 = vmatpush2.msra.mxu0 0.0
  %1539 = vmatprep.subr.mxu0 0.0
  %1540 = vmatpush2.msra.mxu0 0.0
  %1541 = vmatprep.subr.mxu0 0.0
  %1542 = vmatpush2.msra.mxu0 0.0
  %1543 = vmatprep.subr.mxu0 0.0
  %1544 = vmatpush2.msra.mxu0 0.0
  %1545 = vmatprep.subr.mxu0 0.0
  %1546 = vmatpush2.msra.mxu0 0.0
  %1547 = vmatprep.subr.mxu0 0.0
  %1548 = vmatpush2.msra.mxu0 0.0
  %1549 = vmatprep.subr.mxu0 0.0
  %1550 = vmatpush2.msra.mxu0 0.0
  %1551 = vmatprep.subr.mxu0 0.0
  %1552 = vmatpush2.msra.mxu0 0.0
  %1553 = vmatprep.subr.mxu0 0.0
  %1554 = vmatpush2.msra.mxu0 0.0
  %1555 = vmatprep.subr.mxu0 0.0
  %1556 = vmatpush2.msra.mxu0 0.0
  %1557 = vmatprep.subr.mxu0 0.0
  %1558 = vmatpush2.msra.mxu0 0.0
  %1559 = vmatprep.subr.mxu0 0.0
  %1560 = vmatpush2.msra.mxu0 0.0
  %1561 = vmatprep.subr.mxu0 0.0
  %1562 = vmatpush2.msra.mxu0 0.0
  %1563 = vmatprep.subr.mxu0 0.0
  %1564 = vmatpush2.msra.mxu0 0.0
  %1565 = vmatprep.subr.mxu0 0.0
  %1566 = vmatpush2.msra.mxu0 0.0
  %1567 = vmatprep.subr.mxu0 0.0
  %1568 = vmatpush2.msra.mxu0 0.0
  %1569 = vmatprep.mubr.f32.mxu0 0.0
  %1570 = vmatmul.mubr.f32.gmra.mxu0 %v1440
  %v1571 = vpop.f32.mrf.mxu0
  %v1572 = vadd.f32 0.0, %v1571
  %v1573 = vpop.f32.mrf.mxu0
  %v1574 = vadd.f32 0.0, %v1573
  %1575 = vdwg.mxu0
  %1576 = vmatprep.subr.mxu0 %v1504
  %1577 = vmatpush1.msra.mxu0 %v1503
  %1578 = vmatprep.subr.mxu0 %v1500
  %1579 = vmatpush1.msra.mxu0 %v1499
  %1580 = vmatprep.subr.mxu0 %v1496
  %1581 = vmatpush1.msra.mxu0 %v1495
  %1582 = vmatprep.subr.mxu0 %v1492
  %1583 = vmatpush1.msra.mxu0 %v1491
  %1584 = vmatprep.subr.mxu0 %v1488
  %1585 = vmatpush1.msra.mxu0 %v1487
  %1586 = vmatprep.subr.mxu0 %v1484
  %1587 = vmatpush1.msra.mxu0 %v1483
  %1588 = vmatprep.subr.mxu0 %v1480
  %1589 = vmatpush1.msra.mxu0 %v1479
  %1590 = vmatprep.subr.mxu0 %v1476
  %1591 = vmatpush1.msra.mxu0 %v1475
  %1592 = vmatprep.subr.mxu0 %v1472
  %1593 = vmatpush1.msra.mxu0 %v1471
  %1594 = vmatprep.subr.mxu0 %v1468
  %1595 = vmatpush1.msra.mxu0 %v1467
  %1596 = vmatprep.subr.mxu0 %v1464
  %1597 = vmatpush1.msra.mxu0 %v1463
  %1598 = vmatprep.subr.mxu0 %v1460
  %1599 = vmatpush1.msra.mxu0 %v1459
  %1600 = vmatprep.subr.mxu0 %v1456
  %1601 = vmatpush1.msra.mxu0 %v1455
  %1602 = vmatprep.subr.mxu0 %v1452
  %1603 = vmatpush1.msra.mxu0 %v1451
  %1604 = vmatprep.subr.mxu0 %v1448
  %1605 = vmatpush1.msra.mxu0 %v1447
  %1606 = vmatprep.subr.mxu0 %v1444
  %1607 = vmatpush1.msra.mxu0 %v1443
  %1608 = vmatprep.subr.mxu0 0.0
  %1609 = vmatpush2.msra.mxu0 0.0
  %1610 = vmatprep.subr.mxu0 0.0
  %1611 = vmatpush2.msra.mxu0 0.0
  %1612 = vmatprep.subr.mxu0 0.0
  %1613 = vmatpush2.msra.mxu0 0.0
  %1614 = vmatprep.subr.mxu0 0.0
  %1615 = vmatpush2.msra.mxu0 0.0
  %1616 = vmatprep.subr.mxu0 0.0
  %1617 = vmatpush2.msra.mxu0 0.0
  %1618 = vmatprep.subr.mxu0 0.0
  %1619 = vmatpush2.msra.mxu0 0.0
  %1620 = vmatprep.subr.mxu0 0.0
  %1621 = vmatpush2.msra.mxu0 0.0
  %1622 = vmatprep.subr.mxu0 0.0
  %1623 = vmatpush2.msra.mxu0 0.0
  %1624 = vmatprep.subr.mxu0 0.0
  %1625 = vmatpush2.msra.mxu0 0.0
  %1626 = vmatprep.subr.mxu0 0.0
  %1627 = vmatpush2.msra.mxu0 0.0
  %1628 = vmatprep.subr.mxu0 0.0
  %1629 = vmatpush2.msra.mxu0 0.0
  %1630 = vmatprep.subr.mxu0 0.0
  %1631 = vmatpush2.msra.mxu0 0.0
  %1632 = vmatprep.subr.mxu0 0.0
  %1633 = vmatpush2.msra.mxu0 0.0
  %1634 = vmatprep.subr.mxu0 0.0
  %1635 = vmatpush2.msra.mxu0 0.0
  %1636 = vmatprep.subr.mxu0 0.0
  %1637 = vmatpush2.msra.mxu0 0.0
  %1638 = vmatprep.subr.mxu0 0.0
  %1639 = vmatpush2.msra.mxu0 0.0
  %1640 = vmatprep.mubr.f32.mxu0 0.0
  %1641 = vmatmul.mubr.f32.gmra.mxu0 %v1440
  %v1642 = vpop.f32.mrf.mxu0
  %v1643 = vadd.f32 0.0, %v1642
  %v1644 = vpop.f32.mrf.mxu0
  %v1645 = vadd.f32 0.0, %v1644
  %1646 = vdwg.mxu0
  %v1647 = vadd.f32 %v1436, %v1572
  %v1648 = vadd.f32 %v1437, %v1574
  %v1649 = vadd.f32 %v1438, %v1643
  %v1650 = vadd.f32 %v1439, %v1645
  %v1651 = vxor.u32 %v1647, 2147483648
  %v1652 = vmul.f32 %v1651, 1.442695
  %v1653 = vpow.pop %v1652
  %v1654 = vadd.f32 %v1653, 1.0
  %v1655 = vrcp.pop %v1654
  %v1656 = vmul.f32 1.0, %v1655
  %v1657 = vxor.u32 %v1648, 2147483648
  %v1658 = vmul.f32 %v1657, 1.442695
  %v1659 = vpow.pop %v1658
  %v1660 = vadd.f32 %v1659, 1.0
  %v1661 = vrcp.pop %v1660
  %v1662 = vmul.f32 1.0, %v1661
  %v1663 = vtanh.pop %v1649
  %v1664 = vxor.u32 %v1650, 2147483648
  %v1665 = vmul.f32 %v1664, 1.442695
  %v1666 = vpow.pop %v1665
  %v1667 = vadd.f32 %v1666, 1.0
  %v1668 = vrcp.pop %v1667
  %v1669 = vmul.f32 1.0, %v1668
  %v1670 = vld [vmem:[#allocation6] sm:$0xff]
  %v1671 = vmul.f32 %v1662, %v1670
  %v1672 = vmul.f32 %v1656, %v1663
  %v1673 = vadd.f32 %v1671, %v1672
  %v1674 = vtanh.pop %v1673
  %v1675 = vmul.f32 %v1669, %v1674
  %1676 = vst [vmem:[#allocation6] sm:$0xff] %v1673
  %1677 = vst [vmem:[#allocation5] sm:$0xff] %v1675
  %s1678 = scalar_lea.vmem [#allocation3], 16
  %1679 = vst.msk [vmem:[%s1678] sm:$0xff] %vm1150, %v1675
  %1681 = vrot.lane.b32.xlu0 %v1675, 64
  %v1682 = vpop.permute.xlu0 %1681
  %s1684 = scalar_lea.vmem [#allocation4], 40
  %1685 = vst.msk [vmem:[%s1684] sm:$0xff] %vm1150, %v1682
  %s1686 = smul.u32 3, 4
  %s1687 = smul.addr %s1686, 8
  %s1688 = scalar_lea.vmem [#allocation2], %s1687
  %v1689 = vld [vmem:[%s1688] sm:$0xff]
  %v1690 = vld [vmem:[%s1688 + $0x8] sm:$0xff]
  %v1691 = vld [vmem:[%s1688 + $0x10] sm:$0xff]
  %v1692 = vld [vmem:[%s1688 + $0x18] sm:$0xff]
  %s1693 = smul.u32 4, 4
  %s1694 = smul.addr %s1693, 8
  %s1695 = scalar_lea.vmem [#allocation2], %s1694
  %v1696 = vld [vmem:[%s1695] sm:$0xff]
  %v1697 = vld [vmem:[%s1695 + $0x8] sm:$0xff]
  %v1698 = vld [vmem:[%s1695 + $0x10] sm:$0xff]
  %v1699 = vld [vmem:[%s1695 + $0x18] sm:$0xff]
  %v1700 = vsel %vm94, %v1689, %v1696
  %v1701 = vsel %vm95, %v1690, %v1697
  %v1702 = vsel %vm96, %v1691, %v1698
  %v1703 = vsel %vm97, %v1692, %v1699
  %v1704 = vld [vmem:[#allocation5] sm:$0xff]
  %v1705 = vld [vmem:[%s2] sm:$0xff]
  %v1706 = vld [vmem:[%s2 + $0x8] sm:$0xff]
  %v1707 = vld [vmem:[%s2 + $0x10] sm:$0xff]
  %v1708 = vld [vmem:[%s2 + $0x18] sm:$0xff]
  %v1709 = vld [vmem:[%s2 + $0x20] sm:$0xff]
  %v1710 = vld [vmem:[%s2 + $0x28] sm:$0xff]
  %v1711 = vld [vmem:[%s2 + $0x30] sm:$0xff]
  %v1712 = vld [vmem:[%s2 + $0x38] sm:$0xff]
  %v1713 = vld [vmem:[%s2 + $0x40] sm:$0xff]
  %v1714 = vld [vmem:[%s2 + $0x48] sm:$0xff]
  %v1715 = vld [vmem:[%s2 + $0x50] sm:$0xff]
  %v1716 = vld [vmem:[%s2 + $0x58] sm:$0xff]
  %v1717 = vld [vmem:[%s2 + $0x60] sm:$0xff]
  %v1718 = vld [vmem:[%s2 + $0x68] sm:$0xff]
  %v1719 = vld [vmem:[%s2 + $0x70] sm:$0xff]
  %v1720 = vld [vmem:[%s2 + $0x78] sm:$0xff]
  %v1721 = vld [vmem:[%s2 + $0x80] sm:$0xff]
  %v1722 = vld [vmem:[%s2 + $0x88] sm:$0xff]
  %v1723 = vld [vmem:[%s2 + $0x90] sm:$0xff]
  %v1724 = vld [vmem:[%s2 + $0x98] sm:$0xff]
  %v1725 = vld [vmem:[%s2 + $0xa0] sm:$0xff]
  %v1726 = vld [vmem:[%s2 + $0xa8] sm:$0xff]
  %v1727 = vld [vmem:[%s2 + $0xb0] sm:$0xff]
  %v1728 = vld [vmem:[%s2 + $0xb8] sm:$0xff]
  %v1729 = vld [vmem:[%s2 + $0xc0] sm:$0xff]
  %v1730 = vld [vmem:[%s2 + $0xc8] sm:$0xff]
  %v1731 = vld [vmem:[%s2 + $0xd0] sm:$0xff]
  %v1732 = vld [vmem:[%s2 + $0xd8] sm:$0xff]
  %v1733 = vld [vmem:[%s2 + $0xe0] sm:$0xff]
  %v1734 = vld [vmem:[%s2 + $0xe8] sm:$0xff]
  %v1735 = vld [vmem:[%s2 + $0xf0] sm:$0xff]
  %v1736 = vld [vmem:[%s2 + $0xf8] sm:$0xff]
  %v1737 = vld [vmem:[%s2 + $0x100] sm:$0xff]
  %v1738 = vld [vmem:[%s2 + $0x108] sm:$0xff]
  %v1739 = vld [vmem:[%s2 + $0x110] sm:$0xff]
  %v1740 = vld [vmem:[%s2 + $0x118] sm:$0xff]
  %v1741 = vld [vmem:[%s2 + $0x120] sm:$0xff]
  %v1742 = vld [vmem:[%s2 + $0x128] sm:$0xff]
  %v1743 = vld [vmem:[%s2 + $0x130] sm:$0xff]
  %v1744 = vld [vmem:[%s2 + $0x138] sm:$0xff]
  %v1745 = vld [vmem:[%s2 + $0x140] sm:$0xff]
  %v1746 = vld [vmem:[%s2 + $0x148] sm:$0xff]
  %v1747 = vld [vmem:[%s2 + $0x150] sm:$0xff]
  %v1748 = vld [vmem:[%s2 + $0x158] sm:$0xff]
  %v1749 = vld [vmem:[%s2 + $0x160] sm:$0xff]
  %v1750 = vld [vmem:[%s2 + $0x168] sm:$0xff]
  %v1751 = vld [vmem:[%s2 + $0x170] sm:$0xff]
  %v1752 = vld [vmem:[%s2 + $0x178] sm:$0xff]
  %v1753 = vld [vmem:[%s2 + $0x180] sm:$0xff]
  %v1754 = vld [vmem:[%s2 + $0x188] sm:$0xff]
  %v1755 = vld [vmem:[%s2 + $0x190] sm:$0xff]
  %v1756 = vld [vmem:[%s2 + $0x198] sm:$0xff]
  %v1757 = vld [vmem:[%s2 + $0x1a0] sm:$0xff]
  %v1758 = vld [vmem:[%s2 + $0x1a8] sm:$0xff]
  %v1759 = vld [vmem:[%s2 + $0x1b0] sm:$0xff]
  %v1760 = vld [vmem:[%s2 + $0x1b8] sm:$0xff]
  %v1761 = vld [vmem:[%s2 + $0x1c0] sm:$0xff]
  %v1762 = vld [vmem:[%s2 + $0x1c8] sm:$0xff]
  %v1763 = vld [vmem:[%s2 + $0x1d0] sm:$0xff]
  %v1764 = vld [vmem:[%s2 + $0x1d8] sm:$0xff]
  %v1765 = vld [vmem:[%s2 + $0x1e0] sm:$0xff]
  %v1766 = vld [vmem:[%s2 + $0x1e8] sm:$0xff]
  %v1767 = vld [vmem:[%s2 + $0x1f0] sm:$0xff]
  %v1768 = vld [vmem:[%s2 + $0x1f8] sm:$0xff]
  %1769 = vmatprep.subr.mxu0 %v1766
  %1770 = vmatpush1.msra.mxu0 %v1765
  %1771 = vmatprep.subr.mxu0 %v1762
  %1772 = vmatpush1.msra.mxu0 %v1761
  %1773 = vmatprep.subr.mxu0 %v1758
  %1774 = vmatpush1.msra.mxu0 %v1757
  %1775 = vmatprep.subr.mxu0 %v1754
  %1776 = vmatpush1.msra.mxu0 %v1753
  %1777 = vmatprep.subr.mxu0 %v1750
  %1778 = vmatpush1.msra.mxu0 %v1749
  %1779 = vmatprep.subr.mxu0 %v1746
  %1780 = vmatpush1.msra.mxu0 %v1745
  %1781 = vmatprep.subr.mxu0 %v1742
  %1782 = vmatpush1.msra.mxu0 %v1741
  %1783 = vmatprep.subr.mxu0 %v1738
  %1784 = vmatpush1.msra.mxu0 %v1737
  %1785 = vmatprep.subr.mxu0 %v1734
  %1786 = vmatpush1.msra.mxu0 %v1733
  %1787 = vmatprep.subr.mxu0 %v1730
  %1788 = vmatpush1.msra.mxu0 %v1729
  %1789 = vmatprep.subr.mxu0 %v1726
  %1790 = vmatpush1.msra.mxu0 %v1725
  %1791 = vmatprep.subr.mxu0 %v1722
  %1792 = vmatpush1.msra.mxu0 %v1721
  %1793 = vmatprep.subr.mxu0 %v1718
  %1794 = vmatpush1.msra.mxu0 %v1717
  %1795 = vmatprep.subr.mxu0 %v1714
  %1796 = vmatpush1.msra.mxu0 %v1713
  %1797 = vmatprep.subr.mxu0 %v1710
  %1798 = vmatpush1.msra.mxu0 %v1709
  %1799 = vmatprep.subr.mxu0 %v1706
  %1800 = vmatpush1.msra.mxu0 %v1705
  %1801 = vmatprep.subr.mxu0 0.0
  %1802 = vmatpush2.msra.mxu0 0.0
  %1803 = vmatprep.subr.mxu0 0.0
  %1804 = vmatpush2.msra.mxu0 0.0
  %1805 = vmatprep.subr.mxu0 0.0
  %1806 = vmatpush2.msra.mxu0 0.0
  %1807 = vmatprep.subr.mxu0 0.0
  %1808 = vmatpush2.msra.mxu0 0.0
  %1809 = vmatprep.subr.mxu0 0.0
  %1810 = vmatpush2.msra.mxu0 0.0
  %1811 = vmatprep.subr.mxu0 0.0
  %1812 = vmatpush2.msra.mxu0 0.0
  %1813 = vmatprep.subr.mxu0 0.0
  %1814 = vmatpush2.msra.mxu0 0.0
  %1815 = vmatprep.subr.mxu0 0.0
  %1816 = vmatpush2.msra.mxu0 0.0
  %1817 = vmatprep.subr.mxu0 0.0
  %1818 = vmatpush2.msra.mxu0 0.0
  %1819 = vmatprep.subr.mxu0 0.0
  %1820 = vmatpush2.msra.mxu0 0.0
  %1821 = vmatprep.subr.mxu0 0.0
  %1822 = vmatpush2.msra.mxu0 0.0
  %1823 = vmatprep.subr.mxu0 0.0
  %1824 = vmatpush2.msra.mxu0 0.0
  %1825 = vmatprep.subr.mxu0 0.0
  %1826 = vmatpush2.msra.mxu0 0.0
  %1827 = vmatprep.subr.mxu0 0.0
  %1828 = vmatpush2.msra.mxu0 0.0
  %1829 = vmatprep.subr.mxu0 0.0
  %1830 = vmatpush2.msra.mxu0 0.0
  %1831 = vmatprep.subr.mxu0 0.0
  %1832 = vmatpush2.msra.mxu0 0.0
  %1833 = vmatprep.mubr.f32.mxu0 0.0
  %1834 = vmatmul.mubr.f32.gmra.mxu0 %v1704
  %v1835 = vpop.f32.mrf.mxu0
  %v1836 = vadd.f32 0.0, %v1835
  %v1837 = vpop.f32.mrf.mxu0
  %v1838 = vadd.f32 0.0, %v1837
  %1839 = vdwg.mxu0
  %1840 = vmatprep.subr.mxu0 %v1768
  %1841 = vmatpush1.msra.mxu0 %v1767
  %1842 = vmatprep.subr.mxu0 %v1764
  %1843 = vmatpush1.msra.mxu0 %v1763
  %1844 = vmatprep.subr.mxu0 %v1760
  %1845 = vmatpush1.msra.mxu0 %v1759
  %1846 = vmatprep.subr.mxu0 %v1756
  %1847 = vmatpush1.msra.mxu0 %v1755
  %1848 = vmatprep.subr.mxu0 %v1752
  %1849 = vmatpush1.msra.mxu0 %v1751
  %1850 = vmatprep.subr.mxu0 %v1748
  %1851 = vmatpush1.msra.mxu0 %v1747
  %1852 = vmatprep.subr.mxu0 %v1744
  %1853 = vmatpush1.msra.mxu0 %v1743
  %1854 = vmatprep.subr.mxu0 %v1740
  %1855 = vmatpush1.msra.mxu0 %v1739
  %1856 = vmatprep.subr.mxu0 %v1736
  %1857 = vmatpush1.msra.mxu0 %v1735
  %1858 = vmatprep.subr.mxu0 %v1732
  %1859 = vmatpush1.msra.mxu0 %v1731
  %1860 = vmatprep.subr.mxu0 %v1728
  %1861 = vmatpush1.msra.mxu0 %v1727
  %1862 = vmatprep.subr.mxu0 %v1724
  %1863 = vmatpush1.msra.mxu0 %v1723
  %1864 = vmatprep.subr.mxu0 %v1720
  %1865 = vmatpush1.msra.mxu0 %v1719
  %1866 = vmatprep.subr.mxu0 %v1716
  %1867 = vmatpush1.msra.mxu0 %v1715
  %1868 = vmatprep.subr.mxu0 %v1712
  %1869 = vmatpush1.msra.mxu0 %v1711
  %1870 = vmatprep.subr.mxu0 %v1708
  %1871 = vmatpush1.msra.mxu0 %v1707
  %1872 = vmatprep.subr.mxu0 0.0
  %1873 = vmatpush2.msra.mxu0 0.0
  %1874 = vmatprep.subr.mxu0 0.0
  %1875 = vmatpush2.msra.mxu0 0.0
  %1876 = vmatprep.subr.mxu0 0.0
  %1877 = vmatpush2.msra.mxu0 0.0
  %1878 = vmatprep.subr.mxu0 0.0
  %1879 = vmatpush2.msra.mxu0 0.0
  %1880 = vmatprep.subr.mxu0 0.0
  %1881 = vmatpush2.msra.mxu0 0.0
  %1882 = vmatprep.subr.mxu0 0.0
  %1883 = vmatpush2.msra.mxu0 0.0
  %1884 = vmatprep.subr.mxu0 0.0
  %1885 = vmatpush2.msra.mxu0 0.0
  %1886 = vmatprep.subr.mxu0 0.0
  %1887 = vmatpush2.msra.mxu0 0.0
  %1888 = vmatprep.subr.mxu0 0.0
  %1889 = vmatpush2.msra.mxu0 0.0
  %1890 = vmatprep.subr.mxu0 0.0
  %1891 = vmatpush2.msra.mxu0 0.0
  %1892 = vmatprep.subr.mxu0 0.0
  %1893 = vmatpush2.msra.mxu0 0.0
  %1894 = vmatprep.subr.mxu0 0.0
  %1895 = vmatpush2.msra.mxu0 0.0
  %1896 = vmatprep.subr.mxu0 0.0
  %1897 = vmatpush2.msra.mxu0 0.0
  %1898 = vmatprep.subr.mxu0 0.0
  %1899 = vmatpush2.msra.mxu0 0.0
  %1900 = vmatprep.subr.mxu0 0.0
  %1901 = vmatpush2.msra.mxu0 0.0
  %1902 = vmatprep.subr.mxu0 0.0
  %1903 = vmatpush2.msra.mxu0 0.0
  %1904 = vmatprep.mubr.f32.mxu0 0.0
  %1905 = vmatmul.mubr.f32.gmra.mxu0 %v1704
  %v1906 = vpop.f32.mrf.mxu0
  %v1907 = vadd.f32 0.0, %v1906
  %v1908 = vpop.f32.mrf.mxu0
  %v1909 = vadd.f32 0.0, %v1908
  %1910 = vdwg.mxu0
  %v1911 = vadd.f32 %v1700, %v1836
  %v1912 = vadd.f32 %v1701, %v1838
  %v1913 = vadd.f32 %v1702, %v1907
  %v1914 = vadd.f32 %v1703, %v1909
  %v1915 = vxor.u32 %v1911, 2147483648
  %v1916 = vmul.f32 %v1915, 1.442695
  %v1917 = vpow.pop %v1916
  %v1918 = vadd.f32 %v1917, 1.0
  %v1919 = vrcp.pop %v1918
  %v1920 = vmul.f32 1.0, %v1919
  %v1921 = vxor.u32 %v1912, 2147483648
  %v1922 = vmul.f32 %v1921, 1.442695
  %v1923 = vpow.pop %v1922
  %v1924 = vadd.f32 %v1923, 1.0
  %v1925 = vrcp.pop %v1924
  %v1926 = vmul.f32 1.0, %v1925
  %v1927 = vtanh.pop %v1913
  %v1928 = vxor.u32 %v1914, 2147483648
  %v1929 = vmul.f32 %v1928, 1.442695
  %v1930 = vpow.pop %v1929
  %v1931 = vadd.f32 %v1930, 1.0
  %v1932 = vrcp.pop %v1931
  %v1933 = vmul.f32 1.0, %v1932
  %v1934 = vld [vmem:[#allocation6] sm:$0xff]
  %v1935 = vmul.f32 %v1926, %v1934
  %v1936 = vmul.f32 %v1920, %v1927
  %v1937 = vadd.f32 %v1935, %v1936
  %v1938 = vtanh.pop %v1937
  %v1939 = vmul.f32 %v1933, %v1938
  %1940 = vst [vmem:[#allocation6] sm:$0xff] %v1937
  %1941 = vst [vmem:[#allocation5] sm:$0xff] %v1939
  %s1942 = scalar_lea.vmem [#allocation3], 24
  %1943 = vst.msk [vmem:[%s1942] sm:$0xff] %vm1150, %v1939
  %1945 = vrot.lane.b32.xlu0 %v1939, 64
  %v1946 = vpop.permute.xlu0 %1945
  %s1948 = scalar_lea.vmem [#allocation4], 32
  %1949 = vst.msk [vmem:[%s1948] sm:$0xff] %vm1150, %v1946
  %v1950 = vld [vmem:[%s1695] sm:$0xff]
  %v1951 = vld [vmem:[%s1695 + $0x8] sm:$0xff]
  %v1952 = vld [vmem:[%s1695 + $0x10] sm:$0xff]
  %v1953 = vld [vmem:[%s1695 + $0x18] sm:$0xff]
  %v1954 = vld [vmem:[%s1688] sm:$0xff]
  %v1955 = vld [vmem:[%s1688 + $0x8] sm:$0xff]
  %v1956 = vld [vmem:[%s1688 + $0x10] sm:$0xff]
  %v1957 = vld [vmem:[%s1688 + $0x18] sm:$0xff]
  %v1958 = vsel %vm94, %v1950, %v1954
  %v1959 = vsel %vm95, %v1951, %v1955
  %v1960 = vsel %vm96, %v1952, %v1956
  %v1961 = vsel %vm97, %v1953, %v1957
  %v1962 = vld [vmem:[#allocation5] sm:$0xff]
  %v1963 = vld [vmem:[%s2] sm:$0xff]
  %v1964 = vld [vmem:[%s2 + $0x8] sm:$0xff]
  %v1965 = vld [vmem:[%s2 + $0x10] sm:$0xff]
  %v1966 = vld [vmem:[%s2 + $0x18] sm:$0xff]
  %v1967 = vld [vmem:[%s2 + $0x20] sm:$0xff]
  %v1968 = vld [vmem:[%s2 + $0x28] sm:$0xff]
  %v1969 = vld [vmem:[%s2 + $0x30] sm:$0xff]
  %v1970 = vld [vmem:[%s2 + $0x38] sm:$0xff]
  %v1971 = vld [vmem:[%s2 + $0x40] sm:$0xff]
  %v1972 = vld [vmem:[%s2 + $0x48] sm:$0xff]
  %v1973 = vld [vmem:[%s2 + $0x50] sm:$0xff]
  %v1974 = vld [vmem:[%s2 + $0x58] sm:$0xff]
  %v1975 = vld [vmem:[%s2 + $0x60] sm:$0xff]
  %v1976 = vld [vmem:[%s2 + $0x68] sm:$0xff]
  %v1977 = vld [vmem:[%s2 + $0x70] sm:$0xff]
  %v1978 = vld [vmem:[%s2 + $0x78] sm:$0xff]
  %v1979 = vld [vmem:[%s2 + $0x80] sm:$0xff]
  %v1980 = vld [vmem:[%s2 + $0x88] sm:$0xff]
  %v1981 = vld [vmem:[%s2 + $0x90] sm:$0xff]
  %v1982 = vld [vmem:[%s2 + $0x98] sm:$0xff]
  %v1983 = vld [vmem:[%s2 + $0xa0] sm:$0xff]
  %v1984 = vld [vmem:[%s2 + $0xa8] sm:$0xff]
  %v1985 = vld [vmem:[%s2 + $0xb0] sm:$0xff]
  %v1986 = vld [vmem:[%s2 + $0xb8] sm:$0xff]
  %v1987 = vld [vmem:[%s2 + $0xc0] sm:$0xff]
  %v1988 = vld [vmem:[%s2 + $0xc8] sm:$0xff]
  %v1989 = vld [vmem:[%s2 + $0xd0] sm:$0xff]
  %v1990 = vld [vmem:[%s2 + $0xd8] sm:$0xff]
  %v1991 = vld [vmem:[%s2 + $0xe0] sm:$0xff]
  %v1992 = vld [vmem:[%s2 + $0xe8] sm:$0xff]
  %v1993 = vld [vmem:[%s2 + $0xf0] sm:$0xff]
  %v1994 = vld [vmem:[%s2 + $0xf8] sm:$0xff]
  %v1995 = vld [vmem:[%s2 + $0x100] sm:$0xff]
  %v1996 = vld [vmem:[%s2 + $0x108] sm:$0xff]
  %v1997 = vld [vmem:[%s2 + $0x110] sm:$0xff]
  %v1998 = vld [vmem:[%s2 + $0x118] sm:$0xff]
  %v1999 = vld [vmem:[%s2 + $0x120] sm:$0xff]
  %v2000 = vld [vmem:[%s2 + $0x128] sm:$0xff]
  %v2001 = vld [vmem:[%s2 + $0x130] sm:$0xff]
  %v2002 = vld [vmem:[%s2 + $0x138] sm:$0xff]
  %v2003 = vld [vmem:[%s2 + $0x140] sm:$0xff]
  %v2004 = vld [vmem:[%s2 + $0x148] sm:$0xff]
  %v2005 = vld [vmem:[%s2 + $0x150] sm:$0xff]
  %v2006 = vld [vmem:[%s2 + $0x158] sm:$0xff]
  %v2007 = vld [vmem:[%s2 + $0x160] sm:$0xff]
  %v2008 = vld [vmem:[%s2 + $0x168] sm:$0xff]
  %v2009 = vld [vmem:[%s2 + $0x170] sm:$0xff]
  %v2010 = vld [vmem:[%s2 + $0x178] sm:$0xff]
  %v2011 = vld [vmem:[%s2 + $0x180] sm:$0xff]
  %v2012 = vld [vmem:[%s2 + $0x188] sm:$0xff]
  %v2013 = vld [vmem:[%s2 + $0x190] sm:$0xff]
  %v2014 = vld [vmem:[%s2 + $0x198] sm:$0xff]
  %v2015 = vld [vmem:[%s2 + $0x1a0] sm:$0xff]
  %v2016 = vld [vmem:[%s2 + $0x1a8] sm:$0xff]
  %v2017 = vld [vmem:[%s2 + $0x1b0] sm:$0xff]
  %v2018 = vld [vmem:[%s2 + $0x1b8] sm:$0xff]
  %v2019 = vld [vmem:[%s2 + $0x1c0] sm:$0xff]
  %v2020 = vld [vmem:[%s2 + $0x1c8] sm:$0xff]
  %v2021 = vld [vmem:[%s2 + $0x1d0] sm:$0xff]
  %v2022 = vld [vmem:[%s2 + $0x1d8] sm:$0xff]
  %v2023 = vld [vmem:[%s2 + $0x1e0] sm:$0xff]
  %v2024 = vld [vmem:[%s2 + $0x1e8] sm:$0xff]
  %v2025 = vld [vmem:[%s2 + $0x1f0] sm:$0xff]
  %v2026 = vld [vmem:[%s2 + $0x1f8] sm:$0xff]
  %2027 = vmatprep.subr.mxu0 %v2024
  %2028 = vmatpush1.msra.mxu0 %v2023
  %2029 = vmatprep.subr.mxu0 %v2020
  %2030 = vmatpush1.msra.mxu0 %v2019
  %2031 = vmatprep.subr.mxu0 %v2016
  %2032 = vmatpush1.msra.mxu0 %v2015
  %2033 = vmatprep.subr.mxu0 %v2012
  %2034 = vmatpush1.msra.mxu0 %v2011
  %2035 = vmatprep.subr.mxu0 %v2008
  %2036 = vmatpush1.msra.mxu0 %v2007
  %2037 = vmatprep.subr.mxu0 %v2004
  %2038 = vmatpush1.msra.mxu0 %v2003
  %2039 = vmatprep.subr.mxu0 %v2000
  %2040 = vmatpush1.msra.mxu0 %v1999
  %2041 = vmatprep.subr.mxu0 %v1996
  %2042 = vmatpush1.msra.mxu0 %v1995
  %2043 = vmatprep.subr.mxu0 %v1992
  %2044 = vmatpush1.msra.mxu0 %v1991
  %2045 = vmatprep.subr.mxu0 %v1988
  %2046 = vmatpush1.msra.mxu0 %v1987
  %2047 = vmatprep.subr.mxu0 %v1984
  %2048 = vmatpush1.msra.mxu0 %v1983
  %2049 = vmatprep.subr.mxu0 %v1980
  %2050 = vmatpush1.msra.mxu0 %v1979
  %2051 = vmatprep.subr.mxu0 %v1976
  %2052 = vmatpush1.msra.mxu0 %v1975
  %2053 = vmatprep.subr.mxu0 %v1972
  %2054 = vmatpush1.msra.mxu0 %v1971
  %2055 = vmatprep.subr.mxu0 %v1968
  %2056 = vmatpush1.msra.mxu0 %v1967
  %2057 = vmatprep.subr.mxu0 %v1964
  %2058 = vmatpush1.msra.mxu0 %v1963
  %2059 = vmatprep.subr.mxu0 0.0
  %2060 = vmatpush2.msra.mxu0 0.0
  %2061 = vmatprep.subr.mxu0 0.0
  %2062 = vmatpush2.msra.mxu0 0.0
  %2063 = vmatprep.subr.mxu0 0.0
  %2064 = vmatpush2.msra.mxu0 0.0
  %2065 = vmatprep.subr.mxu0 0.0
  %2066 = vmatpush2.msra.mxu0 0.0
  %2067 = vmatprep.subr.mxu0 0.0
  %2068 = vmatpush2.msra.mxu0 0.0
  %2069 = vmatprep.subr.mxu0 0.0
  %2070 = vmatpush2.msra.mxu0 0.0
  %2071 = vmatprep.subr.mxu0 0.0
  %2072 = vmatpush2.msra.mxu0 0.0
  %2073 = vmatprep.subr.mxu0 0.0
  %2074 = vmatpush2.msra.mxu0 0.0
  %2075 = vmatprep.subr.mxu0 0.0
  %2076 = vmatpush2.msra.mxu0 0.0
  %2077 = vmatprep.subr.mxu0 0.0
  %2078 = vmatpush2.msra.mxu0 0.0
  %2079 = vmatprep.subr.mxu0 0.0
  %2080 = vmatpush2.msra.mxu0 0.0
  %2081 = vmatprep.subr.mxu0 0.0
  %2082 = vmatpush2.msra.mxu0 0.0
  %2083 = vmatprep.subr.mxu0 0.0
  %2084 = vmatpush2.msra.mxu0 0.0
  %2085 = vmatprep.subr.mxu0 0.0
  %2086 = vmatpush2.msra.mxu0 0.0
  %2087 = vmatprep.subr.mxu0 0.0
  %2088 = vmatpush2.msra.mxu0 0.0
  %2089 = vmatprep.subr.mxu0 0.0
  %2090 = vmatpush2.msra.mxu0 0.0
  %2091 = vmatprep.mubr.f32.mxu0 0.0
  %2092 = vmatmul.mubr.f32.gmra.mxu0 %v1962
  %v2093 = vpop.f32.mrf.mxu0
  %v2094 = vadd.f32 0.0, %v2093
  %v2095 = vpop.f32.mrf.mxu0
  %v2096 = vadd.f32 0.0, %v2095
  %2097 = vdwg.mxu0
  %2098 = vmatprep.subr.mxu0 %v2026
  %2099 = vmatpush1.msra.mxu0 %v2025
  %2100 = vmatprep.subr.mxu0 %v2022
  %2101 = vmatpush1.msra.mxu0 %v2021
  %2102 = vmatprep.subr.mxu0 %v2018
  %2103 = vmatpush1.msra.mxu0 %v2017
  %2104 = vmatprep.subr.mxu0 %v2014
  %2105 = vmatpush1.msra.mxu0 %v2013
  %2106 = vmatprep.subr.mxu0 %v2010
  %2107 = vmatpush1.msra.mxu0 %v2009
  %2108 = vmatprep.subr.mxu0 %v2006
  %2109 = vmatpush1.msra.mxu0 %v2005
  %2110 = vmatprep.subr.mxu0 %v2002
  %2111 = vmatpush1.msra.mxu0 %v2001
  %2112 = vmatprep.subr.mxu0 %v1998
  %2113 = vmatpush1.msra.mxu0 %v1997
  %2114 = vmatprep.subr.mxu0 %v1994
  %2115 = vmatpush1.msra.mxu0 %v1993
  %2116 = vmatprep.subr.mxu0 %v1990
  %2117 = vmatpush1.msra.mxu0 %v1989
  %2118 = vmatprep.subr.mxu0 %v1986
  %2119 = vmatpush1.msra.mxu0 %v1985
  %2120 = vmatprep.subr.mxu0 %v1982
  %2121 = vmatpush1.msra.mxu0 %v1981
  %2122 = vmatprep.subr.mxu0 %v1978
  %2123 = vmatpush1.msra.mxu0 %v1977
  %2124 = vmatprep.subr.mxu0 %v1974
  %2125 = vmatpush1.msra.mxu0 %v1973
  %2126 = vmatprep.subr.mxu0 %v1970
  %2127 = vmatpush1.msra.mxu0 %v1969
  %2128 = vmatprep.subr.mxu0 %v1966
  %2129 = vmatpush1.msra.mxu0 %v1965
  %2130 = vmatprep.subr.mxu0 0.0
  %2131 = vmatpush2.msra.mxu0 0.0
  %2132 = vmatprep.subr.mxu0 0.0
  %2133 = vmatpush2.msra.mxu0 0.0
  %2134 = vmatprep.subr.mxu0 0.0
  %2135 = vmatpush2.msra.mxu0 0.0
  %2136 = vmatprep.subr.mxu0 0.0
  %2137 = vmatpush2.msra.mxu0 0.0
  %2138 = vmatprep.subr.mxu0 0.0
  %2139 = vmatpush2.msra.mxu0 0.0
  %2140 = vmatprep.subr.mxu0 0.0
  %2141 = vmatpush2.msra.mxu0 0.0
  %2142 = vmatprep.subr.mxu0 0.0
  %2143 = vmatpush2.msra.mxu0 0.0
  %2144 = vmatprep.subr.mxu0 0.0
  %2145 = vmatpush2.msra.mxu0 0.0
  %2146 = vmatprep.subr.mxu0 0.0
  %2147 = vmatpush2.msra.mxu0 0.0
  %2148 = vmatprep.subr.mxu0 0.0
  %2149 = vmatpush2.msra.mxu0 0.0
  %2150 = vmatprep.subr.mxu0 0.0
  %2151 = vmatpush2.msra.mxu0 0.0
  %2152 = vmatprep.subr.mxu0 0.0
  %2153 = vmatpush2.msra.mxu0 0.0
  %2154 = vmatprep.subr.mxu0 0.0
  %2155 = vmatpush2.msra.mxu0 0.0
  %2156 = vmatprep.subr.mxu0 0.0
  %2157 = vmatpush2.msra.mxu0 0.0
  %2158 = vmatprep.subr.mxu0 0.0
  %2159 = vmatpush2.msra.mxu0 0.0
  %2160 = vmatprep.subr.mxu0 0.0
  %2161 = vmatpush2.msra.mxu0 0.0
  %2162 = vmatprep.mubr.f32.mxu0 0.0
  %2163 = vmatmul.mubr.f32.gmra.mxu0 %v1962
  %v2164 = vpop.f32.mrf.mxu0
  %v2165 = vadd.f32 0.0, %v2164
  %v2166 = vpop.f32.mrf.mxu0
  %v2167 = vadd.f32 0.0, %v2166
  %2168 = vdwg.mxu0
  %v2169 = vadd.f32 %v1958, %v2094
  %v2170 = vadd.f32 %v1959, %v2096
  %v2171 = vadd.f32 %v1960, %v2165
  %v2172 = vadd.f32 %v1961, %v2167
  %v2173 = vxor.u32 %v2169, 2147483648
  %v2174 = vmul.f32 %v2173, 1.442695
  %v2175 = vpow.pop %v2174
  %v2176 = vadd.f32 %v2175, 1.0
  %v2177 = vrcp.pop %v2176
  %v2178 = vmul.f32 1.0, %v2177
  %v2179 = vxor.u32 %v2170, 2147483648
  %v2180 = vmul.f32 %v2179, 1.442695
  %v2181 = vpow.pop %v2180
  %v2182 = vadd.f32 %v2181, 1.0
  %v2183 = vrcp.pop %v2182
  %v2184 = vmul.f32 1.0, %v2183
  %v2185 = vtanh.pop %v2171
  %v2186 = vxor.u32 %v2172, 2147483648
  %v2187 = vmul.f32 %v2186, 1.442695
  %v2188 = vpow.pop %v2187
  %v2189 = vadd.f32 %v2188, 1.0
  %v2190 = vrcp.pop %v2189
  %v2191 = vmul.f32 1.0, %v2190
  %v2192 = vld [vmem:[#allocation6] sm:$0xff]
  %v2193 = vmul.f32 %v2184, %v2192
  %v2194 = vmul.f32 %v2178, %v2185
  %v2195 = vadd.f32 %v2193, %v2194
  %v2196 = vtanh.pop %v2195
  %v2197 = vmul.f32 %v2191, %v2196
  %2198 = vst [vmem:[#allocation6] sm:$0xff] %v2195
  %2199 = vst [vmem:[#allocation5] sm:$0xff] %v2197
  %s2200 = scalar_lea.vmem [#allocation3], 32
  %2201 = vst.msk [vmem:[%s2200] sm:$0xff] %vm1150, %v2197
  %2203 = vrot.lane.b32.xlu0 %v2197, 64
  %v2204 = vpop.permute.xlu0 %2203
  %s2206 = scalar_lea.vmem [#allocation4], 24
  %2207 = vst.msk [vmem:[%s2206] sm:$0xff] %vm1150, %v2204
  %v2208 = vld [vmem:[%s1431] sm:$0xff]
  %v2209 = vld [vmem:[%s1431 + $0x8] sm:$0xff]
  %v2210 = vld [vmem:[%s1431 + $0x10] sm:$0xff]
  %v2211 = vld [vmem:[%s1431 + $0x18] sm:$0xff]
  %v2212 = vld [vmem:[%s1424] sm:$0xff]
  %v2213 = vld [vmem:[%s1424 + $0x8] sm:$0xff]
  %v2214 = vld [vmem:[%s1424 + $0x10] sm:$0xff]
  %v2215 = vld [vmem:[%s1424 + $0x18] sm:$0xff]
  %v2216 = vsel %vm94, %v2208, %v2212
  %v2217 = vsel %vm95, %v2209, %v2213
  %v2218 = vsel %vm96, %v2210, %v2214
  %v2219 = vsel %vm97, %v2211, %v2215
  %v2220 = vld [vmem:[#allocation5] sm:$0xff]
  %v2221 = vld [vmem:[%s2] sm:$0xff]
  %v2222 = vld [vmem:[%s2 + $0x8] sm:$0xff]
  %v2223 = vld [vmem:[%s2 + $0x10] sm:$0xff]
  %v2224 = vld [vmem:[%s2 + $0x18] sm:$0xff]
  %v2225 = vld [vmem:[%s2 + $0x20] sm:$0xff]
  %v2226 = vld [vmem:[%s2 + $0x28] sm:$0xff]
  %v2227 = vld [vmem:[%s2 + $0x30] sm:$0xff]
  %v2228 = vld [vmem:[%s2 + $0x38] sm:$0xff]
  %v2229 = vld [vmem:[%s2 + $0x40] sm:$0xff]
  %v2230 = vld [vmem:[%s2 + $0x48] sm:$0xff]
  %v2231 = vld [vmem:[%s2 + $0x50] sm:$0xff]
  %v2232 = vld [vmem:[%s2 + $0x58] sm:$0xff]
  %v2233 = vld [vmem:[%s2 + $0x60] sm:$0xff]
  %v2234 = vld [vmem:[%s2 + $0x68] sm:$0xff]
  %v2235 = vld [vmem:[%s2 + $0x70] sm:$0xff]
  %v2236 = vld [vmem:[%s2 + $0x78] sm:$0xff]
  %v2237 = vld [vmem:[%s2 + $0x80] sm:$0xff]
  %v2238 = vld [vmem:[%s2 + $0x88] sm:$0xff]
  %v2239 = vld [vmem:[%s2 + $0x90] sm:$0xff]
  %v2240 = vld [vmem:[%s2 + $0x98] sm:$0xff]
  %v2241 = vld [vmem:[%s2 + $0xa0] sm:$0xff]
  %v2242 = vld [vmem:[%s2 + $0xa8] sm:$0xff]
  %v2243 = vld [vmem:[%s2 + $0xb0] sm:$0xff]
  %v2244 = vld [vmem:[%s2 + $0xb8] sm:$0xff]
  %v2245 = vld [vmem:[%s2 + $0xc0] sm:$0xff]
  %v2246 = vld [vmem:[%s2 + $0xc8] sm:$0xff]
  %v2247 = vld [vmem:[%s2 + $0xd0] sm:$0xff]
  %v2248 = vld [vmem:[%s2 + $0xd8] sm:$0xff]
  %v2249 = vld [vmem:[%s2 + $0xe0] sm:$0xff]
  %v2250 = vld [vmem:[%s2 + $0xe8] sm:$0xff]
  %v2251 = vld [vmem:[%s2 + $0xf0] sm:$0xff]
  %v2252 = vld [vmem:[%s2 + $0xf8] sm:$0xff]
  %v2253 = vld [vmem:[%s2 + $0x100] sm:$0xff]
  %v2254 = vld [vmem:[%s2 + $0x108] sm:$0xff]
  %v2255 = vld [vmem:[%s2 + $0x110] sm:$0xff]
  %v2256 = vld [vmem:[%s2 + $0x118] sm:$0xff]
  %v2257 = vld [vmem:[%s2 + $0x120] sm:$0xff]
  %v2258 = vld [vmem:[%s2 + $0x128] sm:$0xff]
  %v2259 = vld [vmem:[%s2 + $0x130] sm:$0xff]
  %v2260 = vld [vmem:[%s2 + $0x138] sm:$0xff]
  %v2261 = vld [vmem:[%s2 + $0x140] sm:$0xff]
  %v2262 = vld [vmem:[%s2 + $0x148] sm:$0xff]
  %v2263 = vld [vmem:[%s2 + $0x150] sm:$0xff]
  %v2264 = vld [vmem:[%s2 + $0x158] sm:$0xff]
  %v2265 = vld [vmem:[%s2 + $0x160] sm:$0xff]
  %v2266 = vld [vmem:[%s2 + $0x168] sm:$0xff]
  %v2267 = vld [vmem:[%s2 + $0x170] sm:$0xff]
  %v2268 = vld [vmem:[%s2 + $0x178] sm:$0xff]
  %v2269 = vld [vmem:[%s2 + $0x180] sm:$0xff]
  %v2270 = vld [vmem:[%s2 + $0x188] sm:$0xff]
  %v2271 = vld [vmem:[%s2 + $0x190] sm:$0xff]
  %v2272 = vld [vmem:[%s2 + $0x198] sm:$0xff]
  %v2273 = vld [vmem:[%s2 + $0x1a0] sm:$0xff]
  %v2274 = vld [vmem:[%s2 + $0x1a8] sm:$0xff]
  %v2275 = vld [vmem:[%s2 + $0x1b0] sm:$0xff]
  %v2276 = vld [vmem:[%s2 + $0x1b8] sm:$0xff]
  %v2277 = vld [vmem:[%s2 + $0x1c0] sm:$0xff]
  %v2278 = vld [vmem:[%s2 + $0x1c8] sm:$0xff]
  %v2279 = vld [vmem:[%s2 + $0x1d0] sm:$0xff]
  %v2280 = vld [vmem:[%s2 + $0x1d8] sm:$0xff]
  %v2281 = vld [vmem:[%s2 + $0x1e0] sm:$0xff]
  %v2282 = vld [vmem:[%s2 + $0x1e8] sm:$0xff]
  %v2283 = vld [vmem:[%s2 + $0x1f0] sm:$0xff]
  %v2284 = vld [vmem:[%s2 + $0x1f8] sm:$0xff]
  %2285 = vmatprep.subr.mxu0 %v2282
  %2286 = vmatpush1.msra.mxu0 %v2281
  %2287 = vmatprep.subr.mxu0 %v2278
  %2288 = vmatpush1.msra.mxu0 %v2277
  %2289 = vmatprep.subr.mxu0 %v2274
  %2290 = vmatpush1.msra.mxu0 %v2273
  %2291 = vmatprep.subr.mxu0 %v2270
  %2292 = vmatpush1.msra.mxu0 %v2269
  %2293 = vmatprep.subr.mxu0 %v2266
  %2294 = vmatpush1.msra.mxu0 %v2265
  %2295 = vmatprep.subr.mxu0 %v2262
  %2296 = vmatpush1.msra.mxu0 %v2261
  %2297 = vmatprep.subr.mxu0 %v2258
  %2298 = vmatpush1.msra.mxu0 %v2257
  %2299 = vmatprep.subr.mxu0 %v2254
  %2300 = vmatpush1.msra.mxu0 %v2253
  %2301 = vmatprep.subr.mxu0 %v2250
  %2302 = vmatpush1.msra.mxu0 %v2249
  %2303 = vmatprep.subr.mxu0 %v2246
  %2304 = vmatpush1.msra.mxu0 %v2245
  %2305 = vmatprep.subr.mxu0 %v2242
  %2306 = vmatpush1.msra.mxu0 %v2241
  %2307 = vmatprep.subr.mxu0 %v2238
  %2308 = vmatpush1.msra.mxu0 %v2237
  %2309 = vmatprep.subr.mxu0 %v2234
  %2310 = vmatpush1.msra.mxu0 %v2233
  %2311 = vmatprep.subr.mxu0 %v2230
  %2312 = vmatpush1.msra.mxu0 %v2229
  %2313 = vmatprep.subr.mxu0 %v2226
  %2314 = vmatpush1.msra.mxu0 %v2225
  %2315 = vmatprep.subr.mxu0 %v2222
  %2316 = vmatpush1.msra.mxu0 %v2221
  %2317 = vmatprep.subr.mxu0 0.0
  %2318 = vmatpush2.msra.mxu0 0.0
  %2319 = vmatprep.subr.mxu0 0.0
  %2320 = vmatpush2.msra.mxu0 0.0
  %2321 = vmatprep.subr.mxu0 0.0
  %2322 = vmatpush2.msra.mxu0 0.0
  %2323 = vmatprep.subr.mxu0 0.0
  %2324 = vmatpush2.msra.mxu0 0.0
  %2325 = vmatprep.subr.mxu0 0.0
  %2326 = vmatpush2.msra.mxu0 0.0
  %2327 = vmatprep.subr.mxu0 0.0
  %2328 = vmatpush2.msra.mxu0 0.0
  %2329 = vmatprep.subr.mxu0 0.0
  %2330 = vmatpush2.msra.mxu0 0.0
  %2331 = vmatprep.subr.mxu0 0.0
  %2332 = vmatpush2.msra.mxu0 0.0
  %2333 = vmatprep.subr.mxu0 0.0
  %2334 = vmatpush2.msra.mxu0 0.0
  %2335 = vmatprep.subr.mxu0 0.0
  %2336 = vmatpush2.msra.mxu0 0.0
  %2337 = vmatprep.subr.mxu0 0.0
  %2338 = vmatpush2.msra.mxu0 0.0
  %2339 = vmatprep.subr.mxu0 0.0
  %2340 = vmatpush2.msra.mxu0 0.0
  %2341 = vmatprep.subr.mxu0 0.0
  %2342 = vmatpush2.msra.mxu0 0.0
  %2343 = vmatprep.subr.mxu0 0.0
  %2344 = vmatpush2.msra.mxu0 0.0
  %2345 = vmatprep.subr.mxu0 0.0
  %2346 = vmatpush2.msra.mxu0 0.0
  %2347 = vmatprep.subr.mxu0 0.0
  %2348 = vmatpush2.msra.mxu0 0.0
  %2349 = vmatprep.mubr.f32.mxu0 0.0
  %2350 = vmatmul.mubr.f32.gmra.mxu0 %v2220
  %v2351 = vpop.f32.mrf.mxu0
  %v2352 = vadd.f32 0.0, %v2351
  %v2353 = vpop.f32.mrf.mxu0
  %v2354 = vadd.f32 0.0, %v2353
  %2355 = vdwg.mxu0
  %2356 = vmatprep.subr.mxu0 %v2284
  %2357 = vmatpush1.msra.mxu0 %v2283
  %2358 = vmatprep.subr.mxu0 %v2280
  %2359 = vmatpush1.msra.mxu0 %v2279
  %2360 = vmatprep.subr.mxu0 %v2276
  %2361 = vmatpush1.msra.mxu0 %v2275
  %2362 = vmatprep.subr.mxu0 %v2272
  %2363 = vmatpush1.msra.mxu0 %v2271
  %2364 = vmatprep.subr.mxu0 %v2268
  %2365 = vmatpush1.msra.mxu0 %v2267
  %2366 = vmatprep.subr.mxu0 %v2264
  %2367 = vmatpush1.msra.mxu0 %v2263
  %2368 = vmatprep.subr.mxu0 %v2260
  %2369 = vmatpush1.msra.mxu0 %v2259
  %2370 = vmatprep.subr.mxu0 %v2256
  %2371 = vmatpush1.msra.mxu0 %v2255
  %2372 = vmatprep.subr.mxu0 %v2252
  %2373 = vmatpush1.msra.mxu0 %v2251
  %2374 = vmatprep.subr.mxu0 %v2248
  %2375 = vmatpush1.msra.mxu0 %v2247
  %2376 = vmatprep.subr.mxu0 %v2244
  %2377 = vmatpush1.msra.mxu0 %v2243
  %2378 = vmatprep.subr.mxu0 %v2240
  %2379 = vmatpush1.msra.mxu0 %v2239
  %2380 = vmatprep.subr.mxu0 %v2236
  %2381 = vmatpush1.msra.mxu0 %v2235
  %2382 = vmatprep.subr.mxu0 %v2232
  %2383 = vmatpush1.msra.mxu0 %v2231
  %2384 = vmatprep.subr.mxu0 %v2228
  %2385 = vmatpush1.msra.mxu0 %v2227
  %2386 = vmatprep.subr.mxu0 %v2224
  %2387 = vmatpush1.msra.mxu0 %v2223
  %2388 = vmatprep.subr.mxu0 0.0
  %2389 = vmatpush2.msra.mxu0 0.0
  %2390 = vmatprep.subr.mxu0 0.0
  %2391 = vmatpush2.msra.mxu0 0.0
  %2392 = vmatprep.subr.mxu0 0.0
  %2393 = vmatpush2.msra.mxu0 0.0
  %2394 = vmatprep.subr.mxu0 0.0
  %2395 = vmatpush2.msra.mxu0 0.0
  %2396 = vmatprep.subr.mxu0 0.0
  %2397 = vmatpush2.msra.mxu0 0.0
  %2398 = vmatprep.subr.mxu0 0.0
  %2399 = vmatpush2.msra.mxu0 0.0
  %2400 = vmatprep.subr.mxu0 0.0
  %2401 = vmatpush2.msra.mxu0 0.0
  %2402 = vmatprep.subr.mxu0 0.0
  %2403 = vmatpush2.msra.mxu0 0.0
  %2404 = vmatprep.subr.mxu0 0.0
  %2405 = vmatpush2.msra.mxu0 0.0
  %2406 = vmatprep.subr.mxu0 0.0
  %2407 = vmatpush2.msra.mxu0 0.0
  %2408 = vmatprep.subr.mxu0 0.0
  %2409 = vmatpush2.msra.mxu0 0.0
  %2410 = vmatprep.subr.mxu0 0.0
  %2411 = vmatpush2.msra.mxu0 0.0
  %2412 = vmatprep.subr.mxu0 0.0
  %2413 = vmatpush2.msra.mxu0 0.0
  %2414 = vmatprep.subr.mxu0 0.0
  %2415 = vmatpush2.msra.mxu0 0.0
  %2416 = vmatprep.subr.mxu0 0.0
  %2417 = vmatpush2.msra.mxu0 0.0
  %2418 = vmatprep.subr.mxu0 0.0
  %2419 = vmatpush2.msra.mxu0 0.0
  %2420 = vmatprep.mubr.f32.mxu0 0.0
  %2421 = vmatmul.mubr.f32.gmra.mxu0 %v2220
  %v2422 = vpop.f32.mrf.mxu0
  %v2423 = vadd.f32 0.0, %v2422
  %v2424 = vpop.f32.mrf.mxu0
  %v2425 = vadd.f32 0.0, %v2424
  %2426 = vdwg.mxu0
  %v2427 = vadd.f32 %v2216, %v2352
  %v2428 = vadd.f32 %v2217, %v2354
  %v2429 = vadd.f32 %v2218, %v2423
  %v2430 = vadd.f32 %v2219, %v2425
  %v2431 = vxor.u32 %v2427, 2147483648
  %v2432 = vmul.f32 %v2431, 1.442695
  %v2433 = vpow.pop %v2432
  %v2434 = vadd.f32 %v2433, 1.0
  %v2435 = vrcp.pop %v2434
  %v2436 = vmul.f32 1.0, %v2435
  %v2437 = vxor.u32 %v2428, 2147483648
  %v2438 = vmul.f32 %v2437, 1.442695
  %v2439 = vpow.pop %v2438
  %v2440 = vadd.f32 %v2439, 1.0
  %v2441 = vrcp.pop %v2440
  %v2442 = vmul.f32 1.0, %v2441
  %v2443 = vtanh.pop %v2429
  %v2444 = vxor.u32 %v2430, 2147483648
  %v2445 = vmul.f32 %v2444, 1.442695
  %v2446 = vpow.pop %v2445
  %v2447 = vadd.f32 %v2446, 1.0
  %v2448 = vrcp.pop %v2447
  %v2449 = vmul.f32 1.0, %v2448
  %v2450 = vld [vmem:[#allocation6] sm:$0xff]
  %v2451 = vmul.f32 %v2442, %v2450
  %v2452 = vmul.f32 %v2436, %v2443
  %v2453 = vadd.f32 %v2451, %v2452
  %v2454 = vtanh.pop %v2453
  %v2455 = vmul.f32 %v2449, %v2454
  %2456 = vst [vmem:[#allocation6] sm:$0xff] %v2453
  %2457 = vst [vmem:[#allocation5] sm:$0xff] %v2455
  %s2458 = scalar_lea.vmem [#allocation3], 40
  %2459 = vst.msk [vmem:[%s2458] sm:$0xff] %vm1150, %v2455
  %2461 = vrot.lane.b32.xlu0 %v2455, 64
  %v2462 = vpop.permute.xlu0 %2461
  %s2464 = scalar_lea.vmem [#allocation4], 16
  %2465 = vst.msk [vmem:[%s2464] sm:$0xff] %vm1150, %v2462
  %v2466 = vld [vmem:[%s1167] sm:$0xff]
  %v2467 = vld [vmem:[%s1167 + $0x8] sm:$0xff]
  %v2468 = vld [vmem:[%s1167 + $0x10] sm:$0xff]
  %v2469 = vld [vmem:[%s1167 + $0x18] sm:$0xff]
  %v2470 = vld [vmem:[%s1160] sm:$0xff]
  %v2471 = vld [vmem:[%s1160 + $0x8] sm:$0xff]
  %v2472 = vld [vmem:[%s1160 + $0x10] sm:$0xff]
  %v2473 = vld [vmem:[%s1160 + $0x18] sm:$0xff]
  %v2474 = vsel %vm94, %v2466, %v2470
  %v2475 = vsel %vm95, %v2467, %v2471
  %v2476 = vsel %vm96, %v2468, %v2472
  %v2477 = vsel %vm97, %v2469, %v2473
  %v2478 = vld [vmem:[#allocation5] sm:$0xff]
  %v2479 = vld [vmem:[%s2] sm:$0xff]
  %v2480 = vld [vmem:[%s2 + $0x8] sm:$0xff]
  %v2481 = vld [vmem:[%s2 + $0x10] sm:$0xff]
  %v2482 = vld [vmem:[%s2 + $0x18] sm:$0xff]
  %v2483 = vld [vmem:[%s2 + $0x20] sm:$0xff]
  %v2484 = vld [vmem:[%s2 + $0x28] sm:$0xff]
  %v2485 = vld [vmem:[%s2 + $0x30] sm:$0xff]
  %v2486 = vld [vmem:[%s2 + $0x38] sm:$0xff]
  %v2487 = vld [vmem:[%s2 + $0x40] sm:$0xff]
  %v2488 = vld [vmem:[%s2 + $0x48] sm:$0xff]
  %v2489 = vld [vmem:[%s2 + $0x50] sm:$0xff]
  %v2490 = vld [vmem:[%s2 + $0x58] sm:$0xff]
  %v2491 = vld [vmem:[%s2 + $0x60] sm:$0xff]
  %v2492 = vld [vmem:[%s2 + $0x68] sm:$0xff]
  %v2493 = vld [vmem:[%s2 + $0x70] sm:$0xff]
  %v2494 = vld [vmem:[%s2 + $0x78] sm:$0xff]
  %v2495 = vld [vmem:[%s2 + $0x80] sm:$0xff]
  %v2496 = vld [vmem:[%s2 + $0x88] sm:$0xff]
  %v2497 = vld [vmem:[%s2 + $0x90] sm:$0xff]
  %v2498 = vld [vmem:[%s2 + $0x98] sm:$0xff]
  %v2499 = vld [vmem:[%s2 + $0xa0] sm:$0xff]
  %v2500 = vld [vmem:[%s2 + $0xa8] sm:$0xff]
  %v2501 = vld [vmem:[%s2 + $0xb0] sm:$0xff]
  %v2502 = vld [vmem:[%s2 + $0xb8] sm:$0xff]
  %v2503 = vld [vmem:[%s2 + $0xc0] sm:$0xff]
  %v2504 = vld [vmem:[%s2 + $0xc8] sm:$0xff]
  %v2505 = vld [vmem:[%s2 + $0xd0] sm:$0xff]
  %v2506 = vld [vmem:[%s2 + $0xd8] sm:$0xff]
  %v2507 = vld [vmem:[%s2 + $0xe0] sm:$0xff]
  %v2508 = vld [vmem:[%s2 + $0xe8] sm:$0xff]
  %v2509 = vld [vmem:[%s2 + $0xf0] sm:$0xff]
  %v2510 = vld [vmem:[%s2 + $0xf8] sm:$0xff]
  %v2511 = vld [vmem:[%s2 + $0x100] sm:$0xff]
  %v2512 = vld [vmem:[%s2 + $0x108] sm:$0xff]
  %v2513 = vld [vmem:[%s2 + $0x110] sm:$0xff]
  %v2514 = vld [vmem:[%s2 + $0x118] sm:$0xff]
  %v2515 = vld [vmem:[%s2 + $0x120] sm:$0xff]
  %v2516 = vld [vmem:[%s2 + $0x128] sm:$0xff]
  %v2517 = vld [vmem:[%s2 + $0x130] sm:$0xff]
  %v2518 = vld [vmem:[%s2 + $0x138] sm:$0xff]
  %v2519 = vld [vmem:[%s2 + $0x140] sm:$0xff]
  %v2520 = vld [vmem:[%s2 + $0x148] sm:$0xff]
  %v2521 = vld [vmem:[%s2 + $0x150] sm:$0xff]
  %v2522 = vld [vmem:[%s2 + $0x158] sm:$0xff]
  %v2523 = vld [vmem:[%s2 + $0x160] sm:$0xff]
  %v2524 = vld [vmem:[%s2 + $0x168] sm:$0xff]
  %v2525 = vld [vmem:[%s2 + $0x170] sm:$0xff]
  %v2526 = vld [vmem:[%s2 + $0x178] sm:$0xff]
  %v2527 = vld [vmem:[%s2 + $0x180] sm:$0xff]
  %v2528 = vld [vmem:[%s2 + $0x188] sm:$0xff]
  %v2529 = vld [vmem:[%s2 + $0x190] sm:$0xff]
  %v2530 = vld [vmem:[%s2 + $0x198] sm:$0xff]
  %v2531 = vld [vmem:[%s2 + $0x1a0] sm:$0xff]
  %v2532 = vld [vmem:[%s2 + $0x1a8] sm:$0xff]
  %v2533 = vld [vmem:[%s2 + $0x1b0] sm:$0xff]
  %v2534 = vld [vmem:[%s2 + $0x1b8] sm:$0xff]
  %v2535 = vld [vmem:[%s2 + $0x1c0] sm:$0xff]
  %v2536 = vld [vmem:[%s2 + $0x1c8] sm:$0xff]
  %v2537 = vld [vmem:[%s2 + $0x1d0] sm:$0xff]
  %v2538 = vld [vmem:[%s2 + $0x1d8] sm:$0xff]
  %v2539 = vld [vmem:[%s2 + $0x1e0] sm:$0xff]
  %v2540 = vld [vmem:[%s2 + $0x1e8] sm:$0xff]
  %v2541 = vld [vmem:[%s2 + $0x1f0] sm:$0xff]
  %v2542 = vld [vmem:[%s2 + $0x1f8] sm:$0xff]
  %2543 = vmatprep.subr.mxu0 %v2540
  %2544 = vmatpush1.msra.mxu0 %v2539
  %2545 = vmatprep.subr.mxu0 %v2536
  %2546 = vmatpush1.msra.mxu0 %v2535
  %2547 = vmatprep.subr.mxu0 %v2532
  %2548 = vmatpush1.msra.mxu0 %v2531
  %2549 = vmatprep.subr.mxu0 %v2528
  %2550 = vmatpush1.msra.mxu0 %v2527
  %2551 = vmatprep.subr.mxu0 %v2524
  %2552 = vmatpush1.msra.mxu0 %v2523
  %2553 = vmatprep.subr.mxu0 %v2520
  %2554 = vmatpush1.msra.mxu0 %v2519
  %2555 = vmatprep.subr.mxu0 %v2516
  %2556 = vmatpush1.msra.mxu0 %v2515
  %2557 = vmatprep.subr.mxu0 %v2512
  %2558 = vmatpush1.msra.mxu0 %v2511
  %2559 = vmatprep.subr.mxu0 %v2508
  %2560 = vmatpush1.msra.mxu0 %v2507
  %2561 = vmatprep.subr.mxu0 %v2504
  %2562 = vmatpush1.msra.mxu0 %v2503
  %2563 = vmatprep.subr.mxu0 %v2500
  %2564 = vmatpush1.msra.mxu0 %v2499
  %2565 = vmatprep.subr.mxu0 %v2496
  %2566 = vmatpush1.msra.mxu0 %v2495
  %2567 = vmatprep.subr.mxu0 %v2492
  %2568 = vmatpush1.msra.mxu0 %v2491
  %2569 = vmatprep.subr.mxu0 %v2488
  %2570 = vmatpush1.msra.mxu0 %v2487
  %2571 = vmatprep.subr.mxu0 %v2484
  %2572 = vmatpush1.msra.mxu0 %v2483
  %2573 = vmatprep.subr.mxu0 %v2480
  %2574 = vmatpush1.msra.mxu0 %v2479
  %2575 = vmatprep.subr.mxu0 0.0
  %2576 = vmatpush2.msra.mxu0 0.0
  %2577 = vmatprep.subr.mxu0 0.0
  %2578 = vmatpush2.msra.mxu0 0.0
  %2579 = vmatprep.subr.mxu0 0.0
  %2580 = vmatpush2.msra.mxu0 0.0
  %2581 = vmatprep.subr.mxu0 0.0
  %2582 = vmatpush2.msra.mxu0 0.0
  %2583 = vmatprep.subr.mxu0 0.0
  %2584 = vmatpush2.msra.mxu0 0.0
  %2585 = vmatprep.subr.mxu0 0.0
  %2586 = vmatpush2.msra.mxu0 0.0
  %2587 = vmatprep.subr.mxu0 0.0
  %2588 = vmatpush2.msra.mxu0 0.0
  %2589 = vmatprep.subr.mxu0 0.0
  %2590 = vmatpush2.msra.mxu0 0.0
  %2591 = vmatprep.subr.mxu0 0.0
  %2592 = vmatpush2.msra.mxu0 0.0
  %2593 = vmatprep.subr.mxu0 0.0
  %2594 = vmatpush2.msra.mxu0 0.0
  %2595 = vmatprep.subr.mxu0 0.0
  %2596 = vmatpush2.msra.mxu0 0.0
  %2597 = vmatprep.subr.mxu0 0.0
  %2598 = vmatpush2.msra.mxu0 0.0
  %2599 = vmatprep.subr.mxu0 0.0
  %2600 = vmatpush2.msra.mxu0 0.0
  %2601 = vmatprep.subr.mxu0 0.0
  %2602 = vmatpush2.msra.mxu0 0.0
  %2603 = vmatprep.subr.mxu0 0.0
  %2604 = vmatpush2.msra.mxu0 0.0
  %2605 = vmatprep.subr.mxu0 0.0
  %2606 = vmatpush2.msra.mxu0 0.0
  %2607 = vmatprep.mubr.f32.mxu0 0.0
  %2608 = vmatmul.mubr.f32.gmra.mxu0 %v2478
  %v2609 = vpop.f32.mrf.mxu0
  %v2610 = vadd.f32 0.0, %v2609
  %v2611 = vpop.f32.mrf.mxu0
  %v2612 = vadd.f32 0.0, %v2611
  %2613 = vdwg.mxu0
  %2614 = vmatprep.subr.mxu0 %v2542
  %2615 = vmatpush1.msra.mxu0 %v2541
  %2616 = vmatprep.subr.mxu0 %v2538
  %2617 = vmatpush1.msra.mxu0 %v2537
  %2618 = vmatprep.subr.mxu0 %v2534
  %2619 = vmatpush1.msra.mxu0 %v2533
  %2620 = vmatprep.subr.mxu0 %v2530
  %2621 = vmatpush1.msra.mxu0 %v2529
  %2622 = vmatprep.subr.mxu0 %v2526
  %2623 = vmatpush1.msra.mxu0 %v2525
  %2624 = vmatprep.subr.mxu0 %v2522
  %2625 = vmatpush1.msra.mxu0 %v2521
  %2626 = vmatprep.subr.mxu0 %v2518
  %2627 = vmatpush1.msra.mxu0 %v2517
  %2628 = vmatprep.subr.mxu0 %v2514
  %2629 = vmatpush1.msra.mxu0 %v2513
  %2630 = vmatprep.subr.mxu0 %v2510
  %2631 = vmatpush1.msra.mxu0 %v2509
  %2632 = vmatprep.subr.mxu0 %v2506
  %2633 = vmatpush1.msra.mxu0 %v2505
  %2634 = vmatprep.subr.mxu0 %v2502
  %2635 = vmatpush1.msra.mxu0 %v2501
  %2636 = vmatprep.subr.mxu0 %v2498
  %2637 = vmatpush1.msra.mxu0 %v2497
  %2638 = vmatprep.subr.mxu0 %v2494
  %2639 = vmatpush1.msra.mxu0 %v2493
  %2640 = vmatprep.subr.mxu0 %v2490
  %2641 = vmatpush1.msra.mxu0 %v2489
  %2642 = vmatprep.subr.mxu0 %v2486
  %2643 = vmatpush1.msra.mxu0 %v2485
  %2644 = vmatprep.subr.mxu0 %v2482
  %2645 = vmatpush1.msra.mxu0 %v2481
  %2646 = vmatprep.subr.mxu0 0.0
  %2647 = vmatpush2.msra.mxu0 0.0
  %2648 = vmatprep.subr.mxu0 0.0
  %2649 = vmatpush2.msra.mxu0 0.0
  %2650 = vmatprep.subr.mxu0 0.0
  %2651 = vmatpush2.msra.mxu0 0.0
  %2652 = vmatprep.subr.mxu0 0.0
  %2653 = vmatpush2.msra.mxu0 0.0
  %2654 = vmatprep.subr.mxu0 0.0
  %2655 = vmatpush2.msra.mxu0 0.0
  %2656 = vmatprep.subr.mxu0 0.0
  %2657 = vmatpush2.msra.mxu0 0.0
  %2658 = vmatprep.subr.mxu0 0.0
  %2659 = vmatpush2.msra.mxu0 0.0
  %2660 = vmatprep.subr.mxu0 0.0
  %2661 = vmatpush2.msra.mxu0 0.0
  %2662 = vmatprep.subr.mxu0 0.0
  %2663 = vmatpush2.msra.mxu0 0.0
  %2664 = vmatprep.subr.mxu0 0.0
  %2665 = vmatpush2.msra.mxu0 0.0
  %2666 = vmatprep.subr.mxu0 0.0
  %2667 = vmatpush2.msra.mxu0 0.0
  %2668 = vmatprep.subr.mxu0 0.0
  %2669 = vmatpush2.msra.mxu0 0.0
  %2670 = vmatprep.subr.mxu0 0.0
  %2671 = vmatpush2.msra.mxu0 0.0
  %2672 = vmatprep.subr.mxu0 0.0
  %2673 = vmatpush2.msra.mxu0 0.0
  %2674 = vmatprep.subr.mxu0 0.0
  %2675 = vmatpush2.msra.mxu0 0.0
  %2676 = vmatprep.subr.mxu0 0.0
  %2677 = vmatpush2.msra.mxu0 0.0
  %2678 = vmatprep.mubr.f32.mxu0 0.0
  %2679 = vmatmul.mubr.f32.gmra.mxu0 %v2478
  %v2680 = vpop.f32.mrf.mxu0
  %v2681 = vadd.f32 0.0, %v2680
  %v2682 = vpop.f32.mrf.mxu0
  %v2683 = vadd.f32 0.0, %v2682
  %2684 = vdwg.mxu0
  %v2685 = vadd.f32 %v2474, %v2610
  %v2686 = vadd.f32 %v2475, %v2612
  %v2687 = vadd.f32 %v2476, %v2681
  %v2688 = vadd.f32 %v2477, %v2683
  %v2689 = vxor.u32 %v2685, 2147483648
  %v2690 = vmul.f32 %v2689, 1.442695
  %v2691 = vpow.pop %v2690
  %v2692 = vadd.f32 %v2691, 1.0
  %v2693 = vrcp.pop %v2692
  %v2694 = vmul.f32 1.0, %v2693
  %v2695 = vxor.u32 %v2686, 2147483648
  %v2696 = vmul.f32 %v2695, 1.442695
  %v2697 = vpow.pop %v2696
  %v2698 = vadd.f32 %v2697, 1.0
  %v2699 = vrcp.pop %v2698
  %v2700 = vmul.f32 1.0, %v2699
  %v2701 = vtanh.pop %v2687
  %v2702 = vxor.u32 %v2688, 2147483648
  %v2703 = vmul.f32 %v2702, 1.442695
  %v2704 = vpow.pop %v2703
  %v2705 = vadd.f32 %v2704, 1.0
  %v2706 = vrcp.pop %v2705
  %v2707 = vmul.f32 1.0, %v2706
  %v2708 = vld [vmem:[#allocation6] sm:$0xff]
  %v2709 = vmul.f32 %v2700, %v2708
  %v2710 = vmul.f32 %v2694, %v2701
  %v2711 = vadd.f32 %v2709, %v2710
  %v2712 = vtanh.pop %v2711
  %v2713 = vmul.f32 %v2707, %v2712
  %2714 = vst [vmem:[#allocation6] sm:$0xff] %v2711
  %2715 = vst [vmem:[#allocation5] sm:$0xff] %v2713
  %s2716 = scalar_lea.vmem [#allocation3], 48
  %2717 = vst.msk [vmem:[%s2716] sm:$0xff] %vm1150, %v2713
  %2719 = vrot.lane.b32.xlu0 %v2713, 64
  %v2720 = vpop.permute.xlu0 %2719
  %s2722 = scalar_lea.vmem [#allocation4], 8
  %2723 = vst.msk [vmem:[%s2722] sm:$0xff] %vm1150, %v2720
  %v2724 = vld [vmem:[%s903] sm:$0xff]
  %v2725 = vld [vmem:[%s903 + $0x8] sm:$0xff]
  %v2726 = vld [vmem:[%s903 + $0x10] sm:$0xff]
  %v2727 = vld [vmem:[%s903 + $0x18] sm:$0xff]
  %v2728 = vld [vmem:[%s896] sm:$0xff]
  %v2729 = vld [vmem:[%s896 + $0x8] sm:$0xff]
  %v2730 = vld [vmem:[%s896 + $0x10] sm:$0xff]
  %v2731 = vld [vmem:[%s896 + $0x18] sm:$0xff]
  %v2732 = vsel %vm94, %v2724, %v2728
  %v2733 = vsel %vm95, %v2725, %v2729
  %v2734 = vsel %vm96, %v2726, %v2730
  %v2735 = vsel %vm97, %v2727, %v2731
  %v2736 = vld [vmem:[#allocation5] sm:$0xff]
  %v2737 = vld [vmem:[%s2] sm:$0xff]
  %v2738 = vld [vmem:[%s2 + $0x8] sm:$0xff]
  %v2739 = vld [vmem:[%s2 + $0x10] sm:$0xff]
  %v2740 = vld [vmem:[%s2 + $0x18] sm:$0xff]
  %v2741 = vld [vmem:[%s2 + $0x20] sm:$0xff]
  %v2742 = vld [vmem:[%s2 + $0x28] sm:$0xff]
  %v2743 = vld [vmem:[%s2 + $0x30] sm:$0xff]
  %v2744 = vld [vmem:[%s2 + $0x38] sm:$0xff]
  %v2745 = vld [vmem:[%s2 + $0x40] sm:$0xff]
  %v2746 = vld [vmem:[%s2 + $0x48] sm:$0xff]
  %v2747 = vld [vmem:[%s2 + $0x50] sm:$0xff]
  %v2748 = vld [vmem:[%s2 + $0x58] sm:$0xff]
  %v2749 = vld [vmem:[%s2 + $0x60] sm:$0xff]
  %v2750 = vld [vmem:[%s2 + $0x68] sm:$0xff]
  %v2751 = vld [vmem:[%s2 + $0x70] sm:$0xff]
  %v2752 = vld [vmem:[%s2 + $0x78] sm:$0xff]
  %v2753 = vld [vmem:[%s2 + $0x80] sm:$0xff]
  %v2754 = vld [vmem:[%s2 + $0x88] sm:$0xff]
  %v2755 = vld [vmem:[%s2 + $0x90] sm:$0xff]
  %v2756 = vld [vmem:[%s2 + $0x98] sm:$0xff]
  %v2757 = vld [vmem:[%s2 + $0xa0] sm:$0xff]
  %v2758 = vld [vmem:[%s2 + $0xa8] sm:$0xff]
  %v2759 = vld [vmem:[%s2 + $0xb0] sm:$0xff]
  %v2760 = vld [vmem:[%s2 + $0xb8] sm:$0xff]
  %v2761 = vld [vmem:[%s2 + $0xc0] sm:$0xff]
  %v2762 = vld [vmem:[%s2 + $0xc8] sm:$0xff]
  %v2763 = vld [vmem:[%s2 + $0xd0] sm:$0xff]
  %v2764 = vld [vmem:[%s2 + $0xd8] sm:$0xff]
  %v2765 = vld [vmem:[%s2 + $0xe0] sm:$0xff]
  %v2766 = vld [vmem:[%s2 + $0xe8] sm:$0xff]
  %v2767 = vld [vmem:[%s2 + $0xf0] sm:$0xff]
  %v2768 = vld [vmem:[%s2 + $0xf8] sm:$0xff]
  %v2769 = vld [vmem:[%s2 + $0x100] sm:$0xff]
  %v2770 = vld [vmem:[%s2 + $0x108] sm:$0xff]
  %v2771 = vld [vmem:[%s2 + $0x110] sm:$0xff]
  %v2772 = vld [vmem:[%s2 + $0x118] sm:$0xff]
  %v2773 = vld [vmem:[%s2 + $0x120] sm:$0xff]
  %v2774 = vld [vmem:[%s2 + $0x128] sm:$0xff]
  %v2775 = vld [vmem:[%s2 + $0x130] sm:$0xff]
  %v2776 = vld [vmem:[%s2 + $0x138] sm:$0xff]
  %v2777 = vld [vmem:[%s2 + $0x140] sm:$0xff]
  %v2778 = vld [vmem:[%s2 + $0x148] sm:$0xff]
  %v2779 = vld [vmem:[%s2 + $0x150] sm:$0xff]
  %v2780 = vld [vmem:[%s2 + $0x158] sm:$0xff]
  %v2781 = vld [vmem:[%s2 + $0x160] sm:$0xff]
  %v2782 = vld [vmem:[%s2 + $0x168] sm:$0xff]
  %v2783 = vld [vmem:[%s2 + $0x170] sm:$0xff]
  %v2784 = vld [vmem:[%s2 + $0x178] sm:$0xff]
  %v2785 = vld [vmem:[%s2 + $0x180] sm:$0xff]
  %v2786 = vld [vmem:[%s2 + $0x188] sm:$0xff]
  %v2787 = vld [vmem:[%s2 + $0x190] sm:$0xff]
  %v2788 = vld [vmem:[%s2 + $0x198] sm:$0xff]
  %v2789 = vld [vmem:[%s2 + $0x1a0] sm:$0xff]
  %v2790 = vld [vmem:[%s2 + $0x1a8] sm:$0xff]
  %v2791 = vld [vmem:[%s2 + $0x1b0] sm:$0xff]
  %v2792 = vld [vmem:[%s2 + $0x1b8] sm:$0xff]
  %v2793 = vld [vmem:[%s2 + $0x1c0] sm:$0xff]
  %v2794 = vld [vmem:[%s2 + $0x1c8] sm:$0xff]
  %v2795 = vld [vmem:[%s2 + $0x1d0] sm:$0xff]
  %v2796 = vld [vmem:[%s2 + $0x1d8] sm:$0xff]
  %v2797 = vld [vmem:[%s2 + $0x1e0] sm:$0xff]
  %v2798 = vld [vmem:[%s2 + $0x1e8] sm:$0xff]
  %v2799 = vld [vmem:[%s2 + $0x1f0] sm:$0xff]
  %v2800 = vld [vmem:[%s2 + $0x1f8] sm:$0xff]
  %2801 = vmatprep.subr.mxu0 %v2798
  %2802 = vmatpush1.msra.mxu0 %v2797
  %2803 = vmatprep.subr.mxu0 %v2794
  %2804 = vmatpush1.msra.mxu0 %v2793
  %2805 = vmatprep.subr.mxu0 %v2790
  %2806 = vmatpush1.msra.mxu0 %v2789
  %2807 = vmatprep.subr.mxu0 %v2786
  %2808 = vmatpush1.msra.mxu0 %v2785
  %2809 = vmatprep.subr.mxu0 %v2782
  %2810 = vmatpush1.msra.mxu0 %v2781
  %2811 = vmatprep.subr.mxu0 %v2778
  %2812 = vmatpush1.msra.mxu0 %v2777
  %2813 = vmatprep.subr.mxu0 %v2774
  %2814 = vmatpush1.msra.mxu0 %v2773
  %2815 = vmatprep.subr.mxu0 %v2770
  %2816 = vmatpush1.msra.mxu0 %v2769
  %2817 = vmatprep.subr.mxu0 %v2766
  %2818 = vmatpush1.msra.mxu0 %v2765
  %2819 = vmatprep.subr.mxu0 %v2762
  %2820 = vmatpush1.msra.mxu0 %v2761
  %2821 = vmatprep.subr.mxu0 %v2758
  %2822 = vmatpush1.msra.mxu0 %v2757
  %2823 = vmatprep.subr.mxu0 %v2754
  %2824 = vmatpush1.msra.mxu0 %v2753
  %2825 = vmatprep.subr.mxu0 %v2750
  %2826 = vmatpush1.msra.mxu0 %v2749
  %2827 = vmatprep.subr.mxu0 %v2746
  %2828 = vmatpush1.msra.mxu0 %v2745
  %2829 = vmatprep.subr.mxu0 %v2742
  %2830 = vmatpush1.msra.mxu0 %v2741
  %2831 = vmatprep.subr.mxu0 %v2738
  %2832 = vmatpush1.msra.mxu0 %v2737
  %2833 = vmatprep.subr.mxu0 0.0
  %2834 = vmatpush2.msra.mxu0 0.0
  %2835 = vmatprep.subr.mxu0 0.0
  %2836 = vmatpush2.msra.mxu0 0.0
  %2837 = vmatprep.subr.mxu0 0.0
  %2838 = vmatpush2.msra.mxu0 0.0
  %2839 = vmatprep.subr.mxu0 0.0
  %2840 = vmatpush2.msra.mxu0 0.0
  %2841 = vmatprep.subr.mxu0 0.0
  %2842 = vmatpush2.msra.mxu0 0.0
  %2843 = vmatprep.subr.mxu0 0.0
  %2844 = vmatpush2.msra.mxu0 0.0
  %2845 = vmatprep.subr.mxu0 0.0
  %2846 = vmatpush2.msra.mxu0 0.0
  %2847 = vmatprep.subr.mxu0 0.0
  %2848 = vmatpush2.msra.mxu0 0.0
  %2849 = vmatprep.subr.mxu0 0.0
  %2850 = vmatpush2.msra.mxu0 0.0
  %2851 = vmatprep.subr.mxu0 0.0
  %2852 = vmatpush2.msra.mxu0 0.0
  %2853 = vmatprep.subr.mxu0 0.0
  %2854 = vmatpush2.msra.mxu0 0.0
  %2855 = vmatprep.subr.mxu0 0.0
  %2856 = vmatpush2.msra.mxu0 0.0
  %2857 = vmatprep.subr.mxu0 0.0
  %2858 = vmatpush2.msra.mxu0 0.0
  %2859 = vmatprep.subr.mxu0 0.0
  %2860 = vmatpush2.msra.mxu0 0.0
  %2861 = vmatprep.subr.mxu0 0.0
  %2862 = vmatpush2.msra.mxu0 0.0
  %2863 = vmatprep.subr.mxu0 0.0
  %2864 = vmatpush2.msra.mxu0 0.0
  %2865 = vmatprep.mubr.f32.mxu0 0.0
  %2866 = vmatmul.mubr.f32.gmra.mxu0 %v2736
  %v2867 = vpop.f32.mrf.mxu0
  %v2868 = vadd.f32 0.0, %v2867
  %v2869 = vpop.f32.mrf.mxu0
  %v2870 = vadd.f32 0.0, %v2869
  %2871 = vdwg.mxu0
  %2872 = vmatprep.subr.mxu0 %v2800
  %2873 = vmatpush1.msra.mxu0 %v2799
  %2874 = vmatprep.subr.mxu0 %v2796
  %2875 = vmatpush1.msra.mxu0 %v2795
  %2876 = vmatprep.subr.mxu0 %v2792
  %2877 = vmatpush1.msra.mxu0 %v2791
  %2878 = vmatprep.subr.mxu0 %v2788
  %2879 = vmatpush1.msra.mxu0 %v2787
  %2880 = vmatprep.subr.mxu0 %v2784
  %2881 = vmatpush1.msra.mxu0 %v2783
  %2882 = vmatprep.subr.mxu0 %v2780
  %2883 = vmatpush1.msra.mxu0 %v2779
  %2884 = vmatprep.subr.mxu0 %v2776
  %2885 = vmatpush1.msra.mxu0 %v2775
  %2886 = vmatprep.subr.mxu0 %v2772
  %2887 = vmatpush1.msra.mxu0 %v2771
  %2888 = vmatprep.subr.mxu0 %v2768
  %2889 = vmatpush1.msra.mxu0 %v2767
  %2890 = vmatprep.subr.mxu0 %v2764
  %2891 = vmatpush1.msra.mxu0 %v2763
  %2892 = vmatprep.subr.mxu0 %v2760
  %2893 = vmatpush1.msra.mxu0 %v2759
  %2894 = vmatprep.subr.mxu0 %v2756
  %2895 = vmatpush1.msra.mxu0 %v2755
  %2896 = vmatprep.subr.mxu0 %v2752
  %2897 = vmatpush1.msra.mxu0 %v2751
  %2898 = vmatprep.subr.mxu0 %v2748
  %2899 = vmatpush1.msra.mxu0 %v2747
  %2900 = vmatprep.subr.mxu0 %v2744
  %2901 = vmatpush1.msra.mxu0 %v2743
  %2902 = vmatprep.subr.mxu0 %v2740
  %2903 = vmatpush1.msra.mxu0 %v2739
  %2904 = vmatprep.subr.mxu0 0.0
  %2905 = vmatpush2.msra.mxu0 0.0
  %2906 = vmatprep.subr.mxu0 0.0
  %2907 = vmatpush2.msra.mxu0 0.0
  %2908 = vmatprep.subr.mxu0 0.0
  %2909 = vmatpush2.msra.mxu0 0.0
  %2910 = vmatprep.subr.mxu0 0.0
  %2911 = vmatpush2.msra.mxu0 0.0
  %2912 = vmatprep.subr.mxu0 0.0
  %2913 = vmatpush2.msra.mxu0 0.0
  %2914 = vmatprep.subr.mxu0 0.0
  %2915 = vmatpush2.msra.mxu0 0.0
  %2916 = vmatprep.subr.mxu0 0.0
  %2917 = vmatpush2.msra.mxu0 0.0
  %2918 = vmatprep.subr.mxu0 0.0
  %2919 = vmatpush2.msra.mxu0 0.0
  %2920 = vmatprep.subr.mxu0 0.0
  %2921 = vmatpush2.msra.mxu0 0.0
  %2922 = vmatprep.subr.mxu0 0.0
  %2923 = vmatpush2.msra.mxu0 0.0
  %2924 = vmatprep.subr.mxu0 0.0
  %2925 = vmatpush2.msra.mxu0 0.0
  %2926 = vmatprep.subr.mxu0 0.0
  %2927 = vmatpush2.msra.mxu0 0.0
  %2928 = vmatprep.subr.mxu0 0.0
  %2929 = vmatpush2.msra.mxu0 0.0
  %2930 = vmatprep.subr.mxu0 0.0
  %2931 = vmatpush2.msra.mxu0 0.0
  %2932 = vmatprep.subr.mxu0 0.0
  %2933 = vmatpush2.msra.mxu0 0.0
  %2934 = vmatprep.subr.mxu0 0.0
  %2935 = vmatpush2.msra.mxu0 0.0
  %2936 = vmatprep.mubr.f32.mxu0 0.0
  %2937 = vmatmul.mubr.f32.gmra.mxu0 %v2736
  %v2938 = vpop.f32.mrf.mxu0
  %v2939 = vadd.f32 0.0, %v2938
  %v2940 = vpop.f32.mrf.mxu0
  %v2941 = vadd.f32 0.0, %v2940
  %2942 = vdwg.mxu0
  %v2943 = vadd.f32 %v2732, %v2868
  %v2944 = vadd.f32 %v2733, %v2870
  %v2945 = vadd.f32 %v2734, %v2939
  %v2946 = vadd.f32 %v2735, %v2941
  %v2947 = vxor.u32 %v2943, 2147483648
  %v2948 = vmul.f32 %v2947, 1.442695
  %v2949 = vpow.pop %v2948
  %v2950 = vadd.f32 %v2949, 1.0
  %v2951 = vrcp.pop %v2950
  %v2952 = vmul.f32 1.0, %v2951
  %v2953 = vxor.u32 %v2944, 2147483648
  %v2954 = vmul.f32 %v2953, 1.442695
  %v2955 = vpow.pop %v2954
  %v2956 = vadd.f32 %v2955, 1.0
  %v2957 = vrcp.pop %v2956
  %v2958 = vmul.f32 1.0, %v2957
  %v2959 = vtanh.pop %v2945
  %v2960 = vxor.u32 %v2946, 2147483648
  %v2961 = vmul.f32 %v2960, 1.442695
  %v2962 = vpow.pop %v2961
  %v2963 = vadd.f32 %v2962, 1.0
  %v2964 = vrcp.pop %v2963
  %v2965 = vmul.f32 1.0, %v2964
  %v2966 = vld [vmem:[#allocation6] sm:$0xff]
  %v2967 = vmul.f32 %v2958, %v2966
  %v2968 = vmul.f32 %v2952, %v2959
  %v2969 = vadd.f32 %v2967, %v2968
  %v2970 = vtanh.pop %v2969
  %v2971 = vmul.f32 %v2965, %v2970
  %2972 = vst [vmem:[#allocation6] sm:$0xff] %v2969
  %2973 = vst [vmem:[#allocation5] sm:$0xff] %v2971
  %s2974 = scalar_lea.vmem [#allocation3], 56
  %2975 = vst.msk [vmem:[%s2974] sm:$0xff] %vm1150, %v2971
  %2977 = vrot.lane.b32.xlu0 %v2971, 64
  %v2978 = vpop.permute.xlu0 %2977
  %2980 = vst.msk [vmem:[#allocation4] sm:$0xff] %vm1150, %v2978
  %v2981 = vld [vmem:[#allocation5] sm:$0xff]
  %v2982 = vld [vmem:[#allocation3] sm:$0xff]
  %v2983 = vld [vmem:[#allocation3 + $0x8] sm:$0xff]
  %v2984 = vld [vmem:[#allocation3 + $0x10] sm:$0xff]
  %v2985 = vld [vmem:[#allocation3 + $0x18] sm:$0xff]
  %v2986 = vld [vmem:[#allocation3 + $0x20] sm:$0xff]
  %v2987 = vld [vmem:[#allocation3 + $0x28] sm:$0xff]
  %v2988 = vld [vmem:[#allocation3 + $0x30] sm:$0xff]
  %v2989 = vld [vmem:[#allocation3 + $0x38] sm:$0xff]
  %v2990 = vld [vmem:[%s4] sm:$0xff]
  %v2991 = vld [vmem:[%s4 + $0x8] sm:$0xff]
  %v2992 = vld [vmem:[%s4 + $0x10] sm:$0xff]
  %v2993 = vld [vmem:[%s4 + $0x18] sm:$0xff]
  %v2994 = vld [vmem:[%s4 + $0x20] sm:$0xff]
  %v2995 = vld [vmem:[%s4 + $0x28] sm:$0xff]
  %v2996 = vld [vmem:[%s4 + $0x30] sm:$0xff]
  %v2997 = vld [vmem:[%s4 + $0x38] sm:$0xff]
  %v2998 = vld [vmem:[%s4 + $0x40] sm:$0xff]
  %v2999 = vld [vmem:[%s4 + $0x48] sm:$0xff]
  %v3000 = vld [vmem:[%s4 + $0x50] sm:$0xff]
  %v3001 = vld [vmem:[%s4 + $0x58] sm:$0xff]
  %v3002 = vld [vmem:[%s4 + $0x60] sm:$0xff]
  %v3003 = vld [vmem:[%s4 + $0x68] sm:$0xff]
  %v3004 = vld [vmem:[%s4 + $0x70] sm:$0xff]
  %v3005 = vld [vmem:[%s4 + $0x78] sm:$0xff]
  %v3006 = vld [vmem:[%s4 + $0x80] sm:$0xff]
  %v3007 = vld [vmem:[%s4 + $0x88] sm:$0xff]
  %v3008 = vld [vmem:[%s4 + $0x90] sm:$0xff]
  %v3009 = vld [vmem:[%s4 + $0x98] sm:$0xff]
  %v3010 = vld [vmem:[%s4 + $0xa0] sm:$0xff]
  %v3011 = vld [vmem:[%s4 + $0xa8] sm:$0xff]
  %v3012 = vld [vmem:[%s4 + $0xb0] sm:$0xff]
  %v3013 = vld [vmem:[%s4 + $0xb8] sm:$0xff]
  %v3014 = vld [vmem:[%s4 + $0xc0] sm:$0xff]
  %v3015 = vld [vmem:[%s4 + $0xc8] sm:$0xff]
  %v3016 = vld [vmem:[%s4 + $0xd0] sm:$0xff]
  %v3017 = vld [vmem:[%s4 + $0xd8] sm:$0xff]
  %v3018 = vld [vmem:[%s4 + $0xe0] sm:$0xff]
  %v3019 = vld [vmem:[%s4 + $0xe8] sm:$0xff]
  %v3020 = vld [vmem:[%s4 + $0xf0] sm:$0xff]
  %v3021 = vld [vmem:[%s4 + $0xf8] sm:$0xff]
  %v3022 = vld [vmem:[#allocation4] sm:$0xff]
  %v3023 = vld [vmem:[#allocation4 + $0x8] sm:$0xff]
  %v3024 = vld [vmem:[#allocation4 + $0x10] sm:$0xff]
  %v3025 = vld [vmem:[#allocation4 + $0x18] sm:$0xff]
  %v3026 = vld [vmem:[#allocation4 + $0x20] sm:$0xff]
  %v3027 = vld [vmem:[#allocation4 + $0x28] sm:$0xff]
  %v3028 = vld [vmem:[#allocation4 + $0x30] sm:$0xff]
  %v3029 = vld [vmem:[#allocation4 + $0x38] sm:$0xff]
  %v3030 = vld [vmem:[%s5] sm:$0xff]
  %v3031 = vld [vmem:[%s5 + $0x8] sm:$0xff]
  %v3032 = vld [vmem:[%s5 + $0x10] sm:$0xff]
  %v3033 = vld [vmem:[%s5 + $0x18] sm:$0xff]
  %v3034 = vld [vmem:[%s5 + $0x20] sm:$0xff]
  %v3035 = vld [vmem:[%s5 + $0x28] sm:$0xff]
  %v3036 = vld [vmem:[%s5 + $0x30] sm:$0xff]
  %v3037 = vld [vmem:[%s5 + $0x38] sm:$0xff]
  %v3038 = vld [vmem:[%s5 + $0x40] sm:$0xff]
  %v3039 = vld [vmem:[%s5 + $0x48] sm:$0xff]
  %v3040 = vld [vmem:[%s5 + $0x50] sm:$0xff]
  %v3041 = vld [vmem:[%s5 + $0x58] sm:$0xff]
  %v3042 = vld [vmem:[%s5 + $0x60] sm:$0xff]
  %v3043 = vld [vmem:[%s5 + $0x68] sm:$0xff]
  %v3044 = vld [vmem:[%s5 + $0x70] sm:$0xff]
  %v3045 = vld [vmem:[%s5 + $0x78] sm:$0xff]
  %v3046 = vld [vmem:[%s5 + $0x80] sm:$0xff]
  %v3047 = vld [vmem:[%s5 + $0x88] sm:$0xff]
  %v3048 = vld [vmem:[%s5 + $0x90] sm:$0xff]
  %v3049 = vld [vmem:[%s5 + $0x98] sm:$0xff]
  %v3050 = vld [vmem:[%s5 + $0xa0] sm:$0xff]
  %v3051 = vld [vmem:[%s5 + $0xa8] sm:$0xff]
  %v3052 = vld [vmem:[%s5 + $0xb0] sm:$0xff]
  %v3053 = vld [vmem:[%s5 + $0xb8] sm:$0xff]
  %v3054 = vld [vmem:[%s5 + $0xc0] sm:$0xff]
  %v3055 = vld [vmem:[%s5 + $0xc8] sm:$0xff]
  %v3056 = vld [vmem:[%s5 + $0xd0] sm:$0xff]
  %v3057 = vld [vmem:[%s5 + $0xd8] sm:$0xff]
  %v3058 = vld [vmem:[%s5 + $0xe0] sm:$0xff]
  %v3059 = vld [vmem:[%s5 + $0xe8] sm:$0xff]
  %v3060 = vld [vmem:[%s5 + $0xf0] sm:$0xff]
  %v3061 = vld [vmem:[%s5 + $0xf8] sm:$0xff]
  %v3063 = vsel %vm1150, %v3022, 0
  %v3066 = vsel %vm1150, %v3023, 0
  %v3069 = vsel %vm1150, %v3024, 0
  %v3072 = vsel %vm1150, %v3025, 0
  %v3075 = vsel %vm1150, %v3026, 0
  %v3078 = vsel %vm1150, %v3027, 0
  %v3081 = vsel %vm1150, %v3028, 0
  %v3084 = vsel %vm1150, %v3029, 0
  %3086 = vmatprep.subr.mxu0 0.0
  %3087 = vmatpush1.msra.mxu0 0.0
  %3088 = vmatprep.subr.mxu0 0.0
  %3089 = vmatpush1.msra.mxu0 0.0
  %3090 = vmatprep.subr.mxu0 0.0
  %3091 = vmatpush1.msra.mxu0 0.0
  %3092 = vmatprep.subr.mxu0 0.0
  %3093 = vmatpush1.msra.mxu0 0.0
  %3094 = vmatprep.subr.mxu0 0.0
  %3095 = vmatpush1.msra.mxu0 0.0
  %3096 = vmatprep.subr.mxu0 0.0
  %3097 = vmatpush1.msra.mxu0 0.0
  %3098 = vmatprep.subr.mxu0 0.0
  %3099 = vmatpush1.msra.mxu0 0.0
  %3100 = vmatprep.subr.mxu0 0.0
  %3101 = vmatpush1.msra.mxu0 0.0
  %3102 = vmatprep.subr.mxu0 %v3059
  %3103 = vmatpush1.msra.mxu0 %v3058
  %3104 = vmatprep.subr.mxu0 %v3055
  %3105 = vmatpush1.msra.mxu0 %v3054
  %3106 = vmatprep.subr.mxu0 %v3051
  %3107 = vmatpush1.msra.mxu0 %v3050
  %3108 = vmatprep.subr.mxu0 %v3047
  %3109 = vmatpush1.msra.mxu0 %v3046
  %3110 = vmatprep.subr.mxu0 %v3043
  %3111 = vmatpush1.msra.mxu0 %v3042
  %3112 = vmatprep.subr.mxu0 %v3039
  %3113 = vmatpush1.msra.mxu0 %v3038
  %3114 = vmatprep.subr.mxu0 %v3035
  %3115 = vmatpush1.msra.mxu0 %v3034
  %3116 = vmatprep.subr.mxu0 %v3031
  %3117 = vmatpush1.msra.mxu0 %v3030
  %3118 = vmatprep.subr.mxu0 0.0
  %3119 = vmatpush2.msra.mxu0 0.0
  %3120 = vmatprep.subr.mxu0 0.0
  %3121 = vmatpush2.msra.mxu0 0.0
  %3122 = vmatprep.subr.mxu0 0.0
  %3123 = vmatpush2.msra.mxu0 0.0
  %3124 = vmatprep.subr.mxu0 0.0
  %3125 = vmatpush2.msra.mxu0 0.0
  %3126 = vmatprep.subr.mxu0 0.0
  %3127 = vmatpush2.msra.mxu0 0.0
  %3128 = vmatprep.subr.mxu0 0.0
  %3129 = vmatpush2.msra.mxu0 0.0
  %3130 = vmatprep.subr.mxu0 0.0
  %3131 = vmatpush2.msra.mxu0 0.0
  %3132 = vmatprep.subr.mxu0 0.0
  %3133 = vmatpush2.msra.mxu0 0.0
  %3134 = vmatprep.subr.mxu0 0.0
  %3135 = vmatpush2.msra.mxu0 0.0
  %3136 = vmatprep.subr.mxu0 0.0
  %3137 = vmatpush2.msra.mxu0 0.0
  %3138 = vmatprep.subr.mxu0 0.0
  %3139 = vmatpush2.msra.mxu0 0.0
  %3140 = vmatprep.subr.mxu0 0.0
  %3141 = vmatpush2.msra.mxu0 0.0
  %3142 = vmatprep.subr.mxu0 0.0
  %3143 = vmatpush2.msra.mxu0 0.0
  %3144 = vmatprep.subr.mxu0 0.0
  %3145 = vmatpush2.msra.mxu0 0.0
  %3146 = vmatprep.subr.mxu0 0.0
  %3147 = vmatpush2.msra.mxu0 0.0
  %3148 = vmatprep.subr.mxu0 0.0
  %3149 = vmatpush2.msra.mxu0 0.0
  %3150 = vmatprep.mubr.f32.mxu0 0.0
  %3151 = vmatmul.mubr.f32.gmra.mxu0 %v3063
  %v3152 = vpop.f32.mrf.mxu0
  %v3153 = vadd.f32 0.0, %v3152
  %v3154 = vpop.f32.mrf.mxu0
  %v3155 = vadd.f32 0.0, %v3154
  %3156 = vmatprep.mubr.f32.mxu0 0.0
  %3157 = vmatmul.mubr.f32.gmra.mxu0 %v3066
  %v3158 = vpop.f32.mrf.mxu0
  %v3159 = vadd.f32 0.0, %v3158
  %v3160 = vpop.f32.mrf.mxu0
  %v3161 = vadd.f32 0.0, %v3160
  %3162 = vmatprep.mubr.f32.mxu0 0.0
  %3163 = vmatmul.mubr.f32.gmra.mxu0 %v3069
  %v3164 = vpop.f32.mrf.mxu0
  %v3165 = vadd.f32 0.0, %v3164
  %v3166 = vpop.f32.mrf.mxu0
  %v3167 = vadd.f32 0.0, %v3166
  %3168 = vmatprep.mubr.f32.mxu0 0.0
  %3169 = vmatmul.mubr.f32.gmra.mxu0 %v3072
  %v3170 = vpop.f32.mrf.mxu0
  %v3171 = vadd.f32 0.0, %v3170
  %v3172 = vpop.f32.mrf.mxu0
  %v3173 = vadd.f32 0.0, %v3172
  %3174 = vmatprep.mubr.f32.mxu0 0.0
  %3175 = vmatmul.mubr.f32.gmra.mxu0 %v3075
  %v3176 = vpop.f32.mrf.mxu0
  %v3177 = vadd.f32 0.0, %v3176
  %v3178 = vpop.f32.mrf.mxu0
  %v3179 = vadd.f32 0.0, %v3178
  %3180 = vmatprep.mubr.f32.mxu0 0.0
  %3181 = vmatmul.mubr.f32.gmra.mxu0 %v3078
  %v3182 = vpop.f32.mrf.mxu0
  %v3183 = vadd.f32 0.0, %v3182
  %v3184 = vpop.f32.mrf.mxu0
  %v3185 = vadd.f32 0.0, %v3184
  %3186 = vmatprep.mubr.f32.mxu0 0.0
  %3187 = vmatmul.mubr.f32.gmra.mxu0 %v3081
  %v3188 = vpop.f32.mrf.mxu0
  %v3189 = vadd.f32 0.0, %v3188
  %v3190 = vpop.f32.mrf.mxu0
  %v3191 = vadd.f32 0.0, %v3190
  %3192 = vmatprep.mubr.f32.mxu0 0.0
  %3193 = vmatmul.mubr.f32.gmra.mxu0 %v3084
  %v3194 = vpop.f32.mrf.mxu0
  %v3195 = vadd.f32 0.0, %v3194
  %v3196 = vpop.f32.mrf.mxu0
  %v3197 = vadd.f32 0.0, %v3196
  %3198 = vdwg.mxu0
  %3199 = vmatprep.subr.mxu0 0.0
  %3200 = vmatpush1.msra.mxu0 0.0
  %3201 = vmatprep.subr.mxu0 0.0
  %3202 = vmatpush1.msra.mxu0 0.0
  %3203 = vmatprep.subr.mxu0 0.0
  %3204 = vmatpush1.msra.mxu0 0.0
  %3205 = vmatprep.subr.mxu0 0.0
  %3206 = vmatpush1.msra.mxu0 0.0
  %3207 = vmatprep.subr.mxu0 0.0
  %3208 = vmatpush1.msra.mxu0 0.0
  %3209 = vmatprep.subr.mxu0 0.0
  %3210 = vmatpush1.msra.mxu0 0.0
  %3211 = vmatprep.subr.mxu0 0.0
  %3212 = vmatpush1.msra.mxu0 0.0
  %3213 = vmatprep.subr.mxu0 0.0
  %3214 = vmatpush1.msra.mxu0 0.0
  %3215 = vmatprep.subr.mxu0 %v3061
  %3216 = vmatpush1.msra.mxu0 %v3060
  %3217 = vmatprep.subr.mxu0 %v3057
  %3218 = vmatpush1.msra.mxu0 %v3056
  %3219 = vmatprep.subr.mxu0 %v3053
  %3220 = vmatpush1.msra.mxu0 %v3052
  %3221 = vmatprep.subr.mxu0 %v3049
  %3222 = vmatpush1.msra.mxu0 %v3048
  %3223 = vmatprep.subr.mxu0 %v3045
  %3224 = vmatpush1.msra.mxu0 %v3044
  %3225 = vmatprep.subr.mxu0 %v3041
  %3226 = vmatpush1.msra.mxu0 %v3040
  %3227 = vmatprep.subr.mxu0 %v3037
  %3228 = vmatpush1.msra.mxu0 %v3036
  %3229 = vmatprep.subr.mxu0 %v3033
  %3230 = vmatpush1.msra.mxu0 %v3032
  %3231 = vmatprep.subr.mxu0 0.0
  %3232 = vmatpush2.msra.mxu0 0.0
  %3233 = vmatprep.subr.mxu0 0.0
  %3234 = vmatpush2.msra.mxu0 0.0
  %3235 = vmatprep.subr.mxu0 0.0
  %3236 = vmatpush2.msra.mxu0 0.0
  %3237 = vmatprep.subr.mxu0 0.0
  %3238 = vmatpush2.msra.mxu0 0.0
  %3239 = vmatprep.subr.mxu0 0.0
  %3240 = vmatpush2.msra.mxu0 0.0
  %3241 = vmatprep.subr.mxu0 0.0
  %3242 = vmatpush2.msra.mxu0 0.0
  %3243 = vmatprep.subr.mxu0 0.0
  %3244 = vmatpush2.msra.mxu0 0.0
  %3245 = vmatprep.subr.mxu0 0.0
  %3246 = vmatpush2.msra.mxu0 0.0
  %3247 = vmatprep.subr.mxu0 0.0
  %3248 = vmatpush2.msra.mxu0 0.0
  %3249 = vmatprep.subr.mxu0 0.0
  %3250 = vmatpush2.msra.mxu0 0.0
  %3251 = vmatprep.subr.mxu0 0.0
  %3252 = vmatpush2.msra.mxu0 0.0
  %3253 = vmatprep.subr.mxu0 0.0
  %3254 = vmatpush2.msra.mxu0 0.0
  %3255 = vmatprep.subr.mxu0 0.0
  %3256 = vmatpush2.msra.mxu0 0.0
  %3257 = vmatprep.subr.mxu0 0.0
  %3258 = vmatpush2.msra.mxu0 0.0
  %3259 = vmatprep.subr.mxu0 0.0
  %3260 = vmatpush2.msra.mxu0 0.0
  %3261 = vmatprep.subr.mxu0 0.0
  %3262 = vmatpush2.msra.mxu0 0.0
  %3263 = vmatprep.mubr.f32.mxu0 0.0
  %3264 = vmatmul.mubr.f32.gmra.mxu0 %v3063
  %v3265 = vpop.f32.mrf.mxu0
  %v3266 = vadd.f32 0.0, %v3265
  %v3267 = vpop.f32.mrf.mxu0
  %v3268 = vadd.f32 0.0, %v3267
  %3269 = vmatprep.mubr.f32.mxu0 0.0
  %3270 = vmatmul.mubr.f32.gmra.mxu0 %v3066
  %v3271 = vpop.f32.mrf.mxu0
  %v3272 = vadd.f32 0.0, %v3271
  %v3273 = vpop.f32.mrf.mxu0
  %v3274 = vadd.f32 0.0, %v3273
  %3275 = vmatprep.mubr.f32.mxu0 0.0
  %3276 = vmatmul.mubr.f32.gmra.mxu0 %v3069
  %v3277 = vpop.f32.mrf.mxu0
  %v3278 = vadd.f32 0.0, %v3277
  %v3279 = vpop.f32.mrf.mxu0
  %v3280 = vadd.f32 0.0, %v3279
  %3281 = vmatprep.mubr.f32.mxu0 0.0
  %3282 = vmatmul.mubr.f32.gmra.mxu0 %v3072
  %v3283 = vpop.f32.mrf.mxu0
  %v3284 = vadd.f32 0.0, %v3283
  %v3285 = vpop.f32.mrf.mxu0
  %v3286 = vadd.f32 0.0, %v3285
  %3287 = vmatprep.mubr.f32.mxu0 0.0
  %3288 = vmatmul.mubr.f32.gmra.mxu0 %v3075
  %v3289 = vpop.f32.mrf.mxu0
  %v3290 = vadd.f32 0.0, %v3289
  %v3291 = vpop.f32.mrf.mxu0
  %v3292 = vadd.f32 0.0, %v3291
  %3293 = vmatprep.mubr.f32.mxu0 0.0
  %3294 = vmatmul.mubr.f32.gmra.mxu0 %v3078
  %v3295 = vpop.f32.mrf.mxu0
  %v3296 = vadd.f32 0.0, %v3295
  %v3297 = vpop.f32.mrf.mxu0
  %v3298 = vadd.f32 0.0, %v3297
  %3299 = vmatprep.mubr.f32.mxu0 0.0
  %3300 = vmatmul.mubr.f32.gmra.mxu0 %v3081
  %v3301 = vpop.f32.mrf.mxu0
  %v3302 = vadd.f32 0.0, %v3301
  %v3303 = vpop.f32.mrf.mxu0
  %v3304 = vadd.f32 0.0, %v3303
  %3305 = vmatprep.mubr.f32.mxu0 0.0
  %3306 = vmatmul.mubr.f32.gmra.mxu0 %v3084
  %v3307 = vpop.f32.mrf.mxu0
  %v3308 = vadd.f32 0.0, %v3307
  %v3309 = vpop.f32.mrf.mxu0
  %v3310 = vadd.f32 0.0, %v3309
  %3311 = vdwg.mxu0
  %v3313 = vsel %vm1150, %v2982, 0
  %v3316 = vsel %vm1150, %v2983, 0
  %v3319 = vsel %vm1150, %v2984, 0
  %v3322 = vsel %vm1150, %v2985, 0
  %v3325 = vsel %vm1150, %v2986, 0
  %v3328 = vsel %vm1150, %v2987, 0
  %v3331 = vsel %vm1150, %v2988, 0
  %v3334 = vsel %vm1150, %v2989, 0
  %3336 = vmatprep.subr.mxu0 0.0
  %3337 = vmatpush1.msra.mxu0 0.0
  %3338 = vmatprep.subr.mxu0 0.0
  %3339 = vmatpush1.msra.mxu0 0.0
  %3340 = vmatprep.subr.mxu0 0.0
  %3341 = vmatpush1.msra.mxu0 0.0
  %3342 = vmatprep.subr.mxu0 0.0
  %3343 = vmatpush1.msra.mxu0 0.0
  %3344 = vmatprep.subr.mxu0 0.0
  %3345 = vmatpush1.msra.mxu0 0.0
  %3346 = vmatprep.subr.mxu0 0.0
  %3347 = vmatpush1.msra.mxu0 0.0
  %3348 = vmatprep.subr.mxu0 0.0
  %3349 = vmatpush1.msra.mxu0 0.0
  %3350 = vmatprep.subr.mxu0 0.0
  %3351 = vmatpush1.msra.mxu0 0.0
  %3352 = vmatprep.subr.mxu0 %v3019
  %3353 = vmatpush1.msra.mxu0 %v3018
  %3354 = vmatprep.subr.mxu0 %v3015
  %3355 = vmatpush1.msra.mxu0 %v3014
  %3356 = vmatprep.subr.mxu0 %v3011
  %3357 = vmatpush1.msra.mxu0 %v3010
  %3358 = vmatprep.subr.mxu0 %v3007
  %3359 = vmatpush1.msra.mxu0 %v3006
  %3360 = vmatprep.subr.mxu0 %v3003
  %3361 = vmatpush1.msra.mxu0 %v3002
  %3362 = vmatprep.subr.mxu0 %v2999
  %3363 = vmatpush1.msra.mxu0 %v2998
  %3364 = vmatprep.subr.mxu0 %v2995
  %3365 = vmatpush1.msra.mxu0 %v2994
  %3366 = vmatprep.subr.mxu0 %v2991
  %3367 = vmatpush1.msra.mxu0 %v2990
  %3368 = vmatprep.subr.mxu0 0.0
  %3369 = vmatpush2.msra.mxu0 0.0
  %3370 = vmatprep.subr.mxu0 0.0
  %3371 = vmatpush2.msra.mxu0 0.0
  %3372 = vmatprep.subr.mxu0 0.0
  %3373 = vmatpush2.msra.mxu0 0.0
  %3374 = vmatprep.subr.mxu0 0.0
  %3375 = vmatpush2.msra.mxu0 0.0
  %3376 = vmatprep.subr.mxu0 0.0
  %3377 = vmatpush2.msra.mxu0 0.0
  %3378 = vmatprep.subr.mxu0 0.0
  %3379 = vmatpush2.msra.mxu0 0.0
  %3380 = vmatprep.subr.mxu0 0.0
  %3381 = vmatpush2.msra.mxu0 0.0
  %3382 = vmatprep.subr.mxu0 0.0
  %3383 = vmatpush2.msra.mxu0 0.0
  %3384 = vmatprep.subr.mxu0 0.0
  %3385 = vmatpush2.msra.mxu0 0.0
  %3386 = vmatprep.subr.mxu0 0.0
  %3387 = vmatpush2.msra.mxu0 0.0
  %3388 = vmatprep.subr.mxu0 0.0
  %3389 = vmatpush2.msra.mxu0 0.0
  %3390 = vmatprep.subr.mxu0 0.0
  %3391 = vmatpush2.msra.mxu0 0.0
  %3392 = vmatprep.subr.mxu0 0.0
  %3393 = vmatpush2.msra.mxu0 0.0
  %3394 = vmatprep.subr.mxu0 0.0
  %3395 = vmatpush2.msra.mxu0 0.0
  %3396 = vmatprep.subr.mxu0 0.0
  %3397 = vmatpush2.msra.mxu0 0.0
  %3398 = vmatprep.subr.mxu0 0.0
  %3399 = vmatpush2.msra.mxu0 0.0
  %3400 = vmatprep.mubr.f32.mxu0 0.0
  %3401 = vmatmul.mubr.f32.gmra.mxu0 %v3313
  %v3402 = vpop.f32.mrf.mxu0
  %v3403 = vadd.f32 %v3153, %v3402
  %v3404 = vpop.f32.mrf.mxu0
  %v3405 = vadd.f32 %v3155, %v3404
  %3406 = vmatprep.mubr.f32.mxu0 0.0
  %3407 = vmatmul.mubr.f32.gmra.mxu0 %v3316
  %v3408 = vpop.f32.mrf.mxu0
  %v3409 = vadd.f32 %v3159, %v3408
  %v3410 = vpop.f32.mrf.mxu0
  %v3411 = vadd.f32 %v3161, %v3410
  %3412 = vmatprep.mubr.f32.mxu0 0.0
  %3413 = vmatmul.mubr.f32.gmra.mxu0 %v3319
  %v3414 = vpop.f32.mrf.mxu0
  %v3415 = vadd.f32 %v3165, %v3414
  %v3416 = vpop.f32.mrf.mxu0
  %v3417 = vadd.f32 %v3167, %v3416
  %3418 = vmatprep.mubr.f32.mxu0 0.0
  %3419 = vmatmul.mubr.f32.gmra.mxu0 %v3322
  %v3420 = vpop.f32.mrf.mxu0
  %v3421 = vadd.f32 %v3171, %v3420
  %v3422 = vpop.f32.mrf.mxu0
  %v3423 = vadd.f32 %v3173, %v3422
  %3424 = vmatprep.mubr.f32.mxu0 0.0
  %3425 = vmatmul.mubr.f32.gmra.mxu0 %v3325
  %v3426 = vpop.f32.mrf.mxu0
  %v3427 = vadd.f32 %v3177, %v3426
  %v3428 = vpop.f32.mrf.mxu0
  %v3429 = vadd.f32 %v3179, %v3428
  %3430 = vmatprep.mubr.f32.mxu0 0.0
  %3431 = vmatmul.mubr.f32.gmra.mxu0 %v3328
  %v3432 = vpop.f32.mrf.mxu0
  %v3433 = vadd.f32 %v3183, %v3432
  %v3434 = vpop.f32.mrf.mxu0
  %v3435 = vadd.f32 %v3185, %v3434
  %3436 = vmatprep.mubr.f32.mxu0 0.0
  %3437 = vmatmul.mubr.f32.gmra.mxu0 %v3331
  %v3438 = vpop.f32.mrf.mxu0
  %v3439 = vadd.f32 %v3189, %v3438
  %v3440 = vpop.f32.mrf.mxu0
  %v3441 = vadd.f32 %v3191, %v3440
  %3442 = vmatprep.mubr.f32.mxu0 0.0
  %3443 = vmatmul.mubr.f32.gmra.mxu0 %v3334
  %v3444 = vpop.f32.mrf.mxu0
  %v3445 = vadd.f32 %v3195, %v3444
  %v3446 = vpop.f32.mrf.mxu0
  %v3447 = vadd.f32 %v3197, %v3446
  %3448 = vdwg.mxu0
  %3449 = vmatprep.subr.mxu0 0.0
  %3450 = vmatpush1.msra.mxu0 0.0
  %3451 = vmatprep.subr.mxu0 0.0
  %3452 = vmatpush1.msra.mxu0 0.0
  %3453 = vmatprep.subr.mxu0 0.0
  %3454 = vmatpush1.msra.mxu0 0.0
  %3455 = vmatprep.subr.mxu0 0.0
  %3456 = vmatpush1.msra.mxu0 0.0
  %3457 = vmatprep.subr.mxu0 0.0
  %3458 = vmatpush1.msra.mxu0 0.0
  %3459 = vmatprep.subr.mxu0 0.0
  %3460 = vmatpush1.msra.mxu0 0.0
  %3461 = vmatprep.subr.mxu0 0.0
  %3462 = vmatpush1.msra.mxu0 0.0
  %3463 = vmatprep.subr.mxu0 0.0
  %3464 = vmatpush1.msra.mxu0 0.0
  %3465 = vmatprep.subr.mxu0 %v3021
  %3466 = vmatpush1.msra.mxu0 %v3020
  %3467 = vmatprep.subr.mxu0 %v3017
  %3468 = vmatpush1.msra.mxu0 %v3016
  %3469 = vmatprep.subr.mxu0 %v3013
  %3470 = vmatpush1.msra.mxu0 %v3012
  %3471 = vmatprep.subr.mxu0 %v3009
  %3472 = vmatpush1.msra.mxu0 %v3008
  %3473 = vmatprep.subr.mxu0 %v3005
  %3474 = vmatpush1.msra.mxu0 %v3004
  %3475 = vmatprep.subr.mxu0 %v3001
  %3476 = vmatpush1.msra.mxu0 %v3000
  %3477 = vmatprep.subr.mxu0 %v2997
  %3478 = vmatpush1.msra.mxu0 %v2996
  %3479 = vmatprep.subr.mxu0 %v2993
  %3480 = vmatpush1.msra.mxu0 %v2992
  %3481 = vmatprep.subr.mxu0 0.0
  %3482 = vmatpush2.msra.mxu0 0.0
  %3483 = vmatprep.subr.mxu0 0.0
  %3484 = vmatpush2.msra.mxu0 0.0
  %3485 = vmatprep.subr.mxu0 0.0
  %3486 = vmatpush2.msra.mxu0 0.0
  %3487 = vmatprep.subr.mxu0 0.0
  %3488 = vmatpush2.msra.mxu0 0.0
  %3489 = vmatprep.subr.mxu0 0.0
  %3490 = vmatpush2.msra.mxu0 0.0
  %3491 = vmatprep.subr.mxu0 0.0
  %3492 = vmatpush2.msra.mxu0 0.0
  %3493 = vmatprep.subr.mxu0 0.0
  %3494 = vmatpush2.msra.mxu0 0.0
  %3495 = vmatprep.subr.mxu0 0.0
  %3496 = vmatpush2.msra.mxu0 0.0
  %3497 = vmatprep.subr.mxu0 0.0
  %3498 = vmatpush2.msra.mxu0 0.0
  %3499 = vmatprep.subr.mxu0 0.0
  %3500 = vmatpush2.msra.mxu0 0.0
  %3501 = vmatprep.subr.mxu0 0.0
  %3502 = vmatpush2.msra.mxu0 0.0
  %3503 = vmatprep.subr.mxu0 0.0
  %3504 = vmatpush2.msra.mxu0 0.0
  %3505 = vmatprep.subr.mxu0 0.0
  %3506 = vmatpush2.msra.mxu0 0.0
  %3507 = vmatprep.subr.mxu0 0.0
  %3508 = vmatpush2.msra.mxu0 0.0
  %3509 = vmatprep.subr.mxu0 0.0
  %3510 = vmatpush2.msra.mxu0 0.0
  %3511 = vmatprep.subr.mxu0 0.0
  %3512 = vmatpush2.msra.mxu0 0.0
  %3513 = vmatprep.mubr.f32.mxu0 0.0
  %3514 = vmatmul.mubr.f32.gmra.mxu0 %v3313
  %v3515 = vpop.f32.mrf.mxu0
  %v3516 = vadd.f32 %v3266, %v3515
  %v3517 = vpop.f32.mrf.mxu0
  %v3518 = vadd.f32 %v3268, %v3517
  %3519 = vmatprep.mubr.f32.mxu0 0.0
  %3520 = vmatmul.mubr.f32.gmra.mxu0 %v3316
  %v3521 = vpop.f32.mrf.mxu0
  %v3522 = vadd.f32 %v3272, %v3521
  %v3523 = vpop.f32.mrf.mxu0
  %v3524 = vadd.f32 %v3274, %v3523
  %3525 = vmatprep.mubr.f32.mxu0 0.0
  %3526 = vmatmul.mubr.f32.gmra.mxu0 %v3319
  %v3527 = vpop.f32.mrf.mxu0
  %v3528 = vadd.f32 %v3278, %v3527
  %v3529 = vpop.f32.mrf.mxu0
  %v3530 = vadd.f32 %v3280, %v3529
  %3531 = vmatprep.mubr.f32.mxu0 0.0
  %3532 = vmatmul.mubr.f32.gmra.mxu0 %v3322
  %v3533 = vpop.f32.mrf.mxu0
  %v3534 = vadd.f32 %v3284, %v3533
  %v3535 = vpop.f32.mrf.mxu0
  %v3536 = vadd.f32 %v3286, %v3535
  %3537 = vmatprep.mubr.f32.mxu0 0.0
  %3538 = vmatmul.mubr.f32.gmra.mxu0 %v3325
  %v3539 = vpop.f32.mrf.mxu0
  %v3540 = vadd.f32 %v3290, %v3539
  %v3541 = vpop.f32.mrf.mxu0
  %v3542 = vadd.f32 %v3292, %v3541
  %3543 = vmatprep.mubr.f32.mxu0 0.0
  %3544 = vmatmul.mubr.f32.gmra.mxu0 %v3328
  %v3545 = vpop.f32.mrf.mxu0
  %v3546 = vadd.f32 %v3296, %v3545
  %v3547 = vpop.f32.mrf.mxu0
  %v3548 = vadd.f32 %v3298, %v3547
  %3549 = vmatprep.mubr.f32.mxu0 0.0
  %3550 = vmatmul.mubr.f32.gmra.mxu0 %v3331
  %v3551 = vpop.f32.mrf.mxu0
  %v3552 = vadd.f32 %v3302, %v3551
  %v3553 = vpop.f32.mrf.mxu0
  %v3554 = vadd.f32 %v3304, %v3553
  %3555 = vmatprep.mubr.f32.mxu0 0.0
  %3556 = vmatmul.mubr.f32.gmra.mxu0 %v3334
  %v3557 = vpop.f32.mrf.mxu0
  %v3558 = vadd.f32 %v3308, %v3557
  %v3559 = vpop.f32.mrf.mxu0
  %v3560 = vadd.f32 %v3310, %v3559
  %3561 = vdwg.mxu0
  %v3562 = vld [vmem:[%s7] sm:$0xf]
  %v3564 = vlaneseq
  %v3565 = vshrl.u32 %v3564, 7
  %v3566 = vsub.s32 0, %v3565
  %v3567 = vrot.slane %v3562, %v3566
  %v3568 = vlaneseq
  %v3569 = vshrl.u32 %v3568, 7
  %v3570 = vsub.s32 1, %v3569
  %v3571 = vrot.slane %v3562, %v3570
  %v3572 = vlaneseq
  %v3573 = vshrl.u32 %v3572, 7
  %v3574 = vsub.s32 2, %v3573
  %v3575 = vrot.slane %v3562, %v3574
  %v3576 = vlaneseq
  %v3577 = vshrl.u32 %v3576, 7
  %v3578 = vsub.s32 3, %v3577
  %v3579 = vrot.slane %v3562, %v3578
  %v3584 = vadd.f32 %v3403, %v3567
  %v3585 = vadd.f32 %v3405, %v3571
  %v3586 = vadd.f32 %v3516, %v3575
  %v3587 = vadd.f32 %v3518, %v3579
  %v3588 = vadd.f32 %v3409, %v3567
  %v3589 = vadd.f32 %v3411, %v3571
  %v3590 = vadd.f32 %v3522, %v3575
  %v3591 = vadd.f32 %v3524, %v3579
  %v3592 = vadd.f32 %v3415, %v3567
  %v3593 = vadd.f32 %v3417, %v3571
  %v3594 = vadd.f32 %v3528, %v3575
  %v3595 = vadd.f32 %v3530, %v3579
  %v3596 = vadd.f32 %v3421, %v3567
  %v3597 = vadd.f32 %v3423, %v3571
  %v3598 = vadd.f32 %v3534, %v3575
  %v3599 = vadd.f32 %v3536, %v3579
  %v3600 = vadd.f32 %v3427, %v3567
  %v3601 = vadd.f32 %v3429, %v3571
  %v3602 = vadd.f32 %v3540, %v3575
  %v3603 = vadd.f32 %v3542, %v3579
  %v3604 = vadd.f32 %v3433, %v3567
  %v3605 = vadd.f32 %v3435, %v3571
  %v3606 = vadd.f32 %v3546, %v3575
  %v3607 = vadd.f32 %v3548, %v3579
  %v3608 = vadd.f32 %v3439, %v3567
  %v3609 = vadd.f32 %v3441, %v3571
  %v3610 = vadd.f32 %v3552, %v3575
  %v3611 = vadd.f32 %v3554, %v3579
  %v3612 = vadd.f32 %v3445, %v3567
  %v3613 = vadd.f32 %v3447, %v3571
  %v3614 = vadd.f32 %v3558, %v3575
  %v3615 = vadd.f32 %v3560, %v3579
  %3616 = vst [vmem:[#allocation2] sm:$0xff] %v3584
  %3617 = vst [vmem:[#allocation2 + $0x8] sm:$0xff] %v3585
  %3618 = vst [vmem:[#allocation2 + $0x10] sm:$0xff] %v3586
  %3619 = vst [vmem:[#allocation2 + $0x18] sm:$0xff] %v3587
  %3620 = vst [vmem:[#allocation2 + $0x20] sm:$0xff] %v3588
  %3621 = vst [vmem:[#allocation2 + $0x28] sm:$0xff] %v3589
  %3622 = vst [vmem:[#allocation2 + $0x30] sm:$0xff] %v3590
  %3623 = vst [vmem:[#allocation2 + $0x38] sm:$0xff] %v3591
  %3624 = vst [vmem:[#allocation2 + $0x40] sm:$0xff] %v3592
  %3625 = vst [vmem:[#allocation2 + $0x48] sm:$0xff] %v3593
  %3626 = vst [vmem:[#allocation2 + $0x50] sm:$0xff] %v3594
  %3627 = vst [vmem:[#allocation2 + $0x58] sm:$0xff] %v3595
  %3628 = vst [vmem:[#allocation2 + $0x60] sm:$0xff] %v3596
  %3629 = vst [vmem:[#allocation2 + $0x68] sm:$0xff] %v3597
  %3630 = vst [vmem:[#allocation2 + $0x70] sm:$0xff] %v3598
  %3631 = vst [vmem:[#allocation2 + $0x78] sm:$0xff] %v3599
  %3632 = vst [vmem:[#allocation2 + $0x80] sm:$0xff] %v3600
  %3633 = vst [vmem:[#allocation2 + $0x88] sm:$0xff] %v3601
  %3634 = vst [vmem:[#allocation2 + $0x90] sm:$0xff] %v3602
  %3635 = vst [vmem:[#allocation2 + $0x98] sm:$0xff] %v3603
  %3636 = vst [vmem:[#allocation2 + $0xa0] sm:$0xff] %v3604
  %3637 = vst [vmem:[#allocation2 + $0xa8] sm:$0xff] %v3605
  %3638 = vst [vmem:[#allocation2 + $0xb0] sm:$0xff] %v3606
  %3639 = vst [vmem:[#allocation2 + $0xb8] sm:$0xff] %v3607
  %3640 = vst [vmem:[#allocation2 + $0xc0] sm:$0xff] %v3608
  %3641 = vst [vmem:[#allocation2 + $0xc8] sm:$0xff] %v3609
  %3642 = vst [vmem:[#allocation2 + $0xd0] sm:$0xff] %v3610
  %3643 = vst [vmem:[#allocation2 + $0xd8] sm:$0xff] %v3611
  %3644 = vst [vmem:[#allocation2 + $0xe0] sm:$0xff] %v3612
  %3645 = vst [vmem:[#allocation2 + $0xe8] sm:$0xff] %v3613
  %3646 = vst [vmem:[#allocation2 + $0xf0] sm:$0xff] %v3614
  %3647 = vst [vmem:[#allocation2 + $0xf8] sm:$0xff] %v3615
  %3648 = vst [vmem:[#allocation5] sm:$0xff] 0.0
  %3649 = vst [vmem:[#allocation6] sm:$0xff] 0.0
  %v3650 = vld [vmem:[%s896] sm:$0xff]
  %v3651 = vld [vmem:[%s896 + $0x8] sm:$0xff]
  %v3652 = vld [vmem:[%s896 + $0x10] sm:$0xff]
  %v3653 = vld [vmem:[%s896 + $0x18] sm:$0xff]
  %v3654 = vld [vmem:[%s903] sm:$0xff]
  %v3655 = vld [vmem:[%s903 + $0x8] sm:$0xff]
  %v3656 = vld [vmem:[%s903 + $0x10] sm:$0xff]
  %v3657 = vld [vmem:[%s903 + $0x18] sm:$0xff]
  %v3658 = vsel %vm94, %v3650, %v3654
  %v3659 = vsel %vm95, %v3651, %v3655
  %v3660 = vsel %vm96, %v3652, %v3656
  %v3661 = vsel %vm97, %v3653, %v3657
  %v3662 = vld [vmem:[#allocation5] sm:$0xff]
  %v3663 = vld [vmem:[%s6] sm:$0xff]
  %v3664 = vld [vmem:[%s6 + $0x8] sm:$0xff]
  %v3665 = vld [vmem:[%s6 + $0x10] sm:$0xff]
  %v3666 = vld [vmem:[%s6 + $0x18] sm:$0xff]
  %v3667 = vld [vmem:[%s6 + $0x20] sm:$0xff]
  %v3668 = vld [vmem:[%s6 + $0x28] sm:$0xff]
  %v3669 = vld [vmem:[%s6 + $0x30] sm:$0xff]
  %v3670 = vld [vmem:[%s6 + $0x38] sm:$0xff]
  %v3671 = vld [vmem:[%s6 + $0x40] sm:$0xff]
  %v3672 = vld [vmem:[%s6 + $0x48] sm:$0xff]
  %v3673 = vld [vmem:[%s6 + $0x50] sm:$0xff]
  %v3674 = vld [vmem:[%s6 + $0x58] sm:$0xff]
  %v3675 = vld [vmem:[%s6 + $0x60] sm:$0xff]
  %v3676 = vld [vmem:[%s6 + $0x68] sm:$0xff]
  %v3677 = vld [vmem:[%s6 + $0x70] sm:$0xff]
  %v3678 = vld [vmem:[%s6 + $0x78] sm:$0xff]
  %v3679 = vld [vmem:[%s6 + $0x80] sm:$0xff]
  %v3680 = vld [vmem:[%s6 + $0x88] sm:$0xff]
  %v3681 = vld [vmem:[%s6 + $0x90] sm:$0xff]
  %v3682 = vld [vmem:[%s6 + $0x98] sm:$0xff]
  %v3683 = vld [vmem:[%s6 + $0xa0] sm:$0xff]
  %v3684 = vld [vmem:[%s6 + $0xa8] sm:$0xff]
  %v3685 = vld [vmem:[%s6 + $0xb0] sm:$0xff]
  %v3686 = vld [vmem:[%s6 + $0xb8] sm:$0xff]
  %v3687 = vld [vmem:[%s6 + $0xc0] sm:$0xff]
  %v3688 = vld [vmem:[%s6 + $0xc8] sm:$0xff]
  %v3689 = vld [vmem:[%s6 + $0xd0] sm:$0xff]
  %v3690 = vld [vmem:[%s6 + $0xd8] sm:$0xff]
  %v3691 = vld [vmem:[%s6 + $0xe0] sm:$0xff]
  %v3692 = vld [vmem:[%s6 + $0xe8] sm:$0xff]
  %v3693 = vld [vmem:[%s6 + $0xf0] sm:$0xff]
  %v3694 = vld [vmem:[%s6 + $0xf8] sm:$0xff]
  %v3695 = vld [vmem:[%s6 + $0x100] sm:$0xff]
  %v3696 = vld [vmem:[%s6 + $0x108] sm:$0xff]
  %v3697 = vld [vmem:[%s6 + $0x110] sm:$0xff]
  %v3698 = vld [vmem:[%s6 + $0x118] sm:$0xff]
  %v3699 = vld [vmem:[%s6 + $0x120] sm:$0xff]
  %v3700 = vld [vmem:[%s6 + $0x128] sm:$0xff]
  %v3701 = vld [vmem:[%s6 + $0x130] sm:$0xff]
  %v3702 = vld [vmem:[%s6 + $0x138] sm:$0xff]
  %v3703 = vld [vmem:[%s6 + $0x140] sm:$0xff]
  %v3704 = vld [vmem:[%s6 + $0x148] sm:$0xff]
  %v3705 = vld [vmem:[%s6 + $0x150] sm:$0xff]
  %v3706 = vld [vmem:[%s6 + $0x158] sm:$0xff]
  %v3707 = vld [vmem:[%s6 + $0x160] sm:$0xff]
  %v3708 = vld [vmem:[%s6 + $0x168] sm:$0xff]
  %v3709 = vld [vmem:[%s6 + $0x170] sm:$0xff]
  %v3710 = vld [vmem:[%s6 + $0x178] sm:$0xff]
  %v3711 = vld [vmem:[%s6 + $0x180] sm:$0xff]
  %v3712 = vld [vmem:[%s6 + $0x188] sm:$0xff]
  %v3713 = vld [vmem:[%s6 + $0x190] sm:$0xff]
  %v3714 = vld [vmem:[%s6 + $0x198] sm:$0xff]
  %v3715 = vld [vmem:[%s6 + $0x1a0] sm:$0xff]
  %v3716 = vld [vmem:[%s6 + $0x1a8] sm:$0xff]
  %v3717 = vld [vmem:[%s6 + $0x1b0] sm:$0xff]
  %v3718 = vld [vmem:[%s6 + $0x1b8] sm:$0xff]
  %v3719 = vld [vmem:[%s6 + $0x1c0] sm:$0xff]
  %v3720 = vld [vmem:[%s6 + $0x1c8] sm:$0xff]
  %v3721 = vld [vmem:[%s6 + $0x1d0] sm:$0xff]
  %v3722 = vld [vmem:[%s6 + $0x1d8] sm:$0xff]
  %v3723 = vld [vmem:[%s6 + $0x1e0] sm:$0xff]
  %v3724 = vld [vmem:[%s6 + $0x1e8] sm:$0xff]
  %v3725 = vld [vmem:[%s6 + $0x1f0] sm:$0xff]
  %v3726 = vld [vmem:[%s6 + $0x1f8] sm:$0xff]
  %3727 = vmatprep.subr.mxu0 %v3724
  %3728 = vmatpush1.msra.mxu0 %v3723
  %3729 = vmatprep.subr.mxu0 %v3720
  %3730 = vmatpush1.msra.mxu0 %v3719
  %3731 = vmatprep.subr.mxu0 %v3716
  %3732 = vmatpush1.msra.mxu0 %v3715
  %3733 = vmatprep.subr.mxu0 %v3712
  %3734 = vmatpush1.msra.mxu0 %v3711
  %3735 = vmatprep.subr.mxu0 %v3708
  %3736 = vmatpush1.msra.mxu0 %v3707
  %3737 = vmatprep.subr.mxu0 %v3704
  %3738 = vmatpush1.msra.mxu0 %v3703
  %3739 = vmatprep.subr.mxu0 %v3700
  %3740 = vmatpush1.msra.mxu0 %v3699
  %3741 = vmatprep.subr.mxu0 %v3696
  %3742 = vmatpush1.msra.mxu0 %v3695
  %3743 = vmatprep.subr.mxu0 %v3692
  %3744 = vmatpush1.msra.mxu0 %v3691
  %3745 = vmatprep.subr.mxu0 %v3688
  %3746 = vmatpush1.msra.mxu0 %v3687
  %3747 = vmatprep.subr.mxu0 %v3684
  %3748 = vmatpush1.msra.mxu0 %v3683
  %3749 = vmatprep.subr.mxu0 %v3680
  %3750 = vmatpush1.msra.mxu0 %v3679
  %3751 = vmatprep.subr.mxu0 %v3676
  %3752 = vmatpush1.msra.mxu0 %v3675
  %3753 = vmatprep.subr.mxu0 %v3672
  %3754 = vmatpush1.msra.mxu0 %v3671
  %3755 = vmatprep.subr.mxu0 %v3668
  %3756 = vmatpush1.msra.mxu0 %v3667
  %3757 = vmatprep.subr.mxu0 %v3664
  %3758 = vmatpush1.msra.mxu0 %v3663
  %3759 = vmatprep.subr.mxu0 0.0
  %3760 = vmatpush2.msra.mxu0 0.0
  %3761 = vmatprep.subr.mxu0 0.0
  %3762 = vmatpush2.msra.mxu0 0.0
  %3763 = vmatprep.subr.mxu0 0.0
  %3764 = vmatpush2.msra.mxu0 0.0
  %3765 = vmatprep.subr.mxu0 0.0
  %3766 = vmatpush2.msra.mxu0 0.0
  %3767 = vmatprep.subr.mxu0 0.0
  %3768 = vmatpush2.msra.mxu0 0.0
  %3769 = vmatprep.subr.mxu0 0.0
  %3770 = vmatpush2.msra.mxu0 0.0
  %3771 = vmatprep.subr.mxu0 0.0
  %3772 = vmatpush2.msra.mxu0 0.0
  %3773 = vmatprep.subr.mxu0 0.0
  %3774 = vmatpush2.msra.mxu0 0.0
  %3775 = vmatprep.subr.mxu0 0.0
  %3776 = vmatpush2.msra.mxu0 0.0
  %3777 = vmatprep.subr.mxu0 0.0
  %3778 = vmatpush2.msra.mxu0 0.0
  %3779 = vmatprep.subr.mxu0 0.0
  %3780 = vmatpush2.msra.mxu0 0.0
  %3781 = vmatprep.subr.mxu0 0.0
  %3782 = vmatpush2.msra.mxu0 0.0
  %3783 = vmatprep.subr.mxu0 0.0
  %3784 = vmatpush2.msra.mxu0 0.0
  %3785 = vmatprep.subr.mxu0 0.0
  %3786 = vmatpush2.msra.mxu0 0.0
  %3787 = vmatprep.subr.mxu0 0.0
  %3788 = vmatpush2.msra.mxu0 0.0
  %3789 = vmatprep.subr.mxu0 0.0
  %3790 = vmatpush2.msra.mxu0 0.0
  %3791 = vmatprep.mubr.f32.mxu0 0.0
  %3792 = vmatmul.mubr.f32.gmra.mxu0 %v3662
  %v3793 = vpop.f32.mrf.mxu0
  %v3794 = vadd.f32 0.0, %v3793
  %v3795 = vpop.f32.mrf.mxu0
  %v3796 = vadd.f32 0.0, %v3795
  %3797 = vdwg.mxu0
  %3798 = vmatprep.subr.mxu0 %v3726
  %3799 = vmatpush1.msra.mxu0 %v3725
  %3800 = vmatprep.subr.mxu0 %v3722
  %3801 = vmatpush1.msra.mxu0 %v3721
  %3802 = vmatprep.subr.mxu0 %v3718
  %3803 = vmatpush1.msra.mxu0 %v3717
  %3804 = vmatprep.subr.mxu0 %v3714
  %3805 = vmatpush1.msra.mxu0 %v3713
  %3806 = vmatprep.subr.mxu0 %v3710
  %3807 = vmatpush1.msra.mxu0 %v3709
  %3808 = vmatprep.subr.mxu0 %v3706
  %3809 = vmatpush1.msra.mxu0 %v3705
  %3810 = vmatprep.subr.mxu0 %v3702
  %3811 = vmatpush1.msra.mxu0 %v3701
  %3812 = vmatprep.subr.mxu0 %v3698
  %3813 = vmatpush1.msra.mxu0 %v3697
  %3814 = vmatprep.subr.mxu0 %v3694
  %3815 = vmatpush1.msra.mxu0 %v3693
  %3816 = vmatprep.subr.mxu0 %v3690
  %3817 = vmatpush1.msra.mxu0 %v3689
  %3818 = vmatprep.subr.mxu0 %v3686
  %3819 = vmatpush1.msra.mxu0 %v3685
  %3820 = vmatprep.subr.mxu0 %v3682
  %3821 = vmatpush1.msra.mxu0 %v3681
  %3822 = vmatprep.subr.mxu0 %v3678
  %3823 = vmatpush1.msra.mxu0 %v3677
  %3824 = vmatprep.subr.mxu0 %v3674
  %3825 = vmatpush1.msra.mxu0 %v3673
  %3826 = vmatprep.subr.mxu0 %v3670
  %3827 = vmatpush1.msra.mxu0 %v3669
  %3828 = vmatprep.subr.mxu0 %v3666
  %3829 = vmatpush1.msra.mxu0 %v3665
  %3830 = vmatprep.subr.mxu0 0.0
  %3831 = vmatpush2.msra.mxu0 0.0
  %3832 = vmatprep.subr.mxu0 0.0
  %3833 = vmatpush2.msra.mxu0 0.0
  %3834 = vmatprep.subr.mxu0 0.0
  %3835 = vmatpush2.msra.mxu0 0.0
  %3836 = vmatprep.subr.mxu0 0.0
  %3837 = vmatpush2.msra.mxu0 0.0
  %3838 = vmatprep.subr.mxu0 0.0
  %3839 = vmatpush2.msra.mxu0 0.0
  %3840 = vmatprep.subr.mxu0 0.0
  %3841 = vmatpush2.msra.mxu0 0.0
  %3842 = vmatprep.subr.mxu0 0.0
  %3843 = vmatpush2.msra.mxu0 0.0
  %3844 = vmatprep.subr.mxu0 0.0
  %3845 = vmatpush2.msra.mxu0 0.0
  %3846 = vmatprep.subr.mxu0 0.0
  %3847 = vmatpush2.msra.mxu0 0.0
  %3848 = vmatprep.subr.mxu0 0.0
  %3849 = vmatpush2.msra.mxu0 0.0
  %3850 = vmatprep.subr.mxu0 0.0
  %3851 = vmatpush2.msra.mxu0 0.0
  %3852 = vmatprep.subr.mxu0 0.0
  %3853 = vmatpush2.msra.mxu0 0.0
  %3854 = vmatprep.subr.mxu0 0.0
  %3855 = vmatpush2.msra.mxu0 0.0
  %3856 = vmatprep.subr.mxu0 0.0
  %3857 = vmatpush2.msra.mxu0 0.0
  %3858 = vmatprep.subr.mxu0 0.0
  %3859 = vmatpush2.msra.mxu0 0.0
  %3860 = vmatprep.subr.mxu0 0.0
  %3861 = vmatpush2.msra.mxu0 0.0
  %3862 = vmatprep.mubr.f32.mxu0 0.0
  %3863 = vmatmul.mubr.f32.gmra.mxu0 %v3662
  %v3864 = vpop.f32.mrf.mxu0
  %v3865 = vadd.f32 0.0, %v3864
  %v3866 = vpop.f32.mrf.mxu0
  %v3867 = vadd.f32 0.0, %v3866
  %3868 = vdwg.mxu0
  %v3869 = vadd.f32 %v3658, %v3794
  %v3870 = vadd.f32 %v3659, %v3796
  %v3871 = vadd.f32 %v3660, %v3865
  %v3872 = vadd.f32 %v3661, %v3867
  %v3873 = vxor.u32 %v3869, 2147483648
  %v3874 = vmul.f32 %v3873, 1.442695
  %v3875 = vpow.pop %v3874
  %v3876 = vadd.f32 %v3875, 1.0
  %v3877 = vrcp.pop %v3876
  %v3878 = vmul.f32 1.0, %v3877
  %v3879 = vxor.u32 %v3870, 2147483648
  %v3880 = vmul.f32 %v3879, 1.442695
  %v3881 = vpow.pop %v3880
  %v3882 = vadd.f32 %v3881, 1.0
  %v3883 = vrcp.pop %v3882
  %v3884 = vmul.f32 1.0, %v3883
  %v3885 = vtanh.pop %v3871
  %v3886 = vxor.u32 %v3872, 2147483648
  %v3887 = vmul.f32 %v3886, 1.442695
  %v3888 = vpow.pop %v3887
  %v3889 = vadd.f32 %v3888, 1.0
  %v3890 = vrcp.pop %v3889
  %v3891 = vmul.f32 1.0, %v3890
  %v3892 = vld [vmem:[#allocation6] sm:$0xff]
  %v3893 = vmul.f32 %v3884, %v3892
  %v3894 = vmul.f32 %v3878, %v3885
  %v3895 = vadd.f32 %v3893, %v3894
  %v3896 = vtanh.pop %v3895
  %v3897 = vmul.f32 %v3891, %v3896
  %3898 = vst [vmem:[#allocation6] sm:$0xff] %v3895
  %3899 = vst [vmem:[#allocation5] sm:$0xff] %v3897
  %v3900 = vld [vmem:[%s1160] sm:$0xff]
  %v3901 = vld [vmem:[%s1160 + $0x8] sm:$0xff]
  %v3902 = vld [vmem:[%s1160 + $0x10] sm:$0xff]
  %v3903 = vld [vmem:[%s1160 + $0x18] sm:$0xff]
  %v3904 = vld [vmem:[%s1167] sm:$0xff]
  %v3905 = vld [vmem:[%s1167 + $0x8] sm:$0xff]
  %v3906 = vld [vmem:[%s1167 + $0x10] sm:$0xff]
  %v3907 = vld [vmem:[%s1167 + $0x18] sm:$0xff]
  %v3908 = vsel %vm94, %v3900, %v3904
  %v3909 = vsel %vm95, %v3901, %v3905
  %v3910 = vsel %vm96, %v3902, %v3906
  %v3911 = vsel %vm97, %v3903, %v3907
  %v3912 = vld [vmem:[#allocation5] sm:$0xff]
  %v3913 = vld [vmem:[%s6] sm:$0xff]
  %v3914 = vld [vmem:[%s6 + $0x8] sm:$0xff]
  %v3915 = vld [vmem:[%s6 + $0x10] sm:$0xff]
  %v3916 = vld [vmem:[%s6 + $0x18] sm:$0xff]
  %v3917 = vld [vmem:[%s6 + $0x20] sm:$0xff]
  %v3918 = vld [vmem:[%s6 + $0x28] sm:$0xff]
  %v3919 = vld [vmem:[%s6 + $0x30] sm:$0xff]
  %v3920 = vld [vmem:[%s6 + $0x38] sm:$0xff]
  %v3921 = vld [vmem:[%s6 + $0x40] sm:$0xff]
  %v3922 = vld [vmem:[%s6 + $0x48] sm:$0xff]
  %v3923 = vld [vmem:[%s6 + $0x50] sm:$0xff]
  %v3924 = vld [vmem:[%s6 + $0x58] sm:$0xff]
  %v3925 = vld [vmem:[%s6 + $0x60] sm:$0xff]
  %v3926 = vld [vmem:[%s6 + $0x68] sm:$0xff]
  %v3927 = vld [vmem:[%s6 + $0x70] sm:$0xff]
  %v3928 = vld [vmem:[%s6 + $0x78] sm:$0xff]
  %v3929 = vld [vmem:[%s6 + $0x80] sm:$0xff]
  %v3930 = vld [vmem:[%s6 + $0x88] sm:$0xff]
  %v3931 = vld [vmem:[%s6 + $0x90] sm:$0xff]
  %v3932 = vld [vmem:[%s6 + $0x98] sm:$0xff]
  %v3933 = vld [vmem:[%s6 + $0xa0] sm:$0xff]
  %v3934 = vld [vmem:[%s6 + $0xa8] sm:$0xff]
  %v3935 = vld [vmem:[%s6 + $0xb0] sm:$0xff]
  %v3936 = vld [vmem:[%s6 + $0xb8] sm:$0xff]
  %v3937 = vld [vmem:[%s6 + $0xc0] sm:$0xff]
  %v3938 = vld [vmem:[%s6 + $0xc8] sm:$0xff]
  %v3939 = vld [vmem:[%s6 + $0xd0] sm:$0xff]
  %v3940 = vld [vmem:[%s6 + $0xd8] sm:$0xff]
  %v3941 = vld [vmem:[%s6 + $0xe0] sm:$0xff]
  %v3942 = vld [vmem:[%s6 + $0xe8] sm:$0xff]
  %v3943 = vld [vmem:[%s6 + $0xf0] sm:$0xff]
  %v3944 = vld [vmem:[%s6 + $0xf8] sm:$0xff]
  %v3945 = vld [vmem:[%s6 + $0x100] sm:$0xff]
  %v3946 = vld [vmem:[%s6 + $0x108] sm:$0xff]
  %v3947 = vld [vmem:[%s6 + $0x110] sm:$0xff]
  %v3948 = vld [vmem:[%s6 + $0x118] sm:$0xff]
  %v3949 = vld [vmem:[%s6 + $0x120] sm:$0xff]
  %v3950 = vld [vmem:[%s6 + $0x128] sm:$0xff]
  %v3951 = vld [vmem:[%s6 + $0x130] sm:$0xff]
  %v3952 = vld [vmem:[%s6 + $0x138] sm:$0xff]
  %v3953 = vld [vmem:[%s6 + $0x140] sm:$0xff]
  %v3954 = vld [vmem:[%s6 + $0x148] sm:$0xff]
  %v3955 = vld [vmem:[%s6 + $0x150] sm:$0xff]
  %v3956 = vld [vmem:[%s6 + $0x158] sm:$0xff]
  %v3957 = vld [vmem:[%s6 + $0x160] sm:$0xff]
  %v3958 = vld [vmem:[%s6 + $0x168] sm:$0xff]
  %v3959 = vld [vmem:[%s6 + $0x170] sm:$0xff]
  %v3960 = vld [vmem:[%s6 + $0x178] sm:$0xff]
  %v3961 = vld [vmem:[%s6 + $0x180] sm:$0xff]
  %v3962 = vld [vmem:[%s6 + $0x188] sm:$0xff]
  %v3963 = vld [vmem:[%s6 + $0x190] sm:$0xff]
  %v3964 = vld [vmem:[%s6 + $0x198] sm:$0xff]
  %v3965 = vld [vmem:[%s6 + $0x1a0] sm:$0xff]
  %v3966 = vld [vmem:[%s6 + $0x1a8] sm:$0xff]
  %v3967 = vld [vmem:[%s6 + $0x1b0] sm:$0xff]
  %v3968 = vld [vmem:[%s6 + $0x1b8] sm:$0xff]
  %v3969 = vld [vmem:[%s6 + $0x1c0] sm:$0xff]
  %v3970 = vld [vmem:[%s6 + $0x1c8] sm:$0xff]
  %v3971 = vld [vmem:[%s6 + $0x1d0] sm:$0xff]
  %v3972 = vld [vmem:[%s6 + $0x1d8] sm:$0xff]
  %v3973 = vld [vmem:[%s6 + $0x1e0] sm:$0xff]
  %v3974 = vld [vmem:[%s6 + $0x1e8] sm:$0xff]
  %v3975 = vld [vmem:[%s6 + $0x1f0] sm:$0xff]
  %v3976 = vld [vmem:[%s6 + $0x1f8] sm:$0xff]
  %3977 = vmatprep.subr.mxu0 %v3974
  %3978 = vmatpush1.msra.mxu0 %v3973
  %3979 = vmatprep.subr.mxu0 %v3970
  %3980 = vmatpush1.msra.mxu0 %v3969
  %3981 = vmatprep.subr.mxu0 %v3966
  %3982 = vmatpush1.msra.mxu0 %v3965
  %3983 = vmatprep.subr.mxu0 %v3962
  %3984 = vmatpush1.msra.mxu0 %v3961
  %3985 = vmatprep.subr.mxu0 %v3958
  %3986 = vmatpush1.msra.mxu0 %v3957
  %3987 = vmatprep.subr.mxu0 %v3954
  %3988 = vmatpush1.msra.mxu0 %v3953
  %3989 = vmatprep.subr.mxu0 %v3950
  %3990 = vmatpush1.msra.mxu0 %v3949
  %3991 = vmatprep.subr.mxu0 %v3946
  %3992 = vmatpush1.msra.mxu0 %v3945
  %3993 = vmatprep.subr.mxu0 %v3942
  %3994 = vmatpush1.msra.mxu0 %v3941
  %3995 = vmatprep.subr.mxu0 %v3938
  %3996 = vmatpush1.msra.mxu0 %v3937
  %3997 = vmatprep.subr.mxu0 %v3934
  %3998 = vmatpush1.msra.mxu0 %v3933
  %3999 = vmatprep.subr.mxu0 %v3930
  %4000 = vmatpush1.msra.mxu0 %v3929
  %4001 = vmatprep.subr.mxu0 %v3926
  %4002 = vmatpush1.msra.mxu0 %v3925
  %4003 = vmatprep.subr.mxu0 %v3922
  %4004 = vmatpush1.msra.mxu0 %v3921
  %4005 = vmatprep.subr.mxu0 %v3918
  %4006 = vmatpush1.msra.mxu0 %v3917
  %4007 = vmatprep.subr.mxu0 %v3914
  %4008 = vmatpush1.msra.mxu0 %v3913
  %4009 = vmatprep.subr.mxu0 0.0
  %4010 = vmatpush2.msra.mxu0 0.0
  %4011 = vmatprep.subr.mxu0 0.0
  %4012 = vmatpush2.msra.mxu0 0.0
  %4013 = vmatprep.subr.mxu0 0.0
  %4014 = vmatpush2.msra.mxu0 0.0
  %4015 = vmatprep.subr.mxu0 0.0
  %4016 = vmatpush2.msra.mxu0 0.0
  %4017 = vmatprep.subr.mxu0 0.0
  %4018 = vmatpush2.msra.mxu0 0.0
  %4019 = vmatprep.subr.mxu0 0.0
  %4020 = vmatpush2.msra.mxu0 0.0
  %4021 = vmatprep.subr.mxu0 0.0
  %4022 = vmatpush2.msra.mxu0 0.0
  %4023 = vmatprep.subr.mxu0 0.0
  %4024 = vmatpush2.msra.mxu0 0.0
  %4025 = vmatprep.subr.mxu0 0.0
  %4026 = vmatpush2.msra.mxu0 0.0
  %4027 = vmatprep.subr.mxu0 0.0
  %4028 = vmatpush2.msra.mxu0 0.0
  %4029 = vmatprep.subr.mxu0 0.0
  %4030 = vmatpush2.msra.mxu0 0.0
  %4031 = vmatprep.subr.mxu0 0.0
  %4032 = vmatpush2.msra.mxu0 0.0
  %4033 = vmatprep.subr.mxu0 0.0
  %4034 = vmatpush2.msra.mxu0 0.0
  %4035 = vmatprep.subr.mxu0 0.0
  %4036 = vmatpush2.msra.mxu0 0.0
  %4037 = vmatprep.subr.mxu0 0.0
  %4038 = vmatpush2.msra.mxu0 0.0
  %4039 = vmatprep.subr.mxu0 0.0
  %4040 = vmatpush2.msra.mxu0 0.0
  %4041 = vmatprep.mubr.f32.mxu0 0.0
  %4042 = vmatmul.mubr.f32.gmra.mxu0 %v3912
  %v4043 = vpop.f32.mrf.mxu0
  %v4044 = vadd.f32 0.0, %v4043
  %v4045 = vpop.f32.mrf.mxu0
  %v4046 = vadd.f32 0.0, %v4045
  %4047 = vdwg.mxu0
  %4048 = vmatprep.subr.mxu0 %v3976
  %4049 = vmatpush1.msra.mxu0 %v3975
  %4050 = vmatprep.subr.mxu0 %v3972
  %4051 = vmatpush1.msra.mxu0 %v3971
  %4052 = vmatprep.subr.mxu0 %v3968
  %4053 = vmatpush1.msra.mxu0 %v3967
  %4054 = vmatprep.subr.mxu0 %v3964
  %4055 = vmatpush1.msra.mxu0 %v3963
  %4056 = vmatprep.subr.mxu0 %v3960
  %4057 = vmatpush1.msra.mxu0 %v3959
  %4058 = vmatprep.subr.mxu0 %v3956
  %4059 = vmatpush1.msra.mxu0 %v3955
  %4060 = vmatprep.subr.mxu0 %v3952
  %4061 = vmatpush1.msra.mxu0 %v3951
  %4062 = vmatprep.subr.mxu0 %v3948
  %4063 = vmatpush1.msra.mxu0 %v3947
  %4064 = vmatprep.subr.mxu0 %v3944
  %4065 = vmatpush1.msra.mxu0 %v3943
  %4066 = vmatprep.subr.mxu0 %v3940
  %4067 = vmatpush1.msra.mxu0 %v3939
  %4068 = vmatprep.subr.mxu0 %v3936
  %4069 = vmatpush1.msra.mxu0 %v3935
  %4070 = vmatprep.subr.mxu0 %v3932
  %4071 = vmatpush1.msra.mxu0 %v3931
  %4072 = vmatprep.subr.mxu0 %v3928
  %4073 = vmatpush1.msra.mxu0 %v3927
  %4074 = vmatprep.subr.mxu0 %v3924
  %4075 = vmatpush1.msra.mxu0 %v3923
  %4076 = vmatprep.subr.mxu0 %v3920
  %4077 = vmatpush1.msra.mxu0 %v3919
  %4078 = vmatprep.subr.mxu0 %v3916
  %4079 = vmatpush1.msra.mxu0 %v3915
  %4080 = vmatprep.subr.mxu0 0.0
  %4081 = vmatpush2.msra.mxu0 0.0
  %4082 = vmatprep.subr.mxu0 0.0
  %4083 = vmatpush2.msra.mxu0 0.0
  %4084 = vmatprep.subr.mxu0 0.0
  %4085 = vmatpush2.msra.mxu0 0.0
  %4086 = vmatprep.subr.mxu0 0.0
  %4087 = vmatpush2.msra.mxu0 0.0
  %4088 = vmatprep.subr.mxu0 0.0
  %4089 = vmatpush2.msra.mxu0 0.0
  %4090 = vmatprep.subr.mxu0 0.0
  %4091 = vmatpush2.msra.mxu0 0.0
  %4092 = vmatprep.subr.mxu0 0.0
  %4093 = vmatpush2.msra.mxu0 0.0
  %4094 = vmatprep.subr.mxu0 0.0
  %4095 = vmatpush2.msra.mxu0 0.0
  %4096 = vmatprep.subr.mxu0 0.0
  %4097 = vmatpush2.msra.mxu0 0.0
  %4098 = vmatprep.subr.mxu0 0.0
  %4099 = vmatpush2.msra.mxu0 0.0
  %4100 = vmatprep.subr.mxu0 0.0
  %4101 = vmatpush2.msra.mxu0 0.0
  %4102 = vmatprep.subr.mxu0 0.0
  %4103 = vmatpush2.msra.mxu0 0.0
  %4104 = vmatprep.subr.mxu0 0.0
  %4105 = vmatpush2.msra.mxu0 0.0
  %4106 = vmatprep.subr.mxu0 0.0
  %4107 = vmatpush2.msra.mxu0 0.0
  %4108 = vmatprep.subr.mxu0 0.0
  %4109 = vmatpush2.msra.mxu0 0.0
  %4110 = vmatprep.subr.mxu0 0.0
  %4111 = vmatpush2.msra.mxu0 0.0
  %4112 = vmatprep.mubr.f32.mxu0 0.0
  %4113 = vmatmul.mubr.f32.gmra.mxu0 %v3912
  %v4114 = vpop.f32.mrf.mxu0
  %v4115 = vadd.f32 0.0, %v4114
  %v4116 = vpop.f32.mrf.mxu0
  %v4117 = vadd.f32 0.0, %v4116
  %4118 = vdwg.mxu0
  %v4119 = vadd.f32 %v3908, %v4044
  %v4120 = vadd.f32 %v3909, %v4046
  %v4121 = vadd.f32 %v3910, %v4115
  %v4122 = vadd.f32 %v3911, %v4117
  %v4123 = vxor.u32 %v4119, 2147483648
  %v4124 = vmul.f32 %v4123, 1.442695
  %v4125 = vpow.pop %v4124
  %v4126 = vadd.f32 %v4125, 1.0
  %v4127 = vrcp.pop %v4126
  %v4128 = vmul.f32 1.0, %v4127
  %v4129 = vxor.u32 %v4120, 2147483648
  %v4130 = vmul.f32 %v4129, 1.442695
  %v4131 = vpow.pop %v4130
  %v4132 = vadd.f32 %v4131, 1.0
  %v4133 = vrcp.pop %v4132
  %v4134 = vmul.f32 1.0, %v4133
  %v4135 = vtanh.pop %v4121
  %v4136 = vxor.u32 %v4122, 2147483648
  %v4137 = vmul.f32 %v4136, 1.442695
  %v4138 = vpow.pop %v4137
  %v4139 = vadd.f32 %v4138, 1.0
  %v4140 = vrcp.pop %v4139
  %v4141 = vmul.f32 1.0, %v4140
  %v4142 = vld [vmem:[#allocation6] sm:$0xff]
  %v4143 = vmul.f32 %v4134, %v4142
  %v4144 = vmul.f32 %v4128, %v4135
  %v4145 = vadd.f32 %v4143, %v4144
  %v4146 = vtanh.pop %v4145
  %v4147 = vmul.f32 %v4141, %v4146
  %4148 = vst [vmem:[#allocation6] sm:$0xff] %v4145
  %4149 = vst [vmem:[#allocation5] sm:$0xff] %v4147
  %v4150 = vld [vmem:[%s1424] sm:$0xff]
  %v4151 = vld [vmem:[%s1424 + $0x8] sm:$0xff]
  %v4152 = vld [vmem:[%s1424 + $0x10] sm:$0xff]
  %v4153 = vld [vmem:[%s1424 + $0x18] sm:$0xff]
  %v4154 = vld [vmem:[%s1431] sm:$0xff]
  %v4155 = vld [vmem:[%s1431 + $0x8] sm:$0xff]
  %v4156 = vld [vmem:[%s1431 + $0x10] sm:$0xff]
  %v4157 = vld [vmem:[%s1431 + $0x18] sm:$0xff]
  %v4158 = vsel %vm94, %v4150, %v4154
  %v4159 = vsel %vm95, %v4151, %v4155
  %v4160 = vsel %vm96, %v4152, %v4156
  %v4161 = vsel %vm97, %v4153, %v4157
  %v4162 = vld [vmem:[#allocation5] sm:$0xff]
  %v4163 = vld [vmem:[%s6] sm:$0xff]
  %v4164 = vld [vmem:[%s6 + $0x8] sm:$0xff]
  %v4165 = vld [vmem:[%s6 + $0x10] sm:$0xff]
  %v4166 = vld [vmem:[%s6 + $0x18] sm:$0xff]
  %v4167 = vld [vmem:[%s6 + $0x20] sm:$0xff]
  %v4168 = vld [vmem:[%s6 + $0x28] sm:$0xff]
  %v4169 = vld [vmem:[%s6 + $0x30] sm:$0xff]
  %v4170 = vld [vmem:[%s6 + $0x38] sm:$0xff]
  %v4171 = vld [vmem:[%s6 + $0x40] sm:$0xff]
  %v4172 = vld [vmem:[%s6 + $0x48] sm:$0xff]
  %v4173 = vld [vmem:[%s6 + $0x50] sm:$0xff]
  %v4174 = vld [vmem:[%s6 + $0x58] sm:$0xff]
  %v4175 = vld [vmem:[%s6 + $0x60] sm:$0xff]
  %v4176 = vld [vmem:[%s6 + $0x68] sm:$0xff]
  %v4177 = vld [vmem:[%s6 + $0x70] sm:$0xff]
  %v4178 = vld [vmem:[%s6 + $0x78] sm:$0xff]
  %v4179 = vld [vmem:[%s6 + $0x80] sm:$0xff]
  %v4180 = vld [vmem:[%s6 + $0x88] sm:$0xff]
  %v4181 = vld [vmem:[%s6 + $0x90] sm:$0xff]
  %v4182 = vld [vmem:[%s6 + $0x98] sm:$0xff]
  %v4183 = vld [vmem:[%s6 + $0xa0] sm:$0xff]
  %v4184 = vld [vmem:[%s6 + $0xa8] sm:$0xff]
  %v4185 = vld [vmem:[%s6 + $0xb0] sm:$0xff]
  %v4186 = vld [vmem:[%s6 + $0xb8] sm:$0xff]
  %v4187 = vld [vmem:[%s6 + $0xc0] sm:$0xff]
  %v4188 = vld [vmem:[%s6 + $0xc8] sm:$0xff]
  %v4189 = vld [vmem:[%s6 + $0xd0] sm:$0xff]
  %v4190 = vld [vmem:[%s6 + $0xd8] sm:$0xff]
  %v4191 = vld [vmem:[%s6 + $0xe0] sm:$0xff]
  %v4192 = vld [vmem:[%s6 + $0xe8] sm:$0xff]
  %v4193 = vld [vmem:[%s6 + $0xf0] sm:$0xff]
  %v4194 = vld [vmem:[%s6 + $0xf8] sm:$0xff]
  %v4195 = vld [vmem:[%s6 + $0x100] sm:$0xff]
  %v4196 = vld [vmem:[%s6 + $0x108] sm:$0xff]
  %v4197 = vld [vmem:[%s6 + $0x110] sm:$0xff]
  %v4198 = vld [vmem:[%s6 + $0x118] sm:$0xff]
  %v4199 = vld [vmem:[%s6 + $0x120] sm:$0xff]
  %v4200 = vld [vmem:[%s6 + $0x128] sm:$0xff]
  %v4201 = vld [vmem:[%s6 + $0x130] sm:$0xff]
  %v4202 = vld [vmem:[%s6 + $0x138] sm:$0xff]
  %v4203 = vld [vmem:[%s6 + $0x140] sm:$0xff]
  %v4204 = vld [vmem:[%s6 + $0x148] sm:$0xff]
  %v4205 = vld [vmem:[%s6 + $0x150] sm:$0xff]
  %v4206 = vld [vmem:[%s6 + $0x158] sm:$0xff]
  %v4207 = vld [vmem:[%s6 + $0x160] sm:$0xff]
  %v4208 = vld [vmem:[%s6 + $0x168] sm:$0xff]
  %v4209 = vld [vmem:[%s6 + $0x170] sm:$0xff]
  %v4210 = vld [vmem:[%s6 + $0x178] sm:$0xff]
  %v4211 = vld [vmem:[%s6 + $0x180] sm:$0xff]
  %v4212 = vld [vmem:[%s6 + $0x188] sm:$0xff]
  %v4213 = vld [vmem:[%s6 + $0x190] sm:$0xff]
  %v4214 = vld [vmem:[%s6 + $0x198] sm:$0xff]
  %v4215 = vld [vmem:[%s6 + $0x1a0] sm:$0xff]
  %v4216 = vld [vmem:[%s6 + $0x1a8] sm:$0xff]
  %v4217 = vld [vmem:[%s6 + $0x1b0] sm:$0xff]
  %v4218 = vld [vmem:[%s6 + $0x1b8] sm:$0xff]
  %v4219 = vld [vmem:[%s6 + $0x1c0] sm:$0xff]
  %v4220 = vld [vmem:[%s6 + $0x1c8] sm:$0xff]
  %v4221 = vld [vmem:[%s6 + $0x1d0] sm:$0xff]
  %v4222 = vld [vmem:[%s6 + $0x1d8] sm:$0xff]
  %v4223 = vld [vmem:[%s6 + $0x1e0] sm:$0xff]
  %v4224 = vld [vmem:[%s6 + $0x1e8] sm:$0xff]
  %v4225 = vld [vmem:[%s6 + $0x1f0] sm:$0xff]
  %v4226 = vld [vmem:[%s6 + $0x1f8] sm:$0xff]
  %4227 = vmatprep.subr.mxu0 %v4224
  %4228 = vmatpush1.msra.mxu0 %v4223
  %4229 = vmatprep.subr.mxu0 %v4220
  %4230 = vmatpush1.msra.mxu0 %v4219
  %4231 = vmatprep.subr.mxu0 %v4216
  %4232 = vmatpush1.msra.mxu0 %v4215
  %4233 = vmatprep.subr.mxu0 %v4212
  %4234 = vmatpush1.msra.mxu0 %v4211
  %4235 = vmatprep.subr.mxu0 %v4208
  %4236 = vmatpush1.msra.mxu0 %v4207
  %4237 = vmatprep.subr.mxu0 %v4204
  %4238 = vmatpush1.msra.mxu0 %v4203
  %4239 = vmatprep.subr.mxu0 %v4200
  %4240 = vmatpush1.msra.mxu0 %v4199
  %4241 = vmatprep.subr.mxu0 %v4196
  %4242 = vmatpush1.msra.mxu0 %v4195
  %4243 = vmatprep.subr.mxu0 %v4192
  %4244 = vmatpush1.msra.mxu0 %v4191
  %4245 = vmatprep.subr.mxu0 %v4188
  %4246 = vmatpush1.msra.mxu0 %v4187
  %4247 = vmatprep.subr.mxu0 %v4184
  %4248 = vmatpush1.msra.mxu0 %v4183
  %4249 = vmatprep.subr.mxu0 %v4180
  %4250 = vmatpush1.msra.mxu0 %v4179
  %4251 = vmatprep.subr.mxu0 %v4176
  %4252 = vmatpush1.msra.mxu0 %v4175
  %4253 = vmatprep.subr.mxu0 %v4172
  %4254 = vmatpush1.msra.mxu0 %v4171
  %4255 = vmatprep.subr.mxu0 %v4168
  %4256 = vmatpush1.msra.mxu0 %v4167
  %4257 = vmatprep.subr.mxu0 %v4164
  %4258 = vmatpush1.msra.mxu0 %v4163
  %4259 = vmatprep.subr.mxu0 0.0
  %4260 = vmatpush2.msra.mxu0 0.0
  %4261 = vmatprep.subr.mxu0 0.0
  %4262 = vmatpush2.msra.mxu0 0.0
  %4263 = vmatprep.subr.mxu0 0.0
  %4264 = vmatpush2.msra.mxu0 0.0
  %4265 = vmatprep.subr.mxu0 0.0
  %4266 = vmatpush2.msra.mxu0 0.0
  %4267 = vmatprep.subr.mxu0 0.0
  %4268 = vmatpush2.msra.mxu0 0.0
  %4269 = vmatprep.subr.mxu0 0.0
  %4270 = vmatpush2.msra.mxu0 0.0
  %4271 = vmatprep.subr.mxu0 0.0
  %4272 = vmatpush2.msra.mxu0 0.0
  %4273 = vmatprep.subr.mxu0 0.0
  %4274 = vmatpush2.msra.mxu0 0.0
  %4275 = vmatprep.subr.mxu0 0.0
  %4276 = vmatpush2.msra.mxu0 0.0
  %4277 = vmatprep.subr.mxu0 0.0
  %4278 = vmatpush2.msra.mxu0 0.0
  %4279 = vmatprep.subr.mxu0 0.0
  %4280 = vmatpush2.msra.mxu0 0.0
  %4281 = vmatprep.subr.mxu0 0.0
  %4282 = vmatpush2.msra.mxu0 0.0
  %4283 = vmatprep.subr.mxu0 0.0
  %4284 = vmatpush2.msra.mxu0 0.0
  %4285 = vmatprep.subr.mxu0 0.0
  %4286 = vmatpush2.msra.mxu0 0.0
  %4287 = vmatprep.subr.mxu0 0.0
  %4288 = vmatpush2.msra.mxu0 0.0
  %4289 = vmatprep.subr.mxu0 0.0
  %4290 = vmatpush2.msra.mxu0 0.0
  %4291 = vmatprep.mubr.f32.mxu0 0.0
  %4292 = vmatmul.mubr.f32.gmra.mxu0 %v4162
  %v4293 = vpop.f32.mrf.mxu0
  %v4294 = vadd.f32 0.0, %v4293
  %v4295 = vpop.f32.mrf.mxu0
  %v4296 = vadd.f32 0.0, %v4295
  %4297 = vdwg.mxu0
  %4298 = vmatprep.subr.mxu0 %v4226
  %4299 = vmatpush1.msra.mxu0 %v4225
  %4300 = vmatprep.subr.mxu0 %v4222
  %4301 = vmatpush1.msra.mxu0 %v4221
  %4302 = vmatprep.subr.mxu0 %v4218
  %4303 = vmatpush1.msra.mxu0 %v4217
  %4304 = vmatprep.subr.mxu0 %v4214
  %4305 = vmatpush1.msra.mxu0 %v4213
  %4306 = vmatprep.subr.mxu0 %v4210
  %4307 = vmatpush1.msra.mxu0 %v4209
  %4308 = vmatprep.subr.mxu0 %v4206
  %4309 = vmatpush1.msra.mxu0 %v4205
  %4310 = vmatprep.subr.mxu0 %v4202
  %4311 = vmatpush1.msra.mxu0 %v4201
  %4312 = vmatprep.subr.mxu0 %v4198
  %4313 = vmatpush1.msra.mxu0 %v4197
  %4314 = vmatprep.subr.mxu0 %v4194
  %4315 = vmatpush1.msra.mxu0 %v4193
  %4316 = vmatprep.subr.mxu0 %v4190
  %4317 = vmatpush1.msra.mxu0 %v4189
  %4318 = vmatprep.subr.mxu0 %v4186
  %4319 = vmatpush1.msra.mxu0 %v4185
  %4320 = vmatprep.subr.mxu0 %v4182
  %4321 = vmatpush1.msra.mxu0 %v4181
  %4322 = vmatprep.subr.mxu0 %v4178
  %4323 = vmatpush1.msra.mxu0 %v4177
  %4324 = vmatprep.subr.mxu0 %v4174
  %4325 = vmatpush1.msra.mxu0 %v4173
  %4326 = vmatprep.subr.mxu0 %v4170
  %4327 = vmatpush1.msra.mxu0 %v4169
  %4328 = vmatprep.subr.mxu0 %v4166
  %4329 = vmatpush1.msra.mxu0 %v4165
  %4330 = vmatprep.subr.mxu0 0.0
  %4331 = vmatpush2.msra.mxu0 0.0
  %4332 = vmatprep.subr.mxu0 0.0
  %4333 = vmatpush2.msra.mxu0 0.0
  %4334 = vmatprep.subr.mxu0 0.0
  %4335 = vmatpush2.msra.mxu0 0.0
  %4336 = vmatprep.subr.mxu0 0.0
  %4337 = vmatpush2.msra.mxu0 0.0
  %4338 = vmatprep.subr.mxu0 0.0
  %4339 = vmatpush2.msra.mxu0 0.0
  %4340 = vmatprep.subr.mxu0 0.0
  %4341 = vmatpush2.msra.mxu0 0.0
  %4342 = vmatprep.subr.mxu0 0.0
  %4343 = vmatpush2.msra.mxu0 0.0
  %4344 = vmatprep.subr.mxu0 0.0
  %4345 = vmatpush2.msra.mxu0 0.0
  %4346 = vmatprep.subr.mxu0 0.0
  %4347 = vmatpush2.msra.mxu0 0.0
  %4348 = vmatprep.subr.mxu0 0.0
  %4349 = vmatpush2.msra.mxu0 0.0
  %4350 = vmatprep.subr.mxu0 0.0
  %4351 = vmatpush2.msra.mxu0 0.0
  %4352 = vmatprep.subr.mxu0 0.0
  %4353 = vmatpush2.msra.mxu0 0.0
  %4354 = vmatprep.subr.mxu0 0.0
  %4355 = vmatpush2.msra.mxu0 0.0
  %4356 = vmatprep.subr.mxu0 0.0
  %4357 = vmatpush2.msra.mxu0 0.0
  %4358 = vmatprep.subr.mxu0 0.0
  %4359 = vmatpush2.msra.mxu0 0.0
  %4360 = vmatprep.subr.mxu0 0.0
  %4361 = vmatpush2.msra.mxu0 0.0
  %4362 = vmatprep.mubr.f32.mxu0 0.0
  %4363 = vmatmul.mubr.f32.gmra.mxu0 %v4162
  %v4364 = vpop.f32.mrf.mxu0
  %v4365 = vadd.f32 0.0, %v4364
  %v4366 = vpop.f32.mrf.mxu0
  %v4367 = vadd.f32 0.0, %v4366
  %4368 = vdwg.mxu0
  %v4369 = vadd.f32 %v4158, %v4294
  %v4370 = vadd.f32 %v4159, %v4296
  %v4371 = vadd.f32 %v4160, %v4365
  %v4372 = vadd.f32 %v4161, %v4367
  %v4373 = vxor.u32 %v4369, 2147483648
  %v4374 = vmul.f32 %v4373, 1.442695
  %v4375 = vpow.pop %v4374
  %v4376 = vadd.f32 %v4375, 1.0
  %v4377 = vrcp.pop %v4376
  %v4378 = vmul.f32 1.0, %v4377
  %v4379 = vxor.u32 %v4370, 2147483648
  %v4380 = vmul.f32 %v4379, 1.442695
  %v4381 = vpow.pop %v4380
  %v4382 = vadd.f32 %v4381, 1.0
  %v4383 = vrcp.pop %v4382
  %v4384 = vmul.f32 1.0, %v4383
  %v4385 = vtanh.pop %v4371
  %v4386 = vxor.u32 %v4372, 2147483648
  %v4387 = vmul.f32 %v4386, 1.442695
  %v4388 = vpow.pop %v4387
  %v4389 = vadd.f32 %v4388, 1.0
  %v4390 = vrcp.pop %v4389
  %v4391 = vmul.f32 1.0, %v4390
  %v4392 = vld [vmem:[#allocation6] sm:$0xff]
  %v4393 = vmul.f32 %v4384, %v4392
  %v4394 = vmul.f32 %v4378, %v4385
  %v4395 = vadd.f32 %v4393, %v4394
  %v4396 = vtanh.pop %v4395
  %v4397 = vmul.f32 %v4391, %v4396
  %4398 = vst [vmem:[#allocation6] sm:$0xff] %v4395
  %4399 = vst [vmem:[#allocation5] sm:$0xff] %v4397
  %v4400 = vld [vmem:[%s1688] sm:$0xff]
  %v4401 = vld [vmem:[%s1688 + $0x8] sm:$0xff]
  %v4402 = vld [vmem:[%s1688 + $0x10] sm:$0xff]
  %v4403 = vld [vmem:[%s1688 + $0x18] sm:$0xff]
  %v4404 = vld [vmem:[%s1695] sm:$0xff]
  %v4405 = vld [vmem:[%s1695 + $0x8] sm:$0xff]
  %v4406 = vld [vmem:[%s1695 + $0x10] sm:$0xff]
  %v4407 = vld [vmem:[%s1695 + $0x18] sm:$0xff]
  %v4408 = vsel %vm94, %v4400, %v4404
  %v4409 = vsel %vm95, %v4401, %v4405
  %v4410 = vsel %vm96, %v4402, %v4406
  %v4411 = vsel %vm97, %v4403, %v4407
  %v4412 = vld [vmem:[#allocation5] sm:$0xff]
  %v4413 = vld [vmem:[%s6] sm:$0xff]
  %v4414 = vld [vmem:[%s6 + $0x8] sm:$0xff]
  %v4415 = vld [vmem:[%s6 + $0x10] sm:$0xff]
  %v4416 = vld [vmem:[%s6 + $0x18] sm:$0xff]
  %v4417 = vld [vmem:[%s6 + $0x20] sm:$0xff]
  %v4418 = vld [vmem:[%s6 + $0x28] sm:$0xff]
  %v4419 = vld [vmem:[%s6 + $0x30] sm:$0xff]
  %v4420 = vld [vmem:[%s6 + $0x38] sm:$0xff]
  %v4421 = vld [vmem:[%s6 + $0x40] sm:$0xff]
  %v4422 = vld [vmem:[%s6 + $0x48] sm:$0xff]
  %v4423 = vld [vmem:[%s6 + $0x50] sm:$0xff]
  %v4424 = vld [vmem:[%s6 + $0x58] sm:$0xff]
  %v4425 = vld [vmem:[%s6 + $0x60] sm:$0xff]
  %v4426 = vld [vmem:[%s6 + $0x68] sm:$0xff]
  %v4427 = vld [vmem:[%s6 + $0x70] sm:$0xff]
  %v4428 = vld [vmem:[%s6 + $0x78] sm:$0xff]
  %v4429 = vld [vmem:[%s6 + $0x80] sm:$0xff]
  %v4430 = vld [vmem:[%s6 + $0x88] sm:$0xff]
  %v4431 = vld [vmem:[%s6 + $0x90] sm:$0xff]
  %v4432 = vld [vmem:[%s6 + $0x98] sm:$0xff]
  %v4433 = vld [vmem:[%s6 + $0xa0] sm:$0xff]
  %v4434 = vld [vmem:[%s6 + $0xa8] sm:$0xff]
  %v4435 = vld [vmem:[%s6 + $0xb0] sm:$0xff]
  %v4436 = vld [vmem:[%s6 + $0xb8] sm:$0xff]
  %v4437 = vld [vmem:[%s6 + $0xc0] sm:$0xff]
  %v4438 = vld [vmem:[%s6 + $0xc8] sm:$0xff]
  %v4439 = vld [vmem:[%s6 + $0xd0] sm:$0xff]
  %v4440 = vld [vmem:[%s6 + $0xd8] sm:$0xff]
  %v4441 = vld [vmem:[%s6 + $0xe0] sm:$0xff]
  %v4442 = vld [vmem:[%s6 + $0xe8] sm:$0xff]
  %v4443 = vld [vmem:[%s6 + $0xf0] sm:$0xff]
  %v4444 = vld [vmem:[%s6 + $0xf8] sm:$0xff]
  %v4445 = vld [vmem:[%s6 + $0x100] sm:$0xff]
  %v4446 = vld [vmem:[%s6 + $0x108] sm:$0xff]
  %v4447 = vld [vmem:[%s6 + $0x110] sm:$0xff]
  %v4448 = vld [vmem:[%s6 + $0x118] sm:$0xff]
  %v4449 = vld [vmem:[%s6 + $0x120] sm:$0xff]
  %v4450 = vld [vmem:[%s6 + $0x128] sm:$0xff]
  %v4451 = vld [vmem:[%s6 + $0x130] sm:$0xff]
  %v4452 = vld [vmem:[%s6 + $0x138] sm:$0xff]
  %v4453 = vld [vmem:[%s6 + $0x140] sm:$0xff]
  %v4454 = vld [vmem:[%s6 + $0x148] sm:$0xff]
  %v4455 = vld [vmem:[%s6 + $0x150] sm:$0xff]
  %v4456 = vld [vmem:[%s6 + $0x158] sm:$0xff]
  %v4457 = vld [vmem:[%s6 + $0x160] sm:$0xff]
  %v4458 = vld [vmem:[%s6 + $0x168] sm:$0xff]
  %v4459 = vld [vmem:[%s6 + $0x170] sm:$0xff]
  %v4460 = vld [vmem:[%s6 + $0x178] sm:$0xff]
  %v4461 = vld [vmem:[%s6 + $0x180] sm:$0xff]
  %v4462 = vld [vmem:[%s6 + $0x188] sm:$0xff]
  %v4463 = vld [vmem:[%s6 + $0x190] sm:$0xff]
  %v4464 = vld [vmem:[%s6 + $0x198] sm:$0xff]
  %v4465 = vld [vmem:[%s6 + $0x1a0] sm:$0xff]
  %v4466 = vld [vmem:[%s6 + $0x1a8] sm:$0xff]
  %v4467 = vld [vmem:[%s6 + $0x1b0] sm:$0xff]
  %v4468 = vld [vmem:[%s6 + $0x1b8] sm:$0xff]
  %v4469 = vld [vmem:[%s6 + $0x1c0] sm:$0xff]
  %v4470 = vld [vmem:[%s6 + $0x1c8] sm:$0xff]
  %v4471 = vld [vmem:[%s6 + $0x1d0] sm:$0xff]
  %v4472 = vld [vmem:[%s6 + $0x1d8] sm:$0xff]
  %v4473 = vld [vmem:[%s6 + $0x1e0] sm:$0xff]
  %v4474 = vld [vmem:[%s6 + $0x1e8] sm:$0xff]
  %v4475 = vld [vmem:[%s6 + $0x1f0] sm:$0xff]
  %v4476 = vld [vmem:[%s6 + $0x1f8] sm:$0xff]
  %4477 = vmatprep.subr.mxu0 %v4474
  %4478 = vmatpush1.msra.mxu0 %v4473
  %4479 = vmatprep.subr.mxu0 %v4470
  %4480 = vmatpush1.msra.mxu0 %v4469
  %4481 = vmatprep.subr.mxu0 %v4466
  %4482 = vmatpush1.msra.mxu0 %v4465
  %4483 = vmatprep.subr.mxu0 %v4462
  %4484 = vmatpush1.msra.mxu0 %v4461
  %4485 = vmatprep.subr.mxu0 %v4458
  %4486 = vmatpush1.msra.mxu0 %v4457
  %4487 = vmatprep.subr.mxu0 %v4454
  %4488 = vmatpush1.msra.mxu0 %v4453
  %4489 = vmatprep.subr.mxu0 %v4450
  %4490 = vmatpush1.msra.mxu0 %v4449
  %4491 = vmatprep.subr.mxu0 %v4446
  %4492 = vmatpush1.msra.mxu0 %v4445
  %4493 = vmatprep.subr.mxu0 %v4442
  %4494 = vmatpush1.msra.mxu0 %v4441
  %4495 = vmatprep.subr.mxu0 %v4438
  %4496 = vmatpush1.msra.mxu0 %v4437
  %4497 = vmatprep.subr.mxu0 %v4434
  %4498 = vmatpush1.msra.mxu0 %v4433
  %4499 = vmatprep.subr.mxu0 %v4430
  %4500 = vmatpush1.msra.mxu0 %v4429
  %4501 = vmatprep.subr.mxu0 %v4426
  %4502 = vmatpush1.msra.mxu0 %v4425
  %4503 = vmatprep.subr.mxu0 %v4422
  %4504 = vmatpush1.msra.mxu0 %v4421
  %4505 = vmatprep.subr.mxu0 %v4418
  %4506 = vmatpush1.msra.mxu0 %v4417
  %4507 = vmatprep.subr.mxu0 %v4414
  %4508 = vmatpush1.msra.mxu0 %v4413
  %4509 = vmatprep.subr.mxu0 0.0
  %4510 = vmatpush2.msra.mxu0 0.0
  %4511 = vmatprep.subr.mxu0 0.0
  %4512 = vmatpush2.msra.mxu0 0.0
  %4513 = vmatprep.subr.mxu0 0.0
  %4514 = vmatpush2.msra.mxu0 0.0
  %4515 = vmatprep.subr.mxu0 0.0
  %4516 = vmatpush2.msra.mxu0 0.0
  %4517 = vmatprep.subr.mxu0 0.0
  %4518 = vmatpush2.msra.mxu0 0.0
  %4519 = vmatprep.subr.mxu0 0.0
  %4520 = vmatpush2.msra.mxu0 0.0
  %4521 = vmatprep.subr.mxu0 0.0
  %4522 = vmatpush2.msra.mxu0 0.0
  %4523 = vmatprep.subr.mxu0 0.0
  %4524 = vmatpush2.msra.mxu0 0.0
  %4525 = vmatprep.subr.mxu0 0.0
  %4526 = vmatpush2.msra.mxu0 0.0
  %4527 = vmatprep.subr.mxu0 0.0
  %4528 = vmatpush2.msra.mxu0 0.0
  %4529 = vmatprep.subr.mxu0 0.0
  %4530 = vmatpush2.msra.mxu0 0.0
  %4531 = vmatprep.subr.mxu0 0.0
  %4532 = vmatpush2.msra.mxu0 0.0
  %4533 = vmatprep.subr.mxu0 0.0
  %4534 = vmatpush2.msra.mxu0 0.0
  %4535 = vmatprep.subr.mxu0 0.0
  %4536 = vmatpush2.msra.mxu0 0.0
  %4537 = vmatprep.subr.mxu0 0.0
  %4538 = vmatpush2.msra.mxu0 0.0
  %4539 = vmatprep.subr.mxu0 0.0
  %4540 = vmatpush2.msra.mxu0 0.0
  %4541 = vmatprep.mubr.f32.mxu0 0.0
  %4542 = vmatmul.mubr.f32.gmra.mxu0 %v4412
  %v4543 = vpop.f32.mrf.mxu0
  %v4544 = vadd.f32 0.0, %v4543
  %v4545 = vpop.f32.mrf.mxu0
  %v4546 = vadd.f32 0.0, %v4545
  %4547 = vdwg.mxu0
  %4548 = vmatprep.subr.mxu0 %v4476
  %4549 = vmatpush1.msra.mxu0 %v4475
  %4550 = vmatprep.subr.mxu0 %v4472
  %4551 = vmatpush1.msra.mxu0 %v4471
  %4552 = vmatprep.subr.mxu0 %v4468
  %4553 = vmatpush1.msra.mxu0 %v4467
  %4554 = vmatprep.subr.mxu0 %v4464
  %4555 = vmatpush1.msra.mxu0 %v4463
  %4556 = vmatprep.subr.mxu0 %v4460
  %4557 = vmatpush1.msra.mxu0 %v4459
  %4558 = vmatprep.subr.mxu0 %v4456
  %4559 = vmatpush1.msra.mxu0 %v4455
  %4560 = vmatprep.subr.mxu0 %v4452
  %4561 = vmatpush1.msra.mxu0 %v4451
  %4562 = vmatprep.subr.mxu0 %v4448
  %4563 = vmatpush1.msra.mxu0 %v4447
  %4564 = vmatprep.subr.mxu0 %v4444
  %4565 = vmatpush1.msra.mxu0 %v4443
  %4566 = vmatprep.subr.mxu0 %v4440
  %4567 = vmatpush1.msra.mxu0 %v4439
  %4568 = vmatprep.subr.mxu0 %v4436
  %4569 = vmatpush1.msra.mxu0 %v4435
  %4570 = vmatprep.subr.mxu0 %v4432
  %4571 = vmatpush1.msra.mxu0 %v4431
  %4572 = vmatprep.subr.mxu0 %v4428
  %4573 = vmatpush1.msra.mxu0 %v4427
  %4574 = vmatprep.subr.mxu0 %v4424
  %4575 = vmatpush1.msra.mxu0 %v4423
  %4576 = vmatprep.subr.mxu0 %v4420
  %4577 = vmatpush1.msra.mxu0 %v4419
  %4578 = vmatprep.subr.mxu0 %v4416
  %4579 = vmatpush1.msra.mxu0 %v4415
  %4580 = vmatprep.subr.mxu0 0.0
  %4581 = vmatpush2.msra.mxu0 0.0
  %4582 = vmatprep.subr.mxu0 0.0
  %4583 = vmatpush2.msra.mxu0 0.0
  %4584 = vmatprep.subr.mxu0 0.0
  %4585 = vmatpush2.msra.mxu0 0.0
  %4586 = vmatprep.subr.mxu0 0.0
  %4587 = vmatpush2.msra.mxu0 0.0
  %4588 = vmatprep.subr.mxu0 0.0
  %4589 = vmatpush2.msra.mxu0 0.0
  %4590 = vmatprep.subr.mxu0 0.0
  %4591 = vmatpush2.msra.mxu0 0.0
  %4592 = vmatprep.subr.mxu0 0.0
  %4593 = vmatpush2.msra.mxu0 0.0
  %4594 = vmatprep.subr.mxu0 0.0
  %4595 = vmatpush2.msra.mxu0 0.0
  %4596 = vmatprep.subr.mxu0 0.0
  %4597 = vmatpush2.msra.mxu0 0.0
  %4598 = vmatprep.subr.mxu0 0.0
  %4599 = vmatpush2.msra.mxu0 0.0
  %4600 = vmatprep.subr.mxu0 0.0
  %4601 = vmatpush2.msra.mxu0 0.0
  %4602 = vmatprep.subr.mxu0 0.0
  %4603 = vmatpush2.msra.mxu0 0.0
  %4604 = vmatprep.subr.mxu0 0.0
  %4605 = vmatpush2.msra.mxu0 0.0
  %4606 = vmatprep.subr.mxu0 0.0
  %4607 = vmatpush2.msra.mxu0 0.0
  %4608 = vmatprep.subr.mxu0 0.0
  %4609 = vmatpush2.msra.mxu0 0.0
  %4610 = vmatprep.subr.mxu0 0.0
  %4611 = vmatpush2.msra.mxu0 0.0
  %4612 = vmatprep.mubr.f32.mxu0 0.0
  %4613 = vmatmul.mubr.f32.gmra.mxu0 %v4412
  %v4614 = vpop.f32.mrf.mxu0
  %v4615 = vadd.f32 0.0, %v4614
  %v4616 = vpop.f32.mrf.mxu0
  %v4617 = vadd.f32 0.0, %v4616
  %4618 = vdwg.mxu0
  %v4619 = vadd.f32 %v4408, %v4544
  %v4620 = vadd.f32 %v4409, %v4546
  %v4621 = vadd.f32 %v4410, %v4615
  %v4622 = vadd.f32 %v4411, %v4617
  %v4623 = vxor.u32 %v4619, 2147483648
  %v4624 = vmul.f32 %v4623, 1.442695
  %v4625 = vpow.pop %v4624
  %v4626 = vadd.f32 %v4625, 1.0
  %v4627 = vrcp.pop %v4626
  %v4628 = vmul.f32 1.0, %v4627
  %v4629 = vxor.u32 %v4620, 2147483648
  %v4630 = vmul.f32 %v4629, 1.442695
  %v4631 = vpow.pop %v4630
  %v4632 = vadd.f32 %v4631, 1.0
  %v4633 = vrcp.pop %v4632
  %v4634 = vmul.f32 1.0, %v4633
  %v4635 = vtanh.pop %v4621
  %v4636 = vxor.u32 %v4622, 2147483648
  %v4637 = vmul.f32 %v4636, 1.442695
  %v4638 = vpow.pop %v4637
  %v4639 = vadd.f32 %v4638, 1.0
  %v4640 = vrcp.pop %v4639
  %v4641 = vmul.f32 1.0, %v4640
  %v4642 = vld [vmem:[#allocation6] sm:$0xff]
  %v4643 = vmul.f32 %v4634, %v4642
  %v4644 = vmul.f32 %v4628, %v4635
  %v4645 = vadd.f32 %v4643, %v4644
  %v4646 = vtanh.pop %v4645
  %v4647 = vmul.f32 %v4641, %v4646
  %4648 = vst [vmem:[#allocation6] sm:$0xff] %v4645
  %4649 = vst [vmem:[#allocation5] sm:$0xff] %v4647
  %v4650 = vld [vmem:[%s1695] sm:$0xff]
  %v4651 = vld [vmem:[%s1695 + $0x8] sm:$0xff]
  %v4652 = vld [vmem:[%s1695 + $0x10] sm:$0xff]
  %v4653 = vld [vmem:[%s1695 + $0x18] sm:$0xff]
  %v4654 = vld [vmem:[%s1688] sm:$0xff]
  %v4655 = vld [vmem:[%s1688 + $0x8] sm:$0xff]
  %v4656 = vld [vmem:[%s1688 + $0x10] sm:$0xff]
  %v4657 = vld [vmem:[%s1688 + $0x18] sm:$0xff]
  %v4658 = vsel %vm94, %v4650, %v4654
  %v4659 = vsel %vm95, %v4651, %v4655
  %v4660 = vsel %vm96, %v4652, %v4656
  %v4661 = vsel %vm97, %v4653, %v4657
  %v4662 = vld [vmem:[#allocation5] sm:$0xff]
  %v4663 = vld [vmem:[%s6] sm:$0xff]
  %v4664 = vld [vmem:[%s6 + $0x8] sm:$0xff]
  %v4665 = vld [vmem:[%s6 + $0x10] sm:$0xff]
  %v4666 = vld [vmem:[%s6 + $0x18] sm:$0xff]
  %v4667 = vld [vmem:[%s6 + $0x20] sm:$0xff]
  %v4668 = vld [vmem:[%s6 + $0x28] sm:$0xff]
  %v4669 = vld [vmem:[%s6 + $0x30] sm:$0xff]
  %v4670 = vld [vmem:[%s6 + $0x38] sm:$0xff]
  %v4671 = vld [vmem:[%s6 + $0x40] sm:$0xff]
  %v4672 = vld [vmem:[%s6 + $0x48] sm:$0xff]
  %v4673 = vld [vmem:[%s6 + $0x50] sm:$0xff]
  %v4674 = vld [vmem:[%s6 + $0x58] sm:$0xff]
  %v4675 = vld [vmem:[%s6 + $0x60] sm:$0xff]
  %v4676 = vld [vmem:[%s6 + $0x68] sm:$0xff]
  %v4677 = vld [vmem:[%s6 + $0x70] sm:$0xff]
  %v4678 = vld [vmem:[%s6 + $0x78] sm:$0xff]
  %v4679 = vld [vmem:[%s6 + $0x80] sm:$0xff]
  %v4680 = vld [vmem:[%s6 + $0x88] sm:$0xff]
  %v4681 = vld [vmem:[%s6 + $0x90] sm:$0xff]
  %v4682 = vld [vmem:[%s6 + $0x98] sm:$0xff]
  %v4683 = vld [vmem:[%s6 + $0xa0] sm:$0xff]
  %v4684 = vld [vmem:[%s6 + $0xa8] sm:$0xff]
  %v4685 = vld [vmem:[%s6 + $0xb0] sm:$0xff]
  %v4686 = vld [vmem:[%s6 + $0xb8] sm:$0xff]
  %v4687 = vld [vmem:[%s6 + $0xc0] sm:$0xff]
  %v4688 = vld [vmem:[%s6 + $0xc8] sm:$0xff]
  %v4689 = vld [vmem:[%s6 + $0xd0] sm:$0xff]
  %v4690 = vld [vmem:[%s6 + $0xd8] sm:$0xff]
  %v4691 = vld [vmem:[%s6 + $0xe0] sm:$0xff]
  %v4692 = vld [vmem:[%s6 + $0xe8] sm:$0xff]
  %v4693 = vld [vmem:[%s6 + $0xf0] sm:$0xff]
  %v4694 = vld [vmem:[%s6 + $0xf8] sm:$0xff]
  %v4695 = vld [vmem:[%s6 + $0x100] sm:$0xff]
  %v4696 = vld [vmem:[%s6 + $0x108] sm:$0xff]
  %v4697 = vld [vmem:[%s6 + $0x110] sm:$0xff]
  %v4698 = vld [vmem:[%s6 + $0x118] sm:$0xff]
  %v4699 = vld [vmem:[%s6 + $0x120] sm:$0xff]
  %v4700 = vld [vmem:[%s6 + $0x128] sm:$0xff]
  %v4701 = vld [vmem:[%s6 + $0x130] sm:$0xff]
  %v4702 = vld [vmem:[%s6 + $0x138] sm:$0xff]
  %v4703 = vld [vmem:[%s6 + $0x140] sm:$0xff]
  %v4704 = vld [vmem:[%s6 + $0x148] sm:$0xff]
  %v4705 = vld [vmem:[%s6 + $0x150] sm:$0xff]
  %v4706 = vld [vmem:[%s6 + $0x158] sm:$0xff]
  %v4707 = vld [vmem:[%s6 + $0x160] sm:$0xff]
  %v4708 = vld [vmem:[%s6 + $0x168] sm:$0xff]
  %v4709 = vld [vmem:[%s6 + $0x170] sm:$0xff]
  %v4710 = vld [vmem:[%s6 + $0x178] sm:$0xff]
  %v4711 = vld [vmem:[%s6 + $0x180] sm:$0xff]
  %v4712 = vld [vmem:[%s6 + $0x188] sm:$0xff]
  %v4713 = vld [vmem:[%s6 + $0x190] sm:$0xff]
  %v4714 = vld [vmem:[%s6 + $0x198] sm:$0xff]
  %v4715 = vld [vmem:[%s6 + $0x1a0] sm:$0xff]
  %v4716 = vld [vmem:[%s6 + $0x1a8] sm:$0xff]
  %v4717 = vld [vmem:[%s6 + $0x1b0] sm:$0xff]
  %v4718 = vld [vmem:[%s6 + $0x1b8] sm:$0xff]
  %v4719 = vld [vmem:[%s6 + $0x1c0] sm:$0xff]
  %v4720 = vld [vmem:[%s6 + $0x1c8] sm:$0xff]
  %v4721 = vld [vmem:[%s6 + $0x1d0] sm:$0xff]
  %v4722 = vld [vmem:[%s6 + $0x1d8] sm:$0xff]
  %v4723 = vld [vmem:[%s6 + $0x1e0] sm:$0xff]
  %v4724 = vld [vmem:[%s6 + $0x1e8] sm:$0xff]
  %v4725 = vld [vmem:[%s6 + $0x1f0] sm:$0xff]
  %v4726 = vld [vmem:[%s6 + $0x1f8] sm:$0xff]
  %4727 = vmatprep.subr.mxu0 %v4724
  %4728 = vmatpush1.msra.mxu0 %v4723
  %4729 = vmatprep.subr.mxu0 %v4720
  %4730 = vmatpush1.msra.mxu0 %v4719
  %4731 = vmatprep.subr.mxu0 %v4716
  %4732 = vmatpush1.msra.mxu0 %v4715
  %4733 = vmatprep.subr.mxu0 %v4712
  %4734 = vmatpush1.msra.mxu0 %v4711
  %4735 = vmatprep.subr.mxu0 %v4708
  %4736 = vmatpush1.msra.mxu0 %v4707
  %4737 = vmatprep.subr.mxu0 %v4704
  %4738 = vmatpush1.msra.mxu0 %v4703
  %4739 = vmatprep.subr.mxu0 %v4700
  %4740 = vmatpush1.msra.mxu0 %v4699
  %4741 = vmatprep.subr.mxu0 %v4696
  %4742 = vmatpush1.msra.mxu0 %v4695
  %4743 = vmatprep.subr.mxu0 %v4692
  %4744 = vmatpush1.msra.mxu0 %v4691
  %4745 = vmatprep.subr.mxu0 %v4688
  %4746 = vmatpush1.msra.mxu0 %v4687
  %4747 = vmatprep.subr.mxu0 %v4684
  %4748 = vmatpush1.msra.mxu0 %v4683
  %4749 = vmatprep.subr.mxu0 %v4680
  %4750 = vmatpush1.msra.mxu0 %v4679
  %4751 = vmatprep.subr.mxu0 %v4676
  %4752 = vmatpush1.msra.mxu0 %v4675
  %4753 = vmatprep.subr.mxu0 %v4672
  %4754 = vmatpush1.msra.mxu0 %v4671
  %4755 = vmatprep.subr.mxu0 %v4668
  %4756 = vmatpush1.msra.mxu0 %v4667
  %4757 = vmatprep.subr.mxu0 %v4664
  %4758 = vmatpush1.msra.mxu0 %v4663
  %4759 = vmatprep.subr.mxu0 0.0
  %4760 = vmatpush2.msra.mxu0 0.0
  %4761 = vmatprep.subr.mxu0 0.0
  %4762 = vmatpush2.msra.mxu0 0.0
  %4763 = vmatprep.subr.mxu0 0.0
  %4764 = vmatpush2.msra.mxu0 0.0
  %4765 = vmatprep.subr.mxu0 0.0
  %4766 = vmatpush2.msra.mxu0 0.0
  %4767 = vmatprep.subr.mxu0 0.0
  %4768 = vmatpush2.msra.mxu0 0.0
  %4769 = vmatprep.subr.mxu0 0.0
  %4770 = vmatpush2.msra.mxu0 0.0
  %4771 = vmatprep.subr.mxu0 0.0
  %4772 = vmatpush2.msra.mxu0 0.0
  %4773 = vmatprep.subr.mxu0 0.0
  %4774 = vmatpush2.msra.mxu0 0.0
  %4775 = vmatprep.subr.mxu0 0.0
  %4776 = vmatpush2.msra.mxu0 0.0
  %4777 = vmatprep.subr.mxu0 0.0
  %4778 = vmatpush2.msra.mxu0 0.0
  %4779 = vmatprep.subr.mxu0 0.0
  %4780 = vmatpush2.msra.mxu0 0.0
  %4781 = vmatprep.subr.mxu0 0.0
  %4782 = vmatpush2.msra.mxu0 0.0
  %4783 = vmatprep.subr.mxu0 0.0
  %4784 = vmatpush2.msra.mxu0 0.0
  %4785 = vmatprep.subr.mxu0 0.0
  %4786 = vmatpush2.msra.mxu0 0.0
  %4787 = vmatprep.subr.mxu0 0.0
  %4788 = vmatpush2.msra.mxu0 0.0
  %4789 = vmatprep.subr.mxu0 0.0
  %4790 = vmatpush2.msra.mxu0 0.0
  %4791 = vmatprep.mubr.f32.mxu0 0.0
  %4792 = vmatmul.mubr.f32.gmra.mxu0 %v4662
  %v4793 = vpop.f32.mrf.mxu0
  %v4794 = vadd.f32 0.0, %v4793
  %v4795 = vpop.f32.mrf.mxu0
  %v4796 = vadd.f32 0.0, %v4795
  %4797 = vdwg.mxu0
  %4798 = vmatprep.subr.mxu0 %v4726
  %4799 = vmatpush1.msra.mxu0 %v4725
  %4800 = vmatprep.subr.mxu0 %v4722
  %4801 = vmatpush1.msra.mxu0 %v4721
  %4802 = vmatprep.subr.mxu0 %v4718
  %4803 = vmatpush1.msra.mxu0 %v4717
  %4804 = vmatprep.subr.mxu0 %v4714
  %4805 = vmatpush1.msra.mxu0 %v4713
  %4806 = vmatprep.subr.mxu0 %v4710
  %4807 = vmatpush1.msra.mxu0 %v4709
  %4808 = vmatprep.subr.mxu0 %v4706
  %4809 = vmatpush1.msra.mxu0 %v4705
  %4810 = vmatprep.subr.mxu0 %v4702
  %4811 = vmatpush1.msra.mxu0 %v4701
  %4812 = vmatprep.subr.mxu0 %v4698
  %4813 = vmatpush1.msra.mxu0 %v4697
  %4814 = vmatprep.subr.mxu0 %v4694
  %4815 = vmatpush1.msra.mxu0 %v4693
  %4816 = vmatprep.subr.mxu0 %v4690
  %4817 = vmatpush1.msra.mxu0 %v4689
  %4818 = vmatprep.subr.mxu0 %v4686
  %4819 = vmatpush1.msra.mxu0 %v4685
  %4820 = vmatprep.subr.mxu0 %v4682
  %4821 = vmatpush1.msra.mxu0 %v4681
  %4822 = vmatprep.subr.mxu0 %v4678
  %4823 = vmatpush1.msra.mxu0 %v4677
  %4824 = vmatprep.subr.mxu0 %v4674
  %4825 = vmatpush1.msra.mxu0 %v4673
  %4826 = vmatprep.subr.mxu0 %v4670
  %4827 = vmatpush1.msra.mxu0 %v4669
  %4828 = vmatprep.subr.mxu0 %v4666
  %4829 = vmatpush1.msra.mxu0 %v4665
  %4830 = vmatprep.subr.mxu0 0.0
  %4831 = vmatpush2.msra.mxu0 0.0
  %4832 = vmatprep.subr.mxu0 0.0
  %4833 = vmatpush2.msra.mxu0 0.0
  %4834 = vmatprep.subr.mxu0 0.0
  %4835 = vmatpush2.msra.mxu0 0.0
  %4836 = vmatprep.subr.mxu0 0.0
  %4837 = vmatpush2.msra.mxu0 0.0
  %4838 = vmatprep.subr.mxu0 0.0
  %4839 = vmatpush2.msra.mxu0 0.0
  %4840 = vmatprep.subr.mxu0 0.0
  %4841 = vmatpush2.msra.mxu0 0.0
  %4842 = vmatprep.subr.mxu0 0.0
  %4843 = vmatpush2.msra.mxu0 0.0
  %4844 = vmatprep.subr.mxu0 0.0
  %4845 = vmatpush2.msra.mxu0 0.0
  %4846 = vmatprep.subr.mxu0 0.0
  %4847 = vmatpush2.msra.mxu0 0.0
  %4848 = vmatprep.subr.mxu0 0.0
  %4849 = vmatpush2.msra.mxu0 0.0
  %4850 = vmatprep.subr.mxu0 0.0
  %4851 = vmatpush2.msra.mxu0 0.0
  %4852 = vmatprep.subr.mxu0 0.0
  %4853 = vmatpush2.msra.mxu0 0.0
  %4854 = vmatprep.subr.mxu0 0.0
  %4855 = vmatpush2.msra.mxu0 0.0
  %4856 = vmatprep.subr.mxu0 0.0
  %4857 = vmatpush2.msra.mxu0 0.0
  %4858 = vmatprep.subr.mxu0 0.0
  %4859 = vmatpush2.msra.mxu0 0.0
  %4860 = vmatprep.subr.mxu0 0.0
  %4861 = vmatpush2.msra.mxu0 0.0
  %4862 = vmatprep.mubr.f32.mxu0 0.0
  %4863 = vmatmul.mubr.f32.gmra.mxu0 %v4662
  %v4864 = vpop.f32.mrf.mxu0
  %v4865 = vadd.f32 0.0, %v4864
  %v4866 = vpop.f32.mrf.mxu0
  %v4867 = vadd.f32 0.0, %v4866
  %4868 = vdwg.mxu0
  %v4869 = vadd.f32 %v4658, %v4794
  %v4870 = vadd.f32 %v4659, %v4796
  %v4871 = vadd.f32 %v4660, %v4865
  %v4872 = vadd.f32 %v4661, %v4867
  %v4873 = vxor.u32 %v4869, 2147483648
  %v4874 = vmul.f32 %v4873, 1.442695
  %v4875 = vpow.pop %v4874
  %v4876 = vadd.f32 %v4875, 1.0
  %v4877 = vrcp.pop %v4876
  %v4878 = vmul.f32 1.0, %v4877
  %v4879 = vxor.u32 %v4870, 2147483648
  %v4880 = vmul.f32 %v4879, 1.442695
  %v4881 = vpow.pop %v4880
  %v4882 = vadd.f32 %v4881, 1.0
  %v4883 = vrcp.pop %v4882
  %v4884 = vmul.f32 1.0, %v4883
  %v4885 = vtanh.pop %v4871
  %v4886 = vxor.u32 %v4872, 2147483648
  %v4887 = vmul.f32 %v4886, 1.442695
  %v4888 = vpow.pop %v4887
  %v4889 = vadd.f32 %v4888, 1.0
  %v4890 = vrcp.pop %v4889
  %v4891 = vmul.f32 1.0, %v4890
  %v4892 = vld [vmem:[#allocation6] sm:$0xff]
  %v4893 = vmul.f32 %v4884, %v4892
  %v4894 = vmul.f32 %v4878, %v4885
  %v4895 = vadd.f32 %v4893, %v4894
  %v4896 = vtanh.pop %v4895
  %v4897 = vmul.f32 %v4891, %v4896
  %4898 = vst [vmem:[#allocation6] sm:$0xff] %v4895
  %4899 = vst [vmem:[#allocation5] sm:$0xff] %v4897
  %v4900 = vld [vmem:[%s1431] sm:$0xff]
  %v4901 = vld [vmem:[%s1431 + $0x8] sm:$0xff]
  %v4902 = vld [vmem:[%s1431 + $0x10] sm:$0xff]
  %v4903 = vld [vmem:[%s1431 + $0x18] sm:$0xff]
  %v4904 = vld [vmem:[%s1424] sm:$0xff]
  %v4905 = vld [vmem:[%s1424 + $0x8] sm:$0xff]
  %v4906 = vld [vmem:[%s1424 + $0x10] sm:$0xff]
  %v4907 = vld [vmem:[%s1424 + $0x18] sm:$0xff]
  %v4908 = vsel %vm94, %v4900, %v4904
  %v4909 = vsel %vm95, %v4901, %v4905
  %v4910 = vsel %vm96, %v4902, %v4906
  %v4911 = vsel %vm97, %v4903, %v4907
  %v4912 = vld [vmem:[#allocation5] sm:$0xff]
  %v4913 = vld [vmem:[%s6] sm:$0xff]
  %v4914 = vld [vmem:[%s6 + $0x8] sm:$0xff]
  %v4915 = vld [vmem:[%s6 + $0x10] sm:$0xff]
  %v4916 = vld [vmem:[%s6 + $0x18] sm:$0xff]
  %v4917 = vld [vmem:[%s6 + $0x20] sm:$0xff]
  %v4918 = vld [vmem:[%s6 + $0x28] sm:$0xff]
  %v4919 = vld [vmem:[%s6 + $0x30] sm:$0xff]
  %v4920 = vld [vmem:[%s6 + $0x38] sm:$0xff]
  %v4921 = vld [vmem:[%s6 + $0x40] sm:$0xff]
  %v4922 = vld [vmem:[%s6 + $0x48] sm:$0xff]
  %v4923 = vld [vmem:[%s6 + $0x50] sm:$0xff]
  %v4924 = vld [vmem:[%s6 + $0x58] sm:$0xff]
  %v4925 = vld [vmem:[%s6 + $0x60] sm:$0xff]
  %v4926 = vld [vmem:[%s6 + $0x68] sm:$0xff]
  %v4927 = vld [vmem:[%s6 + $0x70] sm:$0xff]
  %v4928 = vld [vmem:[%s6 + $0x78] sm:$0xff]
  %v4929 = vld [vmem:[%s6 + $0x80] sm:$0xff]
  %v4930 = vld [vmem:[%s6 + $0x88] sm:$0xff]
  %v4931 = vld [vmem:[%s6 + $0x90] sm:$0xff]
  %v4932 = vld [vmem:[%s6 + $0x98] sm:$0xff]
  %v4933 = vld [vmem:[%s6 + $0xa0] sm:$0xff]
  %v4934 = vld [vmem:[%s6 + $0xa8] sm:$0xff]
  %v4935 = vld [vmem:[%s6 + $0xb0] sm:$0xff]
  %v4936 = vld [vmem:[%s6 + $0xb8] sm:$0xff]
  %v4937 = vld [vmem:[%s6 + $0xc0] sm:$0xff]
  %v4938 = vld [vmem:[%s6 + $0xc8] sm:$0xff]
  %v4939 = vld [vmem:[%s6 + $0xd0] sm:$0xff]
  %v4940 = vld [vmem:[%s6 + $0xd8] sm:$0xff]
  %v4941 = vld [vmem:[%s6 + $0xe0] sm:$0xff]
  %v4942 = vld [vmem:[%s6 + $0xe8] sm:$0xff]
  %v4943 = vld [vmem:[%s6 + $0xf0] sm:$0xff]
  %v4944 = vld [vmem:[%s6 + $0xf8] sm:$0xff]
  %v4945 = vld [vmem:[%s6 + $0x100] sm:$0xff]
  %v4946 = vld [vmem:[%s6 + $0x108] sm:$0xff]
  %v4947 = vld [vmem:[%s6 + $0x110] sm:$0xff]
  %v4948 = vld [vmem:[%s6 + $0x118] sm:$0xff]
  %v4949 = vld [vmem:[%s6 + $0x120] sm:$0xff]
  %v4950 = vld [vmem:[%s6 + $0x128] sm:$0xff]
  %v4951 = vld [vmem:[%s6 + $0x130] sm:$0xff]
  %v4952 = vld [vmem:[%s6 + $0x138] sm:$0xff]
  %v4953 = vld [vmem:[%s6 + $0x140] sm:$0xff]
  %v4954 = vld [vmem:[%s6 + $0x148] sm:$0xff]
  %v4955 = vld [vmem:[%s6 + $0x150] sm:$0xff]
  %v4956 = vld [vmem:[%s6 + $0x158] sm:$0xff]
  %v4957 = vld [vmem:[%s6 + $0x160] sm:$0xff]
  %v4958 = vld [vmem:[%s6 + $0x168] sm:$0xff]
  %v4959 = vld [vmem:[%s6 + $0x170] sm:$0xff]
  %v4960 = vld [vmem:[%s6 + $0x178] sm:$0xff]
  %v4961 = vld [vmem:[%s6 + $0x180] sm:$0xff]
  %v4962 = vld [vmem:[%s6 + $0x188] sm:$0xff]
  %v4963 = vld [vmem:[%s6 + $0x190] sm:$0xff]
  %v4964 = vld [vmem:[%s6 + $0x198] sm:$0xff]
  %v4965 = vld [vmem:[%s6 + $0x1a0] sm:$0xff]
  %v4966 = vld [vmem:[%s6 + $0x1a8] sm:$0xff]
  %v4967 = vld [vmem:[%s6 + $0x1b0] sm:$0xff]
  %v4968 = vld [vmem:[%s6 + $0x1b8] sm:$0xff]
  %v4969 = vld [vmem:[%s6 + $0x1c0] sm:$0xff]
  %v4970 = vld [vmem:[%s6 + $0x1c8] sm:$0xff]
  %v4971 = vld [vmem:[%s6 + $0x1d0] sm:$0xff]
  %v4972 = vld [vmem:[%s6 + $0x1d8] sm:$0xff]
  %v4973 = vld [vmem:[%s6 + $0x1e0] sm:$0xff]
  %v4974 = vld [vmem:[%s6 + $0x1e8] sm:$0xff]
  %v4975 = vld [vmem:[%s6 + $0x1f0] sm:$0xff]
  %v4976 = vld [vmem:[%s6 + $0x1f8] sm:$0xff]
  %4977 = vmatprep.subr.mxu0 %v4974
  %4978 = vmatpush1.msra.mxu0 %v4973
  %4979 = vmatprep.subr.mxu0 %v4970
  %4980 = vmatpush1.msra.mxu0 %v4969
  %4981 = vmatprep.subr.mxu0 %v4966
  %4982 = vmatpush1.msra.mxu0 %v4965
  %4983 = vmatprep.subr.mxu0 %v4962
  %4984 = vmatpush1.msra.mxu0 %v4961
  %4985 = vmatprep.subr.mxu0 %v4958
  %4986 = vmatpush1.msra.mxu0 %v4957
  %4987 = vmatprep.subr.mxu0 %v4954
  %4988 = vmatpush1.msra.mxu0 %v4953
  %4989 = vmatprep.subr.mxu0 %v4950
  %4990 = vmatpush1.msra.mxu0 %v4949
  %4991 = vmatprep.subr.mxu0 %v4946
  %4992 = vmatpush1.msra.mxu0 %v4945
  %4993 = vmatprep.subr.mxu0 %v4942
  %4994 = vmatpush1.msra.mxu0 %v4941
  %4995 = vmatprep.subr.mxu0 %v4938
  %4996 = vmatpush1.msra.mxu0 %v4937
  %4997 = vmatprep.subr.mxu0 %v4934
  %4998 = vmatpush1.msra.mxu0 %v4933
  %4999 = vmatprep.subr.mxu0 %v4930
  %5000 = vmatpush1.msra.mxu0 %v4929
  %5001 = vmatprep.subr.mxu0 %v4926
  %5002 = vmatpush1.msra.mxu0 %v4925
  %5003 = vmatprep.subr.mxu0 %v4922
  %5004 = vmatpush1.msra.mxu0 %v4921
  %5005 = vmatprep.subr.mxu0 %v4918
  %5006 = vmatpush1.msra.mxu0 %v4917
  %5007 = vmatprep.subr.mxu0 %v4914
  %5008 = vmatpush1.msra.mxu0 %v4913
  %5009 = vmatprep.subr.mxu0 0.0
  %5010 = vmatpush2.msra.mxu0 0.0
  %5011 = vmatprep.subr.mxu0 0.0
  %5012 = vmatpush2.msra.mxu0 0.0
  %5013 = vmatprep.subr.mxu0 0.0
  %5014 = vmatpush2.msra.mxu0 0.0
  %5015 = vmatprep.subr.mxu0 0.0
  %5016 = vmatpush2.msra.mxu0 0.0
  %5017 = vmatprep.subr.mxu0 0.0
  %5018 = vmatpush2.msra.mxu0 0.0
  %5019 = vmatprep.subr.mxu0 0.0
  %5020 = vmatpush2.msra.mxu0 0.0
  %5021 = vmatprep.subr.mxu0 0.0
  %5022 = vmatpush2.msra.mxu0 0.0
  %5023 = vmatprep.subr.mxu0 0.0
  %5024 = vmatpush2.msra.mxu0 0.0
  %5025 = vmatprep.subr.mxu0 0.0
  %5026 = vmatpush2.msra.mxu0 0.0
  %5027 = vmatprep.subr.mxu0 0.0
  %5028 = vmatpush2.msra.mxu0 0.0
  %5029 = vmatprep.subr.mxu0 0.0
  %5030 = vmatpush2.msra.mxu0 0.0
  %5031 = vmatprep.subr.mxu0 0.0
  %5032 = vmatpush2.msra.mxu0 0.0
  %5033 = vmatprep.subr.mxu0 0.0
  %5034 = vmatpush2.msra.mxu0 0.0
  %5035 = vmatprep.subr.mxu0 0.0
  %5036 = vmatpush2.msra.mxu0 0.0
  %5037 = vmatprep.subr.mxu0 0.0
  %5038 = vmatpush2.msra.mxu0 0.0
  %5039 = vmatprep.subr.mxu0 0.0
  %5040 = vmatpush2.msra.mxu0 0.0
  %5041 = vmatprep.mubr.f32.mxu0 0.0
  %5042 = vmatmul.mubr.f32.gmra.mxu0 %v4912
  %v5043 = vpop.f32.mrf.mxu0
  %v5044 = vadd.f32 0.0, %v5043
  %v5045 = vpop.f32.mrf.mxu0
  %v5046 = vadd.f32 0.0, %v5045
  %5047 = vdwg.mxu0
  %5048 = vmatprep.subr.mxu0 %v4976
  %5049 = vmatpush1.msra.mxu0 %v4975
  %5050 = vmatprep.subr.mxu0 %v4972
  %5051 = vmatpush1.msra.mxu0 %v4971
  %5052 = vmatprep.subr.mxu0 %v4968
  %5053 = vmatpush1.msra.mxu0 %v4967
  %5054 = vmatprep.subr.mxu0 %v4964
  %5055 = vmatpush1.msra.mxu0 %v4963
  %5056 = vmatprep.subr.mxu0 %v4960
  %5057 = vmatpush1.msra.mxu0 %v4959
  %5058 = vmatprep.subr.mxu0 %v4956
  %5059 = vmatpush1.msra.mxu0 %v4955
  %5060 = vmatprep.subr.mxu0 %v4952
  %5061 = vmatpush1.msra.mxu0 %v4951
  %5062 = vmatprep.subr.mxu0 %v4948
  %5063 = vmatpush1.msra.mxu0 %v4947
  %5064 = vmatprep.subr.mxu0 %v4944
  %5065 = vmatpush1.msra.mxu0 %v4943
  %5066 = vmatprep.subr.mxu0 %v4940
  %5067 = vmatpush1.msra.mxu0 %v4939
  %5068 = vmatprep.subr.mxu0 %v4936
  %5069 = vmatpush1.msra.mxu0 %v4935
  %5070 = vmatprep.subr.mxu0 %v4932
  %5071 = vmatpush1.msra.mxu0 %v4931
  %5072 = vmatprep.subr.mxu0 %v4928
  %5073 = vmatpush1.msra.mxu0 %v4927
  %5074 = vmatprep.subr.mxu0 %v4924
  %5075 = vmatpush1.msra.mxu0 %v4923
  %5076 = vmatprep.subr.mxu0 %v4920
  %5077 = vmatpush1.msra.mxu0 %v4919
  %5078 = vmatprep.subr.mxu0 %v4916
  %5079 = vmatpush1.msra.mxu0 %v4915
  %5080 = vmatprep.subr.mxu0 0.0
  %5081 = vmatpush2.msra.mxu0 0.0
  %5082 = vmatprep.subr.mxu0 0.0
  %5083 = vmatpush2.msra.mxu0 0.0
  %5084 = vmatprep.subr.mxu0 0.0
  %5085 = vmatpush2.msra.mxu0 0.0
  %5086 = vmatprep.subr.mxu0 0.0
  %5087 = vmatpush2.msra.mxu0 0.0
  %5088 = vmatprep.subr.mxu0 0.0
  %5089 = vmatpush2.msra.mxu0 0.0
  %5090 = vmatprep.subr.mxu0 0.0
  %5091 = vmatpush2.msra.mxu0 0.0
  %5092 = vmatprep.subr.mxu0 0.0
  %5093 = vmatpush2.msra.mxu0 0.0
  %5094 = vmatprep.subr.mxu0 0.0
  %5095 = vmatpush2.msra.mxu0 0.0
  %5096 = vmatprep.subr.mxu0 0.0
  %5097 = vmatpush2.msra.mxu0 0.0
  %5098 = vmatprep.subr.mxu0 0.0
  %5099 = vmatpush2.msra.mxu0 0.0
  %5100 = vmatprep.subr.mxu0 0.0
  %5101 = vmatpush2.msra.mxu0 0.0
  %5102 = vmatprep.subr.mxu0 0.0
  %5103 = vmatpush2.msra.mxu0 0.0
  %5104 = vmatprep.subr.mxu0 0.0
  %5105 = vmatpush2.msra.mxu0 0.0
  %5106 = vmatprep.subr.mxu0 0.0
  %5107 = vmatpush2.msra.mxu0 0.0
  %5108 = vmatprep.subr.mxu0 0.0
  %5109 = vmatpush2.msra.mxu0 0.0
  %5110 = vmatprep.subr.mxu0 0.0
  %5111 = vmatpush2.msra.mxu0 0.0
  %5112 = vmatprep.mubr.f32.mxu0 0.0
  %5113 = vmatmul.mubr.f32.gmra.mxu0 %v4912
  %v5114 = vpop.f32.mrf.mxu0
  %v5115 = vadd.f32 0.0, %v5114
  %v5116 = vpop.f32.mrf.mxu0
  %v5117 = vadd.f32 0.0, %v5116
  %5118 = vdwg.mxu0
  %v5119 = vadd.f32 %v4908, %v5044
  %v5120 = vadd.f32 %v4909, %v5046
  %v5121 = vadd.f32 %v4910, %v5115
  %v5122 = vadd.f32 %v4911, %v5117
  %v5123 = vxor.u32 %v5119, 2147483648
  %v5124 = vmul.f32 %v5123, 1.442695
  %v5125 = vpow.pop %v5124
  %v5126 = vadd.f32 %v5125, 1.0
  %v5127 = vrcp.pop %v5126
  %v5128 = vmul.f32 1.0, %v5127
  %v5129 = vxor.u32 %v5120, 2147483648
  %v5130 = vmul.f32 %v5129, 1.442695
  %v5131 = vpow.pop %v5130
  %v5132 = vadd.f32 %v5131, 1.0
  %v5133 = vrcp.pop %v5132
  %v5134 = vmul.f32 1.0, %v5133
  %v5135 = vtanh.pop %v5121
  %v5136 = vxor.u32 %v5122, 2147483648
  %v5137 = vmul.f32 %v5136, 1.442695
  %v5138 = vpow.pop %v5137
  %v5139 = vadd.f32 %v5138, 1.0
  %v5140 = vrcp.pop %v5139
  %v5141 = vmul.f32 1.0, %v5140
  %v5142 = vld [vmem:[#allocation6] sm:$0xff]
  %v5143 = vmul.f32 %v5134, %v5142
  %v5144 = vmul.f32 %v5128, %v5135
  %v5145 = vadd.f32 %v5143, %v5144
  %v5146 = vtanh.pop %v5145
  %v5147 = vmul.f32 %v5141, %v5146
  %5148 = vst [vmem:[#allocation6] sm:$0xff] %v5145
  %5149 = vst [vmem:[#allocation5] sm:$0xff] %v5147
  %v5150 = vld [vmem:[%s1167] sm:$0xff]
  %v5151 = vld [vmem:[%s1167 + $0x8] sm:$0xff]
  %v5152 = vld [vmem:[%s1167 + $0x10] sm:$0xff]
  %v5153 = vld [vmem:[%s1167 + $0x18] sm:$0xff]
  %v5154 = vld [vmem:[%s1160] sm:$0xff]
  %v5155 = vld [vmem:[%s1160 + $0x8] sm:$0xff]
  %v5156 = vld [vmem:[%s1160 + $0x10] sm:$0xff]
  %v5157 = vld [vmem:[%s1160 + $0x18] sm:$0xff]
  %v5158 = vsel %vm94, %v5150, %v5154
  %v5159 = vsel %vm95, %v5151, %v5155
  %v5160 = vsel %vm96, %v5152, %v5156
  %v5161 = vsel %vm97, %v5153, %v5157
  %v5162 = vld [vmem:[#allocation5] sm:$0xff]
  %v5163 = vld [vmem:[%s6] sm:$0xff]
  %v5164 = vld [vmem:[%s6 + $0x8] sm:$0xff]
  %v5165 = vld [vmem:[%s6 + $0x10] sm:$0xff]
  %v5166 = vld [vmem:[%s6 + $0x18] sm:$0xff]
  %v5167 = vld [vmem:[%s6 + $0x20] sm:$0xff]
  %v5168 = vld [vmem:[%s6 + $0x28] sm:$0xff]
  %v5169 = vld [vmem:[%s6 + $0x30] sm:$0xff]
  %v5170 = vld [vmem:[%s6 + $0x38] sm:$0xff]
  %v5171 = vld [vmem:[%s6 + $0x40] sm:$0xff]
  %v5172 = vld [vmem:[%s6 + $0x48] sm:$0xff]
  %v5173 = vld [vmem:[%s6 + $0x50] sm:$0xff]
  %v5174 = vld [vmem:[%s6 + $0x58] sm:$0xff]
  %v5175 = vld [vmem:[%s6 + $0x60] sm:$0xff]
  %v5176 = vld [vmem:[%s6 + $0x68] sm:$0xff]
  %v5177 = vld [vmem:[%s6 + $0x70] sm:$0xff]
  %v5178 = vld [vmem:[%s6 + $0x78] sm:$0xff]
  %v5179 = vld [vmem:[%s6 + $0x80] sm:$0xff]
  %v5180 = vld [vmem:[%s6 + $0x88] sm:$0xff]
  %v5181 = vld [vmem:[%s6 + $0x90] sm:$0xff]
  %v5182 = vld [vmem:[%s6 + $0x98] sm:$0xff]
  %v5183 = vld [vmem:[%s6 + $0xa0] sm:$0xff]
  %v5184 = vld [vmem:[%s6 + $0xa8] sm:$0xff]
  %v5185 = vld [vmem:[%s6 + $0xb0] sm:$0xff]
  %v5186 = vld [vmem:[%s6 + $0xb8] sm:$0xff]
  %v5187 = vld [vmem:[%s6 + $0xc0] sm:$0xff]
  %v5188 = vld [vmem:[%s6 + $0xc8] sm:$0xff]
  %v5189 = vld [vmem:[%s6 + $0xd0] sm:$0xff]
  %v5190 = vld [vmem:[%s6 + $0xd8] sm:$0xff]
  %v5191 = vld [vmem:[%s6 + $0xe0] sm:$0xff]
  %v5192 = vld [vmem:[%s6 + $0xe8] sm:$0xff]
  %v5193 = vld [vmem:[%s6 + $0xf0] sm:$0xff]
  %v5194 = vld [vmem:[%s6 + $0xf8] sm:$0xff]
  %v5195 = vld [vmem:[%s6 + $0x100] sm:$0xff]
  %v5196 = vld [vmem:[%s6 + $0x108] sm:$0xff]
  %v5197 = vld [vmem:[%s6 + $0x110] sm:$0xff]
  %v5198 = vld [vmem:[%s6 + $0x118] sm:$0xff]
  %v5199 = vld [vmem:[%s6 + $0x120] sm:$0xff]
  %v5200 = vld [vmem:[%s6 + $0x128] sm:$0xff]
  %v5201 = vld [vmem:[%s6 + $0x130] sm:$0xff]
  %v5202 = vld [vmem:[%s6 + $0x138] sm:$0xff]
  %v5203 = vld [vmem:[%s6 + $0x140] sm:$0xff]
  %v5204 = vld [vmem:[%s6 + $0x148] sm:$0xff]
  %v5205 = vld [vmem:[%s6 + $0x150] sm:$0xff]
  %v5206 = vld [vmem:[%s6 + $0x158] sm:$0xff]
  %v5207 = vld [vmem:[%s6 + $0x160] sm:$0xff]
  %v5208 = vld [vmem:[%s6 + $0x168] sm:$0xff]
  %v5209 = vld [vmem:[%s6 + $0x170] sm:$0xff]
  %v5210 = vld [vmem:[%s6 + $0x178] sm:$0xff]
  %v5211 = vld [vmem:[%s6 + $0x180] sm:$0xff]
  %v5212 = vld [vmem:[%s6 + $0x188] sm:$0xff]
  %v5213 = vld [vmem:[%s6 + $0x190] sm:$0xff]
  %v5214 = vld [vmem:[%s6 + $0x198] sm:$0xff]
  %v5215 = vld [vmem:[%s6 + $0x1a0] sm:$0xff]
  %v5216 = vld [vmem:[%s6 + $0x1a8] sm:$0xff]
  %v5217 = vld [vmem:[%s6 + $0x1b0] sm:$0xff]
  %v5218 = vld [vmem:[%s6 + $0x1b8] sm:$0xff]
  %v5219 = vld [vmem:[%s6 + $0x1c0] sm:$0xff]
  %v5220 = vld [vmem:[%s6 + $0x1c8] sm:$0xff]
  %v5221 = vld [vmem:[%s6 + $0x1d0] sm:$0xff]
  %v5222 = vld [vmem:[%s6 + $0x1d8] sm:$0xff]
  %v5223 = vld [vmem:[%s6 + $0x1e0] sm:$0xff]
  %v5224 = vld [vmem:[%s6 + $0x1e8] sm:$0xff]
  %v5225 = vld [vmem:[%s6 + $0x1f0] sm:$0xff]
  %v5226 = vld [vmem:[%s6 + $0x1f8] sm:$0xff]
  %5227 = vmatprep.subr.mxu0 %v5224
  %5228 = vmatpush1.msra.mxu0 %v5223
  %5229 = vmatprep.subr.mxu0 %v5220
  %5230 = vmatpush1.msra.mxu0 %v5219
  %5231 = vmatprep.subr.mxu0 %v5216
  %5232 = vmatpush1.msra.mxu0 %v5215
  %5233 = vmatprep.subr.mxu0 %v5212
  %5234 = vmatpush1.msra.mxu0 %v5211
  %5235 = vmatprep.subr.mxu0 %v5208
  %5236 = vmatpush1.msra.mxu0 %v5207
  %5237 = vmatprep.subr.mxu0 %v5204
  %5238 = vmatpush1.msra.mxu0 %v5203
  %5239 = vmatprep.subr.mxu0 %v5200
  %5240 = vmatpush1.msra.mxu0 %v5199
  %5241 = vmatprep.subr.mxu0 %v5196
  %5242 = vmatpush1.msra.mxu0 %v5195
  %5243 = vmatprep.subr.mxu0 %v5192
  %5244 = vmatpush1.msra.mxu0 %v5191
  %5245 = vmatprep.subr.mxu0 %v5188
  %5246 = vmatpush1.msra.mxu0 %v5187
  %5247 = vmatprep.subr.mxu0 %v5184
  %5248 = vmatpush1.msra.mxu0 %v5183
  %5249 = vmatprep.subr.mxu0 %v5180
  %5250 = vmatpush1.msra.mxu0 %v5179
  %5251 = vmatprep.subr.mxu0 %v5176
  %5252 = vmatpush1.msra.mxu0 %v5175
  %5253 = vmatprep.subr.mxu0 %v5172
  %5254 = vmatpush1.msra.mxu0 %v5171
  %5255 = vmatprep.subr.mxu0 %v5168
  %5256 = vmatpush1.msra.mxu0 %v5167
  %5257 = vmatprep.subr.mxu0 %v5164
  %5258 = vmatpush1.msra.mxu0 %v5163
  %5259 = vmatprep.subr.mxu0 0.0
  %5260 = vmatpush2.msra.mxu0 0.0
  %5261 = vmatprep.subr.mxu0 0.0
  %5262 = vmatpush2.msra.mxu0 0.0
  %5263 = vmatprep.subr.mxu0 0.0
  %5264 = vmatpush2.msra.mxu0 0.0
  %5265 = vmatprep.subr.mxu0 0.0
  %5266 = vmatpush2.msra.mxu0 0.0
  %5267 = vmatprep.subr.mxu0 0.0
  %5268 = vmatpush2.msra.mxu0 0.0
  %5269 = vmatprep.subr.mxu0 0.0
  %5270 = vmatpush2.msra.mxu0 0.0
  %5271 = vmatprep.subr.mxu0 0.0
  %5272 = vmatpush2.msra.mxu0 0.0
  %5273 = vmatprep.subr.mxu0 0.0
  %5274 = vmatpush2.msra.mxu0 0.0
  %5275 = vmatprep.subr.mxu0 0.0
  %5276 = vmatpush2.msra.mxu0 0.0
  %5277 = vmatprep.subr.mxu0 0.0
  %5278 = vmatpush2.msra.mxu0 0.0
  %5279 = vmatprep.subr.mxu0 0.0
  %5280 = vmatpush2.msra.mxu0 0.0
  %5281 = vmatprep.subr.mxu0 0.0
  %5282 = vmatpush2.msra.mxu0 0.0
  %5283 = vmatprep.subr.mxu0 0.0
  %5284 = vmatpush2.msra.mxu0 0.0
  %5285 = vmatprep.subr.mxu0 0.0
  %5286 = vmatpush2.msra.mxu0 0.0
  %5287 = vmatprep.subr.mxu0 0.0
  %5288 = vmatpush2.msra.mxu0 0.0
  %5289 = vmatprep.subr.mxu0 0.0
  %5290 = vmatpush2.msra.mxu0 0.0
  %5291 = vmatprep.mubr.f32.mxu0 0.0
  %5292 = vmatmul.mubr.f32.gmra.mxu0 %v5162
  %v5293 = vpop.f32.mrf.mxu0
  %v5294 = vadd.f32 0.0, %v5293
  %v5295 = vpop.f32.mrf.mxu0
  %v5296 = vadd.f32 0.0, %v5295
  %5297 = vdwg.mxu0
  %5298 = vmatprep.subr.mxu0 %v5226
  %5299 = vmatpush1.msra.mxu0 %v5225
  %5300 = vmatprep.subr.mxu0 %v5222
  %5301 = vmatpush1.msra.mxu0 %v5221
  %5302 = vmatprep.subr.mxu0 %v5218
  %5303 = vmatpush1.msra.mxu0 %v5217
  %5304 = vmatprep.subr.mxu0 %v5214
  %5305 = vmatpush1.msra.mxu0 %v5213
  %5306 = vmatprep.subr.mxu0 %v5210
  %5307 = vmatpush1.msra.mxu0 %v5209
  %5308 = vmatprep.subr.mxu0 %v5206
  %5309 = vmatpush1.msra.mxu0 %v5205
  %5310 = vmatprep.subr.mxu0 %v5202
  %5311 = vmatpush1.msra.mxu0 %v5201
  %5312 = vmatprep.subr.mxu0 %v5198
  %5313 = vmatpush1.msra.mxu0 %v5197
  %5314 = vmatprep.subr.mxu0 %v5194
  %5315 = vmatpush1.msra.mxu0 %v5193
  %5316 = vmatprep.subr.mxu0 %v5190
  %5317 = vmatpush1.msra.mxu0 %v5189
  %5318 = vmatprep.subr.mxu0 %v5186
  %5319 = vmatpush1.msra.mxu0 %v5185
  %5320 = vmatprep.subr.mxu0 %v5182
  %5321 = vmatpush1.msra.mxu0 %v5181
  %5322 = vmatprep.subr.mxu0 %v5178
  %5323 = vmatpush1.msra.mxu0 %v5177
  %5324 = vmatprep.subr.mxu0 %v5174
  %5325 = vmatpush1.msra.mxu0 %v5173
  %5326 = vmatprep.subr.mxu0 %v5170
  %5327 = vmatpush1.msra.mxu0 %v5169
  %5328 = vmatprep.subr.mxu0 %v5166
  %5329 = vmatpush1.msra.mxu0 %v5165
  %5330 = vmatprep.subr.mxu0 0.0
  %5331 = vmatpush2.msra.mxu0 0.0
  %5332 = vmatprep.subr.mxu0 0.0
  %5333 = vmatpush2.msra.mxu0 0.0
  %5334 = vmatprep.subr.mxu0 0.0
  %5335 = vmatpush2.msra.mxu0 0.0
  %5336 = vmatprep.subr.mxu0 0.0
  %5337 = vmatpush2.msra.mxu0 0.0
  %5338 = vmatprep.subr.mxu0 0.0
  %5339 = vmatpush2.msra.mxu0 0.0
  %5340 = vmatprep.subr.mxu0 0.0
  %5341 = vmatpush2.msra.mxu0 0.0
  %5342 = vmatprep.subr.mxu0 0.0
  %5343 = vmatpush2.msra.mxu0 0.0
  %5344 = vmatprep.subr.mxu0 0.0
  %5345 = vmatpush2.msra.mxu0 0.0
  %5346 = vmatprep.subr.mxu0 0.0
  %5347 = vmatpush2.msra.mxu0 0.0
  %5348 = vmatprep.subr.mxu0 0.0
  %5349 = vmatpush2.msra.mxu0 0.0
  %5350 = vmatprep.subr.mxu0 0.0
  %5351 = vmatpush2.msra.mxu0 0.0
  %5352 = vmatprep.subr.mxu0 0.0
  %5353 = vmatpush2.msra.mxu0 0.0
  %5354 = vmatprep.subr.mxu0 0.0
  %5355 = vmatpush2.msra.mxu0 0.0
  %5356 = vmatprep.subr.mxu0 0.0
  %5357 = vmatpush2.msra.mxu0 0.0
  %5358 = vmatprep.subr.mxu0 0.0
  %5359 = vmatpush2.msra.mxu0 0.0
  %5360 = vmatprep.subr.mxu0 0.0
  %5361 = vmatpush2.msra.mxu0 0.0
  %5362 = vmatprep.mubr.f32.mxu0 0.0
  %5363 = vmatmul.mubr.f32.gmra.mxu0 %v5162
  %v5364 = vpop.f32.mrf.mxu0
  %v5365 = vadd.f32 0.0, %v5364
  %v5366 = vpop.f32.mrf.mxu0
  %v5367 = vadd.f32 0.0, %v5366
  %5368 = vdwg.mxu0
  %v5369 = vadd.f32 %v5158, %v5294
  %v5370 = vadd.f32 %v5159, %v5296
  %v5371 = vadd.f32 %v5160, %v5365
  %v5372 = vadd.f32 %v5161, %v5367
  %v5373 = vxor.u32 %v5369, 2147483648
  %v5374 = vmul.f32 %v5373, 1.442695
  %v5375 = vpow.pop %v5374
  %v5376 = vadd.f32 %v5375, 1.0
  %v5377 = vrcp.pop %v5376
  %v5378 = vmul.f32 1.0, %v5377
  %v5379 = vxor.u32 %v5370, 2147483648
  %v5380 = vmul.f32 %v5379, 1.442695
  %v5381 = vpow.pop %v5380
  %v5382 = vadd.f32 %v5381, 1.0
  %v5383 = vrcp.pop %v5382
  %v5384 = vmul.f32 1.0, %v5383
  %v5385 = vtanh.pop %v5371
  %v5386 = vxor.u32 %v5372, 2147483648
  %v5387 = vmul.f32 %v5386, 1.442695
  %v5388 = vpow.pop %v5387
  %v5389 = vadd.f32 %v5388, 1.0
  %v5390 = vrcp.pop %v5389
  %v5391 = vmul.f32 1.0, %v5390
  %v5392 = vld [vmem:[#allocation6] sm:$0xff]
  %v5393 = vmul.f32 %v5384, %v5392
  %v5394 = vmul.f32 %v5378, %v5385
  %v5395 = vadd.f32 %v5393, %v5394
  %v5396 = vtanh.pop %v5395
  %v5397 = vmul.f32 %v5391, %v5396
  %5398 = vst [vmem:[#allocation6] sm:$0xff] %v5395
  %5399 = vst [vmem:[#allocation5] sm:$0xff] %v5397
  %v5400 = vld [vmem:[%s903] sm:$0xff]
  %v5401 = vld [vmem:[%s903 + $0x8] sm:$0xff]
  %v5402 = vld [vmem:[%s903 + $0x10] sm:$0xff]
  %v5403 = vld [vmem:[%s903 + $0x18] sm:$0xff]
  %v5404 = vld [vmem:[%s896] sm:$0xff]
  %v5405 = vld [vmem:[%s896 + $0x8] sm:$0xff]
  %v5406 = vld [vmem:[%s896 + $0x10] sm:$0xff]
  %v5407 = vld [vmem:[%s896 + $0x18] sm:$0xff]
  %v5408 = vsel %vm94, %v5400, %v5404
  %v5409 = vsel %vm95, %v5401, %v5405
  %v5410 = vsel %vm96, %v5402, %v5406
  %v5411 = vsel %vm97, %v5403, %v5407
  %v5412 = vld [vmem:[#allocation5] sm:$0xff]
  %v5413 = vld [vmem:[%s6] sm:$0xff]
  %v5414 = vld [vmem:[%s6 + $0x8] sm:$0xff]
  %v5415 = vld [vmem:[%s6 + $0x10] sm:$0xff]
  %v5416 = vld [vmem:[%s6 + $0x18] sm:$0xff]
  %v5417 = vld [vmem:[%s6 + $0x20] sm:$0xff]
  %v5418 = vld [vmem:[%s6 + $0x28] sm:$0xff]
  %v5419 = vld [vmem:[%s6 + $0x30] sm:$0xff]
  %v5420 = vld [vmem:[%s6 + $0x38] sm:$0xff]
  %v5421 = vld [vmem:[%s6 + $0x40] sm:$0xff]
  %v5422 = vld [vmem:[%s6 + $0x48] sm:$0xff]
  %v5423 = vld [vmem:[%s6 + $0x50] sm:$0xff]
  %v5424 = vld [vmem:[%s6 + $0x58] sm:$0xff]
  %v5425 = vld [vmem:[%s6 + $0x60] sm:$0xff]
  %v5426 = vld [vmem:[%s6 + $0x68] sm:$0xff]
  %v5427 = vld [vmem:[%s6 + $0x70] sm:$0xff]
  %v5428 = vld [vmem:[%s6 + $0x78] sm:$0xff]
  %v5429 = vld [vmem:[%s6 + $0x80] sm:$0xff]
  %v5430 = vld [vmem:[%s6 + $0x88] sm:$0xff]
  %v5431 = vld [vmem:[%s6 + $0x90] sm:$0xff]
  %v5432 = vld [vmem:[%s6 + $0x98] sm:$0xff]
  %v5433 = vld [vmem:[%s6 + $0xa0] sm:$0xff]
  %v5434 = vld [vmem:[%s6 + $0xa8] sm:$0xff]
  %v5435 = vld [vmem:[%s6 + $0xb0] sm:$0xff]
  %v5436 = vld [vmem:[%s6 + $0xb8] sm:$0xff]
  %v5437 = vld [vmem:[%s6 + $0xc0] sm:$0xff]
  %v5438 = vld [vmem:[%s6 + $0xc8] sm:$0xff]
  %v5439 = vld [vmem:[%s6 + $0xd0] sm:$0xff]
  %v5440 = vld [vmem:[%s6 + $0xd8] sm:$0xff]
  %v5441 = vld [vmem:[%s6 + $0xe0] sm:$0xff]
  %v5442 = vld [vmem:[%s6 + $0xe8] sm:$0xff]
  %v5443 = vld [vmem:[%s6 + $0xf0] sm:$0xff]
  %v5444 = vld [vmem:[%s6 + $0xf8] sm:$0xff]
  %v5445 = vld [vmem:[%s6 + $0x100] sm:$0xff]
  %v5446 = vld [vmem:[%s6 + $0x108] sm:$0xff]
  %v5447 = vld [vmem:[%s6 + $0x110] sm:$0xff]
  %v5448 = vld [vmem:[%s6 + $0x118] sm:$0xff]
  %v5449 = vld [vmem:[%s6 + $0x120] sm:$0xff]
  %v5450 = vld [vmem:[%s6 + $0x128] sm:$0xff]
  %v5451 = vld [vmem:[%s6 + $0x130] sm:$0xff]
  %v5452 = vld [vmem:[%s6 + $0x138] sm:$0xff]
  %v5453 = vld [vmem:[%s6 + $0x140] sm:$0xff]
  %v5454 = vld [vmem:[%s6 + $0x148] sm:$0xff]
  %v5455 = vld [vmem:[%s6 + $0x150] sm:$0xff]
  %v5456 = vld [vmem:[%s6 + $0x158] sm:$0xff]
  %v5457 = vld [vmem:[%s6 + $0x160] sm:$0xff]
  %v5458 = vld [vmem:[%s6 + $0x168] sm:$0xff]
  %v5459 = vld [vmem:[%s6 + $0x170] sm:$0xff]
  %v5460 = vld [vmem:[%s6 + $0x178] sm:$0xff]
  %v5461 = vld [vmem:[%s6 + $0x180] sm:$0xff]
  %v5462 = vld [vmem:[%s6 + $0x188] sm:$0xff]
  %v5463 = vld [vmem:[%s6 + $0x190] sm:$0xff]
  %v5464 = vld [vmem:[%s6 + $0x198] sm:$0xff]
  %v5465 = vld [vmem:[%s6 + $0x1a0] sm:$0xff]
  %v5466 = vld [vmem:[%s6 + $0x1a8] sm:$0xff]
  %v5467 = vld [vmem:[%s6 + $0x1b0] sm:$0xff]
  %v5468 = vld [vmem:[%s6 + $0x1b8] sm:$0xff]
  %v5469 = vld [vmem:[%s6 + $0x1c0] sm:$0xff]
  %v5470 = vld [vmem:[%s6 + $0x1c8] sm:$0xff]
  %v5471 = vld [vmem:[%s6 + $0x1d0] sm:$0xff]
  %v5472 = vld [vmem:[%s6 + $0x1d8] sm:$0xff]
  %v5473 = vld [vmem:[%s6 + $0x1e0] sm:$0xff]
  %v5474 = vld [vmem:[%s6 + $0x1e8] sm:$0xff]
  %v5475 = vld [vmem:[%s6 + $0x1f0] sm:$0xff]
  %v5476 = vld [vmem:[%s6 + $0x1f8] sm:$0xff]
  %5477 = vmatprep.subr.mxu0 %v5474
  %5478 = vmatpush1.msra.mxu0 %v5473
  %5479 = vmatprep.subr.mxu0 %v5470
  %5480 = vmatpush1.msra.mxu0 %v5469
  %5481 = vmatprep.subr.mxu0 %v5466
  %5482 = vmatpush1.msra.mxu0 %v5465
  %5483 = vmatprep.subr.mxu0 %v5462
  %5484 = vmatpush1.msra.mxu0 %v5461
  %5485 = vmatprep.subr.mxu0 %v5458
  %5486 = vmatpush1.msra.mxu0 %v5457
  %5487 = vmatprep.subr.mxu0 %v5454
  %5488 = vmatpush1.msra.mxu0 %v5453
  %5489 = vmatprep.subr.mxu0 %v5450
  %5490 = vmatpush1.msra.mxu0 %v5449
  %5491 = vmatprep.subr.mxu0 %v5446
  %5492 = vmatpush1.msra.mxu0 %v5445
  %5493 = vmatprep.subr.mxu0 %v5442
  %5494 = vmatpush1.msra.mxu0 %v5441
  %5495 = vmatprep.subr.mxu0 %v5438
  %5496 = vmatpush1.msra.mxu0 %v5437
  %5497 = vmatprep.subr.mxu0 %v5434
  %5498 = vmatpush1.msra.mxu0 %v5433
  %5499 = vmatprep.subr.mxu0 %v5430
  %5500 = vmatpush1.msra.mxu0 %v5429
  %5501 = vmatprep.subr.mxu0 %v5426
  %5502 = vmatpush1.msra.mxu0 %v5425
  %5503 = vmatprep.subr.mxu0 %v5422
  %5504 = vmatpush1.msra.mxu0 %v5421
  %5505 = vmatprep.subr.mxu0 %v5418
  %5506 = vmatpush1.msra.mxu0 %v5417
  %5507 = vmatprep.subr.mxu0 %v5414
  %5508 = vmatpush1.msra.mxu0 %v5413
  %5509 = vmatprep.subr.mxu0 0.0
  %5510 = vmatpush2.msra.mxu0 0.0
  %5511 = vmatprep.subr.mxu0 0.0
  %5512 = vmatpush2.msra.mxu0 0.0
  %5513 = vmatprep.subr.mxu0 0.0
  %5514 = vmatpush2.msra.mxu0 0.0
  %5515 = vmatprep.subr.mxu0 0.0
  %5516 = vmatpush2.msra.mxu0 0.0
  %5517 = vmatprep.subr.mxu0 0.0
  %5518 = vmatpush2.msra.mxu0 0.0
  %5519 = vmatprep.subr.mxu0 0.0
  %5520 = vmatpush2.msra.mxu0 0.0
  %5521 = vmatprep.subr.mxu0 0.0
  %5522 = vmatpush2.msra.mxu0 0.0
  %5523 = vmatprep.subr.mxu0 0.0
  %5524 = vmatpush2.msra.mxu0 0.0
  %5525 = vmatprep.subr.mxu0 0.0
  %5526 = vmatpush2.msra.mxu0 0.0
  %5527 = vmatprep.subr.mxu0 0.0
  %5528 = vmatpush2.msra.mxu0 0.0
  %5529 = vmatprep.subr.mxu0 0.0
  %5530 = vmatpush2.msra.mxu0 0.0
  %5531 = vmatprep.subr.mxu0 0.0
  %5532 = vmatpush2.msra.mxu0 0.0
  %5533 = vmatprep.subr.mxu0 0.0
  %5534 = vmatpush2.msra.mxu0 0.0
  %5535 = vmatprep.subr.mxu0 0.0
  %5536 = vmatpush2.msra.mxu0 0.0
  %5537 = vmatprep.subr.mxu0 0.0
  %5538 = vmatpush2.msra.mxu0 0.0
  %5539 = vmatprep.subr.mxu0 0.0
  %5540 = vmatpush2.msra.mxu0 0.0
  %5541 = vmatprep.mubr.f32.mxu0 0.0
  %5542 = vmatmul.mubr.f32.gmra.mxu0 %v5412
  %v5543 = vpop.f32.mrf.mxu0
  %v5544 = vadd.f32 0.0, %v5543
  %v5545 = vpop.f32.mrf.mxu0
  %v5546 = vadd.f32 0.0, %v5545
  %5547 = vdwg.mxu0
  %5548 = vmatprep.subr.mxu0 %v5476
  %5549 = vmatpush1.msra.mxu0 %v5475
  %5550 = vmatprep.subr.mxu0 %v5472
  %5551 = vmatpush1.msra.mxu0 %v5471
  %5552 = vmatprep.subr.mxu0 %v5468
  %5553 = vmatpush1.msra.mxu0 %v5467
  %5554 = vmatprep.subr.mxu0 %v5464
  %5555 = vmatpush1.msra.mxu0 %v5463
  %5556 = vmatprep.subr.mxu0 %v5460
  %5557 = vmatpush1.msra.mxu0 %v5459
  %5558 = vmatprep.subr.mxu0 %v5456
  %5559 = vmatpush1.msra.mxu0 %v5455
  %5560 = vmatprep.subr.mxu0 %v5452
  %5561 = vmatpush1.msra.mxu0 %v5451
  %5562 = vmatprep.subr.mxu0 %v5448
  %5563 = vmatpush1.msra.mxu0 %v5447
  %5564 = vmatprep.subr.mxu0 %v5444
  %5565 = vmatpush1.msra.mxu0 %v5443
  %5566 = vmatprep.subr.mxu0 %v5440
  %5567 = vmatpush1.msra.mxu0 %v5439
  %5568 = vmatprep.subr.mxu0 %v5436
  %5569 = vmatpush1.msra.mxu0 %v5435
  %5570 = vmatprep.subr.mxu0 %v5432
  %5571 = vmatpush1.msra.mxu0 %v5431
  %5572 = vmatprep.subr.mxu0 %v5428
  %5573 = vmatpush1.msra.mxu0 %v5427
  %5574 = vmatprep.subr.mxu0 %v5424
  %5575 = vmatpush1.msra.mxu0 %v5423
  %5576 = vmatprep.subr.mxu0 %v5420
  %5577 = vmatpush1.msra.mxu0 %v5419
  %5578 = vmatprep.subr.mxu0 %v5416
  %5579 = vmatpush1.msra.mxu0 %v5415
  %5580 = vmatprep.subr.mxu0 0.0
  %5581 = vmatpush2.msra.mxu0 0.0
  %5582 = vmatprep.subr.mxu0 0.0
  %5583 = vmatpush2.msra.mxu0 0.0
  %5584 = vmatprep.subr.mxu0 0.0
  %5585 = vmatpush2.msra.mxu0 0.0
  %5586 = vmatprep.subr.mxu0 0.0
  %5587 = vmatpush2.msra.mxu0 0.0
  %5588 = vmatprep.subr.mxu0 0.0
  %5589 = vmatpush2.msra.mxu0 0.0
  %5590 = vmatprep.subr.mxu0 0.0
  %5591 = vmatpush2.msra.mxu0 0.0
  %5592 = vmatprep.subr.mxu0 0.0
  %5593 = vmatpush2.msra.mxu0 0.0
  %5594 = vmatprep.subr.mxu0 0.0
  %5595 = vmatpush2.msra.mxu0 0.0
  %5596 = vmatprep.subr.mxu0 0.0
  %5597 = vmatpush2.msra.mxu0 0.0
  %5598 = vmatprep.subr.mxu0 0.0
  %5599 = vmatpush2.msra.mxu0 0.0
  %5600 = vmatprep.subr.mxu0 0.0
  %5601 = vmatpush2.msra.mxu0 0.0
  %5602 = vmatprep.subr.mxu0 0.0
  %5603 = vmatpush2.msra.mxu0 0.0
  %5604 = vmatprep.subr.mxu0 0.0
  %5605 = vmatpush2.msra.mxu0 0.0
  %5606 = vmatprep.subr.mxu0 0.0
  %5607 = vmatpush2.msra.mxu0 0.0
  %5608 = vmatprep.subr.mxu0 0.0
  %5609 = vmatpush2.msra.mxu0 0.0
  %5610 = vmatprep.subr.mxu0 0.0
  %5611 = vmatpush2.msra.mxu0 0.0
  %5612 = vmatprep.mubr.f32.mxu0 0.0
  %5613 = vmatmul.mubr.f32.gmra.mxu0 %v5412
  %v5614 = vpop.f32.mrf.mxu0
  %v5615 = vadd.f32 0.0, %v5614
  %v5616 = vpop.f32.mrf.mxu0
  %v5617 = vadd.f32 0.0, %v5616
  %5618 = vdwg.mxu0
  %v5619 = vadd.f32 %v5408, %v5544
  %v5620 = vadd.f32 %v5409, %v5546
  %v5621 = vadd.f32 %v5410, %v5615
  %v5622 = vadd.f32 %v5411, %v5617
  %v5623 = vxor.u32 %v5619, 2147483648
  %v5624 = vmul.f32 %v5623, 1.442695
  %v5625 = vpow.pop %v5624
  %v5626 = vadd.f32 %v5625, 1.0
  %v5627 = vrcp.pop %v5626
  %v5628 = vmul.f32 1.0, %v5627
  %v5629 = vxor.u32 %v5620, 2147483648
  %v5630 = vmul.f32 %v5629, 1.442695
  %v5631 = vpow.pop %v5630
  %v5632 = vadd.f32 %v5631, 1.0
  %v5633 = vrcp.pop %v5632
  %v5634 = vmul.f32 1.0, %v5633
  %v5635 = vtanh.pop %v5621
  %v5636 = vxor.u32 %v5622, 2147483648
  %v5637 = vmul.f32 %v5636, 1.442695
  %v5638 = vpow.pop %v5637
  %v5639 = vadd.f32 %v5638, 1.0
  %v5640 = vrcp.pop %v5639
  %v5641 = vmul.f32 1.0, %v5640
  %v5642 = vld [vmem:[#allocation6] sm:$0xff]
  %v5643 = vmul.f32 %v5634, %v5642
  %v5644 = vmul.f32 %v5628, %v5635
  %v5645 = vadd.f32 %v5643, %v5644
  %v5646 = vtanh.pop %v5645
  %v5647 = vmul.f32 %v5641, %v5646
  %5648 = vst [vmem:[#allocation6] sm:$0xff] %v5645
  %5649 = vst [vmem:[#allocation5] sm:$0xff] %v5647
  %v5650 = vld [vmem:[#allocation5] sm:$0xff]
  %v5651 = vadd.f32 %v2981, %v5650
  %5653 = vrot.lane.b32.xlu0 %v5651, 64
  %v5654 = vpop.permute.xlu0 %5653
  %v5656 = vadd.f32 %v5651, %v5654
  %v5657 = vmul.f32 %v5656, 0.25
  %v5658 = vld [vmem:[%s8] sm:$0xff]
  %v5659 = vld [vmem:[%s8 + $0x8] sm:$0xff]
  %v5660 = vld [vmem:[%s8 + $0x10] sm:$0xff]
  %v5661 = vld [vmem:[%s8 + $0x18] sm:$0xff]
  %v5662 = vld [vmem:[%s8 + $0x20] sm:$0xff]
  %v5663 = vld [vmem:[%s8 + $0x28] sm:$0xff]
  %v5664 = vld [vmem:[%s8 + $0x30] sm:$0xff]
  %v5665 = vld [vmem:[%s8 + $0x38] sm:$0xff]
  %v5666 = vld [vmem:[%s9] sm:$0x1]
  %v5668 = vlaneseq
  %v5669 = vshrl.u32 %v5668, 7
  %v5670 = vsub.s32 0, %v5669
  %v5671 = vrot.slane %v5666, %v5670
  %v5674 = vsel %vm1150, %v5657, 0
  %5676 = vmatprep.subr.mxu0 0.0
  %5677 = vmatpush1.msra.mxu0 0.0
  %5678 = vmatprep.subr.mxu0 0.0
  %5679 = vmatpush1.msra.mxu0 0.0
  %5680 = vmatprep.subr.mxu0 0.0
  %5681 = vmatpush1.msra.mxu0 0.0
  %5682 = vmatprep.subr.mxu0 0.0
  %5683 = vmatpush1.msra.mxu0 0.0
  %5684 = vmatprep.subr.mxu0 0.0
  %5685 = vmatpush1.msra.mxu0 0.0
  %5686 = vmatprep.subr.mxu0 0.0
  %5687 = vmatpush1.msra.mxu0 0.0
  %5688 = vmatprep.subr.mxu0 0.0
  %5689 = vmatpush1.msra.mxu0 0.0
  %5690 = vmatprep.subr.mxu0 0.0
  %5691 = vmatpush1.msra.mxu0 0.0
  %5692 = vmatprep.subr.mxu0 0.0
  %5693 = vmatpush1.msra.mxu0 %v5665
  %5694 = vmatprep.subr.mxu0 0.0
  %5695 = vmatpush1.msra.mxu0 %v5664
  %5696 = vmatprep.subr.mxu0 0.0
  %5697 = vmatpush1.msra.mxu0 %v5663
  %5698 = vmatprep.subr.mxu0 0.0
  %5699 = vmatpush1.msra.mxu0 %v5662
  %5700 = vmatprep.subr.mxu0 0.0
  %5701 = vmatpush1.msra.mxu0 %v5661
  %5702 = vmatprep.subr.mxu0 0.0
  %5703 = vmatpush1.msra.mxu0 %v5660
  %5704 = vmatprep.subr.mxu0 0.0
  %5705 = vmatpush1.msra.mxu0 %v5659
  %5706 = vmatprep.subr.mxu0 0.0
  %5707 = vmatpush1.msra.mxu0 %v5658
  %5708 = vmatprep.subr.mxu0 0.0
  %5709 = vmatpush2.msra.mxu0 0.0
  %5710 = vmatprep.subr.mxu0 0.0
  %5711 = vmatpush2.msra.mxu0 0.0
  %5712 = vmatprep.subr.mxu0 0.0
  %5713 = vmatpush2.msra.mxu0 0.0
  %5714 = vmatprep.subr.mxu0 0.0
  %5715 = vmatpush2.msra.mxu0 0.0
  %5716 = vmatprep.subr.mxu0 0.0
  %5717 = vmatpush2.msra.mxu0 0.0
  %5718 = vmatprep.subr.mxu0 0.0
  %5719 = vmatpush2.msra.mxu0 0.0
  %5720 = vmatprep.subr.mxu0 0.0
  %5721 = vmatpush2.msra.mxu0 0.0
  %5722 = vmatprep.subr.mxu0 0.0
  %5723 = vmatpush2.msra.mxu0 0.0
  %5724 = vmatprep.subr.mxu0 0.0
  %5725 = vmatpush2.msra.mxu0 0.0
  %5726 = vmatprep.subr.mxu0 0.0
  %5727 = vmatpush2.msra.mxu0 0.0
  %5728 = vmatprep.subr.mxu0 0.0
  %5729 = vmatpush2.msra.mxu0 0.0
  %5730 = vmatprep.subr.mxu0 0.0
  %5731 = vmatpush2.msra.mxu0 0.0
  %5732 = vmatprep.subr.mxu0 0.0
  %5733 = vmatpush2.msra.mxu0 0.0
  %5734 = vmatprep.subr.mxu0 0.0
  %5735 = vmatpush2.msra.mxu0 0.0
  %5736 = vmatprep.subr.mxu0 0.0
  %5737 = vmatpush2.msra.mxu0 0.0
  %5738 = vmatprep.subr.mxu0 0.0
  %5739 = vmatpush2.msra.mxu0 0.0
  %5740 = vmatprep.mubr.f32.mxu0 0.0
  %5741 = vmatmul.mubr.f32.gmra.mxu0 %v5674
  %v5742 = vpop.f32.mrf.mxu0
  %v5743 = vadd.f32 %v5671, %v5742
  %v5744 = vpop.f32.mrf.mxu0
  %5745 = vdwg.mxu0
  %v5746 = vld [vmem:[%s10] sm:$0xff]
  %v5747 = vld [vmem:[%s10 + $0x8] sm:$0xff]
  %v5748 = vld [vmem:[%s10 + $0x10] sm:$0xff]
  %v5749 = vld [vmem:[%s10 + $0x18] sm:$0xff]
  %v5750 = vld [vmem:[%s11] sm:$0x1]
  %v5752 = vlaneseq
  %v5753 = vshrl.u32 %v5752, 7
  %v5754 = vsub.s32 0, %v5753
  %v5755 = vrot.slane %v5750, %v5754
  %vm5757 = vcmask 261120
  %v5759 = vsel %vm5757, %v5743, 0
  %5761 = vmatprep.subr.mxu0 0.0
  %5762 = vmatpush1.msra.mxu0 0.0
  %5763 = vmatprep.subr.mxu0 0.0
  %5764 = vmatpush1.msra.mxu0 0.0
  %5765 = vmatprep.subr.mxu0 0.0
  %5766 = vmatpush1.msra.mxu0 0.0
  %5767 = vmatprep.subr.mxu0 0.0
  %5768 = vmatpush1.msra.mxu0 0.0
  %5769 = vmatprep.subr.mxu0 0.0
  %5770 = vmatpush1.msra.mxu0 0.0
  %5771 = vmatprep.subr.mxu0 0.0
  %5772 = vmatpush1.msra.mxu0 0.0
  %5773 = vmatprep.subr.mxu0 0.0
  %5774 = vmatpush1.msra.mxu0 0.0
  %5775 = vmatprep.subr.mxu0 0.0
  %5776 = vmatpush1.msra.mxu0 0.0
  %5777 = vmatprep.subr.mxu0 0.0
  %5778 = vmatpush1.msra.mxu0 0.0
  %5779 = vmatprep.subr.mxu0 0.0
  %5780 = vmatpush1.msra.mxu0 0.0
  %5781 = vmatprep.subr.mxu0 0.0
  %5782 = vmatpush1.msra.mxu0 0.0
  %5783 = vmatprep.subr.mxu0 0.0
  %5784 = vmatpush1.msra.mxu0 0.0
  %5785 = vmatprep.subr.mxu0 0.0
  %5786 = vmatpush1.msra.mxu0 %v5749
  %5787 = vmatprep.subr.mxu0 0.0
  %5788 = vmatpush1.msra.mxu0 %v5748
  %5789 = vmatprep.subr.mxu0 0.0
  %5790 = vmatpush1.msra.mxu0 %v5747
  %5791 = vmatprep.subr.mxu0 0.0
  %5792 = vmatpush1.msra.mxu0 %v5746
  %5793 = vmatprep.subr.mxu0 0.0
  %5794 = vmatpush2.msra.mxu0 0.0
  %5795 = vmatprep.subr.mxu0 0.0
  %5796 = vmatpush2.msra.mxu0 0.0
  %5797 = vmatprep.subr.mxu0 0.0
  %5798 = vmatpush2.msra.mxu0 0.0
  %5799 = vmatprep.subr.mxu0 0.0
  %5800 = vmatpush2.msra.mxu0 0.0
  %5801 = vmatprep.subr.mxu0 0.0
  %5802 = vmatpush2.msra.mxu0 0.0
  %5803 = vmatprep.subr.mxu0 0.0
  %5804 = vmatpush2.msra.mxu0 0.0
  %5805 = vmatprep.subr.mxu0 0.0
  %5806 = vmatpush2.msra.mxu0 0.0
  %5807 = vmatprep.subr.mxu0 0.0
  %5808 = vmatpush2.msra.mxu0 0.0
  %5809 = vmatprep.subr.mxu0 0.0
  %5810 = vmatpush2.msra.mxu0 0.0
  %5811 = vmatprep.subr.mxu0 0.0
  %5812 = vmatpush2.msra.mxu0 0.0
  %5813 = vmatprep.subr.mxu0 0.0
  %5814 = vmatpush2.msra.mxu0 0.0
  %5815 = vmatprep.subr.mxu0 0.0
  %5816 = vmatpush2.msra.mxu0 0.0
  %5817 = vmatprep.subr.mxu0 0.0
  %5818 = vmatpush2.msra.mxu0 0.0
  %5819 = vmatprep.subr.mxu0 0.0
  %5820 = vmatpush2.msra.mxu0 0.0
  %5821 = vmatprep.subr.mxu0 0.0
  %5822 = vmatpush2.msra.mxu0 0.0
  %5823 = vmatprep.subr.mxu0 0.0
  %5824 = vmatpush2.msra.mxu0 0.0
  %5825 = vmatprep.mubr.f32.mxu0 0.0
  %5826 = vmatmul.mubr.f32.gmra.mxu0 %v5759
  %v5827 = vpop.f32.mrf.mxu0
  %v5828 = vadd.f32 %v5755, %v5827
  %v5829 = vpop.f32.mrf.mxu0
  %5830 = vdwg.mxu0
  %vm5831 = vcmask 113664
  %v5832 = vsel %vm5831, %v5828, -inf
  %5833 = vmax.xlane.f32.xlu0 %v5832
  %v5834 = vpop.xlane.xlu0 %5833
  %v5835 = vsub.f32 %v5828, %v5834
  %v5836 = vmul.f32 %v5835, 1.442695
  %v5837 = vpow.pop %v5836
  %v5838 = vsel %vm5831, %v5837, 0.0
  %5839 = vadd.xlane.f32.xlu0 %v5838
  %v5840 = vpop.xlane.xlu0 %5839
  %v5841 = vrcp.pop %v5840
  %v5842 = vmul.f32 %v5837, %v5841
  %5843 = vst.msk [vmem:[%s12] sm:$0xff] %vm5831, %v5842
  // Predicated region
  $region50: #{init_clip_lstm_pallas.1} parent=0 // pred_check
    _
  $region51: #{init_clip_lstm_pallas.1} parent=0 // pred_check_branch
    %5845 = sbr.rel (0) target = $region53
  $region52: #{init_clip_lstm_pallas.1} parent=0 // pred_region
    _
  $region53: #{init_clip_lstm_pallas.1} parent=0 // pred_fallthru
    _
  // Predicated region
  $region54: #{init_clip_lstm_pallas.1} parent=0 // pred_check
    _
  $region55: #{init_clip_lstm_pallas.1} parent=0 // pred_check_branch
    %5847 = sbr.rel (0) target = $region57
  $region56: #{init_clip_lstm_pallas.1} parent=0 // pred_region
    _
  $region57: #{init_clip_lstm_pallas.1} parent=0 // pred_fallthru
    _

</llo_original>
